<compile_context>
chip_gen: v7x
topology: tpu7x:2x2x1
jax: 0.10.0
libtpu: 0.0.40
codegen_flags: <defaults>
</compile_context>

<pallas_src>
import functools
import math

import jax
import jax.numpy as jnp
from jax.experimental import pallas as pl
from jax.experimental.pallas import tpu as pltpu


PARAM_ORDER = ('wqkv', 'bqkv', 'wo', 'bo',
               'g1', 'be1', 'w1', 'b1', 'w2', 'b2', 'g2', 'be2')


def time_attention_kernel(
    x_ref,
    wqkv_ref, bqkv_ref, wo_ref, bo_ref,
    g1_ref, be1_ref, w1_ref, b1_ref, w2_ref, b2_ref, g2_ref, be2_ref,
    o_ref,
    *, n_heads):
  Bt, L, dm = x_ref.shape
  M = Bt * L
  H = n_heads
  dk = dm // H

  # bf16 activation block from HBM; all arithmetic in f32 (f32 MXU accumulate).
  x2 = x_ref[...].astype(jnp.float32).reshape(M, dm)

  # Hoisted parameter loads (biases / LN params broadcast once per grid step).
  bqkv = bqkv_ref[...]
  bo = bo_ref[...]
  g1 = g1_ref[...]; be1 = be1_ref[...]
  b1 = b1_ref[...]; b2 = b2_ref[...]
  g2 = g2_ref[...]; be2 = be2_ref[...]

  # --- fused QKV projection: one bf16 MXU matmul, f32 accumulation ---
  # (the 1/sqrt(dk) attention scale is pre-folded into the packed Q columns)
  qkv = jnp.dot(x2.astype(jnp.bfloat16), wqkv_ref[...],
                preferred_element_type=jnp.float32) + bqkv        # (M, 3*dm)
  q3 = qkv[:, 0:dm].reshape(Bt, L, dm)
  k3 = qkv[:, dm:2 * dm].reshape(Bt, L, dm)
  v3 = qkv[:, 2 * dm:3 * dm].reshape(Bt, L, dm)

  # --- all heads at once: fold heads into the leading batch dim ---
  # (Bt, L, dm) -> (H*Bt, L, dk) with batch index h*Bt + b; one batched QK^T,
  # one softmax and one batched PV replace the per-head Python loop.
  q_bh = jnp.concatenate([q3[..., h * dk:(h + 1) * dk] for h in range(H)], axis=0)
  k_bh = jnp.concatenate([k3[..., h * dk:(h + 1) * dk] for h in range(H)], axis=0)
  v_bh = jnp.concatenate([v3[..., h * dk:(h + 1) * dk] for h in range(H)], axis=0)

  s = jnp.einsum('bld,bsd->bls', q_bh, k_bh,
                 preferred_element_type=jnp.float32)              # (H*Bt, L, L)
  s = s - jnp.max(s, axis=-1, keepdims=True)
  p = jnp.exp(s)
  denom = jnp.sum(p, axis=-1, keepdims=True)                      # (H*Bt, L, 1)
  o_bh = jnp.einsum('bls,bsd->bld', p, v_bh,
                    preferred_element_type=jnp.float32)           # (H*Bt, L, dk)
  # Deferred softmax normalization: scale the (L, dk) output instead of the
  # (L, L) probability tile; the reciprocal runs on the EUP.
  o_bh = o_bh * pl.reciprocal(denom, approx=True)

  # --- reassemble heads on lanes; ONE (M, dm) @ (dm, dm) output projection ---
  attn = jnp.concatenate([o_bh[h * Bt:(h + 1) * Bt] for h in range(H)],
                         axis=-1).reshape(M, dm)
  attn_out = jnp.dot(attn.astype(jnp.bfloat16), wo_ref[...],
                     preferred_element_type=jnp.float32) + bo

  def layer_norm(y, gamma, beta, eps=1e-5):
    # single-pass variance: mean(y*y) - mu*mu (one fewer (M, dm) VPU pass)
    mu = jnp.mean(y, axis=-1, keepdims=True)
    var = jnp.maximum(jnp.mean(y * y, axis=-1, keepdims=True) - mu * mu, 0.0)
    return (y - mu) * jax.lax.rsqrt(var + eps) * gamma + beta

  # TODO(synk): dropout layers are eval-mode identity (no stochastic dropout).
  h1 = layer_norm(x2 + attn_out, g1, be1)

  # --- MLP: Linear -> tanh-GELU (EUP path) -> Linear ---
  mlp = jnp.dot(h1.astype(jnp.bfloat16), w1_ref[...],
                preferred_element_type=jnp.float32) + b1
  mlp = jax.nn.gelu(mlp, approximate=True)
  mlp = jnp.dot(mlp.astype(jnp.bfloat16), w2_ref[...],
                preferred_element_type=jnp.float32) + b2

  h2 = layer_norm(h1 + mlp, g2, be2)
  o_ref[...] = h2.reshape(Bt, L, dm).astype(o_ref.dtype)


def _round_up(x, m):
  return ((x + m - 1) // m) * m


def _pack_params(params, n_heads):
  """Fuse QKV weights/biases, fold the 1/sqrt(dk) attention scale into the Q
  projection, and cast matmul weights to bf16 (f32 accumulation in-kernel).
  One-time parameter transform (not per-call activation work).
  TODO(synk): optionally pad contraction/output dims of wqkv/wo/w1/w2 to
  128/256 multiples on v6e/v7x (requires masked LN statistics in-kernel)."""
  dm = params['wq'].shape[0]
  scale = 1.0 / math.sqrt(dm // n_heads)
  wqkv = jnp.concatenate([params['wq'] * scale, params['wk'], params['wv']], axis=1)
  bqkv = jnp.concatenate([params['bq'] * scale, params['bk'], params['bv']], axis=1)
  return dict(
      wqkv=wqkv.astype(jnp.bfloat16),
      bqkv=bqkv.astype(jnp.float32),
      wo=params['wo'].astype(jnp.bfloat16),
      bo=params['bo'].astype(jnp.float32),
      g1=params['g1'].astype(jnp.float32), be1=params['be1'].astype(jnp.float32),
      w1=params['w1'].astype(jnp.bfloat16), b1=params['b1'].astype(jnp.float32),
      w2=params['w2'].astype(jnp.bfloat16), b2=params['b2'].astype(jnp.float32),
      g2=params['g2'].astype(jnp.float32), be2=params['be2'].astype(jnp.float32),
  )


def _vmem_capacity_bytes():
  """Physical per-core VMEM (128 MiB v5e/v6e, 64 MiB v7x); conservative fallback."""
  try:
    cap = getattr(pltpu.get_tpu_info(), 'vmem_capacity_bytes', None)
    if cap:
      return int(cap)
  except Exception:
    pass
  return 64 << 20


def _per_token_vmem_bytes(L, dm, d_ff, H):
  """Rough VMEM bytes per (batch, seq) token, lane-padding aware."""
  dk = dm // H
  lp = lambda n: _round_up(max(int(n), 1), 128)
  b = 0
  b += 2 * lp(dm) * 2          # bf16 x block, double-buffered
  b += 2 * lp(dm) * 4          # f32 out block, double-buffered
  b += lp(dm) * 4              # f32 upcast of x
  b += lp(3 * dm) * 4          # fused QKV activations
  b += 3 * H * lp(dk) * 4      # head-batched q / k / v
  b += 2 * H * lp(L) * 4       # attention scores + exp (per review)
  b += H * lp(dk) * 4          # head-batched attention output
  b += 3 * lp(dm) * 4          # reassembled heads, out-proj result, h1
  b += 2 * lp(d_ff) * 4        # MLP hidden (pre/post activation)
  b += lp(dm) * 4              # h2
  return int(b * 1.5)          # relayout temporaries / scheduling headroom


def _pick_block_batch(BB, L, per_token_bytes, act_budget_bytes):
  """Pick (Bt, n_steps) so each grid step holds Bt*L tokens within the VMEM
  activation budget.  Prefers an even step count >= 2 so the 'parallel' grid
  axis splits across both TensorCores on v7x; BB is padded to Bt*n_steps."""
  per_row = max(per_token_bytes * L, 1)
  max_bt = max(1, act_budget_bytes // per_row)
  if BB <= 1:
    return 1, 1
  steps = max(2, -(-BB // max_bt))
  if steps % 2:
    steps += 1
  steps = min(steps, _round_up(BB, 2))
  bt = -(-BB // steps)
  return bt, steps


def time_attention_layer(x, params, n_heads):
  """x: [B, ts_d, seg_num, d_model] -> (out of same shape, None)."""
  B, Dts, L, dm = x.shape
  BB = B * Dts
  H = n_heads
  dk = dm // H
  d_ff = params['w1'].shape[1]

  packed = _pack_params(params, n_heads)
  weight_args = [packed[k] for k in PARAM_ORDER]
  weight_bytes = sum(int(a.size) * a.dtype.itemsize for a in weight_args)

  # --- generation-aware VMEM budget ---
  vmem_cap = _vmem_capacity_bytes()
  vmem_budget = int(vmem_cap * 0.80)            # leave compiler/DMA headroom
  per_token = _per_token_vmem_bytes(L, dm, d_ff, H)
  act_budget = max(vmem_budget - 2 * weight_bytes - (2 << 20), per_token * L)
  Bt, n_steps = _pick_block_batch(BB, L, per_token, act_budget)
  BB_pad = Bt * n_steps

  # Activations cross HBM in bf16 (halves input DMA; all in-kernel math is f32).
  xf = x.reshape(BB, L, dm).astype(jnp.bfloat16)
  if BB_pad != BB:
    xf = jnp.pad(xf, ((0, BB_pad - BB), (0, 0), (0, 0)))

  # Weights/biases are grid-invariant; single-buffer them when supported
  # (constant index_map -> fetched once, a second pipeline buffer is waste).
  def resident_spec(a, single_buffer):
    nd = a.ndim
    idx = lambda i: (0,) * nd
    if single_buffer and hasattr(pl, 'Buffered'):
      return pl.BlockSpec(a.shape, idx, pipeline_mode=pl.Buffered(1))
    return pl.BlockSpec(a.shape, idx)

  # Cost estimate for XLA scheduling around the custom call.
  M_total = BB_pad * L
  flops = (2 * M_total * dm * 3 * dm            # fused QKV
           + BB_pad * H * 4 * L * L * dk        # QK^T + PV
           + 2 * M_total * dm * dm              # output projection
           + 2 * 2 * M_total * dm * d_ff)       # MLP
  transcendentals = BB_pad * H * L * (L + 1) + M_total * d_ff
  bytes_accessed = int(xf.size) * 2 + M_total * dm * 4 + weight_bytes

  vmem_needed = per_token * Bt * L + 2 * weight_bytes + (2 << 20)
  vmem_limit = int(min(vmem_budget, max(vmem_needed, 32 << 20)))

  def run(single_buffer):
    in_specs = [pl.BlockSpec((Bt, L, dm), lambda i: (i, 0, 0))]
    in_specs += [resident_spec(a, single_buffer) for a in weight_args]
    out_spec = pl.BlockSpec((Bt, L, dm), lambda i: (i, 0, 0))
    return pl.pallas_call(
        functools.partial(time_attention_kernel, n_heads=n_heads),
        out_shape=jax.ShapeDtypeStruct((BB_pad, L, dm), jnp.float32),
        grid=(n_steps,),
        in_specs=in_specs,
        out_specs=out_spec,
        compiler_params=pltpu.CompilerParams(
            dimension_semantics=("parallel",),
            vmem_limit_bytes=vmem_limit),
        cost_estimate=pl.CostEstimate(
            flops=int(flops),
            transcendentals=int(transcendentals),
            bytes_accessed=int(bytes_accessed)),
    )(xf, *weight_args)

  try:
    out = run(single_buffer=True)
  except Exception:
    # Fallback for jaxlib versions without BlockSpec(pipeline_mode=...):
    # identical math, default double-buffered weight windows.
    out = run(single_buffer=False)

  out = out[:BB].reshape(B, Dts, L, dm).astype(x.dtype)
  # TODO(synk): attention weights are not materialized (output_attention=False
  # path of FullAttention); return None like the eval-mode PyTorch layer.
  return out, None


def init_params(key, d_model, n_heads, d_ff):
  ks = jax.random.split(key, 16)
  def w(k, fan_in, fan_out, scale=0.05):
    return jax.random.normal(k, (fan_in, fan_out), jnp.float32) * scale
  def b(k, n, scale=0.02):
    return jax.random.normal(k, (1, n), jnp.float32) * scale
  return dict(
      wq=w(ks[0], d_model, d_model), bq=b(ks[1], d_model),
      wk=w(ks[2], d_model, d_model), bk=b(ks[3], d_model),
      wv=w(ks[4], d_model, d_model), bv=b(ks[5], d_model),
      wo=w(ks[6], d_model, d_model), bo=b(ks[7], d_model),
      g1=jnp.ones((1, d_model), jnp.float32), be1=jnp.zeros((1, d_model), jnp.float32),
      w1=w(ks[8], d_model, d_ff), b1=b(ks[9], d_ff),
      w2=w(ks[10], d_ff, d_model), b2=b(ks[11], d_model),
      g2=jnp.ones((1, d_model), jnp.float32), be2=jnp.zeros((1, d_model), jnp.float32),
  )


def ref_forward(x, params, n_heads):
  """Pure-JAX f32 reference mirroring the PyTorch forward (eval mode)."""
  B, Dts, L, dm = x.shape
  dk = dm // n_heads
  xf = x.reshape(B * Dts, L, dm)
  q = (xf @ params['wq'] + params['bq']).reshape(-1, L, n_heads, dk)
  k = (xf @ params['wk'] + params['bk']).reshape(-1, L, n_heads, dk)
  v = (xf @ params['wv'] + params['bv']).reshape(-1, L, n_heads, dk)
  scores = jnp.einsum('blhe,bshe->bhls', q, k) / jnp.sqrt(jnp.float32(dk))
  A = jax.nn.softmax(scores, axis=-1)
  out = jnp.einsum('bhls,bshd->blhd', A, v).reshape(-1, L, dm)
  out = out @ params['wo'] + params['bo']

  def ln(y, g, bb):
    mu = y.mean(-1, keepdims=True)
    var = ((y - mu) ** 2).mean(-1, keepdims=True)
    return (y - mu) / jnp.sqrt(var + 1e-5) * g + bb

  h1 = ln(xf + out, params['g1'], params['be1'])
  m = jax.nn.gelu(h1 @ params['w1'] + params['b1'], approximate=False)
  m = m @ params['w2'] + params['b2']
  h2 = ln(h1 + m, params['g2'], params['be2'])
  return h2.reshape(B, Dts, L, dm)


if __name__ == "__main__":
  B, Dts, L, d_model, n_heads, d_ff = 2, 4, 8, 32, 4, 128
  key = jax.random.PRNGKey(0)
  kx, kp = jax.random.split(key)
  x = jax.random.normal(kx, (B, Dts, L, d_model), jnp.float32)
  params = init_params(kp, d_model, n_heads, d_ff)

  out, attn = time_attention_layer(x, params, n_heads)
  out = jax.block_until_ready(out)

  ref = ref_forward(x, params, n_heads)
  max_err = float(jnp.max(jnp.abs(out - ref)))
  assert out.shape == (B, Dts, L, d_model)
  assert attn is None
  # bf16 activations + bf16 MXU weights (f32 accumulation), tanh GELU and the
  # approx EUP reciprocal vs. the exact-f32 reference => loosened tolerance.
  assert max_err < 3e-2, f"max abs err {max_err}"
  print("KERNEL_OK")
</pallas_src>

<mosaic_0001>
module attributes {stable_mosaic.version = 11 : i64} {
  func.func @time_attention_kernel(%arg0: i32, %arg1: memref<4x8x32xbf16, #tpu.memory_space<vmem>>, %arg2: memref<32x96xbf16, #tpu.memory_space<vmem>>, %arg3: memref<1x96xf32, #tpu.memory_space<vmem>>, %arg4: memref<32x32xbf16, #tpu.memory_space<vmem>>, %arg5: memref<1x32xf32, #tpu.memory_space<vmem>>, %arg6: memref<1x32xf32, #tpu.memory_space<vmem>>, %arg7: memref<1x32xf32, #tpu.memory_space<vmem>>, %arg8: memref<32x128xbf16, #tpu.memory_space<vmem>>, %arg9: memref<1x128xf32, #tpu.memory_space<vmem>>, %arg10: memref<128x32xbf16, #tpu.memory_space<vmem>>, %arg11: memref<1x32xf32, #tpu.memory_space<vmem>>, %arg12: memref<1x32xf32, #tpu.memory_space<vmem>>, %arg13: memref<1x32xf32, #tpu.memory_space<vmem>>, %arg14: memref<4x8x32xf32, #tpu.memory_space<vmem>>) attributes {dimension_semantics = [#tpu.dimension_semantics<parallel>], iteration_bounds = array<i64: 2>, scalar_prefetch = 0 : i64, scratch_operands = 0 : i64, tpu.core_type = #tpu.core_type<tc>, window_params = [{transform_indices = @transform_0, window_bounds = array<i64: 4, 8, 32>}, {pipeline_mode = #tpu.pipeline_mode<synchronous>, transform_indices = @transform_1, window_bounds = array<i64: 32, 96>}, {pipeline_mode = #tpu.pipeline_mode<synchronous>, transform_indices = @transform_2, window_bounds = array<i64: 1, 96>}, {pipeline_mode = #tpu.pipeline_mode<synchronous>, transform_indices = @transform_3, window_bounds = array<i64: 32, 32>}, {pipeline_mode = #tpu.pipeline_mode<synchronous>, transform_indices = @transform_4, window_bounds = array<i64: 1, 32>}, {pipeline_mode = #tpu.pipeline_mode<synchronous>, transform_indices = @transform_5, window_bounds = array<i64: 1, 32>}, {pipeline_mode = #tpu.pipeline_mode<synchronous>, transform_indices = @transform_6, window_bounds = array<i64: 1, 32>}, {pipeline_mode = #tpu.pipeline_mode<synchronous>, transform_indices = @transform_7, window_bounds = array<i64: 32, 128>}, {pipeline_mode = #tpu.pipeline_mode<synchronous>, transform_indices = @transform_8, window_bounds = array<i64: 1, 128>}, {pipeline_mode = #tpu.pipeline_mode<synchronous>, transform_indices = @transform_9, window_bounds = array<i64: 128, 32>}, {pipeline_mode = #tpu.pipeline_mode<synchronous>, transform_indices = @transform_10, window_bounds = array<i64: 1, 32>}, {pipeline_mode = #tpu.pipeline_mode<synchronous>, transform_indices = @transform_11, window_bounds = array<i64: 1, 32>}, {pipeline_mode = #tpu.pipeline_mode<synchronous>, transform_indices = @transform_12, window_bounds = array<i64: 1, 32>}, {transform_indices = @transform_13, window_bounds = array<i64: 4, 8, 32>}]} {
    %c0 = arith.constant 0 : index
    %c0_0 = arith.constant 0 : index
    %c0_1 = arith.constant 0 : index
    %0 = vector.load %arg1[%c0, %c0_0, %c0_1] : memref<4x8x32xbf16, #tpu.memory_space<vmem>>, vector<4x8x32xbf16>
    %1 = arith.extf %0 : vector<4x8x32xbf16> to vector<4x8x32xf32>
    %2 = vector.shape_cast %1 : vector<4x8x32xf32> to vector<32x32xf32>
    %c0_2 = arith.constant 0 : index
    %c0_3 = arith.constant 0 : index
    %3 = vector.load %arg3[%c0_2, %c0_3] : memref<1x96xf32, #tpu.memory_space<vmem>>, vector<1x96xf32>
    %c0_4 = arith.constant 0 : index
    %c0_5 = arith.constant 0 : index
    %4 = vector.load %arg5[%c0_4, %c0_5] : memref<1x32xf32, #tpu.memory_space<vmem>>, vector<1x32xf32>
    %c0_6 = arith.constant 0 : index
    %c0_7 = arith.constant 0 : index
    %5 = vector.load %arg6[%c0_6, %c0_7] : memref<1x32xf32, #tpu.memory_space<vmem>>, vector<1x32xf32>
    %c0_8 = arith.constant 0 : index
    %c0_9 = arith.constant 0 : index
    %6 = vector.load %arg7[%c0_8, %c0_9] : memref<1x32xf32, #tpu.memory_space<vmem>>, vector<1x32xf32>
    %c0_10 = arith.constant 0 : index
    %c0_11 = arith.constant 0 : index
    %7 = vector.load %arg9[%c0_10, %c0_11] : memref<1x128xf32, #tpu.memory_space<vmem>>, vector<1x128xf32>
    %c0_12 = arith.constant 0 : index
    %c0_13 = arith.constant 0 : index
    %8 = vector.load %arg11[%c0_12, %c0_13] : memref<1x32xf32, #tpu.memory_space<vmem>>, vector<1x32xf32>
    %c0_14 = arith.constant 0 : index
    %c0_15 = arith.constant 0 : index
    %9 = vector.load %arg12[%c0_14, %c0_15] : memref<1x32xf32, #tpu.memory_space<vmem>>, vector<1x32xf32>
    %c0_16 = arith.constant 0 : index
    %c0_17 = arith.constant 0 : index
    %10 = vector.load %arg13[%c0_16, %c0_17] : memref<1x32xf32, #tpu.memory_space<vmem>>, vector<1x32xf32>
    %11 = arith.truncf %2 : vector<32x32xf32> to vector<32x32xbf16>
    %c0_18 = arith.constant 0 : index
    %c0_19 = arith.constant 0 : index
    %12 = vector.load %arg2[%c0_18, %c0_19] : memref<32x96xbf16, #tpu.memory_space<vmem>>, vector<32x96xbf16>
    %cst = arith.constant dense<0.000000e+00> : vector<32x96xf32>
    %13 = tpu.matmul %11, %12, %cst {dimension_numbers = #tpu.dot_dimension_numbers<[1], [0], [0], [1], [0, 0, 1, 1], [], []>} : vector<32x32xbf16>, vector<32x96xbf16>, vector<32x96xf32> -> vector<32x96xf32>
    %14 = vector.broadcast %3 : vector<1x96xf32> to vector<32x96xf32>
    %15 = arith.addf %13, %14 : vector<32x96xf32>
    %16 = vector.extract_strided_slice %15 {offsets = [0, 0], sizes = [32, 32], strides = [1, 1]} : vector<32x96xf32> to vector<32x32xf32>
    %17 = vector.shape_cast %16 : vector<32x32xf32> to vector<4x8x32xf32>
    %18 = vector.extract_strided_slice %15 {offsets = [0, 32], sizes = [32, 32], strides = [1, 1]} : vector<32x96xf32> to vector<32x32xf32>
    %19 = vector.shape_cast %18 : vector<32x32xf32> to vector<4x8x32xf32>
    %20 = vector.extract_strided_slice %15 {offsets = [0, 64], sizes = [32, 32], strides = [1, 1]} : vector<32x96xf32> to vector<32x32xf32>
    %21 = vector.shape_cast %20 : vector<32x32xf32> to vector<4x8x32xf32>
    %22 = vector.extract_strided_slice %17 {offsets = [0, 0, 0], sizes = [4, 8, 8], strides = [1, 1, 1]} : vector<4x8x32xf32> to vector<4x8x8xf32>
    %23 = vector.extract_strided_slice %17 {offsets = [0, 0, 8], sizes = [4, 8, 8], strides = [1, 1, 1]} : vector<4x8x32xf32> to vector<4x8x8xf32>
    %24 = vector.extract_strided_slice %17 {offsets = [0, 0, 16], sizes = [4, 8, 8], strides = [1, 1, 1]} : vector<4x8x32xf32> to vector<4x8x8xf32>
    %25 = vector.extract_strided_slice %17 {offsets = [0, 0, 24], sizes = [4, 8, 8], strides = [1, 1, 1]} : vector<4x8x32xf32> to vector<4x8x8xf32>
    %26 = tpu.concatenate %22, %23, %24, %25 in 0 : vector<4x8x8xf32>, vector<4x8x8xf32>, vector<4x8x8xf32>, vector<4x8x8xf32> -> vector<16x8x8xf32>
    %27 = vector.extract_strided_slice %19 {offsets = [0, 0, 0], sizes = [4, 8, 8], strides = [1, 1, 1]} : vector<4x8x32xf32> to vector<4x8x8xf32>
    %28 = vector.extract_strided_slice %19 {offsets = [0, 0, 8], sizes = [4, 8, 8], strides = [1, 1, 1]} : vector<4x8x32xf32> to vector<4x8x8xf32>
    %29 = vector.extract_strided_slice %19 {offsets = [0, 0, 16], sizes = [4, 8, 8], strides = [1, 1, 1]} : vector<4x8x32xf32> to vector<4x8x8xf32>
    %30 = vector.extract_strided_slice %19 {offsets = [0, 0, 24], sizes = [4, 8, 8], strides = [1, 1, 1]} : vector<4x8x32xf32> to vector<4x8x8xf32>
    %31 = tpu.concatenate %27, %28, %29, %30 in 0 : vector<4x8x8xf32>, vector<4x8x8xf32>, vector<4x8x8xf32>, vector<4x8x8xf32> -> vector<16x8x8xf32>
    %32 = vector.extract_strided_slice %21 {offsets = [0, 0, 0], sizes = [4, 8, 8], strides = [1, 1, 1]} : vector<4x8x32xf32> to vector<4x8x8xf32>
    %33 = vector.extract_strided_slice %21 {offsets = [0, 0, 8], sizes = [4, 8, 8], strides = [1, 1, 1]} : vector<4x8x32xf32> to vector<4x8x8xf32>
    %34 = vector.extract_strided_slice %21 {offsets = [0, 0, 16], sizes = [4, 8, 8], strides = [1, 1, 1]} : vector<4x8x32xf32> to vector<4x8x8xf32>
    %35 = vector.extract_strided_slice %21 {offsets = [0, 0, 24], sizes = [4, 8, 8], strides = [1, 1, 1]} : vector<4x8x32xf32> to vector<4x8x8xf32>
    %36 = tpu.concatenate %32, %33, %34, %35 in 0 : vector<4x8x8xf32>, vector<4x8x8xf32>, vector<4x8x8xf32>, vector<4x8x8xf32> -> vector<16x8x8xf32>
    "tpu.trace_start"() <{level = 10 : i32, message = "bld,bsd->bls"}> : () -> ()
    %cst_20 = arith.constant dense<0.000000e+00> : vector<16x8x8xf32>
    %37 = tpu.matmul %26, %31, %cst_20 {dimension_numbers = #tpu.dot_dimension_numbers<[2], [2], [1], [1], [0, 0, 0, 1, 1, 1], [0], [0]>} : vector<16x8x8xf32>, vector<16x8x8xf32>, vector<16x8x8xf32> -> vector<16x8x8xf32>
    "tpu.trace_stop"() : () -> ()
    %cst_21 = arith.constant dense<0xFF800000> : vector<16x8xf32>
    %38 = vector.multi_reduction <maximumf>, %37, %cst_21 [2] : vector<16x8x8xf32> to vector<16x8xf32>
    %39 = vector.shape_cast %38 : vector<16x8xf32> to vector<16x8x1xf32>
    %40 = vector.broadcast %39 : vector<16x8x1xf32> to vector<16x8x8xf32>
    %41 = arith.subf %37, %40 : vector<16x8x8xf32>
    %42 = math.exp %41 : vector<16x8x8xf32>
    %cst_22 = arith.constant dense<0.000000e+00> : vector<16x8xf32>
    %43 = vector.multi_reduction <add>, %42, %cst_22 [2] : vector<16x8x8xf32> to vector<16x8xf32>
    %44 = vector.shape_cast %43 : vector<16x8xf32> to vector<16x8x1xf32>
    "tpu.trace_start"() <{level = 10 : i32, message = "bls,bsd->bld"}> : () -> ()
    %cst_23 = arith.constant dense<0.000000e+00> : vector<16x8x8xf32>
    %45 = tpu.matmul %42, %36, %cst_23 {dimension_numbers = #tpu.dot_dimension_numbers<[2], [1], [1], [2], [0, 0, 0, 1, 1, 2], [0], [0]>} : vector<16x8x8xf32>, vector<16x8x8xf32>, vector<16x8x8xf32> -> vector<16x8x8xf32>
    "tpu.trace_stop"() : () -> ()
    %46 = tpu.reciprocal %44 {approx = true} : vector<16x8x1xf32> -> vector<16x8x1xf32>
    %47 = vector.broadcast %46 : vector<16x8x1xf32> to vector<16x8x8xf32>
    %48 = arith.mulf %45, %47 : vector<16x8x8xf32>
    %49 = vector.extract_strided_slice %48 {offsets = [0, 0, 0], sizes = [4, 8, 8], strides = [1, 1, 1]} : vector<16x8x8xf32> to vector<4x8x8xf32>
    %50 = vector.extract_strided_slice %48 {offsets = [4, 0, 0], sizes = [4, 8, 8], strides = [1, 1, 1]} : vector<16x8x8xf32> to vector<4x8x8xf32>
    %51 = vector.extract_strided_slice %48 {offsets = [8, 0, 0], sizes = [4, 8, 8], strides = [1, 1, 1]} : vector<16x8x8xf32> to vector<4x8x8xf32>
    %52 = vector.extract_strided_slice %48 {offsets = [12, 0, 0], sizes = [4, 8, 8], strides = [1, 1, 1]} : vector<16x8x8xf32> to vector<4x8x8xf32>
    %53 = tpu.concatenate %49, %50, %51, %52 in 2 : vector<4x8x8xf32>, vector<4x8x8xf32>, vector<4x8x8xf32>, vector<4x8x8xf32> -> vector<4x8x32xf32>
    %54 = vector.shape_cast %53 : vector<4x8x32xf32> to vector<32x32xf32>
    %55 = arith.truncf %54 : vector<32x32xf32> to vector<32x32xbf16>
    %c0_24 = arith.constant 0 : index
    %c0_25 = arith.constant 0 : index
    %56 = vector.load %arg4[%c0_24, %c0_25] : memref<32x32xbf16, #tpu.memory_space<vmem>>, vector<32x32xbf16>
    %cst_26 = arith.constant dense<0.000000e+00> : vector<32x32xf32>
    %57 = tpu.matmul %55, %56, %cst_26 {dimension_numbers = #tpu.dot_dimension_numbers<[1], [0], [0], [1], [0, 0, 1, 1], [], []>} : vector<32x32xbf16>, vector<32x32xbf16>, vector<32x32xf32> -> vector<32x32xf32>
    %58 = vector.broadcast %4 : vector<1x32xf32> to vector<32x32xf32>
    %59 = arith.addf %57, %58 : vector<32x32xf32>
    %60 = arith.addf %2, %59 : vector<32x32xf32>
    %cst_27 = arith.constant dense<0.000000e+00> : vector<32xf32>
    %61 = vector.multi_reduction <add>, %60, %cst_27 [1] : vector<32x32xf32> to vector<32xf32>
    %62 = vector.shape_cast %61 : vector<32xf32> to vector<32x1xf32>
    %cst_28 = arith.constant 3.200000e+01 : f32
    %63 = vector.broadcast %cst_28 : f32 to vector<32x1xf32>
    %64 = arith.divf %62, %63 : vector<32x1xf32>
    %65 = arith.mulf %60, %60 : vector<32x32xf32>
    %cst_29 = arith.constant dense<0.000000e+00> : vector<32xf32>
    %66 = vector.multi_reduction <add>, %65, %cst_29 [1] : vector<32x32xf32> to vector<32xf32>
    %67 = vector.shape_cast %66 : vector<32xf32> to vector<32x1xf32>
    %cst_30 = arith.constant 3.200000e+01 : f32
    %68 = vector.broadcast %cst_30 : f32 to vector<32x1xf32>
    %69 = arith.divf %67, %68 : vector<32x1xf32>
    %70 = arith.mulf %64, %64 : vector<32x1xf32>
    %71 = arith.subf %69, %70 : vector<32x1xf32>
    %cst_31 = arith.constant 0.000000e+00 : f32
    %72 = vector.broadcast %cst_31 : f32 to vector<32x1xf32>
    %73 = arith.maximumf %71, %72 : vector<32x1xf32>
    %74 = vector.broadcast %64 : vector<32x1xf32> to vector<32x32xf32>
    %75 = arith.subf %60, %74 : vector<32x32xf32>
    %cst_32 = arith.constant 9.99999974E-6 : f32
    %76 = vector.broadcast %cst_32 : f32 to vector<32x1xf32>
    %77 = arith.addf %73, %76 : vector<32x1xf32>
    %78 = math.rsqrt %77 : vector<32x1xf32>
    %79 = vector.broadcast %78 : vector<32x1xf32> to vector<32x32xf32>
    %80 = arith.mulf %75, %79 : vector<32x32xf32>
    %81 = vector.broadcast %5 : vector<1x32xf32> to vector<32x32xf32>
    %82 = arith.mulf %80, %81 : vector<32x32xf32>
    %83 = vector.broadcast %6 : vector<1x32xf32> to vector<32x32xf32>
    %84 = arith.addf %82, %83 : vector<32x32xf32>
    %85 = arith.truncf %84 : vector<32x32xf32> to vector<32x32xbf16>
    %c0_33 = arith.constant 0 : index
    %c0_34 = arith.constant 0 : index
    %86 = vector.load %arg8[%c0_33, %c0_34] : memref<32x128xbf16, #tpu.memory_space<vmem>>, vector<32x128xbf16>
    %cst_35 = arith.constant dense<0.000000e+00> : vector<32x128xf32>
    %87 = tpu.matmul %85, %86, %cst_35 {dimension_numbers = #tpu.dot_dimension_numbers<[1], [0], [0], [1], [0, 0, 1, 1], [], []>} : vector<32x32xbf16>, vector<32x128xbf16>, vector<32x128xf32> -> vector<32x128xf32>
    %88 = vector.broadcast %7 : vector<1x128xf32> to vector<32x128xf32>
    %89 = arith.addf %87, %88 : vector<32x128xf32>
    %90 = arith.mulf %89, %89 : vector<32x128xf32>
    %91 = arith.mulf %89, %90 : vector<32x128xf32>
    %cst_36 = arith.constant 4.471500e-02 : f32
    %92 = vector.broadcast %cst_36 : f32 to vector<32x128xf32>
    %93 = arith.mulf %92, %91 : vector<32x128xf32>
    %94 = arith.addf %89, %93 : vector<32x128xf32>
    %cst_37 = arith.constant 0.797884583 : f32
    %95 = vector.broadcast %cst_37 : f32 to vector<32x128xf32>
    %96 = arith.mulf %95, %94 : vector<32x128xf32>
    %97 = math.tanh %96 : vector<32x128xf32>
    %cst_38 = arith.constant 1.000000e+00 : f32
    %98 = vector.broadcast %cst_38 : f32 to vector<32x128xf32>
    %99 = arith.addf %98, %97 : vector<32x128xf32>
    %cst_39 = arith.constant 5.000000e-01 : f32
    %100 = vector.broadcast %cst_39 : f32 to vector<32x128xf32>
    %101 = arith.mulf %100, %99 : vector<32x128xf32>
    %102 = arith.mulf %89, %101 : vector<32x128xf32>
    %103 = arith.truncf %102 : vector<32x128xf32> to vector<32x128xbf16>
    %c0_40 = arith.constant 0 : index
    %c0_41 = arith.constant 0 : index
    %104 = vector.load %arg10[%c0_40, %c0_41] : memref<128x32xbf16, #tpu.memory_space<vmem>>, vector<128x32xbf16>
    %cst_42 = arith.constant dense<0.000000e+00> : vector<32x32xf32>
    %105 = tpu.matmul %103, %104, %cst_42 {dimension_numbers = #tpu.dot_dimension_numbers<[1], [0], [0], [1], [0, 0, 1, 1], [], []>} : vector<32x128xbf16>, vector<128x32xbf16>, vector<32x32xf32> -> vector<32x32xf32>
    %106 = vector.broadcast %8 : vector<1x32xf32> to vector<32x32xf32>
    %107 = arith.addf %105, %106 : vector<32x32xf32>
    %108 = arith.addf %84, %107 : vector<32x32xf32>
    %cst_43 = arith.constant dense<0.000000e+00> : vector<32xf32>
    %109 = vector.multi_reduction <add>, %108, %cst_43 [1] : vector<32x32xf32> to vector<32xf32>
    %110 = vector.shape_cast %109 : vector<32xf32> to vector<32x1xf32>
    %cst_44 = arith.constant 3.200000e+01 : f32
    %111 = vector.broadcast %cst_44 : f32 to vector<32x1xf32>
    %112 = arith.divf %110, %111 : vector<32x1xf32>
    %113 = arith.mulf %108, %108 : vector<32x32xf32>
    %cst_45 = arith.constant dense<0.000000e+00> : vector<32xf32>
    %114 = vector.multi_reduction <add>, %113, %cst_45 [1] : vector<32x32xf32> to vector<32xf32>
    %115 = vector.shape_cast %114 : vector<32xf32> to vector<32x1xf32>
    %cst_46 = arith.constant 3.200000e+01 : f32
    %116 = vector.broadcast %cst_46 : f32 to vector<32x1xf32>
    %117 = arith.divf %115, %116 : vector<32x1xf32>
    %118 = arith.mulf %112, %112 : vector<32x1xf32>
    %119 = arith.subf %117, %118 : vector<32x1xf32>
    %cst_47 = arith.constant 0.000000e+00 : f32
    %120 = vector.broadcast %cst_47 : f32 to vector<32x1xf32>
    %121 = arith.maximumf %119, %120 : vector<32x1xf32>
    %122 = vector.broadcast %112 : vector<32x1xf32> to vector<32x32xf32>
    %123 = arith.subf %108, %122 : vector<32x32xf32>
    %cst_48 = arith.constant 9.99999974E-6 : f32
    %124 = vector.broadcast %cst_48 : f32 to vector<32x1xf32>
    %125 = arith.addf %121, %124 : vector<32x1xf32>
    %126 = math.rsqrt %125 : vector<32x1xf32>
    %127 = vector.broadcast %126 : vector<32x1xf32> to vector<32x32xf32>
    %128 = arith.mulf %123, %127 : vector<32x32xf32>
    %129 = vector.broadcast %9 : vector<1x32xf32> to vector<32x32xf32>
    %130 = arith.mulf %128, %129 : vector<32x32xf32>
    %131 = vector.broadcast %10 : vector<1x32xf32> to vector<32x32xf32>
    %132 = arith.addf %130, %131 : vector<32x32xf32>
    %133 = vector.shape_cast %132 : vector<32x32xf32> to vector<4x8x32xf32>
    %c0_49 = arith.constant 0 : index
    %c0_50 = arith.constant 0 : index
    %c0_51 = arith.constant 0 : index
    %134 = vector.load %arg14[%c0_49, %c0_50, %c0_51] : memref<4x8x32xf32, #tpu.memory_space<vmem>>, vector<4x8x32xf32>
    tpu.vector_store %arg14[%c0_49, %c0_50, %c0_51], %133 {strides = array<i32>} : memref<4x8x32xf32, #tpu.memory_space<vmem>>, vector<4x8x32xf32>,
    return
  }
  func.func @transform_0(%arg0: i32) -> (i32, i32, i32) {
    %c0_i32 = arith.constant 0 : i32
    %c0_i32_0 = arith.constant 0 : i32
    %c0_i32_1 = arith.constant 0 : i32
    return %arg0, %c0_i32, %c0_i32_0 : i32, i32, i32
  }
  func.func @transform_1(%arg0: i32) -> (i32, i32) {
    %c0_i32 = arith.constant 0 : i32
    %c0_i32_0 = arith.constant 0 : i32
    %c0_i32_1 = arith.constant 0 : i32
    return %c0_i32, %c0_i32_0 : i32, i32
  }
  func.func @transform_2(%arg0: i32) -> (i32, i32) {
    %c0_i32 = arith.constant 0 : i32
    %c0_i32_0 = arith.constant 0 : i32
    %c0_i32_1 = arith.constant 0 : i32
    return %c0_i32, %c0_i32_0 : i32, i32
  }
  func.func @transform_3(%arg0: i32) -> (i32, i32) {
    %c0_i32 = arith.constant 0 : i32
    %c0_i32_0 = arith.constant 0 : i32
    %c0_i32_1 = arith.constant 0 : i32
    return %c0_i32, %c0_i32_0 : i32, i32
  }
  func.func @transform_4(%arg0: i32) -> (i32, i32) {
    %c0_i32 = arith.constant 0 : i32
    %c0_i32_0 = arith.constant 0 : i32
    %c0_i32_1 = arith.constant 0 : i32
    return %c0_i32, %c0_i32_0 : i32, i32
  }
  func.func @transform_5(%arg0: i32) -> (i32, i32) {
    %c0_i32 = arith.constant 0 : i32
    %c0_i32_0 = arith.constant 0 : i32
    %c0_i32_1 = arith.constant 0 : i32
    return %c0_i32, %c0_i32_0 : i32, i32
  }
  func.func @transform_6(%arg0: i32) -> (i32, i32) {
    %c0_i32 = arith.constant 0 : i32
    %c0_i32_0 = arith.constant 0 : i32
    %c0_i32_1 = arith.constant 0 : i32
    return %c0_i32, %c0_i32_0 : i32, i32
  }
  func.func @transform_7(%arg0: i32) -> (i32, i32) {
    %c0_i32 = arith.constant 0 : i32
    %c0_i32_0 = arith.constant 0 : i32
    %c0_i32_1 = arith.constant 0 : i32
    return %c0_i32, %c0_i32_0 : i32, i32
  }
  func.func @transform_8(%arg0: i32) -> (i32, i32) {
    %c0_i32 = arith.constant 0 : i32
    %c0_i32_0 = arith.constant 0 : i32
    %c0_i32_1 = arith.constant 0 : i32
    return %c0_i32, %c0_i32_0 : i32, i32
  }
  func.func @transform_9(%arg0: i32) -> (i32, i32) {
    %c0_i32 = arith.constant 0 : i32
    %c0_i32_0 = arith.constant 0 : i32
    %c0_i32_1 = arith.constant 0 : i32
    return %c0_i32, %c0_i32_0 : i32, i32
  }
  func.func @transform_10(%arg0: i32) -> (i32, i32) {
    %c0_i32 = arith.constant 0 : i32
    %c0_i32_0 = arith.constant 0 : i32
    %c0_i32_1 = arith.constant 0 : i32
    return %c0_i32, %c0_i32_0 : i32, i32
  }
  func.func @transform_11(%arg0: i32) -> (i32, i32) {
    %c0_i32 = arith.constant 0 : i32
    %c0_i32_0 = arith.constant 0 : i32
    %c0_i32_1 = arith.constant 0 : i32
    return %c0_i32, %c0_i32_0 : i32, i32
  }
  func.func @transform_12(%arg0: i32) -> (i32, i32) {
    %c0_i32 = arith.constant 0 : i32
    %c0_i32_0 = arith.constant 0 : i32
    %c0_i32_1 = arith.constant 0 : i32
    return %c0_i32, %c0_i32_0 : i32, i32
  }
  func.func @transform_13(%arg0: i32) -> (i32, i32, i32) {
    %c0_i32 = arith.constant 0 : i32
    %c0_i32_0 = arith.constant 0 : i32
    %c0_i32_1 = arith.constant 0 : i32
    return %arg0, %c0_i32, %c0_i32_0 : i32, i32, i32
  }
}

module attributes {stable_mosaic.version = 11 : i64} {
  func.func @time_attention_kernel(%arg0: i32, %arg1: memref<4x8x32xbf16, #tpu.memory_space<vmem>>, %arg2: memref<32x96xbf16, #tpu.memory_space<vmem>>, %arg3: memref<1x96xf32, #tpu.memory_space<vmem>>, %arg4: memref<32x32xbf16, #tpu.memory_space<vmem>>, %arg5: memref<1x32xf32, #tpu.memory_space<vmem>>, %arg6: memref<1x32xf32, #tpu.memory_space<vmem>>, %arg7: memref<1x32xf32, #tpu.memory_space<vmem>>, %arg8: memref<32x128xbf16, #tpu.memory_space<vmem>>, %arg9: memref<1x128xf32, #tpu.memory_space<vmem>>, %arg10: memref<128x32xbf16, #tpu.memory_space<vmem>>, %arg11: memref<1x32xf32, #tpu.memory_space<vmem>>, %arg12: memref<1x32xf32, #tpu.memory_space<vmem>>, %arg13: memref<1x32xf32, #tpu.memory_space<vmem>>, %arg14: memref<4x8x32xf32, #tpu.memory_space<vmem>>) attributes {dimension_semantics = [#tpu.dimension_semantics<parallel>], iteration_bounds = array<i64: 2>, scalar_prefetch = 0 : i64, scratch_operands = 0 : i64, tpu.core_type = #tpu.core_type<tc>, window_params = [{transform_indices = @transform_0, window_bounds = array<i64: 4, 8, 32>}, {pipeline_mode = #tpu.pipeline_mode<synchronous>, transform_indices = @transform_1, window_bounds = array<i64: 32, 96>}, {pipeline_mode = #tpu.pipeline_mode<synchronous>, transform_indices = @transform_2, window_bounds = array<i64: 1, 96>}, {pipeline_mode = #tpu.pipeline_mode<synchronous>, transform_indices = @transform_3, window_bounds = array<i64: 32, 32>}, {pipeline_mode = #tpu.pipeline_mode<synchronous>, transform_indices = @transform_4, window_bounds = array<i64: 1, 32>}, {pipeline_mode = #tpu.pipeline_mode<synchronous>, transform_indices = @transform_5, window_bounds = array<i64: 1, 32>}, {pipeline_mode = #tpu.pipeline_mode<synchronous>, transform_indices = @transform_6, window_bounds = array<i64: 1, 32>}, {pipeline_mode = #tpu.pipeline_mode<synchronous>, transform_indices = @transform_7, window_bounds = array<i64: 32, 128>}, {pipeline_mode = #tpu.pipeline_mode<synchronous>, transform_indices = @transform_8, window_bounds = array<i64: 1, 128>}, {pipeline_mode = #tpu.pipeline_mode<synchronous>, transform_indices = @transform_9, window_bounds = array<i64: 128, 32>}, {pipeline_mode = #tpu.pipeline_mode<synchronous>, transform_indices = @transform_10, window_bounds = array<i64: 1, 32>}, {pipeline_mode = #tpu.pipeline_mode<synchronous>, transform_indices = @transform_11, window_bounds = array<i64: 1, 32>}, {pipeline_mode = #tpu.pipeline_mode<synchronous>, transform_indices = @transform_12, window_bounds = array<i64: 1, 32>}, {transform_indices = @transform_13, window_bounds = array<i64: 4, 8, 32>}]} {
    %c0 = arith.constant 0 : index
    %c0_0 = arith.constant 0 : index
    %c0_1 = arith.constant 0 : index
    %0 = vector.load %arg1[%c0, %c0_0, %c0_1] : memref<4x8x32xbf16, #tpu.memory_space<vmem>>, vector<4x8x32xbf16>
    %1 = arith.extf %0 : vector<4x8x32xbf16> to vector<4x8x32xf32>
    %2 = vector.shape_cast %1 : vector<4x8x32xf32> to vector<32x32xf32>
    %c0_2 = arith.constant 0 : index
    %c0_3 = arith.constant 0 : index
    %3 = vector.load %arg3[%c0_2, %c0_3] : memref<1x96xf32, #tpu.memory_space<vmem>>, vector<1x96xf32>
    %c0_4 = arith.constant 0 : index
    %c0_5 = arith.constant 0 : index
    %4 = vector.load %arg5[%c0_4, %c0_5] : memref<1x32xf32, #tpu.memory_space<vmem>>, vector<1x32xf32>
    %c0_6 = arith.constant 0 : index
    %c0_7 = arith.constant 0 : index
    %5 = vector.load %arg6[%c0_6, %c0_7] : memref<1x32xf32, #tpu.memory_space<vmem>>, vector<1x32xf32>
    %c0_8 = arith.constant 0 : index
    %c0_9 = arith.constant 0 : index
    %6 = vector.load %arg7[%c0_8, %c0_9] : memref<1x32xf32, #tpu.memory_space<vmem>>, vector<1x32xf32>
    %c0_10 = arith.constant 0 : index
    %c0_11 = arith.constant 0 : index
    %7 = vector.load %arg9[%c0_10, %c0_11] : memref<1x128xf32, #tpu.memory_space<vmem>>, vector<1x128xf32>
    %c0_12 = arith.constant 0 : index
    %c0_13 = arith.constant 0 : index
    %8 = vector.load %arg11[%c0_12, %c0_13] : memref<1x32xf32, #tpu.memory_space<vmem>>, vector<1x32xf32>
    %c0_14 = arith.constant 0 : index
    %c0_15 = arith.constant 0 : index
    %9 = vector.load %arg12[%c0_14, %c0_15] : memref<1x32xf32, #tpu.memory_space<vmem>>, vector<1x32xf32>
    %c0_16 = arith.constant 0 : index
    %c0_17 = arith.constant 0 : index
    %10 = vector.load %arg13[%c0_16, %c0_17] : memref<1x32xf32, #tpu.memory_space<vmem>>, vector<1x32xf32>
    %11 = arith.truncf %2 : vector<32x32xf32> to vector<32x32xbf16>
    %c0_18 = arith.constant 0 : index
    %c0_19 = arith.constant 0 : index
    %12 = vector.load %arg2[%c0_18, %c0_19] : memref<32x96xbf16, #tpu.memory_space<vmem>>, vector<32x96xbf16>
    %cst = arith.constant dense<0.000000e+00> : vector<32x96xf32>
    %13 = tpu.matmul %11, %12, %cst {dimension_numbers = #tpu.dot_dimension_numbers<[1], [0], [0], [1], [0, 0, 1, 1], [], []>} : vector<32x32xbf16>, vector<32x96xbf16>, vector<32x96xf32> -> vector<32x96xf32>
    %14 = vector.broadcast %3 : vector<1x96xf32> to vector<32x96xf32>
    %15 = arith.addf %13, %14 : vector<32x96xf32>
    %16 = vector.extract_strided_slice %15 {offsets = [0, 0], sizes = [32, 32], strides = [1, 1]} : vector<32x96xf32> to vector<32x32xf32>
    %17 = vector.shape_cast %16 : vector<32x32xf32> to vector<4x8x32xf32>
    %18 = vector.extract_strided_slice %15 {offsets = [0, 32], sizes = [32, 32], strides = [1, 1]} : vector<32x96xf32> to vector<32x32xf32>
    %19 = vector.shape_cast %18 : vector<32x32xf32> to vector<4x8x32xf32>
    %20 = vector.extract_strided_slice %15 {offsets = [0, 64], sizes = [32, 32], strides = [1, 1]} : vector<32x96xf32> to vector<32x32xf32>
    %21 = vector.shape_cast %20 : vector<32x32xf32> to vector<4x8x32xf32>
    %22 = vector.extract_strided_slice %17 {offsets = [0, 0, 0], sizes = [4, 8, 8], strides = [1, 1, 1]} : vector<4x8x32xf32> to vector<4x8x8xf32>
    %23 = vector.extract_strided_slice %17 {offsets = [0, 0, 8], sizes = [4, 8, 8], strides = [1, 1, 1]} : vector<4x8x32xf32> to vector<4x8x8xf32>
    %24 = vector.extract_strided_slice %17 {offsets = [0, 0, 16], sizes = [4, 8, 8], strides = [1, 1, 1]} : vector<4x8x32xf32> to vector<4x8x8xf32>
    %25 = vector.extract_strided_slice %17 {offsets = [0, 0, 24], sizes = [4, 8, 8], strides = [1, 1, 1]} : vector<4x8x32xf32> to vector<4x8x8xf32>
    %26 = tpu.concatenate %22, %23, %24, %25 in 0 : vector<4x8x8xf32>, vector<4x8x8xf32>, vector<4x8x8xf32>, vector<4x8x8xf32> -> vector<16x8x8xf32>
    %27 = vector.extract_strided_slice %19 {offsets = [0, 0, 0], sizes = [4, 8, 8], strides = [1, 1, 1]} : vector<4x8x32xf32> to vector<4x8x8xf32>
    %28 = vector.extract_strided_slice %19 {offsets = [0, 0, 8], sizes = [4, 8, 8], strides = [1, 1, 1]} : vector<4x8x32xf32> to vector<4x8x8xf32>
    %29 = vector.extract_strided_slice %19 {offsets = [0, 0, 16], sizes = [4, 8, 8], strides = [1, 1, 1]} : vector<4x8x32xf32> to vector<4x8x8xf32>
    %30 = vector.extract_strided_slice %19 {offsets = [0, 0, 24], sizes = [4, 8, 8], strides = [1, 1, 1]} : vector<4x8x32xf32> to vector<4x8x8xf32>
    %31 = tpu.concatenate %27, %28, %29, %30 in 0 : vector<4x8x8xf32>, vector<4x8x8xf32>, vector<4x8x8xf32>, vector<4x8x8xf32> -> vector<16x8x8xf32>
    %32 = vector.extract_strided_slice %21 {offsets = [0, 0, 0], sizes = [4, 8, 8], strides = [1, 1, 1]} : vector<4x8x32xf32> to vector<4x8x8xf32>
    %33 = vector.extract_strided_slice %21 {offsets = [0, 0, 8], sizes = [4, 8, 8], strides = [1, 1, 1]} : vector<4x8x32xf32> to vector<4x8x8xf32>
    %34 = vector.extract_strided_slice %21 {offsets = [0, 0, 16], sizes = [4, 8, 8], strides = [1, 1, 1]} : vector<4x8x32xf32> to vector<4x8x8xf32>
    %35 = vector.extract_strided_slice %21 {offsets = [0, 0, 24], sizes = [4, 8, 8], strides = [1, 1, 1]} : vector<4x8x32xf32> to vector<4x8x8xf32>
    %36 = tpu.concatenate %32, %33, %34, %35 in 0 : vector<4x8x8xf32>, vector<4x8x8xf32>, vector<4x8x8xf32>, vector<4x8x8xf32> -> vector<16x8x8xf32>
    "tpu.trace_start"() <{level = 10 : i32, message = "bld,bsd->bls"}> : () -> ()
    %cst_20 = arith.constant dense<0.000000e+00> : vector<16x8x8xf32>
    %37 = tpu.matmul %26, %31, %cst_20 {dimension_numbers = #tpu.dot_dimension_numbers<[2], [2], [1], [1], [0, 0, 0, 1, 1, 1], [0], [0]>} : vector<16x8x8xf32>, vector<16x8x8xf32>, vector<16x8x8xf32> -> vector<16x8x8xf32>
    "tpu.trace_stop"() : () -> ()
    %cst_21 = arith.constant dense<0xFF800000> : vector<16x8xf32>
    %38 = vector.multi_reduction <maximumf>, %37, %cst_21 [2] : vector<16x8x8xf32> to vector<16x8xf32>
    %39 = vector.shape_cast %38 : vector<16x8xf32> to vector<16x8x1xf32>
    %40 = vector.broadcast %39 : vector<16x8x1xf32> to vector<16x8x8xf32>
    %41 = arith.subf %37, %40 : vector<16x8x8xf32>
    %42 = math.exp %41 : vector<16x8x8xf32>
    %cst_22 = arith.constant dense<0.000000e+00> : vector<16x8xf32>
    %43 = vector.multi_reduction <add>, %42, %cst_22 [2] : vector<16x8x8xf32> to vector<16x8xf32>
    %44 = vector.shape_cast %43 : vector<16x8xf32> to vector<16x8x1xf32>
    "tpu.trace_start"() <{level = 10 : i32, message = "bls,bsd->bld"}> : () -> ()
    %cst_23 = arith.constant dense<0.000000e+00> : vector<16x8x8xf32>
    %45 = tpu.matmul %42, %36, %cst_23 {dimension_numbers = #tpu.dot_dimension_numbers<[2], [1], [1], [2], [0, 0, 0, 1, 1, 2], [0], [0]>} : vector<16x8x8xf32>, vector<16x8x8xf32>, vector<16x8x8xf32> -> vector<16x8x8xf32>
    "tpu.trace_stop"() : () -> ()
    %46 = tpu.reciprocal %44 {approx = true} : vector<16x8x1xf32> -> vector<16x8x1xf32>
    %47 = vector.broadcast %46 : vector<16x8x1xf32> to vector<16x8x8xf32>
    %48 = arith.mulf %45, %47 : vector<16x8x8xf32>
    %49 = vector.extract_strided_slice %48 {offsets = [0, 0, 0], sizes = [4, 8, 8], strides = [1, 1, 1]} : vector<16x8x8xf32> to vector<4x8x8xf32>
    %50 = vector.extract_strided_slice %48 {offsets = [4, 0, 0], sizes = [4, 8, 8], strides = [1, 1, 1]} : vector<16x8x8xf32> to vector<4x8x8xf32>
    %51 = vector.extract_strided_slice %48 {offsets = [8, 0, 0], sizes = [4, 8, 8], strides = [1, 1, 1]} : vector<16x8x8xf32> to vector<4x8x8xf32>
    %52 = vector.extract_strided_slice %48 {offsets = [12, 0, 0], sizes = [4, 8, 8], strides = [1, 1, 1]} : vector<16x8x8xf32> to vector<4x8x8xf32>
    %53 = tpu.concatenate %49, %50, %51, %52 in 2 : vector<4x8x8xf32>, vector<4x8x8xf32>, vector<4x8x8xf32>, vector<4x8x8xf32> -> vector<4x8x32xf32>
    %54 = vector.shape_cast %53 : vector<4x8x32xf32> to vector<32x32xf32>
    %55 = arith.truncf %54 : vector<32x32xf32> to vector<32x32xbf16>
    %c0_24 = arith.constant 0 : index
    %c0_25 = arith.constant 0 : index
    %56 = vector.load %arg4[%c0_24, %c0_25] : memref<32x32xbf16, #tpu.memory_space<vmem>>, vector<32x32xbf16>
    %cst_26 = arith.constant dense<0.000000e+00> : vector<32x32xf32>
    %57 = tpu.matmul %55, %56, %cst_26 {dimension_numbers = #tpu.dot_dimension_numbers<[1], [0], [0], [1], [0, 0, 1, 1], [], []>} : vector<32x32xbf16>, vector<32x32xbf16>, vector<32x32xf32> -> vector<32x32xf32>
    %58 = vector.broadcast %4 : vector<1x32xf32> to vector<32x32xf32>
    %59 = arith.addf %57, %58 : vector<32x32xf32>
    %60 = arith.addf %2, %59 : vector<32x32xf32>
    %cst_27 = arith.constant dense<0.000000e+00> : vector<32xf32>
    %61 = vector.multi_reduction <add>, %60, %cst_27 [1] : vector<32x32xf32> to vector<32xf32>
    %62 = vector.shape_cast %61 : vector<32xf32> to vector<32x1xf32>
    %cst_28 = arith.constant 3.200000e+01 : f32
    %63 = vector.broadcast %cst_28 : f32 to vector<32x1xf32>
    %64 = arith.divf %62, %63 : vector<32x1xf32>
    %65 = arith.mulf %60, %60 : vector<32x32xf32>
    %cst_29 = arith.constant dense<0.000000e+00> : vector<32xf32>
    %66 = vector.multi_reduction <add>, %65, %cst_29 [1] : vector<32x32xf32> to vector<32xf32>
    %67 = vector.shape_cast %66 : vector<32xf32> to vector<32x1xf32>
    %cst_30 = arith.constant 3.200000e+01 : f32
    %68 = vector.broadcast %cst_30 : f32 to vector<32x1xf32>
    %69 = arith.divf %67, %68 : vector<32x1xf32>
    %70 = arith.mulf %64, %64 : vector<32x1xf32>
    %71 = arith.subf %69, %70 : vector<32x1xf32>
    %cst_31 = arith.constant 0.000000e+00 : f32
    %72 = vector.broadcast %cst_31 : f32 to vector<32x1xf32>
    %73 = arith.maximumf %71, %72 : vector<32x1xf32>
    %74 = vector.broadcast %64 : vector<32x1xf32> to vector<32x32xf32>
    %75 = arith.subf %60, %74 : vector<32x32xf32>
    %cst_32 = arith.constant 9.99999974E-6 : f32
    %76 = vector.broadcast %cst_32 : f32 to vector<32x1xf32>
    %77 = arith.addf %73, %76 : vector<32x1xf32>
    %78 = math.rsqrt %77 : vector<32x1xf32>
    %79 = vector.broadcast %78 : vector<32x1xf32> to vector<32x32xf32>
    %80 = arith.mulf %75, %79 : vector<32x32xf32>
    %81 = vector.broadcast %5 : vector<1x32xf32> to vector<32x32xf32>
    %82 = arith.mulf %80, %81 : vector<32x32xf32>
    %83 = vector.broadcast %6 : vector<1x32xf32> to vector<32x32xf32>
    %84 = arith.addf %82, %83 : vector<32x32xf32>
    %85 = arith.truncf %84 : vector<32x32xf32> to vector<32x32xbf16>
    %c0_33 = arith.constant 0 : index
    %c0_34 = arith.constant 0 : index
    %86 = vector.load %arg8[%c0_33, %c0_34] : memref<32x128xbf16, #tpu.memory_space<vmem>>, vector<32x128xbf16>
    %cst_35 = arith.constant dense<0.000000e+00> : vector<32x128xf32>
    %87 = tpu.matmul %85, %86, %cst_35 {dimension_numbers = #tpu.dot_dimension_numbers<[1], [0], [0], [1], [0, 0, 1, 1], [], []>} : vector<32x32xbf16>, vector<32x128xbf16>, vector<32x128xf32> -> vector<32x128xf32>
    %88 = vector.broadcast %7 : vector<1x128xf32> to vector<32x128xf32>
    %89 = arith.addf %87, %88 : vector<32x128xf32>
    %90 = arith.mulf %89, %89 : vector<32x128xf32>
    %91 = arith.mulf %89, %90 : vector<32x128xf32>
    %cst_36 = arith.constant 4.471500e-02 : f32
    %92 = vector.broadcast %cst_36 : f32 to vector<32x128xf32>
    %93 = arith.mulf %92, %91 : vector<32x128xf32>
    %94 = arith.addf %89, %93 : vector<32x128xf32>
    %cst_37 = arith.constant 0.797884583 : f32
    %95 = vector.broadcast %cst_37 : f32 to vector<32x128xf32>
    %96 = arith.mulf %95, %94 : vector<32x128xf32>
    %97 = math.tanh %96 : vector<32x128xf32>
    %cst_38 = arith.constant 1.000000e+00 : f32
    %98 = vector.broadcast %cst_38 : f32 to vector<32x128xf32>
    %99 = arith.addf %98, %97 : vector<32x128xf32>
    %cst_39 = arith.constant 5.000000e-01 : f32
    %100 = vector.broadcast %cst_39 : f32 to vector<32x128xf32>
    %101 = arith.mulf %100, %99 : vector<32x128xf32>
    %102 = arith.mulf %89, %101 : vector<32x128xf32>
    %103 = arith.truncf %102 : vector<32x128xf32> to vector<32x128xbf16>
    %c0_40 = arith.constant 0 : index
    %c0_41 = arith.constant 0 : index
    %104 = vector.load %arg10[%c0_40, %c0_41] : memref<128x32xbf16, #tpu.memory_space<vmem>>, vector<128x32xbf16>
    %cst_42 = arith.constant dense<0.000000e+00> : vector<32x32xf32>
    %105 = tpu.matmul %103, %104, %cst_42 {dimension_numbers = #tpu.dot_dimension_numbers<[1], [0], [0], [1], [0, 0, 1, 1], [], []>} : vector<32x128xbf16>, vector<128x32xbf16>, vector<32x32xf32> -> vector<32x32xf32>
    %106 = vector.broadcast %8 : vector<1x32xf32> to vector<32x32xf32>
    %107 = arith.addf %105, %106 : vector<32x32xf32>
    %108 = arith.addf %84, %107 : vector<32x32xf32>
    %cst_43 = arith.constant dense<0.000000e+00> : vector<32xf32>
    %109 = vector.multi_reduction <add>, %108, %cst_43 [1] : vector<32x32xf32> to vector<32xf32>
    %110 = vector.shape_cast %109 : vector<32xf32> to vector<32x1xf32>
    %cst_44 = arith.constant 3.200000e+01 : f32
    %111 = vector.broadcast %cst_44 : f32 to vector<32x1xf32>
    %112 = arith.divf %110, %111 : vector<32x1xf32>
    %113 = arith.mulf %108, %108 : vector<32x32xf32>
    %cst_45 = arith.constant dense<0.000000e+00> : vector<32xf32>
    %114 = vector.multi_reduction <add>, %113, %cst_45 [1] : vector<32x32xf32> to vector<32xf32>
    %115 = vector.shape_cast %114 : vector<32xf32> to vector<32x1xf32>
    %cst_46 = arith.constant 3.200000e+01 : f32
    %116 = vector.broadcast %cst_46 : f32 to vector<32x1xf32>
    %117 = arith.divf %115, %116 : vector<32x1xf32>
    %118 = arith.mulf %112, %112 : vector<32x1xf32>
    %119 = arith.subf %117, %118 : vector<32x1xf32>
    %cst_47 = arith.constant 0.000000e+00 : f32
    %120 = vector.broadcast %cst_47 : f32 to vector<32x1xf32>
    %121 = arith.maximumf %119, %120 : vector<32x1xf32>
    %122 = vector.broadcast %112 : vector<32x1xf32> to vector<32x32xf32>
    %123 = arith.subf %108, %122 : vector<32x32xf32>
    %cst_48 = arith.constant 9.99999974E-6 : f32
    %124 = vector.broadcast %cst_48 : f32 to vector<32x1xf32>
    %125 = arith.addf %121, %124 : vector<32x1xf32>
    %126 = math.rsqrt %125 : vector<32x1xf32>
    %127 = vector.broadcast %126 : vector<32x1xf32> to vector<32x32xf32>
    %128 = arith.mulf %123, %127 : vector<32x32xf32>
    %129 = vector.broadcast %9 : vector<1x32xf32> to vector<32x32xf32>
    %130 = arith.mulf %128, %129 : vector<32x32xf32>
    %131 = vector.broadcast %10 : vector<1x32xf32> to vector<32x32xf32>
    %132 = arith.addf %130, %131 : vector<32x32xf32>
    %133 = vector.shape_cast %132 : vector<32x32xf32> to vector<4x8x32xf32>
    %c0_49 = arith.constant 0 : index
    %c0_50 = arith.constant 0 : index
    %c0_51 = arith.constant 0 : index
    %134 = vector.load %arg14[%c0_49, %c0_50, %c0_51] : memref<4x8x32xf32, #tpu.memory_space<vmem>>, vector<4x8x32xf32>
    tpu.vector_store %arg14[%c0_49, %c0_50, %c0_51], %133 {strides = array<i32>} : memref<4x8x32xf32, #tpu.memory_space<vmem>>, vector<4x8x32xf32>,
    return
  }
  func.func @transform_0(%arg0: i32) -> (i32, i32, i32) {
    %c0_i32 = arith.constant 0 : i32
    %c0_i32_0 = arith.constant 0 : i32
    %c0_i32_1 = arith.constant 0 : i32
    return %arg0, %c0_i32, %c0_i32_0 : i32, i32, i32
  }
  func.func @transform_1(%arg0: i32) -> (i32, i32) {
    %c0_i32 = arith.constant 0 : i32
    %c0_i32_0 = arith.constant 0 : i32
    %c0_i32_1 = arith.constant 0 : i32
    return %c0_i32, %c0_i32_0 : i32, i32
  }
  func.func @transform_2(%arg0: i32) -> (i32, i32) {
    %c0_i32 = arith.constant 0 : i32
    %c0_i32_0 = arith.constant 0 : i32
    %c0_i32_1 = arith.constant 0 : i32
    return %c0_i32, %c0_i32_0 : i32, i32
  }
  func.func @transform_3(%arg0: i32) -> (i32, i32) {
    %c0_i32 = arith.constant 0 : i32
    %c0_i32_0 = arith.constant 0 : i32
    %c0_i32_1 = arith.constant 0 : i32
    return %c0_i32, %c0_i32_0 : i32, i32
  }
  func.func @transform_4(%arg0: i32) -> (i32, i32) {
    %c0_i32 = arith.constant 0 : i32
    %c0_i32_0 = arith.constant 0 : i32
    %c0_i32_1 = arith.constant 0 : i32
    return %c0_i32, %c0_i32_0 : i32, i32
  }
  func.func @transform_5(%arg0: i32) -> (i32, i32) {
    %c0_i32 = arith.constant 0 : i32
    %c0_i32_0 = arith.constant 0 : i32
    %c0_i32_1 = arith.constant 0 : i32
    return %c0_i32, %c0_i32_0 : i32, i32
  }
  func.func @transform_6(%arg0: i32) -> (i32, i32) {
    %c0_i32 = arith.constant 0 : i32
    %c0_i32_0 = arith.constant 0 : i32
    %c0_i32_1 = arith.constant 0 : i32
    return %c0_i32, %c0_i32_0 : i32, i32
  }
  func.func @transform_7(%arg0: i32) -> (i32, i32) {
    %c0_i32 = arith.constant 0 : i32
    %c0_i32_0 = arith.constant 0 : i32
    %c0_i32_1 = arith.constant 0 : i32
    return %c0_i32, %c0_i32_0 : i32, i32
  }
  func.func @transform_8(%arg0: i32) -> (i32, i32) {
    %c0_i32 = arith.constant 0 : i32
    %c0_i32_0 = arith.constant 0 : i32
    %c0_i32_1 = arith.constant 0 : i32
    return %c0_i32, %c0_i32_0 : i32, i32
  }
  func.func @transform_9(%arg0: i32) -> (i32, i32) {
    %c0_i32 = arith.constant 0 : i32
    %c0_i32_0 = arith.constant 0 : i32
    %c0_i32_1 = arith.constant 0 : i32
    return %c0_i32, %c0_i32_0 : i32, i32
  }
  func.func @transform_10(%arg0: i32) -> (i32, i32) {
    %c0_i32 = arith.constant 0 : i32
    %c0_i32_0 = arith.constant 0 : i32
    %c0_i32_1 = arith.constant 0 : i32
    return %c0_i32, %c0_i32_0 : i32, i32
  }
  func.func @transform_11(%arg0: i32) -> (i32, i32) {
    %c0_i32 = arith.constant 0 : i32
    %c0_i32_0 = arith.constant 0 : i32
    %c0_i32_1 = arith.constant 0 : i32
    return %c0_i32, %c0_i32_0 : i32, i32
  }
  func.func @transform_12(%arg0: i32) -> (i32, i32) {
    %c0_i32 = arith.constant 0 : i32
    %c0_i32_0 = arith.constant 0 : i32
    %c0_i32_1 = arith.constant 0 : i32
    return %c0_i32, %c0_i32_0 : i32, i32
  }
  func.func @transform_13(%arg0: i32) -> (i32, i32, i32) {
    %c0_i32 = arith.constant 0 : i32
    %c0_i32_0 = arith.constant 0 : i32
    %c0_i32_1 = arith.constant 0 : i32
    return %arg0, %c0_i32, %c0_i32_0 : i32, i32, i32
  }
}

</mosaic_0001>

<llo_original>
// kernel: tpu_custom_call.1
$region0: #{tpu_custom_call.1}
  #allocation0 [shape = 'u32[]', space=smem, size = 0x4, offset = 0x4, fixed_abs, tag = 'smem constant byte address 0x4 - core index']
  #allocation1 [shape = 'u32[144,128]{1,0:T(1,128)}', space=vmem, size = 0x12000, scoped, tag = 'internal scratch']
  %s0 = inlined_call_operand.vmem [shape: bf16[8,8,32], index: 0, kind: input, shape index: {}]
  %s1 = inlined_call_operand.vmem [shape: bf16[32,96], index: 1, kind: input, shape index: {}]
  %s2 = inlined_call_operand.vmem [shape: f32[1,96], index: 2, kind: input, shape index: {}]
  %s3 = inlined_call_operand.vmem [shape: bf16[32,32], index: 3, kind: input, shape index: {}]
  %s4 = inlined_call_operand.vmem [shape: f32[1,32], index: 4, kind: input, shape index: {}]
  %s5 = inlined_call_operand.vmem [shape: f32[1,32], index: 5, kind: input, shape index: {}]
  %s6 = inlined_call_operand.vmem [shape: f32[1,32], index: 6, kind: input, shape index: {}]
  %s7 = inlined_call_operand.vmem [shape: bf16[32,128], index: 7, kind: input, shape index: {}]
  %s8 = inlined_call_operand.vmem [shape: f32[1,128], index: 8, kind: input, shape index: {}]
  %s9 = inlined_call_operand.vmem [shape: bf16[128,32], index: 9, kind: input, shape index: {}]
  %s10 = inlined_call_operand.vmem [shape: f32[1,32], index: 10, kind: input, shape index: {}]
  %s11 = inlined_call_operand.vmem [shape: f32[1,32], index: 11, kind: input, shape index: {}]
  %s12 = inlined_call_operand.vmem [shape: f32[1,32], index: 12, kind: input, shape index: {}]
  %s13 = inlined_call_operand.hbm [shape: f32[8,8,32], index: 13, kind: output, shape index: {}]
  %s14 = sld [smem:[#allocation0]]
  $region85: #{tpu_custom_call.1} parent=0
    _
  %s16 = ssub.s32 1, %s14
  %s17 = scalar_select 0, %s16, %s14
  $region1: #{tpu_custom_call.1} parent=0
    #allocation2 [shape = 'u8[32768]{0}', space=vmem, size = 0x8000, scoped, tag = 'output window, operand 0']
    #allocation3 [shape = 's32[2]{0}', space=sflag, size = 0x8, scoped, tag = 'scoped memory for tpu_custom_call.1']
    %18 = vsyncpa [#allocation3], 0
    %s19 = scalar_lea.sflag [#allocation3], 1
    %20 = vsyncpa %s19, 0
    loop: start=0, step=1, limit=4
    $region2: #{tpu_custom_call.1} parent=1 // loop_pre_header
      _
    $region3: #{tpu_custom_call.1} parent=1 // loop_header
      %s22 = sphi 0, %s26
      %p23 = scmp.ge.s32.totalorder %s22, 4
      %s32 = sphi 0, %s34
      %s35 = sphi 0, %s32
      %s36 = sphi 0, %s35
      %s52 = sphi 0, %s36
      %s56 = sphi 0, %s56
      %s58 = sphi 0, %s56
      %s59 = sphi 0, %s58
      %s73 = sphi 0, %s59
      %s77 = sphi 0, %s77
      %s79 = sphi 0, %s77
      %s80 = sphi 0, %s79
      %s94 = sphi 0, %s80
      %s98 = sphi 0, %s98
      %s100 = sphi 0, %s98
      %s101 = sphi 0, %s100
      %s115 = sphi 0, %s101
      %s119 = sphi 0, %s119
      %s121 = sphi 0, %s119
      %s122 = sphi 0, %s121
      %s136 = sphi 0, %s122
      %s140 = sphi 0, %s140
      %s142 = sphi 0, %s140
      %s143 = sphi 0, %s142
      %s157 = sphi 0, %s143
      %s161 = sphi 0, %s161
      %s163 = sphi 0, %s161
      %s164 = sphi 0, %s163
      %s178 = sphi 0, %s164
      %s182 = sphi 0, %s182
      %s184 = sphi 0, %s182
      %s185 = sphi 0, %s184
      %s199 = sphi 0, %s185
      %s203 = sphi 0, %s203
      %s205 = sphi 0, %s203
      %s206 = sphi 0, %s205
      %s220 = sphi 0, %s206
      %s224 = sphi 0, %s224
      %s226 = sphi 0, %s224
      %s227 = sphi 0, %s226
      %s241 = sphi 0, %s227
      %s245 = sphi 0, %s245
      %s247 = sphi 0, %s245
      %s248 = sphi 0, %s247
      %s262 = sphi 0, %s248
      %s266 = sphi 0, %s266
      %s268 = sphi 0, %s266
      %s269 = sphi 0, %s268
      %s283 = sphi 0, %s269
      %s287 = sphi 0, %s287
      %s289 = sphi 0, %s287
      %s290 = sphi 0, %s289
      %s304 = sphi 0, %s290
      %s310 = sphi 0, %s312
      %s313 = sphi 0, %s310
      %s314 = sphi 0, %s313
      %s330 = sphi 0, %s314
    $region4: #{tpu_custom_call.1} parent=1 // loop_header_branch
      %25 = sbr.rel (%p23) target = $region8
    $region5: #{tpu_custom_call.1} parent=1 // loop_body
      %s27 = ssub.s32 %s22, 1
      %s28 = ssub.s32 %s22, 2
      %s29 = sadd.s32 %s22, 1
      %s30 = ssub.s32 %s22, %s29
      %p31 = scmp.eq.s32.totalorder %s30, 0
      %s33 = sadd.s32 %s32, 1
      %s34 = scalar_select %p31, %s32, %s33
      %p37 = pneg %p31
      %p38 = scmp.eq.s32.totalorder %s22, 1
      %p39 = por %p37, %p38
      %p40 = scmp.ne.s32.totalorder %s32, %s35
      %p41 = scmp.eq.s32.totalorder %s22, 0
      %p42 = por %p40, %p41
      %p43 = scmp.ne.s32.totalorder %s32, %s35
      %p44 = scmp.eq.s32.totalorder %s27, 1
      %p45 = por %p43, %p44
      %p46 = scmp.ne.s32.totalorder %s35, %s36
      %p47 = scmp.eq.s32.totalorder %s27, 0
      %p48 = por %p46, %p47
      %p49 = scmp.ne.s32.totalorder %s35, %s36
      %p50 = scmp.eq.s32.totalorder %s28, 1
      %p51 = por %p49, %p50
      %p53 = scmp.ne.s32.totalorder %s36, %s52
      %p54 = scmp.eq.s32.totalorder %s28, 0
      %p55 = por %p53, %p54
      %s57 = sadd.s32 %s56, 1
      %p60 = scmp.eq.s32.totalorder %s22, 1
      %p61 = scmp.ne.s32.totalorder %s56, %s58
      %p62 = scmp.eq.s32.totalorder %s22, 0
      %p63 = por %p61, %p62
      %p64 = scmp.ne.s32.totalorder %s56, %s58
      %p65 = scmp.eq.s32.totalorder %s27, 1
      %p66 = por %p64, %p65
      %p67 = scmp.ne.s32.totalorder %s58, %s59
      %p68 = scmp.eq.s32.totalorder %s27, 0
      %p69 = por %p67, %p68
      %p70 = scmp.ne.s32.totalorder %s58, %s59
      %p71 = scmp.eq.s32.totalorder %s28, 1
      %p72 = por %p70, %p71
      %p74 = scmp.ne.s32.totalorder %s59, %s73
      %p75 = scmp.eq.s32.totalorder %s28, 0
      %p76 = por %p74, %p75
      %s78 = sadd.s32 %s77, 1
      %p81 = scmp.eq.s32.totalorder %s22, 1
      %p82 = scmp.ne.s32.totalorder %s77, %s79
      %p83 = scmp.eq.s32.totalorder %s22, 0
      %p84 = por %p82, %p83
      %p85 = scmp.ne.s32.totalorder %s77, %s79
      %p86 = scmp.eq.s32.totalorder %s27, 1
      %p87 = por %p85, %p86
      %p88 = scmp.ne.s32.totalorder %s79, %s80
      %p89 = scmp.eq.s32.totalorder %s27, 0
      %p90 = por %p88, %p89
      %p91 = scmp.ne.s32.totalorder %s79, %s80
      %p92 = scmp.eq.s32.totalorder %s28, 1
      %p93 = por %p91, %p92
      %p95 = scmp.ne.s32.totalorder %s80, %s94
      %p96 = scmp.eq.s32.totalorder %s28, 0
      %p97 = por %p95, %p96
      %s99 = sadd.s32 %s98, 1
      %p102 = scmp.eq.s32.totalorder %s22, 1
      %p103 = scmp.ne.s32.totalorder %s98, %s100
      %p104 = scmp.eq.s32.totalorder %s22, 0
      %p105 = por %p103, %p104
      %p106 = scmp.ne.s32.totalorder %s98, %s100
      %p107 = scmp.eq.s32.totalorder %s27, 1
      %p108 = por %p106, %p107
      %p109 = scmp.ne.s32.totalorder %s100, %s101
      %p110 = scmp.eq.s32.totalorder %s27, 0
      %p111 = por %p109, %p110
      %p112 = scmp.ne.s32.totalorder %s100, %s101
      %p113 = scmp.eq.s32.totalorder %s28, 1
      %p114 = por %p112, %p113
      %p116 = scmp.ne.s32.totalorder %s101, %s115
      %p117 = scmp.eq.s32.totalorder %s28, 0
      %p118 = por %p116, %p117
      %s120 = sadd.s32 %s119, 1
      %p123 = scmp.eq.s32.totalorder %s22, 1
      %p124 = scmp.ne.s32.totalorder %s119, %s121
      %p125 = scmp.eq.s32.totalorder %s22, 0
      %p126 = por %p124, %p125
      %p127 = scmp.ne.s32.totalorder %s119, %s121
      %p128 = scmp.eq.s32.totalorder %s27, 1
      %p129 = por %p127, %p128
      %p130 = scmp.ne.s32.totalorder %s121, %s122
      %p131 = scmp.eq.s32.totalorder %s27, 0
      %p132 = por %p130, %p131
      %p133 = scmp.ne.s32.totalorder %s121, %s122
      %p134 = scmp.eq.s32.totalorder %s28, 1
      %p135 = por %p133, %p134
      %p137 = scmp.ne.s32.totalorder %s122, %s136
      %p138 = scmp.eq.s32.totalorder %s28, 0
      %p139 = por %p137, %p138
      %s141 = sadd.s32 %s140, 1
      %p144 = scmp.eq.s32.totalorder %s22, 1
      %p145 = scmp.ne.s32.totalorder %s140, %s142
      %p146 = scmp.eq.s32.totalorder %s22, 0
      %p147 = por %p145, %p146
      %p148 = scmp.ne.s32.totalorder %s140, %s142
      %p149 = scmp.eq.s32.totalorder %s27, 1
      %p150 = por %p148, %p149
      %p151 = scmp.ne.s32.totalorder %s142, %s143
      %p152 = scmp.eq.s32.totalorder %s27, 0
      %p153 = por %p151, %p152
      %p154 = scmp.ne.s32.totalorder %s142, %s143
      %p155 = scmp.eq.s32.totalorder %s28, 1
      %p156 = por %p154, %p155
      %p158 = scmp.ne.s32.totalorder %s143, %s157
      %p159 = scmp.eq.s32.totalorder %s28, 0
      %p160 = por %p158, %p159
      %s162 = sadd.s32 %s161, 1
      %p165 = scmp.eq.s32.totalorder %s22, 1
      %p166 = scmp.ne.s32.totalorder %s161, %s163
      %p167 = scmp.eq.s32.totalorder %s22, 0
      %p168 = por %p166, %p167
      %p169 = scmp.ne.s32.totalorder %s161, %s163
      %p170 = scmp.eq.s32.totalorder %s27, 1
      %p171 = por %p169, %p170
      %p172 = scmp.ne.s32.totalorder %s163, %s164
      %p173 = scmp.eq.s32.totalorder %s27, 0
      %p174 = por %p172, %p173
      %p175 = scmp.ne.s32.totalorder %s163, %s164
      %p176 = scmp.eq.s32.totalorder %s28, 1
      %p177 = por %p175, %p176
      %p179 = scmp.ne.s32.totalorder %s164, %s178
      %p180 = scmp.eq.s32.totalorder %s28, 0
      %p181 = por %p179, %p180
      %s183 = sadd.s32 %s182, 1
      %p186 = scmp.eq.s32.totalorder %s22, 1
      %p187 = scmp.ne.s32.totalorder %s182, %s184
      %p188 = scmp.eq.s32.totalorder %s22, 0
      %p189 = por %p187, %p188
      %p190 = scmp.ne.s32.totalorder %s182, %s184
      %p191 = scmp.eq.s32.totalorder %s27, 1
      %p192 = por %p190, %p191
      %p193 = scmp.ne.s32.totalorder %s184, %s185
      %p194 = scmp.eq.s32.totalorder %s27, 0
      %p195 = por %p193, %p194
      %p196 = scmp.ne.s32.totalorder %s184, %s185
      %p197 = scmp.eq.s32.totalorder %s28, 1
      %p198 = por %p196, %p197
      %p200 = scmp.ne.s32.totalorder %s185, %s199
      %p201 = scmp.eq.s32.totalorder %s28, 0
      %p202 = por %p200, %p201
      %s204 = sadd.s32 %s203, 1
      %p207 = scmp.eq.s32.totalorder %s22, 1
      %p208 = scmp.ne.s32.totalorder %s203, %s205
      %p209 = scmp.eq.s32.totalorder %s22, 0
      %p210 = por %p208, %p209
      %p211 = scmp.ne.s32.totalorder %s203, %s205
      %p212 = scmp.eq.s32.totalorder %s27, 1
      %p213 = por %p211, %p212
      %p214 = scmp.ne.s32.totalorder %s205, %s206
      %p215 = scmp.eq.s32.totalorder %s27, 0
      %p216 = por %p214, %p215
      %p217 = scmp.ne.s32.totalorder %s205, %s206
      %p218 = scmp.eq.s32.totalorder %s28, 1
      %p219 = por %p217, %p218
      %p221 = scmp.ne.s32.totalorder %s206, %s220
      %p222 = scmp.eq.s32.totalorder %s28, 0
      %p223 = por %p221, %p222
      %s225 = sadd.s32 %s224, 1
      %p228 = scmp.eq.s32.totalorder %s22, 1
      %p229 = scmp.ne.s32.totalorder %s224, %s226
      %p230 = scmp.eq.s32.totalorder %s22, 0
      %p231 = por %p229, %p230
      %p232 = scmp.ne.s32.totalorder %s224, %s226
      %p233 = scmp.eq.s32.totalorder %s27, 1
      %p234 = por %p232, %p233
      %p235 = scmp.ne.s32.totalorder %s226, %s227
      %p236 = scmp.eq.s32.totalorder %s27, 0
      %p237 = por %p235, %p236
      %p238 = scmp.ne.s32.totalorder %s226, %s227
      %p239 = scmp.eq.s32.totalorder %s28, 1
      %p240 = por %p238, %p239
      %p242 = scmp.ne.s32.totalorder %s227, %s241
      %p243 = scmp.eq.s32.totalorder %s28, 0
      %p244 = por %p242, %p243
      %s246 = sadd.s32 %s245, 1
      %p249 = scmp.eq.s32.totalorder %s22, 1
      %p250 = scmp.ne.s32.totalorder %s245, %s247
      %p251 = scmp.eq.s32.totalorder %s22, 0
      %p252 = por %p250, %p251
      %p253 = scmp.ne.s32.totalorder %s245, %s247
      %p254 = scmp.eq.s32.totalorder %s27, 1
      %p255 = por %p253, %p254
      %p256 = scmp.ne.s32.totalorder %s247, %s248
      %p257 = scmp.eq.s32.totalorder %s27, 0
      %p258 = por %p256, %p257
      %p259 = scmp.ne.s32.totalorder %s247, %s248
      %p260 = scmp.eq.s32.totalorder %s28, 1
      %p261 = por %p259, %p260
      %p263 = scmp.ne.s32.totalorder %s248, %s262
      %p264 = scmp.eq.s32.totalorder %s28, 0
      %p265 = por %p263, %p264
      %s267 = sadd.s32 %s266, 1
      %p270 = scmp.eq.s32.totalorder %s22, 1
      %p271 = scmp.ne.s32.totalorder %s266, %s268
      %p272 = scmp.eq.s32.totalorder %s22, 0
      %p273 = por %p271, %p272
      %p274 = scmp.ne.s32.totalorder %s266, %s268
      %p275 = scmp.eq.s32.totalorder %s27, 1
      %p276 = por %p274, %p275
      %p277 = scmp.ne.s32.totalorder %s268, %s269
      %p278 = scmp.eq.s32.totalorder %s27, 0
      %p279 = por %p277, %p278
      %p280 = scmp.ne.s32.totalorder %s268, %s269
      %p281 = scmp.eq.s32.totalorder %s28, 1
      %p282 = por %p280, %p281
      %p284 = scmp.ne.s32.totalorder %s269, %s283
      %p285 = scmp.eq.s32.totalorder %s28, 0
      %p286 = por %p284, %p285
      %s288 = sadd.s32 %s287, 1
      %p291 = scmp.eq.s32.totalorder %s22, 1
      %p292 = scmp.ne.s32.totalorder %s287, %s289
      %p293 = scmp.eq.s32.totalorder %s22, 0
      %p294 = por %p292, %p293
      %p295 = scmp.ne.s32.totalorder %s287, %s289
      %p296 = scmp.eq.s32.totalorder %s27, 1
      %p297 = por %p295, %p296
      %p298 = scmp.ne.s32.totalorder %s289, %s290
      %p299 = scmp.eq.s32.totalorder %s27, 0
      %p300 = por %p298, %p299
      %p301 = scmp.ne.s32.totalorder %s289, %s290
      %p302 = scmp.eq.s32.totalorder %s28, 1
      %p303 = por %p301, %p302
      %p305 = scmp.ne.s32.totalorder %s290, %s304
      %p306 = scmp.eq.s32.totalorder %s28, 0
      %p307 = por %p305, %p306
      %s308 = ssub.s32 %s22, %s29
      %p309 = scmp.eq.s32.totalorder %s308, 0
      %s311 = sadd.s32 %s310, 1
      %s312 = scalar_select %p309, %s310, %s311
      %p315 = pneg %p309
      %p316 = scmp.eq.s32.totalorder %s22, 1
      %p317 = por %p315, %p316
      %p318 = scmp.ne.s32.totalorder %s310, %s313
      %p319 = scmp.eq.s32.totalorder %s22, 0
      %p320 = por %p318, %p319
      %p321 = scmp.ne.s32.totalorder %s310, %s313
      %p322 = scmp.eq.s32.totalorder %s27, 1
      %p323 = por %p321, %p322
      %p324 = scmp.ne.s32.totalorder %s313, %s314
      %p325 = scmp.eq.s32.totalorder %s27, 0
      %p326 = por %p324, %p325
      %p327 = scmp.ne.s32.totalorder %s313, %s314
      %p328 = scmp.eq.s32.totalorder %s28, 1
      %p329 = por %p327, %p328
      %p331 = scmp.ne.s32.totalorder %s314, %s330
      %p332 = scmp.eq.s32.totalorder %s28, 0
      %p333 = por %p331, %p332
      %p334 = scmp.le.s32.totalorder 1, %s22
      %p335 = scmp.lt.s32.totalorder %s22, 3
      %p336 = pnand %p334, %p335
      %p337 = pneg %p336
      // Predicated region
      $region9: #{tpu_custom_call.1} parent=5 // pred_check
        _
      $region10: #{tpu_custom_call.1} parent=5 // pred_check_branch
        %339 = sbr.rel (%p336) target = $region12
      $region11: #{tpu_custom_call.1} parent=5 // pred_region
        %s340 = ssub.s32 %s22, 1
        // Predicated region
        $region13: #{tpu_custom_call.1} parent=11 // pred_check
          %p341 = pneg %p69
        $region14: #{tpu_custom_call.1} parent=11 // pred_check_branch
          %343 = sbr.rel (%p341) target = $region16
        $region15: #{tpu_custom_call.1} parent=11 // pred_region
          _
        $region16: #{tpu_custom_call.1} parent=11 // pred_fallthru
          _
        // Predicated region
        $region17: #{tpu_custom_call.1} parent=11 // pred_check
          %p344 = pneg %p90
        $region18: #{tpu_custom_call.1} parent=11 // pred_check_branch
          %346 = sbr.rel (%p344) target = $region20
        $region19: #{tpu_custom_call.1} parent=11 // pred_region
          _
        $region20: #{tpu_custom_call.1} parent=11 // pred_fallthru
          _
        // Predicated region
        $region21: #{tpu_custom_call.1} parent=11 // pred_check
          %p347 = pneg %p111
        $region22: #{tpu_custom_call.1} parent=11 // pred_check_branch
          %349 = sbr.rel (%p347) target = $region24
        $region23: #{tpu_custom_call.1} parent=11 // pred_region
          _
        $region24: #{tpu_custom_call.1} parent=11 // pred_fallthru
          _
        // Predicated region
        $region25: #{tpu_custom_call.1} parent=11 // pred_check
          %p350 = pneg %p132
        $region26: #{tpu_custom_call.1} parent=11 // pred_check_branch
          %352 = sbr.rel (%p350) target = $region28
        $region27: #{tpu_custom_call.1} parent=11 // pred_region
          _
        $region28: #{tpu_custom_call.1} parent=11 // pred_fallthru
          _
        // Predicated region
        $region29: #{tpu_custom_call.1} parent=11 // pred_check
          %p353 = pneg %p153
        $region30: #{tpu_custom_call.1} parent=11 // pred_check_branch
          %355 = sbr.rel (%p353) target = $region32
        $region31: #{tpu_custom_call.1} parent=11 // pred_region
          _
        $region32: #{tpu_custom_call.1} parent=11 // pred_fallthru
          _
        // Predicated region
        $region33: #{tpu_custom_call.1} parent=11 // pred_check
          %p356 = pneg %p174
        $region34: #{tpu_custom_call.1} parent=11 // pred_check_branch
          %358 = sbr.rel (%p356) target = $region36
        $region35: #{tpu_custom_call.1} parent=11 // pred_region
          _
        $region36: #{tpu_custom_call.1} parent=11 // pred_fallthru
          _
        // Predicated region
        $region37: #{tpu_custom_call.1} parent=11 // pred_check
          %p359 = pneg %p195
        $region38: #{tpu_custom_call.1} parent=11 // pred_check_branch
          %361 = sbr.rel (%p359) target = $region40
        $region39: #{tpu_custom_call.1} parent=11 // pred_region
          _
        $region40: #{tpu_custom_call.1} parent=11 // pred_fallthru
          _
        // Predicated region
        $region41: #{tpu_custom_call.1} parent=11 // pred_check
          %p362 = pneg %p216
        $region42: #{tpu_custom_call.1} parent=11 // pred_check_branch
          %364 = sbr.rel (%p362) target = $region44
        $region43: #{tpu_custom_call.1} parent=11 // pred_region
          _
        $region44: #{tpu_custom_call.1} parent=11 // pred_fallthru
          _
        // Predicated region
        $region45: #{tpu_custom_call.1} parent=11 // pred_check
          %p365 = pneg %p237
        $region46: #{tpu_custom_call.1} parent=11 // pred_check_branch
          %367 = sbr.rel (%p365) target = $region48
        $region47: #{tpu_custom_call.1} parent=11 // pred_region
          _
        $region48: #{tpu_custom_call.1} parent=11 // pred_fallthru
          _
        // Predicated region
        $region49: #{tpu_custom_call.1} parent=11 // pred_check
          %p368 = pneg %p258
        $region50: #{tpu_custom_call.1} parent=11 // pred_check_branch
          %370 = sbr.rel (%p368) target = $region52
        $region51: #{tpu_custom_call.1} parent=11 // pred_region
          _
        $region52: #{tpu_custom_call.1} parent=11 // pred_fallthru
          _
        // Predicated region
        $region53: #{tpu_custom_call.1} parent=11 // pred_check
          %p371 = pneg %p279
        $region54: #{tpu_custom_call.1} parent=11 // pred_check_branch
          %373 = sbr.rel (%p371) target = $region56
        $region55: #{tpu_custom_call.1} parent=11 // pred_region
          _
        $region56: #{tpu_custom_call.1} parent=11 // pred_fallthru
          _
        // Predicated region
        $region57: #{tpu_custom_call.1} parent=11 // pred_check
          %p374 = pneg %p300
        $region58: #{tpu_custom_call.1} parent=11 // pred_check_branch
          %376 = sbr.rel (%p374) target = $region60
        $region59: #{tpu_custom_call.1} parent=11 // pred_region
          _
        $region60: #{tpu_custom_call.1} parent=11 // pred_fallthru
          _
      $region12: #{tpu_custom_call.1} parent=5 // pred_fallthru
        _
      %p377 = scmp.lt.s32.totalorder %s22, 2
      // Predicated region
      $region61: #{tpu_custom_call.1} parent=5 // pred_check
        %p378 = pneg %p377
      $region62: #{tpu_custom_call.1} parent=5 // pred_check_branch
        %380 = sbr.rel (%p378) target = $region64
      $region63: #{tpu_custom_call.1} parent=5 // pred_region
        // Predicated region
        $region65: #{tpu_custom_call.1} parent=63 // pred_check
          %p381 = pneg %p42
        $region66: #{tpu_custom_call.1} parent=63 // pred_check_branch
          %383 = sbr.rel (%p381) target = $region68
        $region67: #{tpu_custom_call.1} parent=63 // pred_region
          %s384 = smul.u32 4, %s22
          %p385 = scmp.lt.s32.totalorder %s384, 7
          %s386 = scalar_select %p385, %s384, 7
          %s387 = smul.addr %s386, 4
          %s388 = scalar_lea.vmem %s0, %s387
          %s389 = smul.u32 4, %s22
        $region68: #{tpu_custom_call.1} parent=63 // pred_fallthru
          _
      $region64: #{tpu_custom_call.1} parent=5 // pred_fallthru
        _
      %p390 = scmp.le.s32.totalorder 1, %s22
      %p391 = scmp.lt.s32.totalorder %s22, 3
      %p392 = pnand %p390, %p391
      %p393 = pneg %p392
      // Predicated region
      $region69: #{tpu_custom_call.1} parent=5 // pred_check
        _
      $region70: #{tpu_custom_call.1} parent=5 // pred_check_branch
        %395 = sbr.rel (%p392) target = $region72
      $region71: #{tpu_custom_call.1} parent=5 // pred_region
        %s396 = ssub.s32 %s22, 1
        %s397 = smul.u32 4, %s27
        %p398 = scmp.lt.s32.totalorder %s397, 7
        %s399 = scalar_select %p398, %s397, 7
        %s400 = smul.addr %s399, 4
        %s401 = scalar_lea.vmem %s0, %s400
        %p402 = pneg %p48
        %p403 = pneg %p45
        %p404 = pneg %p69
        %p405 = pneg %p66
        %p406 = pneg %p90
        %p407 = pneg %p87
        %p408 = pneg %p111
        %p409 = pneg %p108
        %p410 = pneg %p132
        %p411 = pneg %p129
        %p412 = pneg %p153
        %p413 = pneg %p150
        %p414 = pneg %p174
        %p415 = pneg %p171
        %p416 = pneg %p195
        %p417 = pneg %p192
        %p418 = pneg %p216
        %p419 = pneg %p213
        %p420 = pneg %p237
        %p421 = pneg %p234
        %p422 = pneg %p258
        %p423 = pneg %p255
        %p424 = pneg %p279
        %p425 = pneg %p276
        %p426 = pneg %p300
        %p427 = pneg %p297
        %p428 = pneg %p326
        %p429 = pneg %p323
        %s430 = sand.u32 %s313, 1
        %s431 = scalar_lea.sflag [#allocation3], %s430
        %s432 = sand.u32 %s313, 1
        %s433 = smul.addr %s432, 32
        %s434 = scalar_lea.vmem [#allocation2], %s433
        %s435 = smul.u32 4, %s27
        %p436 = scmp.lt.s32.totalorder %s435, 7
        %s437 = scalar_select %p436, %s435, 7
        %s438 = smul.addr %s437, 4
        %s439 = scalar_lea.vmem %s0, %s438
        %s440 = smul.u32 4, %s27
        %s441 = smul.u32 4, %s27
        %v443 = vld [vmem:[%s439] sm:$0xf]
        %v444 = vld [vmem:[%s439 + $0x4] sm:$0xf]
        %v445 = vld [vmem:[%s439 + $0x8] sm:$0xf]
        %v446 = vld [vmem:[%s439 + $0xc] sm:$0xf]
        %v447 = vunpack.c.l.bf16 %v443
        %v448 = vunpack.c.l.bf16 %v444
        %v449 = vunpack.c.l.bf16 %v445
        %v450 = vunpack.c.l.bf16 %v446
        %v451 = vld [vmem:[%s2] sm:$0x1]
        %v452 = vld [vmem:[%s4] sm:$0x1]
        %v453 = vld [vmem:[%s5] sm:$0x1]
        %v454 = vld [vmem:[%s6] sm:$0x1]
        %v455 = vld [vmem:[%s8] sm:$0x1]
        %v456 = vld [vmem:[%s10] sm:$0x1]
        %v457 = vld [vmem:[%s11] sm:$0x1]
        %v458 = vld [vmem:[%s12] sm:$0x1]
        %v459 = vpack.c.bf16 %v448, %v447
        %v460 = vpack.c.bf16 %v450, %v449
        %v461 = vld [vmem:[%s1] sm:$0xf]
        %v462 = vld [vmem:[%s1 + $0x4] sm:$0xf]
        %v463 = vld [vmem:[%s1 + $0x8] sm:$0xf]
        %v464 = vld [vmem:[%s1 + $0xc] sm:$0xf]
        %v466 = vlaneseq
        %v467 = vshrl.u32 %v466, 7
        %v468 = vsub.s32 0, %v467
        %v469 = vrot.slane %v451, %v468
        %v475 = vunpack.c.l.b16 %v461
        %v476 = vunpack.c.l.b16 %v462
        %v477 = vunpack.c.l.b16 %v463
        %v478 = vunpack.c.l.b16 %v464
        %v479 = vpack.c.b16 %v476, %v475
        %v480 = vpack.c.b16 %v478, %v477
        %vm483 = vcmask 261120
        %v485 = vsel %vm483, %v459, 0
        %v488 = vsel %vm483, %v460, 0
        %490 = vmatprep.subr.bf16.mxu0 0
        %491 = vmatpush1.bf16.msra.mxu0 %v479
        %492 = vmatprep.subr.bf16.mxu0 0
        %493 = vmatpush1.bf16.msra.mxu0 %v480
        %494 = vmatprep.subr.bf16.mxu0 0
        %495 = vmatpush1.bf16.msra.mxu0 0
        %496 = vmatprep.subr.bf16.mxu0 0
        %497 = vmatpush1.bf16.msra.mxu0 0
        %498 = vmatprep.subr.bf16.mxu0 0
        %499 = vmatpush1.bf16.msra.mxu0 0
        %500 = vmatprep.subr.bf16.mxu0 0
        %501 = vmatpush1.bf16.msra.mxu0 0
        %502 = vmatprep.subr.bf16.mxu0 0
        %503 = vmatpush1.bf16.msra.mxu0 0
        %504 = vmatprep.subr.bf16.mxu0 0
        %505 = vmatpush1.bf16.msra.mxu0 0
        %506 = vmatprep.subr.bf16.mxu0 0
        %507 = vmatpush1.bf16.msra.mxu0 0
        %508 = vmatprep.subr.bf16.mxu0 0
        %509 = vmatpush1.bf16.msra.mxu0 0
        %510 = vmatprep.subr.bf16.mxu0 0
        %511 = vmatpush1.bf16.msra.mxu0 0
        %512 = vmatprep.subr.bf16.mxu0 0
        %513 = vmatpush1.bf16.msra.mxu0 0
        %514 = vmatprep.subr.bf16.mxu0 0
        %515 = vmatpush1.bf16.msra.mxu0 0
        %516 = vmatprep.subr.bf16.mxu0 0
        %517 = vmatpush1.bf16.msra.mxu0 0
        %518 = vmatprep.subr.bf16.mxu0 0
        %519 = vmatpush1.bf16.msra.mxu0 0
        %520 = vmatprep.subr.bf16.mxu0 0
        %521 = vmatpush1.bf16.msra.mxu0 0
        %522 = vmatprep.mubr.bf16.mxu0 0
        %523 = vmatmul.mubr.bf16.gmra.mrb[0].mxu0 %v485
        %v524 = vpop.f32.mrb[0].mxu0
        %v525 = vadd.f32 %v469, %v524
        %v526 = vpop.f32.mrb[0].mxu0
        %v527 = vpop.f32.mrb[0].mxu0
        %v528 = vadd.f32 %v469, %v527
        %v529 = vpop.f32.mrb[0].mxu0
        %530 = vmatprep.mubr.bf16.mxu0 0
        %531 = vmatmul.mubr.bf16.gmra.mrb[0].mxu0 %v488
        %v532 = vpop.f32.mrb[0].mxu0
        %v533 = vadd.f32 %v469, %v532
        %v534 = vpop.f32.mrb[0].mxu0
        %v535 = vpop.f32.mrb[0].mxu0
        %v536 = vadd.f32 %v469, %v535
        %v537 = vpop.f32.mrb[0].mxu0
        %538 = vdwg.mxu0
        %543 = vrot.lane.b32.xlu0 %v525, 120
        %v544 = vpop.permute.xlu0 %543
        %545 = vrot.lane.b32.xlu0 %v528, 120
        %v546 = vpop.permute.xlu0 %545
        %547 = vrot.lane.b32.xlu0 %v533, 120
        %v548 = vpop.permute.xlu0 %547
        %549 = vrot.lane.b32.xlu0 %v536, 120
        %v550 = vpop.permute.xlu0 %549
        %551 = vrot.lane.b32.xlu0 %v525, 112
        %v552 = vpop.permute.xlu0 %551
        %553 = vrot.lane.b32.xlu0 %v528, 112
        %v554 = vpop.permute.xlu0 %553
        %555 = vrot.lane.b32.xlu0 %v533, 112
        %v556 = vpop.permute.xlu0 %555
        %557 = vrot.lane.b32.xlu0 %v536, 112
        %v558 = vpop.permute.xlu0 %557
        %559 = vrot.lane.b32.xlu0 %v525, 104
        %v560 = vpop.permute.xlu0 %559
        %561 = vrot.lane.b32.xlu0 %v528, 104
        %v562 = vpop.permute.xlu0 %561
        %563 = vrot.lane.b32.xlu0 %v533, 104
        %v564 = vpop.permute.xlu0 %563
        %565 = vrot.lane.b32.xlu0 %v536, 104
        %v566 = vpop.permute.xlu0 %565
        %567 = vrot.lane.b32.xlu0 %v525, 96
        %v568 = vpop.permute.xlu0 %567
        %vm569 = vcmask 64512
        %v570 = vsel %vm569, %v525, 0
        %v572 = vsel %vm569, %v568, 0
        %574 = vmatprep.subr.mxu0 0.0
        %575 = vmatpush1.xpose.msra.mxu0 %v572
        %576 = vmatprep.subr.mxu0 0.0
        %577 = vmatpush1.xpose.msra.mxu0 0.0
        %578 = vmatprep.subr.mxu0 0.0
        %579 = vmatpush1.xpose.msra.mxu0 0.0
        %580 = vmatprep.subr.mxu0 0.0
        %581 = vmatpush1.xpose.msra.mxu0 0.0
        %582 = vmatprep.subr.mxu0 0.0
        %583 = vmatpush1.xpose.msra.mxu0 0.0
        %584 = vmatprep.subr.mxu0 0.0
        %585 = vmatpush1.xpose.msra.mxu0 0.0
        %586 = vmatprep.subr.mxu0 0.0
        %587 = vmatpush1.xpose.msra.mxu0 0.0
        %588 = vmatprep.subr.mxu0 0.0
        %589 = vmatpush1.xpose.msra.mxu0 0.0
        %590 = vmatprep.subr.mxu0 0.0
        %591 = vmatpush1.xpose.msra.mxu0 0.0
        %592 = vmatprep.subr.mxu0 0.0
        %593 = vmatpush1.xpose.msra.mxu0 0.0
        %594 = vmatprep.subr.mxu0 0.0
        %595 = vmatpush1.xpose.msra.mxu0 0.0
        %596 = vmatprep.subr.mxu0 0.0
        %597 = vmatpush1.xpose.msra.mxu0 0.0
        %598 = vmatprep.subr.mxu0 0.0
        %599 = vmatpush1.xpose.msra.mxu0 0.0
        %600 = vmatprep.subr.mxu0 0.0
        %601 = vmatpush1.xpose.msra.mxu0 0.0
        %602 = vmatprep.subr.mxu0 0.0
        %603 = vmatpush1.xpose.msra.mxu0 0.0
        %604 = vmatprep.subr.mxu0 0.0
        %605 = vmatpush1.xpose.msra.mxu0 0.0
        %606 = vmatprep.subr.mxu0 0.0
        %607 = vmatpush1.xpose.msra.mxu0 0.0
        %608 = vmatprep.subr.mxu0 0.0
        %609 = vmatpush1.xpose.msra.mxu0 0.0
        %610 = vmatprep.subr.mxu0 0.0
        %611 = vmatpush1.xpose.msra.mxu0 0.0
        %612 = vmatprep.subr.mxu0 0.0
        %613 = vmatpush1.xpose.msra.mxu0 0.0
        %614 = vmatprep.subr.mxu0 0.0
        %615 = vmatpush1.xpose.msra.mxu0 0.0
        %616 = vmatprep.subr.mxu0 0.0
        %617 = vmatpush1.xpose.msra.mxu0 0.0
        %618 = vmatprep.subr.mxu0 0.0
        %619 = vmatpush1.xpose.msra.mxu0 0.0
        %620 = vmatprep.subr.mxu0 0.0
        %621 = vmatpush1.xpose.msra.mxu0 0.0
        %622 = vmatprep.subr.mxu0 0.0
        %623 = vmatpush1.xpose.msra.mxu0 0.0
        %624 = vmatprep.subr.mxu0 0.0
        %625 = vmatpush1.xpose.msra.mxu0 0.0
        %626 = vmatprep.subr.mxu0 0.0
        %627 = vmatpush1.xpose.msra.mxu0 0.0
        %628 = vmatprep.subr.mxu0 0.0
        %629 = vmatpush1.xpose.msra.mxu0 0.0
        %630 = vmatprep.subr.mxu0 0.0
        %631 = vmatpush1.xpose.msra.mxu0 0.0
        %632 = vmatprep.subr.mxu0 0.0
        %633 = vmatpush1.xpose.msra.mxu0 0.0
        %634 = vmatprep.subr.mxu0 0.0
        %635 = vmatpush1.xpose.msra.mxu0 0.0
        %636 = vmatprep.subr.mxu0 0.0
        %637 = vmatpush1.xpose.msra.mxu0 0.0
        %638 = vmatprep.mubr.f32.mxu0 0.0
        %639 = vmatmul.mubr.f32.gmra.mrb[0].mxu0 %v570
        %v640 = vpop.f32.mrb[0].mxu0
        %v641 = vadd.f32 0.0, %v640
        %v642 = vpop.f32.mrb[0].mxu0
        %643 = vdwg.mxu0
        %644 = vrot.lane.b32.xlu0 %v528, 96
        %v645 = vpop.permute.xlu0 %644
        %v646 = vsel %vm569, %v528, 0
        %v648 = vsel %vm569, %v645, 0
        %650 = vmatprep.subr.mxu0 0.0
        %651 = vmatpush1.xpose.msra.mxu0 %v648
        %652 = vmatprep.subr.mxu0 0.0
        %653 = vmatpush1.xpose.msra.mxu0 0.0
        %654 = vmatprep.subr.mxu0 0.0
        %655 = vmatpush1.xpose.msra.mxu0 0.0
        %656 = vmatprep.subr.mxu0 0.0
        %657 = vmatpush1.xpose.msra.mxu0 0.0
        %658 = vmatprep.subr.mxu0 0.0
        %659 = vmatpush1.xpose.msra.mxu0 0.0
        %660 = vmatprep.subr.mxu0 0.0
        %661 = vmatpush1.xpose.msra.mxu0 0.0
        %662 = vmatprep.subr.mxu0 0.0
        %663 = vmatpush1.xpose.msra.mxu0 0.0
        %664 = vmatprep.subr.mxu0 0.0
        %665 = vmatpush1.xpose.msra.mxu0 0.0
        %666 = vmatprep.subr.mxu0 0.0
        %667 = vmatpush1.xpose.msra.mxu0 0.0
        %668 = vmatprep.subr.mxu0 0.0
        %669 = vmatpush1.xpose.msra.mxu0 0.0
        %670 = vmatprep.subr.mxu0 0.0
        %671 = vmatpush1.xpose.msra.mxu0 0.0
        %672 = vmatprep.subr.mxu0 0.0
        %673 = vmatpush1.xpose.msra.mxu0 0.0
        %674 = vmatprep.subr.mxu0 0.0
        %675 = vmatpush1.xpose.msra.mxu0 0.0
        %676 = vmatprep.subr.mxu0 0.0
        %677 = vmatpush1.xpose.msra.mxu0 0.0
        %678 = vmatprep.subr.mxu0 0.0
        %679 = vmatpush1.xpose.msra.mxu0 0.0
        %680 = vmatprep.subr.mxu0 0.0
        %681 = vmatpush1.xpose.msra.mxu0 0.0
        %682 = vmatprep.subr.mxu0 0.0
        %683 = vmatpush1.xpose.msra.mxu0 0.0
        %684 = vmatprep.subr.mxu0 0.0
        %685 = vmatpush1.xpose.msra.mxu0 0.0
        %686 = vmatprep.subr.mxu0 0.0
        %687 = vmatpush1.xpose.msra.mxu0 0.0
        %688 = vmatprep.subr.mxu0 0.0
        %689 = vmatpush1.xpose.msra.mxu0 0.0
        %690 = vmatprep.subr.mxu0 0.0
        %691 = vmatpush1.xpose.msra.mxu0 0.0
        %692 = vmatprep.subr.mxu0 0.0
        %693 = vmatpush1.xpose.msra.mxu0 0.0
        %694 = vmatprep.subr.mxu0 0.0
        %695 = vmatpush1.xpose.msra.mxu0 0.0
        %696 = vmatprep.subr.mxu0 0.0
        %697 = vmatpush1.xpose.msra.mxu0 0.0
        %698 = vmatprep.subr.mxu0 0.0
        %699 = vmatpush1.xpose.msra.mxu0 0.0
        %700 = vmatprep.subr.mxu0 0.0
        %701 = vmatpush1.xpose.msra.mxu0 0.0
        %702 = vmatprep.subr.mxu0 0.0
        %703 = vmatpush1.xpose.msra.mxu0 0.0
        %704 = vmatprep.subr.mxu0 0.0
        %705 = vmatpush1.xpose.msra.mxu0 0.0
        %706 = vmatprep.subr.mxu0 0.0
        %707 = vmatpush1.xpose.msra.mxu0 0.0
        %708 = vmatprep.subr.mxu0 0.0
        %709 = vmatpush1.xpose.msra.mxu0 0.0
        %710 = vmatprep.subr.mxu0 0.0
        %711 = vmatpush1.xpose.msra.mxu0 0.0
        %712 = vmatprep.subr.mxu0 0.0
        %713 = vmatpush1.xpose.msra.mxu0 0.0
        %714 = vmatprep.mubr.f32.mxu0 0.0
        %715 = vmatmul.mubr.f32.gmra.mrb[0].mxu0 %v646
        %v716 = vpop.f32.mrb[0].mxu0
        %v717 = vadd.f32 0.0, %v716
        %v718 = vpop.f32.mrb[0].mxu0
        %719 = vdwg.mxu0
        %720 = vrot.lane.b32.xlu0 %v533, 96
        %v721 = vpop.permute.xlu0 %720
        %v722 = vsel %vm569, %v533, 0
        %v724 = vsel %vm569, %v721, 0
        %726 = vmatprep.subr.mxu0 0.0
        %727 = vmatpush1.xpose.msra.mxu0 %v724
        %728 = vmatprep.subr.mxu0 0.0
        %729 = vmatpush1.xpose.msra.mxu0 0.0
        %730 = vmatprep.subr.mxu0 0.0
        %731 = vmatpush1.xpose.msra.mxu0 0.0
        %732 = vmatprep.subr.mxu0 0.0
        %733 = vmatpush1.xpose.msra.mxu0 0.0
        %734 = vmatprep.subr.mxu0 0.0
        %735 = vmatpush1.xpose.msra.mxu0 0.0
        %736 = vmatprep.subr.mxu0 0.0
        %737 = vmatpush1.xpose.msra.mxu0 0.0
        %738 = vmatprep.subr.mxu0 0.0
        %739 = vmatpush1.xpose.msra.mxu0 0.0
        %740 = vmatprep.subr.mxu0 0.0
        %741 = vmatpush1.xpose.msra.mxu0 0.0
        %742 = vmatprep.subr.mxu0 0.0
        %743 = vmatpush1.xpose.msra.mxu0 0.0
        %744 = vmatprep.subr.mxu0 0.0
        %745 = vmatpush1.xpose.msra.mxu0 0.0
        %746 = vmatprep.subr.mxu0 0.0
        %747 = vmatpush1.xpose.msra.mxu0 0.0
        %748 = vmatprep.subr.mxu0 0.0
        %749 = vmatpush1.xpose.msra.mxu0 0.0
        %750 = vmatprep.subr.mxu0 0.0
        %751 = vmatpush1.xpose.msra.mxu0 0.0
        %752 = vmatprep.subr.mxu0 0.0
        %753 = vmatpush1.xpose.msra.mxu0 0.0
        %754 = vmatprep.subr.mxu0 0.0
        %755 = vmatpush1.xpose.msra.mxu0 0.0
        %756 = vmatprep.subr.mxu0 0.0
        %757 = vmatpush1.xpose.msra.mxu0 0.0
        %758 = vmatprep.subr.mxu0 0.0
        %759 = vmatpush1.xpose.msra.mxu0 0.0
        %760 = vmatprep.subr.mxu0 0.0
        %761 = vmatpush1.xpose.msra.mxu0 0.0
        %762 = vmatprep.subr.mxu0 0.0
        %763 = vmatpush1.xpose.msra.mxu0 0.0
        %764 = vmatprep.subr.mxu0 0.0
        %765 = vmatpush1.xpose.msra.mxu0 0.0
        %766 = vmatprep.subr.mxu0 0.0
        %767 = vmatpush1.xpose.msra.mxu0 0.0
        %768 = vmatprep.subr.mxu0 0.0
        %769 = vmatpush1.xpose.msra.mxu0 0.0
        %770 = vmatprep.subr.mxu0 0.0
        %771 = vmatpush1.xpose.msra.mxu0 0.0
        %772 = vmatprep.subr.mxu0 0.0
        %773 = vmatpush1.xpose.msra.mxu0 0.0
        %774 = vmatprep.subr.mxu0 0.0
        %775 = vmatpush1.xpose.msra.mxu0 0.0
        %776 = vmatprep.subr.mxu0 0.0
        %777 = vmatpush1.xpose.msra.mxu0 0.0
        %778 = vmatprep.subr.mxu0 0.0
        %779 = vmatpush1.xpose.msra.mxu0 0.0
        %780 = vmatprep.subr.mxu0 0.0
        %781 = vmatpush1.xpose.msra.mxu0 0.0
        %782 = vmatprep.subr.mxu0 0.0
        %783 = vmatpush1.xpose.msra.mxu0 0.0
        %784 = vmatprep.subr.mxu0 0.0
        %785 = vmatpush1.xpose.msra.mxu0 0.0
        %786 = vmatprep.subr.mxu0 0.0
        %787 = vmatpush1.xpose.msra.mxu0 0.0
        %788 = vmatprep.subr.mxu0 0.0
        %789 = vmatpush1.xpose.msra.mxu0 0.0
        %790 = vmatprep.mubr.f32.mxu0 0.0
        %791 = vmatmul.mubr.f32.gmra.mrb[0].mxu0 %v722
        %v792 = vpop.f32.mrb[0].mxu0
        %v793 = vadd.f32 0.0, %v792
        %v794 = vpop.f32.mrb[0].mxu0
        %795 = vdwg.mxu0
        %796 = vrot.lane.b32.xlu0 %v536, 96
        %v797 = vpop.permute.xlu0 %796
        %v798 = vsel %vm569, %v536, 0
        %v800 = vsel %vm569, %v797, 0
        %802 = vmatprep.subr.mxu0 0.0
        %803 = vmatpush1.xpose.msra.mxu0 %v800
        %804 = vmatprep.subr.mxu0 0.0
        %805 = vmatpush1.xpose.msra.mxu0 0.0
        %806 = vmatprep.subr.mxu0 0.0
        %807 = vmatpush1.xpose.msra.mxu0 0.0
        %808 = vmatprep.subr.mxu0 0.0
        %809 = vmatpush1.xpose.msra.mxu0 0.0
        %810 = vmatprep.subr.mxu0 0.0
        %811 = vmatpush1.xpose.msra.mxu0 0.0
        %812 = vmatprep.subr.mxu0 0.0
        %813 = vmatpush1.xpose.msra.mxu0 0.0
        %814 = vmatprep.subr.mxu0 0.0
        %815 = vmatpush1.xpose.msra.mxu0 0.0
        %816 = vmatprep.subr.mxu0 0.0
        %817 = vmatpush1.xpose.msra.mxu0 0.0
        %818 = vmatprep.subr.mxu0 0.0
        %819 = vmatpush1.xpose.msra.mxu0 0.0
        %820 = vmatprep.subr.mxu0 0.0
        %821 = vmatpush1.xpose.msra.mxu0 0.0
        %822 = vmatprep.subr.mxu0 0.0
        %823 = vmatpush1.xpose.msra.mxu0 0.0
        %824 = vmatprep.subr.mxu0 0.0
        %825 = vmatpush1.xpose.msra.mxu0 0.0
        %826 = vmatprep.subr.mxu0 0.0
        %827 = vmatpush1.xpose.msra.mxu0 0.0
        %828 = vmatprep.subr.mxu0 0.0
        %829 = vmatpush1.xpose.msra.mxu0 0.0
        %830 = vmatprep.subr.mxu0 0.0
        %831 = vmatpush1.xpose.msra.mxu0 0.0
        %832 = vmatprep.subr.mxu0 0.0
        %833 = vmatpush1.xpose.msra.mxu0 0.0
        %834 = vmatprep.subr.mxu0 0.0
        %835 = vmatpush1.xpose.msra.mxu0 0.0
        %836 = vmatprep.subr.mxu0 0.0
        %837 = vmatpush1.xpose.msra.mxu0 0.0
        %838 = vmatprep.subr.mxu0 0.0
        %839 = vmatpush1.xpose.msra.mxu0 0.0
        %840 = vmatprep.subr.mxu0 0.0
        %841 = vmatpush1.xpose.msra.mxu0 0.0
        %842 = vmatprep.subr.mxu0 0.0
        %843 = vmatpush1.xpose.msra.mxu0 0.0
        %844 = vmatprep.subr.mxu0 0.0
        %845 = vmatpush1.xpose.msra.mxu0 0.0
        %846 = vmatprep.subr.mxu0 0.0
        %847 = vmatpush1.xpose.msra.mxu0 0.0
        %848 = vmatprep.subr.mxu0 0.0
        %849 = vmatpush1.xpose.msra.mxu0 0.0
        %850 = vmatprep.subr.mxu0 0.0
        %851 = vmatpush1.xpose.msra.mxu0 0.0
        %852 = vmatprep.subr.mxu0 0.0
        %853 = vmatpush1.xpose.msra.mxu0 0.0
        %854 = vmatprep.subr.mxu0 0.0
        %855 = vmatpush1.xpose.msra.mxu0 0.0
        %856 = vmatprep.subr.mxu0 0.0
        %857 = vmatpush1.xpose.msra.mxu0 0.0
        %858 = vmatprep.subr.mxu0 0.0
        %859 = vmatpush1.xpose.msra.mxu0 0.0
        %860 = vmatprep.subr.mxu0 0.0
        %861 = vmatpush1.xpose.msra.mxu0 0.0
        %862 = vmatprep.subr.mxu0 0.0
        %863 = vmatpush1.xpose.msra.mxu0 0.0
        %864 = vmatprep.subr.mxu0 0.0
        %865 = vmatpush1.xpose.msra.mxu0 0.0
        %866 = vmatprep.mubr.f32.mxu0 0.0
        %867 = vmatmul.mubr.f32.gmra.mrb[0].mxu0 %v798
        %v868 = vpop.f32.mrb[0].mxu0
        %v869 = vadd.f32 0.0, %v868
        %v870 = vpop.f32.mrb[0].mxu0
        %871 = vdwg.mxu0
        %872 = vrot.lane.b32.xlu0 %v544, 96
        %v873 = vpop.permute.xlu0 %872
        %v874 = vsel %vm569, %v544, 0
        %v876 = vsel %vm569, %v873, 0
        %878 = vmatprep.subr.mxu0 0.0
        %879 = vmatpush1.xpose.msra.mxu0 %v876
        %880 = vmatprep.subr.mxu0 0.0
        %881 = vmatpush1.xpose.msra.mxu0 0.0
        %882 = vmatprep.subr.mxu0 0.0
        %883 = vmatpush1.xpose.msra.mxu0 0.0
        %884 = vmatprep.subr.mxu0 0.0
        %885 = vmatpush1.xpose.msra.mxu0 0.0
        %886 = vmatprep.subr.mxu0 0.0
        %887 = vmatpush1.xpose.msra.mxu0 0.0
        %888 = vmatprep.subr.mxu0 0.0
        %889 = vmatpush1.xpose.msra.mxu0 0.0
        %890 = vmatprep.subr.mxu0 0.0
        %891 = vmatpush1.xpose.msra.mxu0 0.0
        %892 = vmatprep.subr.mxu0 0.0
        %893 = vmatpush1.xpose.msra.mxu0 0.0
        %894 = vmatprep.subr.mxu0 0.0
        %895 = vmatpush1.xpose.msra.mxu0 0.0
        %896 = vmatprep.subr.mxu0 0.0
        %897 = vmatpush1.xpose.msra.mxu0 0.0
        %898 = vmatprep.subr.mxu0 0.0
        %899 = vmatpush1.xpose.msra.mxu0 0.0
        %900 = vmatprep.subr.mxu0 0.0
        %901 = vmatpush1.xpose.msra.mxu0 0.0
        %902 = vmatprep.subr.mxu0 0.0
        %903 = vmatpush1.xpose.msra.mxu0 0.0
        %904 = vmatprep.subr.mxu0 0.0
        %905 = vmatpush1.xpose.msra.mxu0 0.0
        %906 = vmatprep.subr.mxu0 0.0
        %907 = vmatpush1.xpose.msra.mxu0 0.0
        %908 = vmatprep.subr.mxu0 0.0
        %909 = vmatpush1.xpose.msra.mxu0 0.0
        %910 = vmatprep.subr.mxu0 0.0
        %911 = vmatpush1.xpose.msra.mxu0 0.0
        %912 = vmatprep.subr.mxu0 0.0
        %913 = vmatpush1.xpose.msra.mxu0 0.0
        %914 = vmatprep.subr.mxu0 0.0
        %915 = vmatpush1.xpose.msra.mxu0 0.0
        %916 = vmatprep.subr.mxu0 0.0
        %917 = vmatpush1.xpose.msra.mxu0 0.0
        %918 = vmatprep.subr.mxu0 0.0
        %919 = vmatpush1.xpose.msra.mxu0 0.0
        %920 = vmatprep.subr.mxu0 0.0
        %921 = vmatpush1.xpose.msra.mxu0 0.0
        %922 = vmatprep.subr.mxu0 0.0
        %923 = vmatpush1.xpose.msra.mxu0 0.0
        %924 = vmatprep.subr.mxu0 0.0
        %925 = vmatpush1.xpose.msra.mxu0 0.0
        %926 = vmatprep.subr.mxu0 0.0
        %927 = vmatpush1.xpose.msra.mxu0 0.0
        %928 = vmatprep.subr.mxu0 0.0
        %929 = vmatpush1.xpose.msra.mxu0 0.0
        %930 = vmatprep.subr.mxu0 0.0
        %931 = vmatpush1.xpose.msra.mxu0 0.0
        %932 = vmatprep.subr.mxu0 0.0
        %933 = vmatpush1.xpose.msra.mxu0 0.0
        %934 = vmatprep.subr.mxu0 0.0
        %935 = vmatpush1.xpose.msra.mxu0 0.0
        %936 = vmatprep.subr.mxu0 0.0
        %937 = vmatpush1.xpose.msra.mxu0 0.0
        %938 = vmatprep.subr.mxu0 0.0
        %939 = vmatpush1.xpose.msra.mxu0 0.0
        %940 = vmatprep.subr.mxu0 0.0
        %941 = vmatpush1.xpose.msra.mxu0 0.0
        %942 = vmatprep.mubr.f32.mxu0 0.0
        %943 = vmatmul.mubr.f32.gmra.mrb[0].mxu0 %v874
        %v944 = vpop.f32.mrb[0].mxu0
        %v945 = vadd.f32 0.0, %v944
        %v946 = vpop.f32.mrb[0].mxu0
        %947 = vdwg.mxu0
        %948 = vrot.lane.b32.xlu0 %v546, 96
        %v949 = vpop.permute.xlu0 %948
        %v950 = vsel %vm569, %v546, 0
        %v952 = vsel %vm569, %v949, 0
        %954 = vmatprep.subr.mxu0 0.0
        %955 = vmatpush1.xpose.msra.mxu0 %v952
        %956 = vmatprep.subr.mxu0 0.0
        %957 = vmatpush1.xpose.msra.mxu0 0.0
        %958 = vmatprep.subr.mxu0 0.0
        %959 = vmatpush1.xpose.msra.mxu0 0.0
        %960 = vmatprep.subr.mxu0 0.0
        %961 = vmatpush1.xpose.msra.mxu0 0.0
        %962 = vmatprep.subr.mxu0 0.0
        %963 = vmatpush1.xpose.msra.mxu0 0.0
        %964 = vmatprep.subr.mxu0 0.0
        %965 = vmatpush1.xpose.msra.mxu0 0.0
        %966 = vmatprep.subr.mxu0 0.0
        %967 = vmatpush1.xpose.msra.mxu0 0.0
        %968 = vmatprep.subr.mxu0 0.0
        %969 = vmatpush1.xpose.msra.mxu0 0.0
        %970 = vmatprep.subr.mxu0 0.0
        %971 = vmatpush1.xpose.msra.mxu0 0.0
        %972 = vmatprep.subr.mxu0 0.0
        %973 = vmatpush1.xpose.msra.mxu0 0.0
        %974 = vmatprep.subr.mxu0 0.0
        %975 = vmatpush1.xpose.msra.mxu0 0.0
        %976 = vmatprep.subr.mxu0 0.0
        %977 = vmatpush1.xpose.msra.mxu0 0.0
        %978 = vmatprep.subr.mxu0 0.0
        %979 = vmatpush1.xpose.msra.mxu0 0.0
        %980 = vmatprep.subr.mxu0 0.0
        %981 = vmatpush1.xpose.msra.mxu0 0.0
        %982 = vmatprep.subr.mxu0 0.0
        %983 = vmatpush1.xpose.msra.mxu0 0.0
        %984 = vmatprep.subr.mxu0 0.0
        %985 = vmatpush1.xpose.msra.mxu0 0.0
        %986 = vmatprep.subr.mxu0 0.0
        %987 = vmatpush1.xpose.msra.mxu0 0.0
        %988 = vmatprep.subr.mxu0 0.0
        %989 = vmatpush1.xpose.msra.mxu0 0.0
        %990 = vmatprep.subr.mxu0 0.0
        %991 = vmatpush1.xpose.msra.mxu0 0.0
        %992 = vmatprep.subr.mxu0 0.0
        %993 = vmatpush1.xpose.msra.mxu0 0.0
        %994 = vmatprep.subr.mxu0 0.0
        %995 = vmatpush1.xpose.msra.mxu0 0.0
        %996 = vmatprep.subr.mxu0 0.0
        %997 = vmatpush1.xpose.msra.mxu0 0.0
        %998 = vmatprep.subr.mxu0 0.0
        %999 = vmatpush1.xpose.msra.mxu0 0.0
        %1000 = vmatprep.subr.mxu0 0.0
        %1001 = vmatpush1.xpose.msra.mxu0 0.0
        %1002 = vmatprep.subr.mxu0 0.0
        %1003 = vmatpush1.xpose.msra.mxu0 0.0
        %1004 = vmatprep.subr.mxu0 0.0
        %1005 = vmatpush1.xpose.msra.mxu0 0.0
        %1006 = vmatprep.subr.mxu0 0.0
        %1007 = vmatpush1.xpose.msra.mxu0 0.0
        %1008 = vmatprep.subr.mxu0 0.0
        %1009 = vmatpush1.xpose.msra.mxu0 0.0
        %1010 = vmatprep.subr.mxu0 0.0
        %1011 = vmatpush1.xpose.msra.mxu0 0.0
        %1012 = vmatprep.subr.mxu0 0.0
        %1013 = vmatpush1.xpose.msra.mxu0 0.0
        %1014 = vmatprep.subr.mxu0 0.0
        %1015 = vmatpush1.xpose.msra.mxu0 0.0
        %1016 = vmatprep.subr.mxu0 0.0
        %1017 = vmatpush1.xpose.msra.mxu0 0.0
        %1018 = vmatprep.mubr.f32.mxu0 0.0
        %1019 = vmatmul.mubr.f32.gmra.mrb[0].mxu0 %v950
        %v1020 = vpop.f32.mrb[0].mxu0
        %v1021 = vadd.f32 0.0, %v1020
        %v1022 = vpop.f32.mrb[0].mxu0
        %1023 = vdwg.mxu0
        %1024 = vrot.lane.b32.xlu0 %v548, 96
        %v1025 = vpop.permute.xlu0 %1024
        %v1026 = vsel %vm569, %v548, 0
        %v1028 = vsel %vm569, %v1025, 0
        %1030 = vmatprep.subr.mxu0 0.0
        %1031 = vmatpush1.xpose.msra.mxu0 %v1028
        %1032 = vmatprep.subr.mxu0 0.0
        %1033 = vmatpush1.xpose.msra.mxu0 0.0
        %1034 = vmatprep.subr.mxu0 0.0
        %1035 = vmatpush1.xpose.msra.mxu0 0.0
        %1036 = vmatprep.subr.mxu0 0.0
        %1037 = vmatpush1.xpose.msra.mxu0 0.0
        %1038 = vmatprep.subr.mxu0 0.0
        %1039 = vmatpush1.xpose.msra.mxu0 0.0
        %1040 = vmatprep.subr.mxu0 0.0
        %1041 = vmatpush1.xpose.msra.mxu0 0.0
        %1042 = vmatprep.subr.mxu0 0.0
        %1043 = vmatpush1.xpose.msra.mxu0 0.0
        %1044 = vmatprep.subr.mxu0 0.0
        %1045 = vmatpush1.xpose.msra.mxu0 0.0
        %1046 = vmatprep.subr.mxu0 0.0
        %1047 = vmatpush1.xpose.msra.mxu0 0.0
        %1048 = vmatprep.subr.mxu0 0.0
        %1049 = vmatpush1.xpose.msra.mxu0 0.0
        %1050 = vmatprep.subr.mxu0 0.0
        %1051 = vmatpush1.xpose.msra.mxu0 0.0
        %1052 = vmatprep.subr.mxu0 0.0
        %1053 = vmatpush1.xpose.msra.mxu0 0.0
        %1054 = vmatprep.subr.mxu0 0.0
        %1055 = vmatpush1.xpose.msra.mxu0 0.0
        %1056 = vmatprep.subr.mxu0 0.0
        %1057 = vmatpush1.xpose.msra.mxu0 0.0
        %1058 = vmatprep.subr.mxu0 0.0
        %1059 = vmatpush1.xpose.msra.mxu0 0.0
        %1060 = vmatprep.subr.mxu0 0.0
        %1061 = vmatpush1.xpose.msra.mxu0 0.0
        %1062 = vmatprep.subr.mxu0 0.0
        %1063 = vmatpush1.xpose.msra.mxu0 0.0
        %1064 = vmatprep.subr.mxu0 0.0
        %1065 = vmatpush1.xpose.msra.mxu0 0.0
        %1066 = vmatprep.subr.mxu0 0.0
        %1067 = vmatpush1.xpose.msra.mxu0 0.0
        %1068 = vmatprep.subr.mxu0 0.0
        %1069 = vmatpush1.xpose.msra.mxu0 0.0
        %1070 = vmatprep.subr.mxu0 0.0
        %1071 = vmatpush1.xpose.msra.mxu0 0.0
        %1072 = vmatprep.subr.mxu0 0.0
        %1073 = vmatpush1.xpose.msra.mxu0 0.0
        %1074 = vmatprep.subr.mxu0 0.0
        %1075 = vmatpush1.xpose.msra.mxu0 0.0
        %1076 = vmatprep.subr.mxu0 0.0
        %1077 = vmatpush1.xpose.msra.mxu0 0.0
        %1078 = vmatprep.subr.mxu0 0.0
        %1079 = vmatpush1.xpose.msra.mxu0 0.0
        %1080 = vmatprep.subr.mxu0 0.0
        %1081 = vmatpush1.xpose.msra.mxu0 0.0
        %1082 = vmatprep.subr.mxu0 0.0
        %1083 = vmatpush1.xpose.msra.mxu0 0.0
        %1084 = vmatprep.subr.mxu0 0.0
        %1085 = vmatpush1.xpose.msra.mxu0 0.0
        %1086 = vmatprep.subr.mxu0 0.0
        %1087 = vmatpush1.xpose.msra.mxu0 0.0
        %1088 = vmatprep.subr.mxu0 0.0
        %1089 = vmatpush1.xpose.msra.mxu0 0.0
        %1090 = vmatprep.subr.mxu0 0.0
        %1091 = vmatpush1.xpose.msra.mxu0 0.0
        %1092 = vmatprep.subr.mxu0 0.0
        %1093 = vmatpush1.xpose.msra.mxu0 0.0
        %1094 = vmatprep.mubr.f32.mxu0 0.0
        %1095 = vmatmul.mubr.f32.gmra.mrb[0].mxu0 %v1026
        %v1096 = vpop.f32.mrb[0].mxu0
        %v1097 = vadd.f32 0.0, %v1096
        %v1098 = vpop.f32.mrb[0].mxu0
        %1099 = vdwg.mxu0
        %1100 = vrot.lane.b32.xlu0 %v550, 96
        %v1101 = vpop.permute.xlu0 %1100
        %v1102 = vsel %vm569, %v550, 0
        %v1104 = vsel %vm569, %v1101, 0
        %1106 = vmatprep.subr.mxu0 0.0
        %1107 = vmatpush1.xpose.msra.mxu0 %v1104
        %1108 = vmatprep.subr.mxu0 0.0
        %1109 = vmatpush1.xpose.msra.mxu0 0.0
        %1110 = vmatprep.subr.mxu0 0.0
        %1111 = vmatpush1.xpose.msra.mxu0 0.0
        %1112 = vmatprep.subr.mxu0 0.0
        %1113 = vmatpush1.xpose.msra.mxu0 0.0
        %1114 = vmatprep.subr.mxu0 0.0
        %1115 = vmatpush1.xpose.msra.mxu0 0.0
        %1116 = vmatprep.subr.mxu0 0.0
        %1117 = vmatpush1.xpose.msra.mxu0 0.0
        %1118 = vmatprep.subr.mxu0 0.0
        %1119 = vmatpush1.xpose.msra.mxu0 0.0
        %1120 = vmatprep.subr.mxu0 0.0
        %1121 = vmatpush1.xpose.msra.mxu0 0.0
        %1122 = vmatprep.subr.mxu0 0.0
        %1123 = vmatpush1.xpose.msra.mxu0 0.0
        %1124 = vmatprep.subr.mxu0 0.0
        %1125 = vmatpush1.xpose.msra.mxu0 0.0
        %1126 = vmatprep.subr.mxu0 0.0
        %1127 = vmatpush1.xpose.msra.mxu0 0.0
        %1128 = vmatprep.subr.mxu0 0.0
        %1129 = vmatpush1.xpose.msra.mxu0 0.0
        %1130 = vmatprep.subr.mxu0 0.0
        %1131 = vmatpush1.xpose.msra.mxu0 0.0
        %1132 = vmatprep.subr.mxu0 0.0
        %1133 = vmatpush1.xpose.msra.mxu0 0.0
        %1134 = vmatprep.subr.mxu0 0.0
        %1135 = vmatpush1.xpose.msra.mxu0 0.0
        %1136 = vmatprep.subr.mxu0 0.0
        %1137 = vmatpush1.xpose.msra.mxu0 0.0
        %1138 = vmatprep.subr.mxu0 0.0
        %1139 = vmatpush1.xpose.msra.mxu0 0.0
        %1140 = vmatprep.subr.mxu0 0.0
        %1141 = vmatpush1.xpose.msra.mxu0 0.0
        %1142 = vmatprep.subr.mxu0 0.0
        %1143 = vmatpush1.xpose.msra.mxu0 0.0
        %1144 = vmatprep.subr.mxu0 0.0
        %1145 = vmatpush1.xpose.msra.mxu0 0.0
        %1146 = vmatprep.subr.mxu0 0.0
        %1147 = vmatpush1.xpose.msra.mxu0 0.0
        %1148 = vmatprep.subr.mxu0 0.0
        %1149 = vmatpush1.xpose.msra.mxu0 0.0
        %1150 = vmatprep.subr.mxu0 0.0
        %1151 = vmatpush1.xpose.msra.mxu0 0.0
        %1152 = vmatprep.subr.mxu0 0.0
        %1153 = vmatpush1.xpose.msra.mxu0 0.0
        %1154 = vmatprep.subr.mxu0 0.0
        %1155 = vmatpush1.xpose.msra.mxu0 0.0
        %1156 = vmatprep.subr.mxu0 0.0
        %1157 = vmatpush1.xpose.msra.mxu0 0.0
        %1158 = vmatprep.subr.mxu0 0.0
        %1159 = vmatpush1.xpose.msra.mxu0 0.0
        %1160 = vmatprep.subr.mxu0 0.0
        %1161 = vmatpush1.xpose.msra.mxu0 0.0
        %1162 = vmatprep.subr.mxu0 0.0
        %1163 = vmatpush1.xpose.msra.mxu0 0.0
        %1164 = vmatprep.subr.mxu0 0.0
        %1165 = vmatpush1.xpose.msra.mxu0 0.0
        %1166 = vmatprep.subr.mxu0 0.0
        %1167 = vmatpush1.xpose.msra.mxu0 0.0
        %1168 = vmatprep.subr.mxu0 0.0
        %1169 = vmatpush1.xpose.msra.mxu0 0.0
        %1170 = vmatprep.mubr.f32.mxu0 0.0
        %1171 = vmatmul.mubr.f32.gmra.mrb[0].mxu0 %v1102
        %v1172 = vpop.f32.mrb[0].mxu0
        %v1173 = vadd.f32 0.0, %v1172
        %v1174 = vpop.f32.mrb[0].mxu0
        %1175 = vdwg.mxu0
        %1176 = vrot.lane.b32.xlu0 %v552, 96
        %v1177 = vpop.permute.xlu0 %1176
        %v1178 = vsel %vm569, %v552, 0
        %v1180 = vsel %vm569, %v1177, 0
        %1182 = vmatprep.subr.mxu0 0.0
        %1183 = vmatpush1.xpose.msra.mxu0 %v1180
        %1184 = vmatprep.subr.mxu0 0.0
        %1185 = vmatpush1.xpose.msra.mxu0 0.0
        %1186 = vmatprep.subr.mxu0 0.0
        %1187 = vmatpush1.xpose.msra.mxu0 0.0
        %1188 = vmatprep.subr.mxu0 0.0
        %1189 = vmatpush1.xpose.msra.mxu0 0.0
        %1190 = vmatprep.subr.mxu0 0.0
        %1191 = vmatpush1.xpose.msra.mxu0 0.0
        %1192 = vmatprep.subr.mxu0 0.0
        %1193 = vmatpush1.xpose.msra.mxu0 0.0
        %1194 = vmatprep.subr.mxu0 0.0
        %1195 = vmatpush1.xpose.msra.mxu0 0.0
        %1196 = vmatprep.subr.mxu0 0.0
        %1197 = vmatpush1.xpose.msra.mxu0 0.0
        %1198 = vmatprep.subr.mxu0 0.0
        %1199 = vmatpush1.xpose.msra.mxu0 0.0
        %1200 = vmatprep.subr.mxu0 0.0
        %1201 = vmatpush1.xpose.msra.mxu0 0.0
        %1202 = vmatprep.subr.mxu0 0.0
        %1203 = vmatpush1.xpose.msra.mxu0 0.0
        %1204 = vmatprep.subr.mxu0 0.0
        %1205 = vmatpush1.xpose.msra.mxu0 0.0
        %1206 = vmatprep.subr.mxu0 0.0
        %1207 = vmatpush1.xpose.msra.mxu0 0.0
        %1208 = vmatprep.subr.mxu0 0.0
        %1209 = vmatpush1.xpose.msra.mxu0 0.0
        %1210 = vmatprep.subr.mxu0 0.0
        %1211 = vmatpush1.xpose.msra.mxu0 0.0
        %1212 = vmatprep.subr.mxu0 0.0
        %1213 = vmatpush1.xpose.msra.mxu0 0.0
        %1214 = vmatprep.subr.mxu0 0.0
        %1215 = vmatpush1.xpose.msra.mxu0 0.0
        %1216 = vmatprep.subr.mxu0 0.0
        %1217 = vmatpush1.xpose.msra.mxu0 0.0
        %1218 = vmatprep.subr.mxu0 0.0
        %1219 = vmatpush1.xpose.msra.mxu0 0.0
        %1220 = vmatprep.subr.mxu0 0.0
        %1221 = vmatpush1.xpose.msra.mxu0 0.0
        %1222 = vmatprep.subr.mxu0 0.0
        %1223 = vmatpush1.xpose.msra.mxu0 0.0
        %1224 = vmatprep.subr.mxu0 0.0
        %1225 = vmatpush1.xpose.msra.mxu0 0.0
        %1226 = vmatprep.subr.mxu0 0.0
        %1227 = vmatpush1.xpose.msra.mxu0 0.0
        %1228 = vmatprep.subr.mxu0 0.0
        %1229 = vmatpush1.xpose.msra.mxu0 0.0
        %1230 = vmatprep.subr.mxu0 0.0
        %1231 = vmatpush1.xpose.msra.mxu0 0.0
        %1232 = vmatprep.subr.mxu0 0.0
        %1233 = vmatpush1.xpose.msra.mxu0 0.0
        %1234 = vmatprep.subr.mxu0 0.0
        %1235 = vmatpush1.xpose.msra.mxu0 0.0
        %1236 = vmatprep.subr.mxu0 0.0
        %1237 = vmatpush1.xpose.msra.mxu0 0.0
        %1238 = vmatprep.subr.mxu0 0.0
        %1239 = vmatpush1.xpose.msra.mxu0 0.0
        %1240 = vmatprep.subr.mxu0 0.0
        %1241 = vmatpush1.xpose.msra.mxu0 0.0
        %1242 = vmatprep.subr.mxu0 0.0
        %1243 = vmatpush1.xpose.msra.mxu0 0.0
        %1244 = vmatprep.subr.mxu0 0.0
        %1245 = vmatpush1.xpose.msra.mxu0 0.0
        %1246 = vmatprep.mubr.f32.mxu0 0.0
        %1247 = vmatmul.mubr.f32.gmra.mrb[0].mxu0 %v1178
        %v1248 = vpop.f32.mrb[0].mxu0
        %v1249 = vadd.f32 0.0, %v1248
        %v1250 = vpop.f32.mrb[0].mxu0
        %1251 = vdwg.mxu0
        %1252 = vrot.lane.b32.xlu0 %v554, 96
        %v1253 = vpop.permute.xlu0 %1252
        %v1254 = vsel %vm569, %v554, 0
        %v1256 = vsel %vm569, %v1253, 0
        %1258 = vmatprep.subr.mxu0 0.0
        %1259 = vmatpush1.xpose.msra.mxu0 %v1256
        %1260 = vmatprep.subr.mxu0 0.0
        %1261 = vmatpush1.xpose.msra.mxu0 0.0
        %1262 = vmatprep.subr.mxu0 0.0
        %1263 = vmatpush1.xpose.msra.mxu0 0.0
        %1264 = vmatprep.subr.mxu0 0.0
        %1265 = vmatpush1.xpose.msra.mxu0 0.0
        %1266 = vmatprep.subr.mxu0 0.0
        %1267 = vmatpush1.xpose.msra.mxu0 0.0
        %1268 = vmatprep.subr.mxu0 0.0
        %1269 = vmatpush1.xpose.msra.mxu0 0.0
        %1270 = vmatprep.subr.mxu0 0.0
        %1271 = vmatpush1.xpose.msra.mxu0 0.0
        %1272 = vmatprep.subr.mxu0 0.0
        %1273 = vmatpush1.xpose.msra.mxu0 0.0
        %1274 = vmatprep.subr.mxu0 0.0
        %1275 = vmatpush1.xpose.msra.mxu0 0.0
        %1276 = vmatprep.subr.mxu0 0.0
        %1277 = vmatpush1.xpose.msra.mxu0 0.0
        %1278 = vmatprep.subr.mxu0 0.0
        %1279 = vmatpush1.xpose.msra.mxu0 0.0
        %1280 = vmatprep.subr.mxu0 0.0
        %1281 = vmatpush1.xpose.msra.mxu0 0.0
        %1282 = vmatprep.subr.mxu0 0.0
        %1283 = vmatpush1.xpose.msra.mxu0 0.0
        %1284 = vmatprep.subr.mxu0 0.0
        %1285 = vmatpush1.xpose.msra.mxu0 0.0
        %1286 = vmatprep.subr.mxu0 0.0
        %1287 = vmatpush1.xpose.msra.mxu0 0.0
        %1288 = vmatprep.subr.mxu0 0.0
        %1289 = vmatpush1.xpose.msra.mxu0 0.0
        %1290 = vmatprep.subr.mxu0 0.0
        %1291 = vmatpush1.xpose.msra.mxu0 0.0
        %1292 = vmatprep.subr.mxu0 0.0
        %1293 = vmatpush1.xpose.msra.mxu0 0.0
        %1294 = vmatprep.subr.mxu0 0.0
        %1295 = vmatpush1.xpose.msra.mxu0 0.0
        %1296 = vmatprep.subr.mxu0 0.0
        %1297 = vmatpush1.xpose.msra.mxu0 0.0
        %1298 = vmatprep.subr.mxu0 0.0
        %1299 = vmatpush1.xpose.msra.mxu0 0.0
        %1300 = vmatprep.subr.mxu0 0.0
        %1301 = vmatpush1.xpose.msra.mxu0 0.0
        %1302 = vmatprep.subr.mxu0 0.0
        %1303 = vmatpush1.xpose.msra.mxu0 0.0
        %1304 = vmatprep.subr.mxu0 0.0
        %1305 = vmatpush1.xpose.msra.mxu0 0.0
        %1306 = vmatprep.subr.mxu0 0.0
        %1307 = vmatpush1.xpose.msra.mxu0 0.0
        %1308 = vmatprep.subr.mxu0 0.0
        %1309 = vmatpush1.xpose.msra.mxu0 0.0
        %1310 = vmatprep.subr.mxu0 0.0
        %1311 = vmatpush1.xpose.msra.mxu0 0.0
        %1312 = vmatprep.subr.mxu0 0.0
        %1313 = vmatpush1.xpose.msra.mxu0 0.0
        %1314 = vmatprep.subr.mxu0 0.0
        %1315 = vmatpush1.xpose.msra.mxu0 0.0
        %1316 = vmatprep.subr.mxu0 0.0
        %1317 = vmatpush1.xpose.msra.mxu0 0.0
        %1318 = vmatprep.subr.mxu0 0.0
        %1319 = vmatpush1.xpose.msra.mxu0 0.0
        %1320 = vmatprep.subr.mxu0 0.0
        %1321 = vmatpush1.xpose.msra.mxu0 0.0
        %1322 = vmatprep.mubr.f32.mxu0 0.0
        %1323 = vmatmul.mubr.f32.gmra.mrb[0].mxu0 %v1254
        %v1324 = vpop.f32.mrb[0].mxu0
        %v1325 = vadd.f32 0.0, %v1324
        %v1326 = vpop.f32.mrb[0].mxu0
        %1327 = vdwg.mxu0
        %1328 = vrot.lane.b32.xlu0 %v556, 96
        %v1329 = vpop.permute.xlu0 %1328
        %v1330 = vsel %vm569, %v556, 0
        %v1332 = vsel %vm569, %v1329, 0
        %1334 = vmatprep.subr.mxu0 0.0
        %1335 = vmatpush1.xpose.msra.mxu0 %v1332
        %1336 = vmatprep.subr.mxu0 0.0
        %1337 = vmatpush1.xpose.msra.mxu0 0.0
        %1338 = vmatprep.subr.mxu0 0.0
        %1339 = vmatpush1.xpose.msra.mxu0 0.0
        %1340 = vmatprep.subr.mxu0 0.0
        %1341 = vmatpush1.xpose.msra.mxu0 0.0
        %1342 = vmatprep.subr.mxu0 0.0
        %1343 = vmatpush1.xpose.msra.mxu0 0.0
        %1344 = vmatprep.subr.mxu0 0.0
        %1345 = vmatpush1.xpose.msra.mxu0 0.0
        %1346 = vmatprep.subr.mxu0 0.0
        %1347 = vmatpush1.xpose.msra.mxu0 0.0
        %1348 = vmatprep.subr.mxu0 0.0
        %1349 = vmatpush1.xpose.msra.mxu0 0.0
        %1350 = vmatprep.subr.mxu0 0.0
        %1351 = vmatpush1.xpose.msra.mxu0 0.0
        %1352 = vmatprep.subr.mxu0 0.0
        %1353 = vmatpush1.xpose.msra.mxu0 0.0
        %1354 = vmatprep.subr.mxu0 0.0
        %1355 = vmatpush1.xpose.msra.mxu0 0.0
        %1356 = vmatprep.subr.mxu0 0.0
        %1357 = vmatpush1.xpose.msra.mxu0 0.0
        %1358 = vmatprep.subr.mxu0 0.0
        %1359 = vmatpush1.xpose.msra.mxu0 0.0
        %1360 = vmatprep.subr.mxu0 0.0
        %1361 = vmatpush1.xpose.msra.mxu0 0.0
        %1362 = vmatprep.subr.mxu0 0.0
        %1363 = vmatpush1.xpose.msra.mxu0 0.0
        %1364 = vmatprep.subr.mxu0 0.0
        %1365 = vmatpush1.xpose.msra.mxu0 0.0
        %1366 = vmatprep.subr.mxu0 0.0
        %1367 = vmatpush1.xpose.msra.mxu0 0.0
        %1368 = vmatprep.subr.mxu0 0.0
        %1369 = vmatpush1.xpose.msra.mxu0 0.0
        %1370 = vmatprep.subr.mxu0 0.0
        %1371 = vmatpush1.xpose.msra.mxu0 0.0
        %1372 = vmatprep.subr.mxu0 0.0
        %1373 = vmatpush1.xpose.msra.mxu0 0.0
        %1374 = vmatprep.subr.mxu0 0.0
        %1375 = vmatpush1.xpose.msra.mxu0 0.0
        %1376 = vmatprep.subr.mxu0 0.0
        %1377 = vmatpush1.xpose.msra.mxu0 0.0
        %1378 = vmatprep.subr.mxu0 0.0
        %1379 = vmatpush1.xpose.msra.mxu0 0.0
        %1380 = vmatprep.subr.mxu0 0.0
        %1381 = vmatpush1.xpose.msra.mxu0 0.0
        %1382 = vmatprep.subr.mxu0 0.0
        %1383 = vmatpush1.xpose.msra.mxu0 0.0
        %1384 = vmatprep.subr.mxu0 0.0
        %1385 = vmatpush1.xpose.msra.mxu0 0.0
        %1386 = vmatprep.subr.mxu0 0.0
        %1387 = vmatpush1.xpose.msra.mxu0 0.0
        %1388 = vmatprep.subr.mxu0 0.0
        %1389 = vmatpush1.xpose.msra.mxu0 0.0
        %1390 = vmatprep.subr.mxu0 0.0
        %1391 = vmatpush1.xpose.msra.mxu0 0.0
        %1392 = vmatprep.subr.mxu0 0.0
        %1393 = vmatpush1.xpose.msra.mxu0 0.0
        %1394 = vmatprep.subr.mxu0 0.0
        %1395 = vmatpush1.xpose.msra.mxu0 0.0
        %1396 = vmatprep.subr.mxu0 0.0
        %1397 = vmatpush1.xpose.msra.mxu0 0.0
        %1398 = vmatprep.mubr.f32.mxu0 0.0
        %1399 = vmatmul.mubr.f32.gmra.mrb[0].mxu0 %v1330
        %v1400 = vpop.f32.mrb[0].mxu0
        %v1401 = vadd.f32 0.0, %v1400
        %v1402 = vpop.f32.mrb[0].mxu0
        %1403 = vdwg.mxu0
        %1404 = vrot.lane.b32.xlu0 %v558, 96
        %v1405 = vpop.permute.xlu0 %1404
        %v1406 = vsel %vm569, %v558, 0
        %v1408 = vsel %vm569, %v1405, 0
        %1410 = vmatprep.subr.mxu0 0.0
        %1411 = vmatpush1.xpose.msra.mxu0 %v1408
        %1412 = vmatprep.subr.mxu0 0.0
        %1413 = vmatpush1.xpose.msra.mxu0 0.0
        %1414 = vmatprep.subr.mxu0 0.0
        %1415 = vmatpush1.xpose.msra.mxu0 0.0
        %1416 = vmatprep.subr.mxu0 0.0
        %1417 = vmatpush1.xpose.msra.mxu0 0.0
        %1418 = vmatprep.subr.mxu0 0.0
        %1419 = vmatpush1.xpose.msra.mxu0 0.0
        %1420 = vmatprep.subr.mxu0 0.0
        %1421 = vmatpush1.xpose.msra.mxu0 0.0
        %1422 = vmatprep.subr.mxu0 0.0
        %1423 = vmatpush1.xpose.msra.mxu0 0.0
        %1424 = vmatprep.subr.mxu0 0.0
        %1425 = vmatpush1.xpose.msra.mxu0 0.0
        %1426 = vmatprep.subr.mxu0 0.0
        %1427 = vmatpush1.xpose.msra.mxu0 0.0
        %1428 = vmatprep.subr.mxu0 0.0
        %1429 = vmatpush1.xpose.msra.mxu0 0.0
        %1430 = vmatprep.subr.mxu0 0.0
        %1431 = vmatpush1.xpose.msra.mxu0 0.0
        %1432 = vmatprep.subr.mxu0 0.0
        %1433 = vmatpush1.xpose.msra.mxu0 0.0
        %1434 = vmatprep.subr.mxu0 0.0
        %1435 = vmatpush1.xpose.msra.mxu0 0.0
        %1436 = vmatprep.subr.mxu0 0.0
        %1437 = vmatpush1.xpose.msra.mxu0 0.0
        %1438 = vmatprep.subr.mxu0 0.0
        %1439 = vmatpush1.xpose.msra.mxu0 0.0
        %1440 = vmatprep.subr.mxu0 0.0
        %1441 = vmatpush1.xpose.msra.mxu0 0.0
        %1442 = vmatprep.subr.mxu0 0.0
        %1443 = vmatpush1.xpose.msra.mxu0 0.0
        %1444 = vmatprep.subr.mxu0 0.0
        %1445 = vmatpush1.xpose.msra.mxu0 0.0
        %1446 = vmatprep.subr.mxu0 0.0
        %1447 = vmatpush1.xpose.msra.mxu0 0.0
        %1448 = vmatprep.subr.mxu0 0.0
        %1449 = vmatpush1.xpose.msra.mxu0 0.0
        %1450 = vmatprep.subr.mxu0 0.0
        %1451 = vmatpush1.xpose.msra.mxu0 0.0
        %1452 = vmatprep.subr.mxu0 0.0
        %1453 = vmatpush1.xpose.msra.mxu0 0.0
        %1454 = vmatprep.subr.mxu0 0.0
        %1455 = vmatpush1.xpose.msra.mxu0 0.0
        %1456 = vmatprep.subr.mxu0 0.0
        %1457 = vmatpush1.xpose.msra.mxu0 0.0
        %1458 = vmatprep.subr.mxu0 0.0
        %1459 = vmatpush1.xpose.msra.mxu0 0.0
        %1460 = vmatprep.subr.mxu0 0.0
        %1461 = vmatpush1.xpose.msra.mxu0 0.0
        %1462 = vmatprep.subr.mxu0 0.0
        %1463 = vmatpush1.xpose.msra.mxu0 0.0
        %1464 = vmatprep.subr.mxu0 0.0
        %1465 = vmatpush1.xpose.msra.mxu0 0.0
        %1466 = vmatprep.subr.mxu0 0.0
        %1467 = vmatpush1.xpose.msra.mxu0 0.0
        %1468 = vmatprep.subr.mxu0 0.0
        %1469 = vmatpush1.xpose.msra.mxu0 0.0
        %1470 = vmatprep.subr.mxu0 0.0
        %1471 = vmatpush1.xpose.msra.mxu0 0.0
        %1472 = vmatprep.subr.mxu0 0.0
        %1473 = vmatpush1.xpose.msra.mxu0 0.0
        %1474 = vmatprep.mubr.f32.mxu0 0.0
        %1475 = vmatmul.mubr.f32.gmra.mrb[0].mxu0 %v1406
        %v1476 = vpop.f32.mrb[0].mxu0
        %v1477 = vadd.f32 0.0, %v1476
        %v1478 = vpop.f32.mrb[0].mxu0
        %1479 = vdwg.mxu0
        %1480 = vrot.lane.b32.xlu0 %v560, 96
        %v1481 = vpop.permute.xlu0 %1480
        %v1482 = vsel %vm569, %v560, 0
        %v1484 = vsel %vm569, %v1481, 0
        %1486 = vmatprep.subr.mxu0 0.0
        %1487 = vmatpush1.xpose.msra.mxu0 %v1484
        %1488 = vmatprep.subr.mxu0 0.0
        %1489 = vmatpush1.xpose.msra.mxu0 0.0
        %1490 = vmatprep.subr.mxu0 0.0
        %1491 = vmatpush1.xpose.msra.mxu0 0.0
        %1492 = vmatprep.subr.mxu0 0.0
        %1493 = vmatpush1.xpose.msra.mxu0 0.0
        %1494 = vmatprep.subr.mxu0 0.0
        %1495 = vmatpush1.xpose.msra.mxu0 0.0
        %1496 = vmatprep.subr.mxu0 0.0
        %1497 = vmatpush1.xpose.msra.mxu0 0.0
        %1498 = vmatprep.subr.mxu0 0.0
        %1499 = vmatpush1.xpose.msra.mxu0 0.0
        %1500 = vmatprep.subr.mxu0 0.0
        %1501 = vmatpush1.xpose.msra.mxu0 0.0
        %1502 = vmatprep.subr.mxu0 0.0
        %1503 = vmatpush1.xpose.msra.mxu0 0.0
        %1504 = vmatprep.subr.mxu0 0.0
        %1505 = vmatpush1.xpose.msra.mxu0 0.0
        %1506 = vmatprep.subr.mxu0 0.0
        %1507 = vmatpush1.xpose.msra.mxu0 0.0
        %1508 = vmatprep.subr.mxu0 0.0
        %1509 = vmatpush1.xpose.msra.mxu0 0.0
        %1510 = vmatprep.subr.mxu0 0.0
        %1511 = vmatpush1.xpose.msra.mxu0 0.0
        %1512 = vmatprep.subr.mxu0 0.0
        %1513 = vmatpush1.xpose.msra.mxu0 0.0
        %1514 = vmatprep.subr.mxu0 0.0
        %1515 = vmatpush1.xpose.msra.mxu0 0.0
        %1516 = vmatprep.subr.mxu0 0.0
        %1517 = vmatpush1.xpose.msra.mxu0 0.0
        %1518 = vmatprep.subr.mxu0 0.0
        %1519 = vmatpush1.xpose.msra.mxu0 0.0
        %1520 = vmatprep.subr.mxu0 0.0
        %1521 = vmatpush1.xpose.msra.mxu0 0.0
        %1522 = vmatprep.subr.mxu0 0.0
        %1523 = vmatpush1.xpose.msra.mxu0 0.0
        %1524 = vmatprep.subr.mxu0 0.0
        %1525 = vmatpush1.xpose.msra.mxu0 0.0
        %1526 = vmatprep.subr.mxu0 0.0
        %1527 = vmatpush1.xpose.msra.mxu0 0.0
        %1528 = vmatprep.subr.mxu0 0.0
        %1529 = vmatpush1.xpose.msra.mxu0 0.0
        %1530 = vmatprep.subr.mxu0 0.0
        %1531 = vmatpush1.xpose.msra.mxu0 0.0
        %1532 = vmatprep.subr.mxu0 0.0
        %1533 = vmatpush1.xpose.msra.mxu0 0.0
        %1534 = vmatprep.subr.mxu0 0.0
        %1535 = vmatpush1.xpose.msra.mxu0 0.0
        %1536 = vmatprep.subr.mxu0 0.0
        %1537 = vmatpush1.xpose.msra.mxu0 0.0
        %1538 = vmatprep.subr.mxu0 0.0
        %1539 = vmatpush1.xpose.msra.mxu0 0.0
        %1540 = vmatprep.subr.mxu0 0.0
        %1541 = vmatpush1.xpose.msra.mxu0 0.0
        %1542 = vmatprep.subr.mxu0 0.0
        %1543 = vmatpush1.xpose.msra.mxu0 0.0
        %1544 = vmatprep.subr.mxu0 0.0
        %1545 = vmatpush1.xpose.msra.mxu0 0.0
        %1546 = vmatprep.subr.mxu0 0.0
        %1547 = vmatpush1.xpose.msra.mxu0 0.0
        %1548 = vmatprep.subr.mxu0 0.0
        %1549 = vmatpush1.xpose.msra.mxu0 0.0
        %1550 = vmatprep.mubr.f32.mxu0 0.0
        %1551 = vmatmul.mubr.f32.gmra.mrb[0].mxu0 %v1482
        %v1552 = vpop.f32.mrb[0].mxu0
        %v1553 = vadd.f32 0.0, %v1552
        %v1554 = vpop.f32.mrb[0].mxu0
        %1555 = vdwg.mxu0
        %1556 = vrot.lane.b32.xlu0 %v562, 96
        %v1557 = vpop.permute.xlu0 %1556
        %v1558 = vsel %vm569, %v562, 0
        %v1560 = vsel %vm569, %v1557, 0
        %1562 = vmatprep.subr.mxu0 0.0
        %1563 = vmatpush1.xpose.msra.mxu0 %v1560
        %1564 = vmatprep.subr.mxu0 0.0
        %1565 = vmatpush1.xpose.msra.mxu0 0.0
        %1566 = vmatprep.subr.mxu0 0.0
        %1567 = vmatpush1.xpose.msra.mxu0 0.0
        %1568 = vmatprep.subr.mxu0 0.0
        %1569 = vmatpush1.xpose.msra.mxu0 0.0
        %1570 = vmatprep.subr.mxu0 0.0
        %1571 = vmatpush1.xpose.msra.mxu0 0.0
        %1572 = vmatprep.subr.mxu0 0.0
        %1573 = vmatpush1.xpose.msra.mxu0 0.0
        %1574 = vmatprep.subr.mxu0 0.0
        %1575 = vmatpush1.xpose.msra.mxu0 0.0
        %1576 = vmatprep.subr.mxu0 0.0
        %1577 = vmatpush1.xpose.msra.mxu0 0.0
        %1578 = vmatprep.subr.mxu0 0.0
        %1579 = vmatpush1.xpose.msra.mxu0 0.0
        %1580 = vmatprep.subr.mxu0 0.0
        %1581 = vmatpush1.xpose.msra.mxu0 0.0
        %1582 = vmatprep.subr.mxu0 0.0
        %1583 = vmatpush1.xpose.msra.mxu0 0.0
        %1584 = vmatprep.subr.mxu0 0.0
        %1585 = vmatpush1.xpose.msra.mxu0 0.0
        %1586 = vmatprep.subr.mxu0 0.0
        %1587 = vmatpush1.xpose.msra.mxu0 0.0
        %1588 = vmatprep.subr.mxu0 0.0
        %1589 = vmatpush1.xpose.msra.mxu0 0.0
        %1590 = vmatprep.subr.mxu0 0.0
        %1591 = vmatpush1.xpose.msra.mxu0 0.0
        %1592 = vmatprep.subr.mxu0 0.0
        %1593 = vmatpush1.xpose.msra.mxu0 0.0
        %1594 = vmatprep.subr.mxu0 0.0
        %1595 = vmatpush1.xpose.msra.mxu0 0.0
        %1596 = vmatprep.subr.mxu0 0.0
        %1597 = vmatpush1.xpose.msra.mxu0 0.0
        %1598 = vmatprep.subr.mxu0 0.0
        %1599 = vmatpush1.xpose.msra.mxu0 0.0
        %1600 = vmatprep.subr.mxu0 0.0
        %1601 = vmatpush1.xpose.msra.mxu0 0.0
        %1602 = vmatprep.subr.mxu0 0.0
        %1603 = vmatpush1.xpose.msra.mxu0 0.0
        %1604 = vmatprep.subr.mxu0 0.0
        %1605 = vmatpush1.xpose.msra.mxu0 0.0
        %1606 = vmatprep.subr.mxu0 0.0
        %1607 = vmatpush1.xpose.msra.mxu0 0.0
        %1608 = vmatprep.subr.mxu0 0.0
        %1609 = vmatpush1.xpose.msra.mxu0 0.0
        %1610 = vmatprep.subr.mxu0 0.0
        %1611 = vmatpush1.xpose.msra.mxu0 0.0
        %1612 = vmatprep.subr.mxu0 0.0
        %1613 = vmatpush1.xpose.msra.mxu0 0.0
        %1614 = vmatprep.subr.mxu0 0.0
        %1615 = vmatpush1.xpose.msra.mxu0 0.0
        %1616 = vmatprep.subr.mxu0 0.0
        %1617 = vmatpush1.xpose.msra.mxu0 0.0
        %1618 = vmatprep.subr.mxu0 0.0
        %1619 = vmatpush1.xpose.msra.mxu0 0.0
        %1620 = vmatprep.subr.mxu0 0.0
        %1621 = vmatpush1.xpose.msra.mxu0 0.0
        %1622 = vmatprep.subr.mxu0 0.0
        %1623 = vmatpush1.xpose.msra.mxu0 0.0
        %1624 = vmatprep.subr.mxu0 0.0
        %1625 = vmatpush1.xpose.msra.mxu0 0.0
        %1626 = vmatprep.mubr.f32.mxu0 0.0
        %1627 = vmatmul.mubr.f32.gmra.mrb[0].mxu0 %v1558
        %v1628 = vpop.f32.mrb[0].mxu0
        %v1629 = vadd.f32 0.0, %v1628
        %v1630 = vpop.f32.mrb[0].mxu0
        %1631 = vdwg.mxu0
        %1632 = vrot.lane.b32.xlu0 %v564, 96
        %v1633 = vpop.permute.xlu0 %1632
        %v1634 = vsel %vm569, %v564, 0
        %v1636 = vsel %vm569, %v1633, 0
        %1638 = vmatprep.subr.mxu0 0.0
        %1639 = vmatpush1.xpose.msra.mxu0 %v1636
        %1640 = vmatprep.subr.mxu0 0.0
        %1641 = vmatpush1.xpose.msra.mxu0 0.0
        %1642 = vmatprep.subr.mxu0 0.0
        %1643 = vmatpush1.xpose.msra.mxu0 0.0
        %1644 = vmatprep.subr.mxu0 0.0
        %1645 = vmatpush1.xpose.msra.mxu0 0.0
        %1646 = vmatprep.subr.mxu0 0.0
        %1647 = vmatpush1.xpose.msra.mxu0 0.0
        %1648 = vmatprep.subr.mxu0 0.0
        %1649 = vmatpush1.xpose.msra.mxu0 0.0
        %1650 = vmatprep.subr.mxu0 0.0
        %1651 = vmatpush1.xpose.msra.mxu0 0.0
        %1652 = vmatprep.subr.mxu0 0.0
        %1653 = vmatpush1.xpose.msra.mxu0 0.0
        %1654 = vmatprep.subr.mxu0 0.0
        %1655 = vmatpush1.xpose.msra.mxu0 0.0
        %1656 = vmatprep.subr.mxu0 0.0
        %1657 = vmatpush1.xpose.msra.mxu0 0.0
        %1658 = vmatprep.subr.mxu0 0.0
        %1659 = vmatpush1.xpose.msra.mxu0 0.0
        %1660 = vmatprep.subr.mxu0 0.0
        %1661 = vmatpush1.xpose.msra.mxu0 0.0
        %1662 = vmatprep.subr.mxu0 0.0
        %1663 = vmatpush1.xpose.msra.mxu0 0.0
        %1664 = vmatprep.subr.mxu0 0.0
        %1665 = vmatpush1.xpose.msra.mxu0 0.0
        %1666 = vmatprep.subr.mxu0 0.0
        %1667 = vmatpush1.xpose.msra.mxu0 0.0
        %1668 = vmatprep.subr.mxu0 0.0
        %1669 = vmatpush1.xpose.msra.mxu0 0.0
        %1670 = vmatprep.subr.mxu0 0.0
        %1671 = vmatpush1.xpose.msra.mxu0 0.0
        %1672 = vmatprep.subr.mxu0 0.0
        %1673 = vmatpush1.xpose.msra.mxu0 0.0
        %1674 = vmatprep.subr.mxu0 0.0
        %1675 = vmatpush1.xpose.msra.mxu0 0.0
        %1676 = vmatprep.subr.mxu0 0.0
        %1677 = vmatpush1.xpose.msra.mxu0 0.0
        %1678 = vmatprep.subr.mxu0 0.0
        %1679 = vmatpush1.xpose.msra.mxu0 0.0
        %1680 = vmatprep.subr.mxu0 0.0
        %1681 = vmatpush1.xpose.msra.mxu0 0.0
        %1682 = vmatprep.subr.mxu0 0.0
        %1683 = vmatpush1.xpose.msra.mxu0 0.0
        %1684 = vmatprep.subr.mxu0 0.0
        %1685 = vmatpush1.xpose.msra.mxu0 0.0
        %1686 = vmatprep.subr.mxu0 0.0
        %1687 = vmatpush1.xpose.msra.mxu0 0.0
        %1688 = vmatprep.subr.mxu0 0.0
        %1689 = vmatpush1.xpose.msra.mxu0 0.0
        %1690 = vmatprep.subr.mxu0 0.0
        %1691 = vmatpush1.xpose.msra.mxu0 0.0
        %1692 = vmatprep.subr.mxu0 0.0
        %1693 = vmatpush1.xpose.msra.mxu0 0.0
        %1694 = vmatprep.subr.mxu0 0.0
        %1695 = vmatpush1.xpose.msra.mxu0 0.0
        %1696 = vmatprep.subr.mxu0 0.0
        %1697 = vmatpush1.xpose.msra.mxu0 0.0
        %1698 = vmatprep.subr.mxu0 0.0
        %1699 = vmatpush1.xpose.msra.mxu0 0.0
        %1700 = vmatprep.subr.mxu0 0.0
        %1701 = vmatpush1.xpose.msra.mxu0 0.0
        %1702 = vmatprep.mubr.f32.mxu0 0.0
        %1703 = vmatmul.mubr.f32.gmra.mrb[0].mxu0 %v1634
        %v1704 = vpop.f32.mrb[0].mxu0
        %v1705 = vadd.f32 0.0, %v1704
        %v1706 = vpop.f32.mrb[0].mxu0
        %1707 = vdwg.mxu0
        %1708 = vrot.lane.b32.xlu0 %v566, 96
        %v1709 = vpop.permute.xlu0 %1708
        %v1710 = vsel %vm569, %v566, 0
        %v1712 = vsel %vm569, %v1709, 0
        %1714 = vmatprep.subr.mxu0 0.0
        %1715 = vmatpush1.xpose.msra.mxu0 %v1712
        %1716 = vmatprep.subr.mxu0 0.0
        %1717 = vmatpush1.xpose.msra.mxu0 0.0
        %1718 = vmatprep.subr.mxu0 0.0
        %1719 = vmatpush1.xpose.msra.mxu0 0.0
        %1720 = vmatprep.subr.mxu0 0.0
        %1721 = vmatpush1.xpose.msra.mxu0 0.0
        %1722 = vmatprep.subr.mxu0 0.0
        %1723 = vmatpush1.xpose.msra.mxu0 0.0
        %1724 = vmatprep.subr.mxu0 0.0
        %1725 = vmatpush1.xpose.msra.mxu0 0.0
        %1726 = vmatprep.subr.mxu0 0.0
        %1727 = vmatpush1.xpose.msra.mxu0 0.0
        %1728 = vmatprep.subr.mxu0 0.0
        %1729 = vmatpush1.xpose.msra.mxu0 0.0
        %1730 = vmatprep.subr.mxu0 0.0
        %1731 = vmatpush1.xpose.msra.mxu0 0.0
        %1732 = vmatprep.subr.mxu0 0.0
        %1733 = vmatpush1.xpose.msra.mxu0 0.0
        %1734 = vmatprep.subr.mxu0 0.0
        %1735 = vmatpush1.xpose.msra.mxu0 0.0
        %1736 = vmatprep.subr.mxu0 0.0
        %1737 = vmatpush1.xpose.msra.mxu0 0.0
        %1738 = vmatprep.subr.mxu0 0.0
        %1739 = vmatpush1.xpose.msra.mxu0 0.0
        %1740 = vmatprep.subr.mxu0 0.0
        %1741 = vmatpush1.xpose.msra.mxu0 0.0
        %1742 = vmatprep.subr.mxu0 0.0
        %1743 = vmatpush1.xpose.msra.mxu0 0.0
        %1744 = vmatprep.subr.mxu0 0.0
        %1745 = vmatpush1.xpose.msra.mxu0 0.0
        %1746 = vmatprep.subr.mxu0 0.0
        %1747 = vmatpush1.xpose.msra.mxu0 0.0
        %1748 = vmatprep.subr.mxu0 0.0
        %1749 = vmatpush1.xpose.msra.mxu0 0.0
        %1750 = vmatprep.subr.mxu0 0.0
        %1751 = vmatpush1.xpose.msra.mxu0 0.0
        %1752 = vmatprep.subr.mxu0 0.0
        %1753 = vmatpush1.xpose.msra.mxu0 0.0
        %1754 = vmatprep.subr.mxu0 0.0
        %1755 = vmatpush1.xpose.msra.mxu0 0.0
        %1756 = vmatprep.subr.mxu0 0.0
        %1757 = vmatpush1.xpose.msra.mxu0 0.0
        %1758 = vmatprep.subr.mxu0 0.0
        %1759 = vmatpush1.xpose.msra.mxu0 0.0
        %1760 = vmatprep.subr.mxu0 0.0
        %1761 = vmatpush1.xpose.msra.mxu0 0.0
        %1762 = vmatprep.subr.mxu0 0.0
        %1763 = vmatpush1.xpose.msra.mxu0 0.0
        %1764 = vmatprep.subr.mxu0 0.0
        %1765 = vmatpush1.xpose.msra.mxu0 0.0
        %1766 = vmatprep.subr.mxu0 0.0
        %1767 = vmatpush1.xpose.msra.mxu0 0.0
        %1768 = vmatprep.subr.mxu0 0.0
        %1769 = vmatpush1.xpose.msra.mxu0 0.0
        %1770 = vmatprep.subr.mxu0 0.0
        %1771 = vmatpush1.xpose.msra.mxu0 0.0
        %1772 = vmatprep.subr.mxu0 0.0
        %1773 = vmatpush1.xpose.msra.mxu0 0.0
        %1774 = vmatprep.subr.mxu0 0.0
        %1775 = vmatpush1.xpose.msra.mxu0 0.0
        %1776 = vmatprep.subr.mxu0 0.0
        %1777 = vmatpush1.xpose.msra.mxu0 0.0
        %1778 = vmatprep.mubr.f32.mxu0 0.0
        %1779 = vmatmul.mubr.f32.gmra.mrb[0].mxu0 %v1710
        %v1780 = vpop.f32.mrb[0].mxu0
        %v1781 = vadd.f32 0.0, %v1780
        %v1782 = vpop.f32.mrb[0].mxu0
        %1783 = vdwg.mxu0
        %v1784 = vsel %vm569, %v641, -inf
        %1785 = vmax.xlane.f32.xlu0 %v1784
        %v1786 = vpop.xlane.xlu0 %1785
        %v1787 = vsel %vm569, %v717, -inf
        %1788 = vmax.xlane.f32.xlu0 %v1787
        %v1789 = vpop.xlane.xlu0 %1788
        %v1790 = vsel %vm569, %v793, -inf
        %1791 = vmax.xlane.f32.xlu0 %v1790
        %v1792 = vpop.xlane.xlu0 %1791
        %v1793 = vsel %vm569, %v869, -inf
        %1794 = vmax.xlane.f32.xlu0 %v1793
        %v1795 = vpop.xlane.xlu0 %1794
        %v1796 = vsel %vm569, %v945, -inf
        %1797 = vmax.xlane.f32.xlu0 %v1796
        %v1798 = vpop.xlane.xlu0 %1797
        %v1799 = vsel %vm569, %v1021, -inf
        %1800 = vmax.xlane.f32.xlu0 %v1799
        %v1801 = vpop.xlane.xlu0 %1800
        %v1802 = vsel %vm569, %v1097, -inf
        %1803 = vmax.xlane.f32.xlu0 %v1802
        %v1804 = vpop.xlane.xlu0 %1803
        %v1805 = vsel %vm569, %v1173, -inf
        %1806 = vmax.xlane.f32.xlu0 %v1805
        %v1807 = vpop.xlane.xlu0 %1806
        %v1808 = vsel %vm569, %v1249, -inf
        %1809 = vmax.xlane.f32.xlu0 %v1808
        %v1810 = vpop.xlane.xlu0 %1809
        %v1811 = vsel %vm569, %v1325, -inf
        %1812 = vmax.xlane.f32.xlu0 %v1811
        %v1813 = vpop.xlane.xlu0 %1812
        %v1814 = vsel %vm569, %v1401, -inf
        %1815 = vmax.xlane.f32.xlu0 %v1814
        %v1816 = vpop.xlane.xlu0 %1815
        %v1817 = vsel %vm569, %v1477, -inf
        %1818 = vmax.xlane.f32.xlu0 %v1817
        %v1819 = vpop.xlane.xlu0 %1818
        %v1820 = vsel %vm569, %v1553, -inf
        %1821 = vmax.xlane.f32.xlu0 %v1820
        %v1822 = vpop.xlane.xlu0 %1821
        %v1823 = vsel %vm569, %v1629, -inf
        %1824 = vmax.xlane.f32.xlu0 %v1823
        %v1825 = vpop.xlane.xlu0 %1824
        %v1826 = vsel %vm569, %v1705, -inf
        %1827 = vmax.xlane.f32.xlu0 %v1826
        %v1828 = vpop.xlane.xlu0 %1827
        %v1829 = vsel %vm569, %v1781, -inf
        %1830 = vmax.xlane.f32.xlu0 %v1829
        %v1831 = vpop.xlane.xlu0 %1830
        %v1832 = vsub.f32 %v641, %v1786
        %v1833 = vsub.f32 %v717, %v1789
        %v1834 = vsub.f32 %v793, %v1792
        %v1835 = vsub.f32 %v869, %v1795
        %v1836 = vsub.f32 %v945, %v1798
        %v1837 = vsub.f32 %v1021, %v1801
        %v1838 = vsub.f32 %v1097, %v1804
        %v1839 = vsub.f32 %v1173, %v1807
        %v1840 = vsub.f32 %v1249, %v1810
        %v1841 = vsub.f32 %v1325, %v1813
        %v1842 = vsub.f32 %v1401, %v1816
        %v1843 = vsub.f32 %v1477, %v1819
        %v1844 = vsub.f32 %v1553, %v1822
        %v1845 = vsub.f32 %v1629, %v1825
        %v1846 = vsub.f32 %v1705, %v1828
        %v1847 = vsub.f32 %v1781, %v1831
        %v1848 = vmul.f32 %v1832, 1.442695
        %v1849 = vpow.pop %v1848
        %v1850 = vmul.f32 %v1833, 1.442695
        %v1851 = vpow.pop %v1850
        %v1852 = vmul.f32 %v1834, 1.442695
        %v1853 = vpow.pop %v1852
        %v1854 = vmul.f32 %v1835, 1.442695
        %v1855 = vpow.pop %v1854
        %v1856 = vmul.f32 %v1836, 1.442695
        %v1857 = vpow.pop %v1856
        %v1858 = vmul.f32 %v1837, 1.442695
        %v1859 = vpow.pop %v1858
        %v1860 = vmul.f32 %v1838, 1.442695
        %v1861 = vpow.pop %v1860
        %v1862 = vmul.f32 %v1839, 1.442695
        %v1863 = vpow.pop %v1862
        %v1864 = vmul.f32 %v1840, 1.442695
        %v1865 = vpow.pop %v1864
        %v1866 = vmul.f32 %v1841, 1.442695
        %v1867 = vpow.pop %v1866
        %v1868 = vmul.f32 %v1842, 1.442695
        %v1869 = vpow.pop %v1868
        %v1870 = vmul.f32 %v1843, 1.442695
        %v1871 = vpow.pop %v1870
        %v1872 = vmul.f32 %v1844, 1.442695
        %v1873 = vpow.pop %v1872
        %v1874 = vmul.f32 %v1845, 1.442695
        %v1875 = vpow.pop %v1874
        %v1876 = vmul.f32 %v1846, 1.442695
        %v1877 = vpow.pop %v1876
        %v1878 = vmul.f32 %v1847, 1.442695
        %v1879 = vpow.pop %v1878
        %v1880 = vsel %vm569, %v1849, 0.0
        %1881 = vadd.xlane.f32.xlu0 %v1880
        %v1882 = vpop.xlane.xlu0 %1881
        %v1883 = vsel %vm569, %v1851, 0.0
        %1884 = vadd.xlane.f32.xlu0 %v1883
        %v1885 = vpop.xlane.xlu0 %1884
        %v1886 = vsel %vm569, %v1853, 0.0
        %1887 = vadd.xlane.f32.xlu0 %v1886
        %v1888 = vpop.xlane.xlu0 %1887
        %v1889 = vsel %vm569, %v1855, 0.0
        %1890 = vadd.xlane.f32.xlu0 %v1889
        %v1891 = vpop.xlane.xlu0 %1890
        %v1892 = vsel %vm569, %v1857, 0.0
        %1893 = vadd.xlane.f32.xlu0 %v1892
        %v1894 = vpop.xlane.xlu0 %1893
        %v1895 = vsel %vm569, %v1859, 0.0
        %1896 = vadd.xlane.f32.xlu0 %v1895
        %v1897 = vpop.xlane.xlu0 %1896
        %v1898 = vsel %vm569, %v1861, 0.0
        %1899 = vadd.xlane.f32.xlu0 %v1898
        %v1900 = vpop.xlane.xlu0 %1899
        %v1901 = vsel %vm569, %v1863, 0.0
        %1902 = vadd.xlane.f32.xlu0 %v1901
        %v1903 = vpop.xlane.xlu0 %1902
        %v1904 = vsel %vm569, %v1865, 0.0
        %1905 = vadd.xlane.f32.xlu0 %v1904
        %v1906 = vpop.xlane.xlu0 %1905
        %v1907 = vsel %vm569, %v1867, 0.0
        %1908 = vadd.xlane.f32.xlu0 %v1907
        %v1909 = vpop.xlane.xlu0 %1908
        %v1910 = vsel %vm569, %v1869, 0.0
        %1911 = vadd.xlane.f32.xlu0 %v1910
        %v1912 = vpop.xlane.xlu0 %1911
        %v1913 = vsel %vm569, %v1871, 0.0
        %1914 = vadd.xlane.f32.xlu0 %v1913
        %v1915 = vpop.xlane.xlu0 %1914
        %v1916 = vsel %vm569, %v1873, 0.0
        %1917 = vadd.xlane.f32.xlu0 %v1916
        %v1918 = vpop.xlane.xlu0 %1917
        %v1919 = vsel %vm569, %v1875, 0.0
        %1920 = vadd.xlane.f32.xlu0 %v1919
        %v1921 = vpop.xlane.xlu0 %1920
        %v1922 = vsel %vm569, %v1877, 0.0
        %1923 = vadd.xlane.f32.xlu0 %v1922
        %v1924 = vpop.xlane.xlu0 %1923
        %v1925 = vsel %vm569, %v1879, 0.0
        %1926 = vadd.xlane.f32.xlu0 %v1925
        %v1927 = vpop.xlane.xlu0 %1926
        %1928 = vrot.lane.b32.xlu0 %v525, 64
        %v1929 = vpop.permute.xlu0 %1928
        %v1932 = vsel %vm569, %v1849, 0
        %1934 = vmatprep.subr.mxu0 0.0
        %1935 = vmatpush1.msra.mxu0 %v1929
        %1936 = vmatprep.subr.mxu0 0.0
        %1937 = vmatpush1.msra.mxu0 0.0
        %1938 = vmatprep.subr.mxu0 0.0
        %1939 = vmatpush1.msra.mxu0 0.0
        %1940 = vmatprep.subr.mxu0 0.0
        %1941 = vmatpush1.msra.mxu0 0.0
        %1942 = vmatprep.subr.mxu0 0.0
        %1943 = vmatpush1.msra.mxu0 0.0
        %1944 = vmatprep.subr.mxu0 0.0
        %1945 = vmatpush1.msra.mxu0 0.0
        %1946 = vmatprep.subr.mxu0 0.0
        %1947 = vmatpush1.msra.mxu0 0.0
        %1948 = vmatprep.subr.mxu0 0.0
        %1949 = vmatpush1.msra.mxu0 0.0
        %1950 = vmatprep.subr.mxu0 0.0
        %1951 = vmatpush1.msra.mxu0 0.0
        %1952 = vmatprep.subr.mxu0 0.0
        %1953 = vmatpush1.msra.mxu0 0.0
        %1954 = vmatprep.subr.mxu0 0.0
        %1955 = vmatpush1.msra.mxu0 0.0
        %1956 = vmatprep.subr.mxu0 0.0
        %1957 = vmatpush1.msra.mxu0 0.0
        %1958 = vmatprep.subr.mxu0 0.0
        %1959 = vmatpush1.msra.mxu0 0.0
        %1960 = vmatprep.subr.mxu0 0.0
        %1961 = vmatpush1.msra.mxu0 0.0
        %1962 = vmatprep.subr.mxu0 0.0
        %1963 = vmatpush1.msra.mxu0 0.0
        %1964 = vmatprep.subr.mxu0 0.0
        %1965 = vmatpush1.msra.mxu0 0.0
        %1966 = vmatprep.subr.mxu0 0.0
        %1967 = vmatpush1.msra.mxu0 0.0
        %1968 = vmatprep.subr.mxu0 0.0
        %1969 = vmatpush1.msra.mxu0 0.0
        %1970 = vmatprep.subr.mxu0 0.0
        %1971 = vmatpush1.msra.mxu0 0.0
        %1972 = vmatprep.subr.mxu0 0.0
        %1973 = vmatpush1.msra.mxu0 0.0
        %1974 = vmatprep.subr.mxu0 0.0
        %1975 = vmatpush1.msra.mxu0 0.0
        %1976 = vmatprep.subr.mxu0 0.0
        %1977 = vmatpush1.msra.mxu0 0.0
        %1978 = vmatprep.subr.mxu0 0.0
        %1979 = vmatpush1.msra.mxu0 0.0
        %1980 = vmatprep.subr.mxu0 0.0
        %1981 = vmatpush1.msra.mxu0 0.0
        %1982 = vmatprep.subr.mxu0 0.0
        %1983 = vmatpush1.msra.mxu0 0.0
        %1984 = vmatprep.subr.mxu0 0.0
        %1985 = vmatpush1.msra.mxu0 0.0
        %1986 = vmatprep.subr.mxu0 0.0
        %1987 = vmatpush1.msra.mxu0 0.0
        %1988 = vmatprep.subr.mxu0 0.0
        %1989 = vmatpush1.msra.mxu0 0.0
        %1990 = vmatprep.subr.mxu0 0.0
        %1991 = vmatpush1.msra.mxu0 0.0
        %1992 = vmatprep.subr.mxu0 0.0
        %1993 = vmatpush1.msra.mxu0 0.0
        %1994 = vmatprep.subr.mxu0 0.0
        %1995 = vmatpush1.msra.mxu0 0.0
        %1996 = vmatprep.subr.mxu0 0.0
        %1997 = vmatpush1.msra.mxu0 0.0
        %1998 = vmatprep.mubr.f32.mxu0 0.0
        %1999 = vmatmul.mubr.f32.gmra.mrb[0].mxu0 %v1932
        %v2000 = vpop.f32.mrb[0].mxu0
        %v2001 = vadd.f32 0.0, %v2000
        %v2002 = vpop.f32.mrb[0].mxu0
        %2003 = vdwg.mxu0
        %2004 = vrot.lane.b32.xlu0 %v528, 64
        %v2005 = vpop.permute.xlu0 %2004
        %v2008 = vsel %vm569, %v1851, 0
        %2010 = vmatprep.subr.mxu0 0.0
        %2011 = vmatpush1.msra.mxu0 %v2005
        %2012 = vmatprep.subr.mxu0 0.0
        %2013 = vmatpush1.msra.mxu0 0.0
        %2014 = vmatprep.subr.mxu0 0.0
        %2015 = vmatpush1.msra.mxu0 0.0
        %2016 = vmatprep.subr.mxu0 0.0
        %2017 = vmatpush1.msra.mxu0 0.0
        %2018 = vmatprep.subr.mxu0 0.0
        %2019 = vmatpush1.msra.mxu0 0.0
        %2020 = vmatprep.subr.mxu0 0.0
        %2021 = vmatpush1.msra.mxu0 0.0
        %2022 = vmatprep.subr.mxu0 0.0
        %2023 = vmatpush1.msra.mxu0 0.0
        %2024 = vmatprep.subr.mxu0 0.0
        %2025 = vmatpush1.msra.mxu0 0.0
        %2026 = vmatprep.subr.mxu0 0.0
        %2027 = vmatpush1.msra.mxu0 0.0
        %2028 = vmatprep.subr.mxu0 0.0
        %2029 = vmatpush1.msra.mxu0 0.0
        %2030 = vmatprep.subr.mxu0 0.0
        %2031 = vmatpush1.msra.mxu0 0.0
        %2032 = vmatprep.subr.mxu0 0.0
        %2033 = vmatpush1.msra.mxu0 0.0
        %2034 = vmatprep.subr.mxu0 0.0
        %2035 = vmatpush1.msra.mxu0 0.0
        %2036 = vmatprep.subr.mxu0 0.0
        %2037 = vmatpush1.msra.mxu0 0.0
        %2038 = vmatprep.subr.mxu0 0.0
        %2039 = vmatpush1.msra.mxu0 0.0
        %2040 = vmatprep.subr.mxu0 0.0
        %2041 = vmatpush1.msra.mxu0 0.0
        %2042 = vmatprep.subr.mxu0 0.0
        %2043 = vmatpush1.msra.mxu0 0.0
        %2044 = vmatprep.subr.mxu0 0.0
        %2045 = vmatpush1.msra.mxu0 0.0
        %2046 = vmatprep.subr.mxu0 0.0
        %2047 = vmatpush1.msra.mxu0 0.0
        %2048 = vmatprep.subr.mxu0 0.0
        %2049 = vmatpush1.msra.mxu0 0.0
        %2050 = vmatprep.subr.mxu0 0.0
        %2051 = vmatpush1.msra.mxu0 0.0
        %2052 = vmatprep.subr.mxu0 0.0
        %2053 = vmatpush1.msra.mxu0 0.0
        %2054 = vmatprep.subr.mxu0 0.0
        %2055 = vmatpush1.msra.mxu0 0.0
        %2056 = vmatprep.subr.mxu0 0.0
        %2057 = vmatpush1.msra.mxu0 0.0
        %2058 = vmatprep.subr.mxu0 0.0
        %2059 = vmatpush1.msra.mxu0 0.0
        %2060 = vmatprep.subr.mxu0 0.0
        %2061 = vmatpush1.msra.mxu0 0.0
        %2062 = vmatprep.subr.mxu0 0.0
        %2063 = vmatpush1.msra.mxu0 0.0
        %2064 = vmatprep.subr.mxu0 0.0
        %2065 = vmatpush1.msra.mxu0 0.0
        %2066 = vmatprep.subr.mxu0 0.0
        %2067 = vmatpush1.msra.mxu0 0.0
        %2068 = vmatprep.subr.mxu0 0.0
        %2069 = vmatpush1.msra.mxu0 0.0
        %2070 = vmatprep.subr.mxu0 0.0
        %2071 = vmatpush1.msra.mxu0 0.0
        %2072 = vmatprep.subr.mxu0 0.0
        %2073 = vmatpush1.msra.mxu0 0.0
        %2074 = vmatprep.mubr.f32.mxu0 0.0
        %2075 = vmatmul.mubr.f32.gmra.mrb[0].mxu0 %v2008
        %v2076 = vpop.f32.mrb[0].mxu0
        %v2077 = vadd.f32 0.0, %v2076
        %v2078 = vpop.f32.mrb[0].mxu0
        %2079 = vdwg.mxu0
        %2080 = vrot.lane.b32.xlu0 %v533, 64
        %v2081 = vpop.permute.xlu0 %2080
        %v2084 = vsel %vm569, %v1853, 0
        %2086 = vmatprep.subr.mxu0 0.0
        %2087 = vmatpush1.msra.mxu0 %v2081
        %2088 = vmatprep.subr.mxu0 0.0
        %2089 = vmatpush1.msra.mxu0 0.0
        %2090 = vmatprep.subr.mxu0 0.0
        %2091 = vmatpush1.msra.mxu0 0.0
        %2092 = vmatprep.subr.mxu0 0.0
        %2093 = vmatpush1.msra.mxu0 0.0
        %2094 = vmatprep.subr.mxu0 0.0
        %2095 = vmatpush1.msra.mxu0 0.0
        %2096 = vmatprep.subr.mxu0 0.0
        %2097 = vmatpush1.msra.mxu0 0.0
        %2098 = vmatprep.subr.mxu0 0.0
        %2099 = vmatpush1.msra.mxu0 0.0
        %2100 = vmatprep.subr.mxu0 0.0
        %2101 = vmatpush1.msra.mxu0 0.0
        %2102 = vmatprep.subr.mxu0 0.0
        %2103 = vmatpush1.msra.mxu0 0.0
        %2104 = vmatprep.subr.mxu0 0.0
        %2105 = vmatpush1.msra.mxu0 0.0
        %2106 = vmatprep.subr.mxu0 0.0
        %2107 = vmatpush1.msra.mxu0 0.0
        %2108 = vmatprep.subr.mxu0 0.0
        %2109 = vmatpush1.msra.mxu0 0.0
        %2110 = vmatprep.subr.mxu0 0.0
        %2111 = vmatpush1.msra.mxu0 0.0
        %2112 = vmatprep.subr.mxu0 0.0
        %2113 = vmatpush1.msra.mxu0 0.0
        %2114 = vmatprep.subr.mxu0 0.0
        %2115 = vmatpush1.msra.mxu0 0.0
        %2116 = vmatprep.subr.mxu0 0.0
        %2117 = vmatpush1.msra.mxu0 0.0
        %2118 = vmatprep.subr.mxu0 0.0
        %2119 = vmatpush1.msra.mxu0 0.0
        %2120 = vmatprep.subr.mxu0 0.0
        %2121 = vmatpush1.msra.mxu0 0.0
        %2122 = vmatprep.subr.mxu0 0.0
        %2123 = vmatpush1.msra.mxu0 0.0
        %2124 = vmatprep.subr.mxu0 0.0
        %2125 = vmatpush1.msra.mxu0 0.0
        %2126 = vmatprep.subr.mxu0 0.0
        %2127 = vmatpush1.msra.mxu0 0.0
        %2128 = vmatprep.subr.mxu0 0.0
        %2129 = vmatpush1.msra.mxu0 0.0
        %2130 = vmatprep.subr.mxu0 0.0
        %2131 = vmatpush1.msra.mxu0 0.0
        %2132 = vmatprep.subr.mxu0 0.0
        %2133 = vmatpush1.msra.mxu0 0.0
        %2134 = vmatprep.subr.mxu0 0.0
        %2135 = vmatpush1.msra.mxu0 0.0
        %2136 = vmatprep.subr.mxu0 0.0
        %2137 = vmatpush1.msra.mxu0 0.0
        %2138 = vmatprep.subr.mxu0 0.0
        %2139 = vmatpush1.msra.mxu0 0.0
        %2140 = vmatprep.subr.mxu0 0.0
        %2141 = vmatpush1.msra.mxu0 0.0
        %2142 = vmatprep.subr.mxu0 0.0
        %2143 = vmatpush1.msra.mxu0 0.0
        %2144 = vmatprep.subr.mxu0 0.0
        %2145 = vmatpush1.msra.mxu0 0.0
        %2146 = vmatprep.subr.mxu0 0.0
        %2147 = vmatpush1.msra.mxu0 0.0
        %2148 = vmatprep.subr.mxu0 0.0
        %2149 = vmatpush1.msra.mxu0 0.0
        %2150 = vmatprep.mubr.f32.mxu0 0.0
        %2151 = vmatmul.mubr.f32.gmra.mrb[0].mxu0 %v2084
        %v2152 = vpop.f32.mrb[0].mxu0
        %v2153 = vadd.f32 0.0, %v2152
        %v2154 = vpop.f32.mrb[0].mxu0
        %2155 = vdwg.mxu0
        %2156 = vrot.lane.b32.xlu0 %v536, 64
        %v2157 = vpop.permute.xlu0 %2156
        %v2160 = vsel %vm569, %v1855, 0
        %2162 = vmatprep.subr.mxu0 0.0
        %2163 = vmatpush1.msra.mxu0 %v2157
        %2164 = vmatprep.subr.mxu0 0.0
        %2165 = vmatpush1.msra.mxu0 0.0
        %2166 = vmatprep.subr.mxu0 0.0
        %2167 = vmatpush1.msra.mxu0 0.0
        %2168 = vmatprep.subr.mxu0 0.0
        %2169 = vmatpush1.msra.mxu0 0.0
        %2170 = vmatprep.subr.mxu0 0.0
        %2171 = vmatpush1.msra.mxu0 0.0
        %2172 = vmatprep.subr.mxu0 0.0
        %2173 = vmatpush1.msra.mxu0 0.0
        %2174 = vmatprep.subr.mxu0 0.0
        %2175 = vmatpush1.msra.mxu0 0.0
        %2176 = vmatprep.subr.mxu0 0.0
        %2177 = vmatpush1.msra.mxu0 0.0
        %2178 = vmatprep.subr.mxu0 0.0
        %2179 = vmatpush1.msra.mxu0 0.0
        %2180 = vmatprep.subr.mxu0 0.0
        %2181 = vmatpush1.msra.mxu0 0.0
        %2182 = vmatprep.subr.mxu0 0.0
        %2183 = vmatpush1.msra.mxu0 0.0
        %2184 = vmatprep.subr.mxu0 0.0
        %2185 = vmatpush1.msra.mxu0 0.0
        %2186 = vmatprep.subr.mxu0 0.0
        %2187 = vmatpush1.msra.mxu0 0.0
        %2188 = vmatprep.subr.mxu0 0.0
        %2189 = vmatpush1.msra.mxu0 0.0
        %2190 = vmatprep.subr.mxu0 0.0
        %2191 = vmatpush1.msra.mxu0 0.0
        %2192 = vmatprep.subr.mxu0 0.0
        %2193 = vmatpush1.msra.mxu0 0.0
        %2194 = vmatprep.subr.mxu0 0.0
        %2195 = vmatpush1.msra.mxu0 0.0
        %2196 = vmatprep.subr.mxu0 0.0
        %2197 = vmatpush1.msra.mxu0 0.0
        %2198 = vmatprep.subr.mxu0 0.0
        %2199 = vmatpush1.msra.mxu0 0.0
        %2200 = vmatprep.subr.mxu0 0.0
        %2201 = vmatpush1.msra.mxu0 0.0
        %2202 = vmatprep.subr.mxu0 0.0
        %2203 = vmatpush1.msra.mxu0 0.0
        %2204 = vmatprep.subr.mxu0 0.0
        %2205 = vmatpush1.msra.mxu0 0.0
        %2206 = vmatprep.subr.mxu0 0.0
        %2207 = vmatpush1.msra.mxu0 0.0
        %2208 = vmatprep.subr.mxu0 0.0
        %2209 = vmatpush1.msra.mxu0 0.0
        %2210 = vmatprep.subr.mxu0 0.0
        %2211 = vmatpush1.msra.mxu0 0.0
        %2212 = vmatprep.subr.mxu0 0.0
        %2213 = vmatpush1.msra.mxu0 0.0
        %2214 = vmatprep.subr.mxu0 0.0
        %2215 = vmatpush1.msra.mxu0 0.0
        %2216 = vmatprep.subr.mxu0 0.0
        %2217 = vmatpush1.msra.mxu0 0.0
        %2218 = vmatprep.subr.mxu0 0.0
        %2219 = vmatpush1.msra.mxu0 0.0
        %2220 = vmatprep.subr.mxu0 0.0
        %2221 = vmatpush1.msra.mxu0 0.0
        %2222 = vmatprep.subr.mxu0 0.0
        %2223 = vmatpush1.msra.mxu0 0.0
        %2224 = vmatprep.subr.mxu0 0.0
        %2225 = vmatpush1.msra.mxu0 0.0
        %2226 = vmatprep.mubr.f32.mxu0 0.0
        %2227 = vmatmul.mubr.f32.gmra.mrb[0].mxu0 %v2160
        %v2228 = vpop.f32.mrb[0].mxu0
        %v2229 = vadd.f32 0.0, %v2228
        %v2230 = vpop.f32.mrb[0].mxu0
        %2231 = vdwg.mxu0
        %2232 = vrot.lane.b32.xlu0 %v544, 64
        %v2233 = vpop.permute.xlu0 %2232
        %v2236 = vsel %vm569, %v1857, 0
        %2238 = vmatprep.subr.mxu0 0.0
        %2239 = vmatpush1.msra.mxu0 %v2233
        %2240 = vmatprep.subr.mxu0 0.0
        %2241 = vmatpush1.msra.mxu0 0.0
        %2242 = vmatprep.subr.mxu0 0.0
        %2243 = vmatpush1.msra.mxu0 0.0
        %2244 = vmatprep.subr.mxu0 0.0
        %2245 = vmatpush1.msra.mxu0 0.0
        %2246 = vmatprep.subr.mxu0 0.0
        %2247 = vmatpush1.msra.mxu0 0.0
        %2248 = vmatprep.subr.mxu0 0.0
        %2249 = vmatpush1.msra.mxu0 0.0
        %2250 = vmatprep.subr.mxu0 0.0
        %2251 = vmatpush1.msra.mxu0 0.0
        %2252 = vmatprep.subr.mxu0 0.0
        %2253 = vmatpush1.msra.mxu0 0.0
        %2254 = vmatprep.subr.mxu0 0.0
        %2255 = vmatpush1.msra.mxu0 0.0
        %2256 = vmatprep.subr.mxu0 0.0
        %2257 = vmatpush1.msra.mxu0 0.0
        %2258 = vmatprep.subr.mxu0 0.0
        %2259 = vmatpush1.msra.mxu0 0.0
        %2260 = vmatprep.subr.mxu0 0.0
        %2261 = vmatpush1.msra.mxu0 0.0
        %2262 = vmatprep.subr.mxu0 0.0
        %2263 = vmatpush1.msra.mxu0 0.0
        %2264 = vmatprep.subr.mxu0 0.0
        %2265 = vmatpush1.msra.mxu0 0.0
        %2266 = vmatprep.subr.mxu0 0.0
        %2267 = vmatpush1.msra.mxu0 0.0
        %2268 = vmatprep.subr.mxu0 0.0
        %2269 = vmatpush1.msra.mxu0 0.0
        %2270 = vmatprep.subr.mxu0 0.0
        %2271 = vmatpush1.msra.mxu0 0.0
        %2272 = vmatprep.subr.mxu0 0.0
        %2273 = vmatpush1.msra.mxu0 0.0
        %2274 = vmatprep.subr.mxu0 0.0
        %2275 = vmatpush1.msra.mxu0 0.0
        %2276 = vmatprep.subr.mxu0 0.0
        %2277 = vmatpush1.msra.mxu0 0.0
        %2278 = vmatprep.subr.mxu0 0.0
        %2279 = vmatpush1.msra.mxu0 0.0
        %2280 = vmatprep.subr.mxu0 0.0
        %2281 = vmatpush1.msra.mxu0 0.0
        %2282 = vmatprep.subr.mxu0 0.0
        %2283 = vmatpush1.msra.mxu0 0.0
        %2284 = vmatprep.subr.mxu0 0.0
        %2285 = vmatpush1.msra.mxu0 0.0
        %2286 = vmatprep.subr.mxu0 0.0
        %2287 = vmatpush1.msra.mxu0 0.0
        %2288 = vmatprep.subr.mxu0 0.0
        %2289 = vmatpush1.msra.mxu0 0.0
        %2290 = vmatprep.subr.mxu0 0.0
        %2291 = vmatpush1.msra.mxu0 0.0
        %2292 = vmatprep.subr.mxu0 0.0
        %2293 = vmatpush1.msra.mxu0 0.0
        %2294 = vmatprep.subr.mxu0 0.0
        %2295 = vmatpush1.msra.mxu0 0.0
        %2296 = vmatprep.subr.mxu0 0.0
        %2297 = vmatpush1.msra.mxu0 0.0
        %2298 = vmatprep.subr.mxu0 0.0
        %2299 = vmatpush1.msra.mxu0 0.0
        %2300 = vmatprep.subr.mxu0 0.0
        %2301 = vmatpush1.msra.mxu0 0.0
        %2302 = vmatprep.mubr.f32.mxu0 0.0
        %2303 = vmatmul.mubr.f32.gmra.mrb[0].mxu0 %v2236
        %v2304 = vpop.f32.mrb[0].mxu0
        %v2305 = vadd.f32 0.0, %v2304
        %v2306 = vpop.f32.mrb[0].mxu0
        %2307 = vdwg.mxu0
        %2308 = vrot.lane.b32.xlu0 %v546, 64
        %v2309 = vpop.permute.xlu0 %2308
        %v2312 = vsel %vm569, %v1859, 0
        %2314 = vmatprep.subr.mxu0 0.0
        %2315 = vmatpush1.msra.mxu0 %v2309
        %2316 = vmatprep.subr.mxu0 0.0
        %2317 = vmatpush1.msra.mxu0 0.0
        %2318 = vmatprep.subr.mxu0 0.0
        %2319 = vmatpush1.msra.mxu0 0.0
        %2320 = vmatprep.subr.mxu0 0.0
        %2321 = vmatpush1.msra.mxu0 0.0
        %2322 = vmatprep.subr.mxu0 0.0
        %2323 = vmatpush1.msra.mxu0 0.0
        %2324 = vmatprep.subr.mxu0 0.0
        %2325 = vmatpush1.msra.mxu0 0.0
        %2326 = vmatprep.subr.mxu0 0.0
        %2327 = vmatpush1.msra.mxu0 0.0
        %2328 = vmatprep.subr.mxu0 0.0
        %2329 = vmatpush1.msra.mxu0 0.0
        %2330 = vmatprep.subr.mxu0 0.0
        %2331 = vmatpush1.msra.mxu0 0.0
        %2332 = vmatprep.subr.mxu0 0.0
        %2333 = vmatpush1.msra.mxu0 0.0
        %2334 = vmatprep.subr.mxu0 0.0
        %2335 = vmatpush1.msra.mxu0 0.0
        %2336 = vmatprep.subr.mxu0 0.0
        %2337 = vmatpush1.msra.mxu0 0.0
        %2338 = vmatprep.subr.mxu0 0.0
        %2339 = vmatpush1.msra.mxu0 0.0
        %2340 = vmatprep.subr.mxu0 0.0
        %2341 = vmatpush1.msra.mxu0 0.0
        %2342 = vmatprep.subr.mxu0 0.0
        %2343 = vmatpush1.msra.mxu0 0.0
        %2344 = vmatprep.subr.mxu0 0.0
        %2345 = vmatpush1.msra.mxu0 0.0
        %2346 = vmatprep.subr.mxu0 0.0
        %2347 = vmatpush1.msra.mxu0 0.0
        %2348 = vmatprep.subr.mxu0 0.0
        %2349 = vmatpush1.msra.mxu0 0.0
        %2350 = vmatprep.subr.mxu0 0.0
        %2351 = vmatpush1.msra.mxu0 0.0
        %2352 = vmatprep.subr.mxu0 0.0
        %2353 = vmatpush1.msra.mxu0 0.0
        %2354 = vmatprep.subr.mxu0 0.0
        %2355 = vmatpush1.msra.mxu0 0.0
        %2356 = vmatprep.subr.mxu0 0.0
        %2357 = vmatpush1.msra.mxu0 0.0
        %2358 = vmatprep.subr.mxu0 0.0
        %2359 = vmatpush1.msra.mxu0 0.0
        %2360 = vmatprep.subr.mxu0 0.0
        %2361 = vmatpush1.msra.mxu0 0.0
        %2362 = vmatprep.subr.mxu0 0.0
        %2363 = vmatpush1.msra.mxu0 0.0
        %2364 = vmatprep.subr.mxu0 0.0
        %2365 = vmatpush1.msra.mxu0 0.0
        %2366 = vmatprep.subr.mxu0 0.0
        %2367 = vmatpush1.msra.mxu0 0.0
        %2368 = vmatprep.subr.mxu0 0.0
        %2369 = vmatpush1.msra.mxu0 0.0
        %2370 = vmatprep.subr.mxu0 0.0
        %2371 = vmatpush1.msra.mxu0 0.0
        %2372 = vmatprep.subr.mxu0 0.0
        %2373 = vmatpush1.msra.mxu0 0.0
        %2374 = vmatprep.subr.mxu0 0.0
        %2375 = vmatpush1.msra.mxu0 0.0
        %2376 = vmatprep.subr.mxu0 0.0
        %2377 = vmatpush1.msra.mxu0 0.0
        %2378 = vmatprep.mubr.f32.mxu0 0.0
        %2379 = vmatmul.mubr.f32.gmra.mrb[0].mxu0 %v2312
        %v2380 = vpop.f32.mrb[0].mxu0
        %v2381 = vadd.f32 0.0, %v2380
        %v2382 = vpop.f32.mrb[0].mxu0
        %2383 = vdwg.mxu0
        %2384 = vrot.lane.b32.xlu0 %v548, 64
        %v2385 = vpop.permute.xlu0 %2384
        %v2388 = vsel %vm569, %v1861, 0
        %2390 = vmatprep.subr.mxu0 0.0
        %2391 = vmatpush1.msra.mxu0 %v2385
        %2392 = vmatprep.subr.mxu0 0.0
        %2393 = vmatpush1.msra.mxu0 0.0
        %2394 = vmatprep.subr.mxu0 0.0
        %2395 = vmatpush1.msra.mxu0 0.0
        %2396 = vmatprep.subr.mxu0 0.0
        %2397 = vmatpush1.msra.mxu0 0.0
        %2398 = vmatprep.subr.mxu0 0.0
        %2399 = vmatpush1.msra.mxu0 0.0
        %2400 = vmatprep.subr.mxu0 0.0
        %2401 = vmatpush1.msra.mxu0 0.0
        %2402 = vmatprep.subr.mxu0 0.0
        %2403 = vmatpush1.msra.mxu0 0.0
        %2404 = vmatprep.subr.mxu0 0.0
        %2405 = vmatpush1.msra.mxu0 0.0
        %2406 = vmatprep.subr.mxu0 0.0
        %2407 = vmatpush1.msra.mxu0 0.0
        %2408 = vmatprep.subr.mxu0 0.0
        %2409 = vmatpush1.msra.mxu0 0.0
        %2410 = vmatprep.subr.mxu0 0.0
        %2411 = vmatpush1.msra.mxu0 0.0
        %2412 = vmatprep.subr.mxu0 0.0
        %2413 = vmatpush1.msra.mxu0 0.0
        %2414 = vmatprep.subr.mxu0 0.0
        %2415 = vmatpush1.msra.mxu0 0.0
        %2416 = vmatprep.subr.mxu0 0.0
        %2417 = vmatpush1.msra.mxu0 0.0
        %2418 = vmatprep.subr.mxu0 0.0
        %2419 = vmatpush1.msra.mxu0 0.0
        %2420 = vmatprep.subr.mxu0 0.0
        %2421 = vmatpush1.msra.mxu0 0.0
        %2422 = vmatprep.subr.mxu0 0.0
        %2423 = vmatpush1.msra.mxu0 0.0
        %2424 = vmatprep.subr.mxu0 0.0
        %2425 = vmatpush1.msra.mxu0 0.0
        %2426 = vmatprep.subr.mxu0 0.0
        %2427 = vmatpush1.msra.mxu0 0.0
        %2428 = vmatprep.subr.mxu0 0.0
        %2429 = vmatpush1.msra.mxu0 0.0
        %2430 = vmatprep.subr.mxu0 0.0
        %2431 = vmatpush1.msra.mxu0 0.0
        %2432 = vmatprep.subr.mxu0 0.0
        %2433 = vmatpush1.msra.mxu0 0.0
        %2434 = vmatprep.subr.mxu0 0.0
        %2435 = vmatpush1.msra.mxu0 0.0
        %2436 = vmatprep.subr.mxu0 0.0
        %2437 = vmatpush1.msra.mxu0 0.0
        %2438 = vmatprep.subr.mxu0 0.0
        %2439 = vmatpush1.msra.mxu0 0.0
        %2440 = vmatprep.subr.mxu0 0.0
        %2441 = vmatpush1.msra.mxu0 0.0
        %2442 = vmatprep.subr.mxu0 0.0
        %2443 = vmatpush1.msra.mxu0 0.0
        %2444 = vmatprep.subr.mxu0 0.0
        %2445 = vmatpush1.msra.mxu0 0.0
        %2446 = vmatprep.subr.mxu0 0.0
        %2447 = vmatpush1.msra.mxu0 0.0
        %2448 = vmatprep.subr.mxu0 0.0
        %2449 = vmatpush1.msra.mxu0 0.0
        %2450 = vmatprep.subr.mxu0 0.0
        %2451 = vmatpush1.msra.mxu0 0.0
        %2452 = vmatprep.subr.mxu0 0.0
        %2453 = vmatpush1.msra.mxu0 0.0
        %2454 = vmatprep.mubr.f32.mxu0 0.0
        %2455 = vmatmul.mubr.f32.gmra.mrb[0].mxu0 %v2388
        %v2456 = vpop.f32.mrb[0].mxu0
        %v2457 = vadd.f32 0.0, %v2456
        %v2458 = vpop.f32.mrb[0].mxu0
        %2459 = vdwg.mxu0
        %2460 = vrot.lane.b32.xlu0 %v550, 64
        %v2461 = vpop.permute.xlu0 %2460
        %v2464 = vsel %vm569, %v1863, 0
        %2466 = vmatprep.subr.mxu0 0.0
        %2467 = vmatpush1.msra.mxu0 %v2461
        %2468 = vmatprep.subr.mxu0 0.0
        %2469 = vmatpush1.msra.mxu0 0.0
        %2470 = vmatprep.subr.mxu0 0.0
        %2471 = vmatpush1.msra.mxu0 0.0
        %2472 = vmatprep.subr.mxu0 0.0
        %2473 = vmatpush1.msra.mxu0 0.0
        %2474 = vmatprep.subr.mxu0 0.0
        %2475 = vmatpush1.msra.mxu0 0.0
        %2476 = vmatprep.subr.mxu0 0.0
        %2477 = vmatpush1.msra.mxu0 0.0
        %2478 = vmatprep.subr.mxu0 0.0
        %2479 = vmatpush1.msra.mxu0 0.0
        %2480 = vmatprep.subr.mxu0 0.0
        %2481 = vmatpush1.msra.mxu0 0.0
        %2482 = vmatprep.subr.mxu0 0.0
        %2483 = vmatpush1.msra.mxu0 0.0
        %2484 = vmatprep.subr.mxu0 0.0
        %2485 = vmatpush1.msra.mxu0 0.0
        %2486 = vmatprep.subr.mxu0 0.0
        %2487 = vmatpush1.msra.mxu0 0.0
        %2488 = vmatprep.subr.mxu0 0.0
        %2489 = vmatpush1.msra.mxu0 0.0
        %2490 = vmatprep.subr.mxu0 0.0
        %2491 = vmatpush1.msra.mxu0 0.0
        %2492 = vmatprep.subr.mxu0 0.0
        %2493 = vmatpush1.msra.mxu0 0.0
        %2494 = vmatprep.subr.mxu0 0.0
        %2495 = vmatpush1.msra.mxu0 0.0
        %2496 = vmatprep.subr.mxu0 0.0
        %2497 = vmatpush1.msra.mxu0 0.0
        %2498 = vmatprep.subr.mxu0 0.0
        %2499 = vmatpush1.msra.mxu0 0.0
        %2500 = vmatprep.subr.mxu0 0.0
        %2501 = vmatpush1.msra.mxu0 0.0
        %2502 = vmatprep.subr.mxu0 0.0
        %2503 = vmatpush1.msra.mxu0 0.0
        %2504 = vmatprep.subr.mxu0 0.0
        %2505 = vmatpush1.msra.mxu0 0.0
        %2506 = vmatprep.subr.mxu0 0.0
        %2507 = vmatpush1.msra.mxu0 0.0
        %2508 = vmatprep.subr.mxu0 0.0
        %2509 = vmatpush1.msra.mxu0 0.0
        %2510 = vmatprep.subr.mxu0 0.0
        %2511 = vmatpush1.msra.mxu0 0.0
        %2512 = vmatprep.subr.mxu0 0.0
        %2513 = vmatpush1.msra.mxu0 0.0
        %2514 = vmatprep.subr.mxu0 0.0
        %2515 = vmatpush1.msra.mxu0 0.0
        %2516 = vmatprep.subr.mxu0 0.0
        %2517 = vmatpush1.msra.mxu0 0.0
        %2518 = vmatprep.subr.mxu0 0.0
        %2519 = vmatpush1.msra.mxu0 0.0
        %2520 = vmatprep.subr.mxu0 0.0
        %2521 = vmatpush1.msra.mxu0 0.0
        %2522 = vmatprep.subr.mxu0 0.0
        %2523 = vmatpush1.msra.mxu0 0.0
        %2524 = vmatprep.subr.mxu0 0.0
        %2525 = vmatpush1.msra.mxu0 0.0
        %2526 = vmatprep.subr.mxu0 0.0
        %2527 = vmatpush1.msra.mxu0 0.0
        %2528 = vmatprep.subr.mxu0 0.0
        %2529 = vmatpush1.msra.mxu0 0.0
        %2530 = vmatprep.mubr.f32.mxu0 0.0
        %2531 = vmatmul.mubr.f32.gmra.mrb[0].mxu0 %v2464
        %v2532 = vpop.f32.mrb[0].mxu0
        %v2533 = vadd.f32 0.0, %v2532
        %v2534 = vpop.f32.mrb[0].mxu0
        %2535 = vdwg.mxu0
        %2536 = vrot.lane.b32.xlu0 %v552, 64
        %v2537 = vpop.permute.xlu0 %2536
        %v2540 = vsel %vm569, %v1865, 0
        %2542 = vmatprep.subr.mxu0 0.0
        %2543 = vmatpush1.msra.mxu0 %v2537
        %2544 = vmatprep.subr.mxu0 0.0
        %2545 = vmatpush1.msra.mxu0 0.0
        %2546 = vmatprep.subr.mxu0 0.0
        %2547 = vmatpush1.msra.mxu0 0.0
        %2548 = vmatprep.subr.mxu0 0.0
        %2549 = vmatpush1.msra.mxu0 0.0
        %2550 = vmatprep.subr.mxu0 0.0
        %2551 = vmatpush1.msra.mxu0 0.0
        %2552 = vmatprep.subr.mxu0 0.0
        %2553 = vmatpush1.msra.mxu0 0.0
        %2554 = vmatprep.subr.mxu0 0.0
        %2555 = vmatpush1.msra.mxu0 0.0
        %2556 = vmatprep.subr.mxu0 0.0
        %2557 = vmatpush1.msra.mxu0 0.0
        %2558 = vmatprep.subr.mxu0 0.0
        %2559 = vmatpush1.msra.mxu0 0.0
        %2560 = vmatprep.subr.mxu0 0.0
        %2561 = vmatpush1.msra.mxu0 0.0
        %2562 = vmatprep.subr.mxu0 0.0
        %2563 = vmatpush1.msra.mxu0 0.0
        %2564 = vmatprep.subr.mxu0 0.0
        %2565 = vmatpush1.msra.mxu0 0.0
        %2566 = vmatprep.subr.mxu0 0.0
        %2567 = vmatpush1.msra.mxu0 0.0
        %2568 = vmatprep.subr.mxu0 0.0
        %2569 = vmatpush1.msra.mxu0 0.0
        %2570 = vmatprep.subr.mxu0 0.0
        %2571 = vmatpush1.msra.mxu0 0.0
        %2572 = vmatprep.subr.mxu0 0.0
        %2573 = vmatpush1.msra.mxu0 0.0
        %2574 = vmatprep.subr.mxu0 0.0
        %2575 = vmatpush1.msra.mxu0 0.0
        %2576 = vmatprep.subr.mxu0 0.0
        %2577 = vmatpush1.msra.mxu0 0.0
        %2578 = vmatprep.subr.mxu0 0.0
        %2579 = vmatpush1.msra.mxu0 0.0
        %2580 = vmatprep.subr.mxu0 0.0
        %2581 = vmatpush1.msra.mxu0 0.0
        %2582 = vmatprep.subr.mxu0 0.0
        %2583 = vmatpush1.msra.mxu0 0.0
        %2584 = vmatprep.subr.mxu0 0.0
        %2585 = vmatpush1.msra.mxu0 0.0
        %2586 = vmatprep.subr.mxu0 0.0
        %2587 = vmatpush1.msra.mxu0 0.0
        %2588 = vmatprep.subr.mxu0 0.0
        %2589 = vmatpush1.msra.mxu0 0.0
        %2590 = vmatprep.subr.mxu0 0.0
        %2591 = vmatpush1.msra.mxu0 0.0
        %2592 = vmatprep.subr.mxu0 0.0
        %2593 = vmatpush1.msra.mxu0 0.0
        %2594 = vmatprep.subr.mxu0 0.0
        %2595 = vmatpush1.msra.mxu0 0.0
        %2596 = vmatprep.subr.mxu0 0.0
        %2597 = vmatpush1.msra.mxu0 0.0
        %2598 = vmatprep.subr.mxu0 0.0
        %2599 = vmatpush1.msra.mxu0 0.0
        %2600 = vmatprep.subr.mxu0 0.0
        %2601 = vmatpush1.msra.mxu0 0.0
        %2602 = vmatprep.subr.mxu0 0.0
        %2603 = vmatpush1.msra.mxu0 0.0
        %2604 = vmatprep.subr.mxu0 0.0
        %2605 = vmatpush1.msra.mxu0 0.0
        %2606 = vmatprep.mubr.f32.mxu0 0.0
        %2607 = vmatmul.mubr.f32.gmra.mrb[0].mxu0 %v2540
        %v2608 = vpop.f32.mrb[0].mxu0
        %v2609 = vadd.f32 0.0, %v2608
        %v2610 = vpop.f32.mrb[0].mxu0
        %2611 = vdwg.mxu0
        %2612 = vrot.lane.b32.xlu0 %v554, 64
        %v2613 = vpop.permute.xlu0 %2612
        %v2616 = vsel %vm569, %v1867, 0
        %2618 = vmatprep.subr.mxu0 0.0
        %2619 = vmatpush1.msra.mxu0 %v2613
        %2620 = vmatprep.subr.mxu0 0.0
        %2621 = vmatpush1.msra.mxu0 0.0
        %2622 = vmatprep.subr.mxu0 0.0
        %2623 = vmatpush1.msra.mxu0 0.0
        %2624 = vmatprep.subr.mxu0 0.0
        %2625 = vmatpush1.msra.mxu0 0.0
        %2626 = vmatprep.subr.mxu0 0.0
        %2627 = vmatpush1.msra.mxu0 0.0
        %2628 = vmatprep.subr.mxu0 0.0
        %2629 = vmatpush1.msra.mxu0 0.0
        %2630 = vmatprep.subr.mxu0 0.0
        %2631 = vmatpush1.msra.mxu0 0.0
        %2632 = vmatprep.subr.mxu0 0.0
        %2633 = vmatpush1.msra.mxu0 0.0
        %2634 = vmatprep.subr.mxu0 0.0
        %2635 = vmatpush1.msra.mxu0 0.0
        %2636 = vmatprep.subr.mxu0 0.0
        %2637 = vmatpush1.msra.mxu0 0.0
        %2638 = vmatprep.subr.mxu0 0.0
        %2639 = vmatpush1.msra.mxu0 0.0
        %2640 = vmatprep.subr.mxu0 0.0
        %2641 = vmatpush1.msra.mxu0 0.0
        %2642 = vmatprep.subr.mxu0 0.0
        %2643 = vmatpush1.msra.mxu0 0.0
        %2644 = vmatprep.subr.mxu0 0.0
        %2645 = vmatpush1.msra.mxu0 0.0
        %2646 = vmatprep.subr.mxu0 0.0
        %2647 = vmatpush1.msra.mxu0 0.0
        %2648 = vmatprep.subr.mxu0 0.0
        %2649 = vmatpush1.msra.mxu0 0.0
        %2650 = vmatprep.subr.mxu0 0.0
        %2651 = vmatpush1.msra.mxu0 0.0
        %2652 = vmatprep.subr.mxu0 0.0
        %2653 = vmatpush1.msra.mxu0 0.0
        %2654 = vmatprep.subr.mxu0 0.0
        %2655 = vmatpush1.msra.mxu0 0.0
        %2656 = vmatprep.subr.mxu0 0.0
        %2657 = vmatpush1.msra.mxu0 0.0
        %2658 = vmatprep.subr.mxu0 0.0
        %2659 = vmatpush1.msra.mxu0 0.0
        %2660 = vmatprep.subr.mxu0 0.0
        %2661 = vmatpush1.msra.mxu0 0.0
        %2662 = vmatprep.subr.mxu0 0.0
        %2663 = vmatpush1.msra.mxu0 0.0
        %2664 = vmatprep.subr.mxu0 0.0
        %2665 = vmatpush1.msra.mxu0 0.0
        %2666 = vmatprep.subr.mxu0 0.0
        %2667 = vmatpush1.msra.mxu0 0.0
        %2668 = vmatprep.subr.mxu0 0.0
        %2669 = vmatpush1.msra.mxu0 0.0
        %2670 = vmatprep.subr.mxu0 0.0
        %2671 = vmatpush1.msra.mxu0 0.0
        %2672 = vmatprep.subr.mxu0 0.0
        %2673 = vmatpush1.msra.mxu0 0.0
        %2674 = vmatprep.subr.mxu0 0.0
        %2675 = vmatpush1.msra.mxu0 0.0
        %2676 = vmatprep.subr.mxu0 0.0
        %2677 = vmatpush1.msra.mxu0 0.0
        %2678 = vmatprep.subr.mxu0 0.0
        %2679 = vmatpush1.msra.mxu0 0.0
        %2680 = vmatprep.subr.mxu0 0.0
        %2681 = vmatpush1.msra.mxu0 0.0
        %2682 = vmatprep.mubr.f32.mxu0 0.0
        %2683 = vmatmul.mubr.f32.gmra.mrb[0].mxu0 %v2616
        %v2684 = vpop.f32.mrb[0].mxu0
        %v2685 = vadd.f32 0.0, %v2684
        %v2686 = vpop.f32.mrb[0].mxu0
        %2687 = vdwg.mxu0
        %2688 = vrot.lane.b32.xlu0 %v556, 64
        %v2689 = vpop.permute.xlu0 %2688
        %v2692 = vsel %vm569, %v1869, 0
        %2694 = vmatprep.subr.mxu0 0.0
        %2695 = vmatpush1.msra.mxu0 %v2689
        %2696 = vmatprep.subr.mxu0 0.0
        %2697 = vmatpush1.msra.mxu0 0.0
        %2698 = vmatprep.subr.mxu0 0.0
        %2699 = vmatpush1.msra.mxu0 0.0
        %2700 = vmatprep.subr.mxu0 0.0
        %2701 = vmatpush1.msra.mxu0 0.0
        %2702 = vmatprep.subr.mxu0 0.0
        %2703 = vmatpush1.msra.mxu0 0.0
        %2704 = vmatprep.subr.mxu0 0.0
        %2705 = vmatpush1.msra.mxu0 0.0
        %2706 = vmatprep.subr.mxu0 0.0
        %2707 = vmatpush1.msra.mxu0 0.0
        %2708 = vmatprep.subr.mxu0 0.0
        %2709 = vmatpush1.msra.mxu0 0.0
        %2710 = vmatprep.subr.mxu0 0.0
        %2711 = vmatpush1.msra.mxu0 0.0
        %2712 = vmatprep.subr.mxu0 0.0
        %2713 = vmatpush1.msra.mxu0 0.0
        %2714 = vmatprep.subr.mxu0 0.0
        %2715 = vmatpush1.msra.mxu0 0.0
        %2716 = vmatprep.subr.mxu0 0.0
        %2717 = vmatpush1.msra.mxu0 0.0
        %2718 = vmatprep.subr.mxu0 0.0
        %2719 = vmatpush1.msra.mxu0 0.0
        %2720 = vmatprep.subr.mxu0 0.0
        %2721 = vmatpush1.msra.mxu0 0.0
        %2722 = vmatprep.subr.mxu0 0.0
        %2723 = vmatpush1.msra.mxu0 0.0
        %2724 = vmatprep.subr.mxu0 0.0
        %2725 = vmatpush1.msra.mxu0 0.0
        %2726 = vmatprep.subr.mxu0 0.0
        %2727 = vmatpush1.msra.mxu0 0.0
        %2728 = vmatprep.subr.mxu0 0.0
        %2729 = vmatpush1.msra.mxu0 0.0
        %2730 = vmatprep.subr.mxu0 0.0
        %2731 = vmatpush1.msra.mxu0 0.0
        %2732 = vmatprep.subr.mxu0 0.0
        %2733 = vmatpush1.msra.mxu0 0.0
        %2734 = vmatprep.subr.mxu0 0.0
        %2735 = vmatpush1.msra.mxu0 0.0
        %2736 = vmatprep.subr.mxu0 0.0
        %2737 = vmatpush1.msra.mxu0 0.0
        %2738 = vmatprep.subr.mxu0 0.0
        %2739 = vmatpush1.msra.mxu0 0.0
        %2740 = vmatprep.subr.mxu0 0.0
        %2741 = vmatpush1.msra.mxu0 0.0
        %2742 = vmatprep.subr.mxu0 0.0
        %2743 = vmatpush1.msra.mxu0 0.0
        %2744 = vmatprep.subr.mxu0 0.0
        %2745 = vmatpush1.msra.mxu0 0.0
        %2746 = vmatprep.subr.mxu0 0.0
        %2747 = vmatpush1.msra.mxu0 0.0
        %2748 = vmatprep.subr.mxu0 0.0
        %2749 = vmatpush1.msra.mxu0 0.0
        %2750 = vmatprep.subr.mxu0 0.0
        %2751 = vmatpush1.msra.mxu0 0.0
        %2752 = vmatprep.subr.mxu0 0.0
        %2753 = vmatpush1.msra.mxu0 0.0
        %2754 = vmatprep.subr.mxu0 0.0
        %2755 = vmatpush1.msra.mxu0 0.0
        %2756 = vmatprep.subr.mxu0 0.0
        %2757 = vmatpush1.msra.mxu0 0.0
        %2758 = vmatprep.mubr.f32.mxu0 0.0
        %2759 = vmatmul.mubr.f32.gmra.mrb[0].mxu0 %v2692
        %v2760 = vpop.f32.mrb[0].mxu0
        %v2761 = vadd.f32 0.0, %v2760
        %v2762 = vpop.f32.mrb[0].mxu0
        %2763 = vdwg.mxu0
        %2764 = vrot.lane.b32.xlu0 %v558, 64
        %v2765 = vpop.permute.xlu0 %2764
        %v2768 = vsel %vm569, %v1871, 0
        %2770 = vmatprep.subr.mxu0 0.0
        %2771 = vmatpush1.msra.mxu0 %v2765
        %2772 = vmatprep.subr.mxu0 0.0
        %2773 = vmatpush1.msra.mxu0 0.0
        %2774 = vmatprep.subr.mxu0 0.0
        %2775 = vmatpush1.msra.mxu0 0.0
        %2776 = vmatprep.subr.mxu0 0.0
        %2777 = vmatpush1.msra.mxu0 0.0
        %2778 = vmatprep.subr.mxu0 0.0
        %2779 = vmatpush1.msra.mxu0 0.0
        %2780 = vmatprep.subr.mxu0 0.0
        %2781 = vmatpush1.msra.mxu0 0.0
        %2782 = vmatprep.subr.mxu0 0.0
        %2783 = vmatpush1.msra.mxu0 0.0
        %2784 = vmatprep.subr.mxu0 0.0
        %2785 = vmatpush1.msra.mxu0 0.0
        %2786 = vmatprep.subr.mxu0 0.0
        %2787 = vmatpush1.msra.mxu0 0.0
        %2788 = vmatprep.subr.mxu0 0.0
        %2789 = vmatpush1.msra.mxu0 0.0
        %2790 = vmatprep.subr.mxu0 0.0
        %2791 = vmatpush1.msra.mxu0 0.0
        %2792 = vmatprep.subr.mxu0 0.0
        %2793 = vmatpush1.msra.mxu0 0.0
        %2794 = vmatprep.subr.mxu0 0.0
        %2795 = vmatpush1.msra.mxu0 0.0
        %2796 = vmatprep.subr.mxu0 0.0
        %2797 = vmatpush1.msra.mxu0 0.0
        %2798 = vmatprep.subr.mxu0 0.0
        %2799 = vmatpush1.msra.mxu0 0.0
        %2800 = vmatprep.subr.mxu0 0.0
        %2801 = vmatpush1.msra.mxu0 0.0
        %2802 = vmatprep.subr.mxu0 0.0
        %2803 = vmatpush1.msra.mxu0 0.0
        %2804 = vmatprep.subr.mxu0 0.0
        %2805 = vmatpush1.msra.mxu0 0.0
        %2806 = vmatprep.subr.mxu0 0.0
        %2807 = vmatpush1.msra.mxu0 0.0
        %2808 = vmatprep.subr.mxu0 0.0
        %2809 = vmatpush1.msra.mxu0 0.0
        %2810 = vmatprep.subr.mxu0 0.0
        %2811 = vmatpush1.msra.mxu0 0.0
        %2812 = vmatprep.subr.mxu0 0.0
        %2813 = vmatpush1.msra.mxu0 0.0
        %2814 = vmatprep.subr.mxu0 0.0
        %2815 = vmatpush1.msra.mxu0 0.0
        %2816 = vmatprep.subr.mxu0 0.0
        %2817 = vmatpush1.msra.mxu0 0.0
        %2818 = vmatprep.subr.mxu0 0.0
        %2819 = vmatpush1.msra.mxu0 0.0
        %2820 = vmatprep.subr.mxu0 0.0
        %2821 = vmatpush1.msra.mxu0 0.0
        %2822 = vmatprep.subr.mxu0 0.0
        %2823 = vmatpush1.msra.mxu0 0.0
        %2824 = vmatprep.subr.mxu0 0.0
        %2825 = vmatpush1.msra.mxu0 0.0
        %2826 = vmatprep.subr.mxu0 0.0
        %2827 = vmatpush1.msra.mxu0 0.0
        %2828 = vmatprep.subr.mxu0 0.0
        %2829 = vmatpush1.msra.mxu0 0.0
        %2830 = vmatprep.subr.mxu0 0.0
        %2831 = vmatpush1.msra.mxu0 0.0
        %2832 = vmatprep.subr.mxu0 0.0
        %2833 = vmatpush1.msra.mxu0 0.0
        %2834 = vmatprep.mubr.f32.mxu0 0.0
        %2835 = vmatmul.mubr.f32.gmra.mrb[0].mxu0 %v2768
        %v2836 = vpop.f32.mrb[0].mxu0
        %v2837 = vadd.f32 0.0, %v2836
        %v2838 = vpop.f32.mrb[0].mxu0
        %2839 = vdwg.mxu0
        %2840 = vrot.lane.b32.xlu0 %v560, 64
        %v2841 = vpop.permute.xlu0 %2840
        %v2844 = vsel %vm569, %v1873, 0
        %2846 = vmatprep.subr.mxu0 0.0
        %2847 = vmatpush1.msra.mxu0 %v2841
        %2848 = vmatprep.subr.mxu0 0.0
        %2849 = vmatpush1.msra.mxu0 0.0
        %2850 = vmatprep.subr.mxu0 0.0
        %2851 = vmatpush1.msra.mxu0 0.0
        %2852 = vmatprep.subr.mxu0 0.0
        %2853 = vmatpush1.msra.mxu0 0.0
        %2854 = vmatprep.subr.mxu0 0.0
        %2855 = vmatpush1.msra.mxu0 0.0
        %2856 = vmatprep.subr.mxu0 0.0
        %2857 = vmatpush1.msra.mxu0 0.0
        %2858 = vmatprep.subr.mxu0 0.0
        %2859 = vmatpush1.msra.mxu0 0.0
        %2860 = vmatprep.subr.mxu0 0.0
        %2861 = vmatpush1.msra.mxu0 0.0
        %2862 = vmatprep.subr.mxu0 0.0
        %2863 = vmatpush1.msra.mxu0 0.0
        %2864 = vmatprep.subr.mxu0 0.0
        %2865 = vmatpush1.msra.mxu0 0.0
        %2866 = vmatprep.subr.mxu0 0.0
        %2867 = vmatpush1.msra.mxu0 0.0
        %2868 = vmatprep.subr.mxu0 0.0
        %2869 = vmatpush1.msra.mxu0 0.0
        %2870 = vmatprep.subr.mxu0 0.0
        %2871 = vmatpush1.msra.mxu0 0.0
        %2872 = vmatprep.subr.mxu0 0.0
        %2873 = vmatpush1.msra.mxu0 0.0
        %2874 = vmatprep.subr.mxu0 0.0
        %2875 = vmatpush1.msra.mxu0 0.0
        %2876 = vmatprep.subr.mxu0 0.0
        %2877 = vmatpush1.msra.mxu0 0.0
        %2878 = vmatprep.subr.mxu0 0.0
        %2879 = vmatpush1.msra.mxu0 0.0
        %2880 = vmatprep.subr.mxu0 0.0
        %2881 = vmatpush1.msra.mxu0 0.0
        %2882 = vmatprep.subr.mxu0 0.0
        %2883 = vmatpush1.msra.mxu0 0.0
        %2884 = vmatprep.subr.mxu0 0.0
        %2885 = vmatpush1.msra.mxu0 0.0
        %2886 = vmatprep.subr.mxu0 0.0
        %2887 = vmatpush1.msra.mxu0 0.0
        %2888 = vmatprep.subr.mxu0 0.0
        %2889 = vmatpush1.msra.mxu0 0.0
        %2890 = vmatprep.subr.mxu0 0.0
        %2891 = vmatpush1.msra.mxu0 0.0
        %2892 = vmatprep.subr.mxu0 0.0
        %2893 = vmatpush1.msra.mxu0 0.0
        %2894 = vmatprep.subr.mxu0 0.0
        %2895 = vmatpush1.msra.mxu0 0.0
        %2896 = vmatprep.subr.mxu0 0.0
        %2897 = vmatpush1.msra.mxu0 0.0
        %2898 = vmatprep.subr.mxu0 0.0
        %2899 = vmatpush1.msra.mxu0 0.0
        %2900 = vmatprep.subr.mxu0 0.0
        %2901 = vmatpush1.msra.mxu0 0.0
        %2902 = vmatprep.subr.mxu0 0.0
        %2903 = vmatpush1.msra.mxu0 0.0
        %2904 = vmatprep.subr.mxu0 0.0
        %2905 = vmatpush1.msra.mxu0 0.0
        %2906 = vmatprep.subr.mxu0 0.0
        %2907 = vmatpush1.msra.mxu0 0.0
        %2908 = vmatprep.subr.mxu0 0.0
        %2909 = vmatpush1.msra.mxu0 0.0
        %2910 = vmatprep.mubr.f32.mxu0 0.0
        %2911 = vmatmul.mubr.f32.gmra.mrb[0].mxu0 %v2844
        %v2912 = vpop.f32.mrb[0].mxu0
        %v2913 = vadd.f32 0.0, %v2912
        %v2914 = vpop.f32.mrb[0].mxu0
        %2915 = vdwg.mxu0
        %2916 = vrot.lane.b32.xlu0 %v562, 64
        %v2917 = vpop.permute.xlu0 %2916
        %v2920 = vsel %vm569, %v1875, 0
        %2922 = vmatprep.subr.mxu0 0.0
        %2923 = vmatpush1.msra.mxu0 %v2917
        %2924 = vmatprep.subr.mxu0 0.0
        %2925 = vmatpush1.msra.mxu0 0.0
        %2926 = vmatprep.subr.mxu0 0.0
        %2927 = vmatpush1.msra.mxu0 0.0
        %2928 = vmatprep.subr.mxu0 0.0
        %2929 = vmatpush1.msra.mxu0 0.0
        %2930 = vmatprep.subr.mxu0 0.0
        %2931 = vmatpush1.msra.mxu0 0.0
        %2932 = vmatprep.subr.mxu0 0.0
        %2933 = vmatpush1.msra.mxu0 0.0
        %2934 = vmatprep.subr.mxu0 0.0
        %2935 = vmatpush1.msra.mxu0 0.0
        %2936 = vmatprep.subr.mxu0 0.0
        %2937 = vmatpush1.msra.mxu0 0.0
        %2938 = vmatprep.subr.mxu0 0.0
        %2939 = vmatpush1.msra.mxu0 0.0
        %2940 = vmatprep.subr.mxu0 0.0
        %2941 = vmatpush1.msra.mxu0 0.0
        %2942 = vmatprep.subr.mxu0 0.0
        %2943 = vmatpush1.msra.mxu0 0.0
        %2944 = vmatprep.subr.mxu0 0.0
        %2945 = vmatpush1.msra.mxu0 0.0
        %2946 = vmatprep.subr.mxu0 0.0
        %2947 = vmatpush1.msra.mxu0 0.0
        %2948 = vmatprep.subr.mxu0 0.0
        %2949 = vmatpush1.msra.mxu0 0.0
        %2950 = vmatprep.subr.mxu0 0.0
        %2951 = vmatpush1.msra.mxu0 0.0
        %2952 = vmatprep.subr.mxu0 0.0
        %2953 = vmatpush1.msra.mxu0 0.0
        %2954 = vmatprep.subr.mxu0 0.0
        %2955 = vmatpush1.msra.mxu0 0.0
        %2956 = vmatprep.subr.mxu0 0.0
        %2957 = vmatpush1.msra.mxu0 0.0
        %2958 = vmatprep.subr.mxu0 0.0
        %2959 = vmatpush1.msra.mxu0 0.0
        %2960 = vmatprep.subr.mxu0 0.0
        %2961 = vmatpush1.msra.mxu0 0.0
        %2962 = vmatprep.subr.mxu0 0.0
        %2963 = vmatpush1.msra.mxu0 0.0
        %2964 = vmatprep.subr.mxu0 0.0
        %2965 = vmatpush1.msra.mxu0 0.0
        %2966 = vmatprep.subr.mxu0 0.0
        %2967 = vmatpush1.msra.mxu0 0.0
        %2968 = vmatprep.subr.mxu0 0.0
        %2969 = vmatpush1.msra.mxu0 0.0
        %2970 = vmatprep.subr.mxu0 0.0
        %2971 = vmatpush1.msra.mxu0 0.0
        %2972 = vmatprep.subr.mxu0 0.0
        %2973 = vmatpush1.msra.mxu0 0.0
        %2974 = vmatprep.subr.mxu0 0.0
        %2975 = vmatpush1.msra.mxu0 0.0
        %2976 = vmatprep.subr.mxu0 0.0
        %2977 = vmatpush1.msra.mxu0 0.0
        %2978 = vmatprep.subr.mxu0 0.0
        %2979 = vmatpush1.msra.mxu0 0.0
        %2980 = vmatprep.subr.mxu0 0.0
        %2981 = vmatpush1.msra.mxu0 0.0
        %2982 = vmatprep.subr.mxu0 0.0
        %2983 = vmatpush1.msra.mxu0 0.0
        %2984 = vmatprep.subr.mxu0 0.0
        %2985 = vmatpush1.msra.mxu0 0.0
        %2986 = vmatprep.mubr.f32.mxu0 0.0
        %2987 = vmatmul.mubr.f32.gmra.mrb[0].mxu0 %v2920
        %v2988 = vpop.f32.mrb[0].mxu0
        %v2989 = vadd.f32 0.0, %v2988
        %v2990 = vpop.f32.mrb[0].mxu0
        %2991 = vdwg.mxu0
        %2992 = vrot.lane.b32.xlu0 %v564, 64
        %v2993 = vpop.permute.xlu0 %2992
        %v2996 = vsel %vm569, %v1877, 0
        %2998 = vmatprep.subr.mxu0 0.0
        %2999 = vmatpush1.msra.mxu0 %v2993
        %3000 = vmatprep.subr.mxu0 0.0
        %3001 = vmatpush1.msra.mxu0 0.0
        %3002 = vmatprep.subr.mxu0 0.0
        %3003 = vmatpush1.msra.mxu0 0.0
        %3004 = vmatprep.subr.mxu0 0.0
        %3005 = vmatpush1.msra.mxu0 0.0
        %3006 = vmatprep.subr.mxu0 0.0
        %3007 = vmatpush1.msra.mxu0 0.0
        %3008 = vmatprep.subr.mxu0 0.0
        %3009 = vmatpush1.msra.mxu0 0.0
        %3010 = vmatprep.subr.mxu0 0.0
        %3011 = vmatpush1.msra.mxu0 0.0
        %3012 = vmatprep.subr.mxu0 0.0
        %3013 = vmatpush1.msra.mxu0 0.0
        %3014 = vmatprep.subr.mxu0 0.0
        %3015 = vmatpush1.msra.mxu0 0.0
        %3016 = vmatprep.subr.mxu0 0.0
        %3017 = vmatpush1.msra.mxu0 0.0
        %3018 = vmatprep.subr.mxu0 0.0
        %3019 = vmatpush1.msra.mxu0 0.0
        %3020 = vmatprep.subr.mxu0 0.0
        %3021 = vmatpush1.msra.mxu0 0.0
        %3022 = vmatprep.subr.mxu0 0.0
        %3023 = vmatpush1.msra.mxu0 0.0
        %3024 = vmatprep.subr.mxu0 0.0
        %3025 = vmatpush1.msra.mxu0 0.0
        %3026 = vmatprep.subr.mxu0 0.0
        %3027 = vmatpush1.msra.mxu0 0.0
        %3028 = vmatprep.subr.mxu0 0.0
        %3029 = vmatpush1.msra.mxu0 0.0
        %3030 = vmatprep.subr.mxu0 0.0
        %3031 = vmatpush1.msra.mxu0 0.0
        %3032 = vmatprep.subr.mxu0 0.0
        %3033 = vmatpush1.msra.mxu0 0.0
        %3034 = vmatprep.subr.mxu0 0.0
        %3035 = vmatpush1.msra.mxu0 0.0
        %3036 = vmatprep.subr.mxu0 0.0
        %3037 = vmatpush1.msra.mxu0 0.0
        %3038 = vmatprep.subr.mxu0 0.0
        %3039 = vmatpush1.msra.mxu0 0.0
        %3040 = vmatprep.subr.mxu0 0.0
        %3041 = vmatpush1.msra.mxu0 0.0
        %3042 = vmatprep.subr.mxu0 0.0
        %3043 = vmatpush1.msra.mxu0 0.0
        %3044 = vmatprep.subr.mxu0 0.0
        %3045 = vmatpush1.msra.mxu0 0.0
        %3046 = vmatprep.subr.mxu0 0.0
        %3047 = vmatpush1.msra.mxu0 0.0
        %3048 = vmatprep.subr.mxu0 0.0
        %3049 = vmatpush1.msra.mxu0 0.0
        %3050 = vmatprep.subr.mxu0 0.0
        %3051 = vmatpush1.msra.mxu0 0.0
        %3052 = vmatprep.subr.mxu0 0.0
        %3053 = vmatpush1.msra.mxu0 0.0
        %3054 = vmatprep.subr.mxu0 0.0
        %3055 = vmatpush1.msra.mxu0 0.0
        %3056 = vmatprep.subr.mxu0 0.0
        %3057 = vmatpush1.msra.mxu0 0.0
        %3058 = vmatprep.subr.mxu0 0.0
        %3059 = vmatpush1.msra.mxu0 0.0
        %3060 = vmatprep.subr.mxu0 0.0
        %3061 = vmatpush1.msra.mxu0 0.0
        %3062 = vmatprep.mubr.f32.mxu0 0.0
        %3063 = vmatmul.mubr.f32.gmra.mrb[0].mxu0 %v2996
        %v3064 = vpop.f32.mrb[0].mxu0
        %v3065 = vadd.f32 0.0, %v3064
        %v3066 = vpop.f32.mrb[0].mxu0
        %3067 = vdwg.mxu0
        %3068 = vrot.lane.b32.xlu0 %v566, 64
        %v3069 = vpop.permute.xlu0 %3068
        %v3072 = vsel %vm569, %v1879, 0
        %3074 = vmatprep.subr.mxu0 0.0
        %3075 = vmatpush1.msra.mxu0 %v3069
        %3076 = vmatprep.subr.mxu0 0.0
        %3077 = vmatpush1.msra.mxu0 0.0
        %3078 = vmatprep.subr.mxu0 0.0
        %3079 = vmatpush1.msra.mxu0 0.0
        %3080 = vmatprep.subr.mxu0 0.0
        %3081 = vmatpush1.msra.mxu0 0.0
        %3082 = vmatprep.subr.mxu0 0.0
        %3083 = vmatpush1.msra.mxu0 0.0
        %3084 = vmatprep.subr.mxu0 0.0
        %3085 = vmatpush1.msra.mxu0 0.0
        %3086 = vmatprep.subr.mxu0 0.0
        %3087 = vmatpush1.msra.mxu0 0.0
        %3088 = vmatprep.subr.mxu0 0.0
        %3089 = vmatpush1.msra.mxu0 0.0
        %3090 = vmatprep.subr.mxu0 0.0
        %3091 = vmatpush1.msra.mxu0 0.0
        %3092 = vmatprep.subr.mxu0 0.0
        %3093 = vmatpush1.msra.mxu0 0.0
        %3094 = vmatprep.subr.mxu0 0.0
        %3095 = vmatpush1.msra.mxu0 0.0
        %3096 = vmatprep.subr.mxu0 0.0
        %3097 = vmatpush1.msra.mxu0 0.0
        %3098 = vmatprep.subr.mxu0 0.0
        %3099 = vmatpush1.msra.mxu0 0.0
        %3100 = vmatprep.subr.mxu0 0.0
        %3101 = vmatpush1.msra.mxu0 0.0
        %3102 = vmatprep.subr.mxu0 0.0
        %3103 = vmatpush1.msra.mxu0 0.0
        %3104 = vmatprep.subr.mxu0 0.0
        %3105 = vmatpush1.msra.mxu0 0.0
        %3106 = vmatprep.subr.mxu0 0.0
        %3107 = vmatpush1.msra.mxu0 0.0
        %3108 = vmatprep.subr.mxu0 0.0
        %3109 = vmatpush1.msra.mxu0 0.0
        %3110 = vmatprep.subr.mxu0 0.0
        %3111 = vmatpush1.msra.mxu0 0.0
        %3112 = vmatprep.subr.mxu0 0.0
        %3113 = vmatpush1.msra.mxu0 0.0
        %3114 = vmatprep.subr.mxu0 0.0
        %3115 = vmatpush1.msra.mxu0 0.0
        %3116 = vmatprep.subr.mxu0 0.0
        %3117 = vmatpush1.msra.mxu0 0.0
        %3118 = vmatprep.subr.mxu0 0.0
        %3119 = vmatpush1.msra.mxu0 0.0
        %3120 = vmatprep.subr.mxu0 0.0
        %3121 = vmatpush1.msra.mxu0 0.0
        %3122 = vmatprep.subr.mxu0 0.0
        %3123 = vmatpush1.msra.mxu0 0.0
        %3124 = vmatprep.subr.mxu0 0.0
        %3125 = vmatpush1.msra.mxu0 0.0
        %3126 = vmatprep.subr.mxu0 0.0
        %3127 = vmatpush1.msra.mxu0 0.0
        %3128 = vmatprep.subr.mxu0 0.0
        %3129 = vmatpush1.msra.mxu0 0.0
        %3130 = vmatprep.subr.mxu0 0.0
        %3131 = vmatpush1.msra.mxu0 0.0
        %3132 = vmatprep.subr.mxu0 0.0
        %3133 = vmatpush1.msra.mxu0 0.0
        %3134 = vmatprep.subr.mxu0 0.0
        %3135 = vmatpush1.msra.mxu0 0.0
        %3136 = vmatprep.subr.mxu0 0.0
        %3137 = vmatpush1.msra.mxu0 0.0
        %3138 = vmatprep.mubr.f32.mxu0 0.0
        %3139 = vmatmul.mubr.f32.gmra.mrb[0].mxu0 %v3072
        %v3140 = vpop.f32.mrb[0].mxu0
        %v3141 = vadd.f32 0.0, %v3140
        %v3142 = vpop.f32.mrb[0].mxu0
        %3143 = vdwg.mxu0
        %v3144 = vrcp.pop %v1882
        %v3145 = vrcp.pop %v1885
        %v3146 = vrcp.pop %v1888
        %v3147 = vrcp.pop %v1891
        %v3148 = vrcp.pop %v1894
        %v3149 = vrcp.pop %v1897
        %v3150 = vrcp.pop %v1900
        %v3151 = vrcp.pop %v1903
        %v3152 = vrcp.pop %v1906
        %v3153 = vrcp.pop %v1909
        %v3154 = vrcp.pop %v1912
        %v3155 = vrcp.pop %v1915
        %v3156 = vrcp.pop %v1918
        %v3157 = vrcp.pop %v1921
        %v3158 = vrcp.pop %v1924
        %v3159 = vrcp.pop %v1927
        %v3160 = vmul.f32 %v2001, %v3144
        %v3161 = vmul.f32 %v2077, %v3145
        %v3162 = vmul.f32 %v2153, %v3146
        %v3163 = vmul.f32 %v2229, %v3147
        %v3164 = vmul.f32 %v2305, %v3148
        %v3165 = vmul.f32 %v2381, %v3149
        %v3166 = vmul.f32 %v2457, %v3150
        %v3167 = vmul.f32 %v2533, %v3151
        %v3168 = vmul.f32 %v2609, %v3152
        %v3169 = vmul.f32 %v2685, %v3153
        %v3170 = vmul.f32 %v2761, %v3154
        %v3171 = vmul.f32 %v2837, %v3155
        %v3172 = vmul.f32 %v2913, %v3156
        %v3173 = vmul.f32 %v2989, %v3157
        %v3174 = vmul.f32 %v3065, %v3158
        %v3175 = vmul.f32 %v3141, %v3159
        %3180 = vrot.lane.b32.xlu0 %v3164, 8
        %v3181 = vpop.permute.xlu0 %3180
        %3182 = vrot.lane.b32.xlu0 %v3165, 8
        %v3183 = vpop.permute.xlu0 %3182
        %3184 = vrot.lane.b32.xlu0 %v3166, 8
        %v3185 = vpop.permute.xlu0 %3184
        %3186 = vrot.lane.b32.xlu0 %v3167, 8
        %v3187 = vpop.permute.xlu0 %3186
        %3196 = vrot.lane.b32.xlu0 %v3168, 16
        %v3197 = vpop.permute.xlu0 %3196
        %3198 = vrot.lane.b32.xlu0 %v3169, 16
        %v3199 = vpop.permute.xlu0 %3198
        %3200 = vrot.lane.b32.xlu0 %v3170, 16
        %v3201 = vpop.permute.xlu0 %3200
        %3202 = vrot.lane.b32.xlu0 %v3171, 16
        %v3203 = vpop.permute.xlu0 %3202
        %3212 = vrot.lane.b32.xlu0 %v3172, 24
        %v3213 = vpop.permute.xlu0 %3212
        %3214 = vrot.lane.b32.xlu0 %v3173, 24
        %v3215 = vpop.permute.xlu0 %3214
        %3216 = vrot.lane.b32.xlu0 %v3174, 24
        %v3217 = vpop.permute.xlu0 %3216
        %3218 = vrot.lane.b32.xlu0 %v3175, 24
        %v3219 = vpop.permute.xlu0 %3218
        %v3224 = vsel %vm569, %v3160, %v3181
        %v3225 = vsel %vm569, %v3161, %v3183
        %v3226 = vsel %vm569, %v3162, %v3185
        %v3227 = vsel %vm569, %v3163, %v3187
        %vm3228 = vcmask 130048
        %v3229 = vsel %vm3228, %v3224, %v3197
        %v3230 = vsel %vm3228, %v3225, %v3199
        %v3231 = vsel %vm3228, %v3226, %v3201
        %v3232 = vsel %vm3228, %v3227, %v3203
        %vm3233 = vcmask 195584
        %v3234 = vsel %vm3233, %v3229, %v3213
        %v3235 = vsel %vm3233, %v3230, %v3215
        %v3236 = vsel %vm3233, %v3231, %v3217
        %v3237 = vsel %vm3233, %v3232, %v3219
        %v3238 = vpack.c.bf16 %v3235, %v3234
        %v3239 = vpack.c.bf16 %v3237, %v3236
        %v3240 = vld [vmem:[%s3] sm:$0xf]
        %v3241 = vld [vmem:[%s3 + $0x4] sm:$0xf]
        %v3242 = vld [vmem:[%s3 + $0x8] sm:$0xf]
        %v3243 = vld [vmem:[%s3 + $0xc] sm:$0xf]
        %v3245 = vlaneseq
        %v3246 = vshrl.u32 %v3245, 7
        %v3247 = vsub.s32 0, %v3246
        %v3248 = vrot.slane %v452, %v3247
        %v3254 = vunpack.c.l.b16 %v3240
        %v3255 = vunpack.c.l.b16 %v3241
        %v3256 = vunpack.c.l.b16 %v3242
        %v3257 = vunpack.c.l.b16 %v3243
        %v3258 = vpack.c.b16 %v3255, %v3254
        %v3259 = vpack.c.b16 %v3257, %v3256
        %v3263 = vsel %vm483, %v3238, 0
        %v3266 = vsel %vm483, %v3239, 0
        %3268 = vmatprep.subr.bf16.mxu0 0
        %3269 = vmatpush1.bf16.msra.mxu0 %v3258
        %3270 = vmatprep.subr.bf16.mxu0 0
        %3271 = vmatpush1.bf16.msra.mxu0 %v3259
        %3272 = vmatprep.subr.bf16.mxu0 0
        %3273 = vmatpush1.bf16.msra.mxu0 0
        %3274 = vmatprep.subr.bf16.mxu0 0
        %3275 = vmatpush1.bf16.msra.mxu0 0
        %3276 = vmatprep.subr.bf16.mxu0 0
        %3277 = vmatpush1.bf16.msra.mxu0 0
        %3278 = vmatprep.subr.bf16.mxu0 0
        %3279 = vmatpush1.bf16.msra.mxu0 0
        %3280 = vmatprep.subr.bf16.mxu0 0
        %3281 = vmatpush1.bf16.msra.mxu0 0
        %3282 = vmatprep.subr.bf16.mxu0 0
        %3283 = vmatpush1.bf16.msra.mxu0 0
        %3284 = vmatprep.subr.bf16.mxu0 0
        %3285 = vmatpush1.bf16.msra.mxu0 0
        %3286 = vmatprep.subr.bf16.mxu0 0
        %3287 = vmatpush1.bf16.msra.mxu0 0
        %3288 = vmatprep.subr.bf16.mxu0 0
        %3289 = vmatpush1.bf16.msra.mxu0 0
        %3290 = vmatprep.subr.bf16.mxu0 0
        %3291 = vmatpush1.bf16.msra.mxu0 0
        %3292 = vmatprep.subr.bf16.mxu0 0
        %3293 = vmatpush1.bf16.msra.mxu0 0
        %3294 = vmatprep.subr.bf16.mxu0 0
        %3295 = vmatpush1.bf16.msra.mxu0 0
        %3296 = vmatprep.subr.bf16.mxu0 0
        %3297 = vmatpush1.bf16.msra.mxu0 0
        %3298 = vmatprep.subr.bf16.mxu0 0
        %3299 = vmatpush1.bf16.msra.mxu0 0
        %3300 = vmatprep.mubr.bf16.mxu0 0
        %3301 = vmatmul.mubr.bf16.gmra.mrb[0].mxu0 %v3263
        %v3302 = vpop.f32.mrb[0].mxu0
        %v3303 = vadd.f32 %v3248, %v3302
        %v3304 = vpop.f32.mrb[0].mxu0
        %v3305 = vpop.f32.mrb[0].mxu0
        %v3306 = vadd.f32 %v3248, %v3305
        %v3307 = vpop.f32.mrb[0].mxu0
        %3308 = vmatprep.mubr.bf16.mxu0 0
        %3309 = vmatmul.mubr.bf16.gmra.mrb[0].mxu0 %v3266
        %v3310 = vpop.f32.mrb[0].mxu0
        %v3311 = vadd.f32 %v3248, %v3310
        %v3312 = vpop.f32.mrb[0].mxu0
        %v3313 = vpop.f32.mrb[0].mxu0
        %v3314 = vadd.f32 %v3248, %v3313
        %v3315 = vpop.f32.mrb[0].mxu0
        %3316 = vdwg.mxu0
        %v3317 = vadd.f32 %v447, %v3303
        %v3318 = vadd.f32 %v448, %v3306
        %v3319 = vadd.f32 %v449, %v3311
        %v3320 = vadd.f32 %v450, %v3314
        %v3321 = vsel %vm483, %v3317, 0.0
        %3322 = vadd.xlane.f32.xlu0 %v3321
        %v3323 = vpop.xlane.xlu0 %3322
        %v3324 = vsel %vm483, %v3318, 0.0
        %3325 = vadd.xlane.f32.xlu0 %v3324
        %v3326 = vpop.xlane.xlu0 %3325
        %v3327 = vsel %vm483, %v3319, 0.0
        %3328 = vadd.xlane.f32.xlu0 %v3327
        %v3329 = vpop.xlane.xlu0 %3328
        %v3330 = vsel %vm483, %v3320, 0.0
        %3331 = vadd.xlane.f32.xlu0 %v3330
        %v3332 = vpop.xlane.xlu0 %3331
        %v3333 = vrcp.pop 32.0
        %v3334 = vmul.f32 %v3323, %v3333
        %v3335 = vmul.f32 %v3326, %v3333
        %v3336 = vmul.f32 %v3329, %v3333
        %v3337 = vmul.f32 %v3332, %v3333
        %v3338 = vmul.f32 %v3317, %v3317
        %v3339 = vmul.f32 %v3318, %v3318
        %v3340 = vmul.f32 %v3319, %v3319
        %v3341 = vmul.f32 %v3320, %v3320
        %v3342 = vsel %vm483, %v3338, 0.0
        %3343 = vadd.xlane.f32.xlu0 %v3342
        %v3344 = vpop.xlane.xlu0 %3343
        %v3345 = vsel %vm483, %v3339, 0.0
        %3346 = vadd.xlane.f32.xlu0 %v3345
        %v3347 = vpop.xlane.xlu0 %3346
        %v3348 = vsel %vm483, %v3340, 0.0
        %3349 = vadd.xlane.f32.xlu0 %v3348
        %v3350 = vpop.xlane.xlu0 %3349
        %v3351 = vsel %vm483, %v3341, 0.0
        %3352 = vadd.xlane.f32.xlu0 %v3351
        %v3353 = vpop.xlane.xlu0 %3352
        %v3354 = vmul.f32 %v3344, %v3333
        %v3355 = vmul.f32 %v3347, %v3333
        %v3356 = vmul.f32 %v3350, %v3333
        %v3357 = vmul.f32 %v3353, %v3333
        %v3358 = vmul.f32 %v3334, %v3334
        %v3359 = vmul.f32 %v3335, %v3335
        %v3360 = vmul.f32 %v3336, %v3336
        %v3361 = vmul.f32 %v3337, %v3337
        %v3362 = vsub.f32 %v3354, %v3358
        %v3363 = vsub.f32 %v3355, %v3359
        %v3364 = vsub.f32 %v3356, %v3360
        %v3365 = vsub.f32 %v3357, %v3361
        %v3366 = vmax.f32 %v3362, 0.0
        %v3367 = vmax.f32 %v3363, 0.0
        %v3368 = vmax.f32 %v3364, 0.0
        %v3369 = vmax.f32 %v3365, 0.0
        %v3370 = vsub.f32 %v3317, %v3334
        %v3371 = vsub.f32 %v3318, %v3335
        %v3372 = vsub.f32 %v3319, %v3336
        %v3373 = vsub.f32 %v3320, %v3337
        %v3374 = vadd.f32 %v3366, 1e-05
        %v3375 = vadd.f32 %v3367, 1e-05
        %v3376 = vadd.f32 %v3368, 1e-05
        %v3377 = vadd.f32 %v3369, 1e-05
        %v3378 = vrsqrt.pop %v3374
        %v3379 = vrsqrt.pop %v3375
        %v3380 = vrsqrt.pop %v3376
        %v3381 = vrsqrt.pop %v3377
        %v3382 = vmul.f32 %v3370, %v3378
        %v3383 = vmul.f32 %v3371, %v3379
        %v3384 = vmul.f32 %v3372, %v3380
        %v3385 = vmul.f32 %v3373, %v3381
        %v3387 = vlaneseq
        %v3388 = vshrl.u32 %v3387, 7
        %v3389 = vsub.s32 0, %v3388
        %v3390 = vrot.slane %v453, %v3389
        %v3392 = vmul.f32 %v3382, %v3390
        %v3393 = vmul.f32 %v3383, %v3390
        %v3394 = vmul.f32 %v3384, %v3390
        %v3395 = vmul.f32 %v3385, %v3390
        %v3397 = vlaneseq
        %v3398 = vshrl.u32 %v3397, 7
        %v3399 = vsub.s32 0, %v3398
        %v3400 = vrot.slane %v454, %v3399
        %v3402 = vadd.f32 %v3392, %v3400
        %v3403 = vadd.f32 %v3393, %v3400
        %v3404 = vadd.f32 %v3394, %v3400
        %v3405 = vadd.f32 %v3395, %v3400
        %v3406 = vpack.c.bf16 %v3403, %v3402
        %v3407 = vpack.c.bf16 %v3405, %v3404
        %v3408 = vld [vmem:[%s7] sm:$0xf]
        %v3409 = vld [vmem:[%s7 + $0x4] sm:$0xf]
        %v3410 = vld [vmem:[%s7 + $0x8] sm:$0xf]
        %v3411 = vld [vmem:[%s7 + $0xc] sm:$0xf]
        %v3413 = vlaneseq
        %v3414 = vshrl.u32 %v3413, 7
        %v3415 = vsub.s32 0, %v3414
        %v3416 = vrot.slane %v455, %v3415
        %v3422 = vunpack.c.l.b16 %v3408
        %v3423 = vunpack.c.l.b16 %v3409
        %v3424 = vunpack.c.l.b16 %v3410
        %v3425 = vunpack.c.l.b16 %v3411
        %v3426 = vpack.c.b16 %v3423, %v3422
        %v3427 = vpack.c.b16 %v3425, %v3424
        %v3431 = vsel %vm483, %v3406, 0
        %v3434 = vsel %vm483, %v3407, 0
        %3436 = vmatprep.subr.bf16.mxu0 0
        %3437 = vmatpush1.bf16.msra.mxu0 %v3426
        %3438 = vmatprep.subr.bf16.mxu0 0
        %3439 = vmatpush1.bf16.msra.mxu0 %v3427
        %3440 = vmatprep.subr.bf16.mxu0 0
        %3441 = vmatpush1.bf16.msra.mxu0 0
        %3442 = vmatprep.subr.bf16.mxu0 0
        %3443 = vmatpush1.bf16.msra.mxu0 0
        %3444 = vmatprep.subr.bf16.mxu0 0
        %3445 = vmatpush1.bf16.msra.mxu0 0
        %3446 = vmatprep.subr.bf16.mxu0 0
        %3447 = vmatpush1.bf16.msra.mxu0 0
        %3448 = vmatprep.subr.bf16.mxu0 0
        %3449 = vmatpush1.bf16.msra.mxu0 0
        %3450 = vmatprep.subr.bf16.mxu0 0
        %3451 = vmatpush1.bf16.msra.mxu0 0
        %3452 = vmatprep.subr.bf16.mxu0 0
        %3453 = vmatpush1.bf16.msra.mxu0 0
        %3454 = vmatprep.subr.bf16.mxu0 0
        %3455 = vmatpush1.bf16.msra.mxu0 0
        %3456 = vmatprep.subr.bf16.mxu0 0
        %3457 = vmatpush1.bf16.msra.mxu0 0
        %3458 = vmatprep.subr.bf16.mxu0 0
        %3459 = vmatpush1.bf16.msra.mxu0 0
        %3460 = vmatprep.subr.bf16.mxu0 0
        %3461 = vmatpush1.bf16.msra.mxu0 0
        %3462 = vmatprep.subr.bf16.mxu0 0
        %3463 = vmatpush1.bf16.msra.mxu0 0
        %3464 = vmatprep.subr.bf16.mxu0 0
        %3465 = vmatpush1.bf16.msra.mxu0 0
        %3466 = vmatprep.subr.bf16.mxu0 0
        %3467 = vmatpush1.bf16.msra.mxu0 0
        %3468 = vmatprep.mubr.bf16.mxu0 0
        %3469 = vmatmul.mubr.bf16.gmra.mrb[0].mxu0 %v3431
        %v3470 = vpop.f32.mrb[0].mxu0
        %v3471 = vadd.f32 %v3416, %v3470
        %v3472 = vpop.f32.mrb[0].mxu0
        %v3473 = vpop.f32.mrb[0].mxu0
        %v3474 = vadd.f32 %v3416, %v3473
        %v3475 = vpop.f32.mrb[0].mxu0
        %3476 = vmatprep.mubr.bf16.mxu0 0
        %3477 = vmatmul.mubr.bf16.gmra.mrb[0].mxu0 %v3434
        %v3478 = vpop.f32.mrb[0].mxu0
        %v3479 = vadd.f32 %v3416, %v3478
        %v3480 = vpop.f32.mrb[0].mxu0
        %v3481 = vpop.f32.mrb[0].mxu0
        %v3482 = vadd.f32 %v3416, %v3481
        %v3483 = vpop.f32.mrb[0].mxu0
        %3484 = vdwg.mxu0
        %v3485 = vmul.f32 %v3471, %v3471
        %v3486 = vmul.f32 %v3474, %v3474
        %v3487 = vmul.f32 %v3479, %v3479
        %v3488 = vmul.f32 %v3482, %v3482
        %v3489 = vmul.f32 %v3471, %v3485
        %v3490 = vmul.f32 %v3474, %v3486
        %v3491 = vmul.f32 %v3479, %v3487
        %v3492 = vmul.f32 %v3482, %v3488
        %v3493 = vmul.f32 %v3489, 0.044715
        %v3494 = vmul.f32 %v3490, 0.044715
        %v3495 = vmul.f32 %v3491, 0.044715
        %v3496 = vmul.f32 %v3492, 0.044715
        %v3497 = vadd.f32 %v3471, %v3493
        %v3498 = vadd.f32 %v3474, %v3494
        %v3499 = vadd.f32 %v3479, %v3495
        %v3500 = vadd.f32 %v3482, %v3496
        %v3501 = vmul.f32 %v3497, 0.7978846
        %v3502 = vmul.f32 %v3498, 0.7978846
        %v3503 = vmul.f32 %v3499, 0.7978846
        %v3504 = vmul.f32 %v3500, 0.7978846
        %v3505 = vtanh.pop %v3501
        %v3506 = vtanh.pop %v3502
        %v3507 = vtanh.pop %v3503
        %v3508 = vtanh.pop %v3504
        %v3509 = vadd.f32 %v3505, 1.0
        %v3510 = vadd.f32 %v3506, 1.0
        %v3511 = vadd.f32 %v3507, 1.0
        %v3512 = vadd.f32 %v3508, 1.0
        %v3513 = vmul.f32 %v3509, 0.5
        %v3514 = vmul.f32 %v3510, 0.5
        %v3515 = vmul.f32 %v3511, 0.5
        %v3516 = vmul.f32 %v3512, 0.5
        %v3517 = vmul.f32 %v3471, %v3513
        %v3518 = vmul.f32 %v3474, %v3514
        %v3519 = vmul.f32 %v3479, %v3515
        %v3520 = vmul.f32 %v3482, %v3516
        %v3521 = vpack.c.bf16 %v3518, %v3517
        %v3522 = vpack.c.bf16 %v3520, %v3519
        %v3523 = vld [vmem:[%s9] sm:$0xf]
        %v3524 = vld [vmem:[%s9 + $0x4] sm:$0xf]
        %v3525 = vld [vmem:[%s9 + $0x8] sm:$0xf]
        %v3526 = vld [vmem:[%s9 + $0xc] sm:$0xf]
        %v3527 = vld [vmem:[%s9 + $0x10] sm:$0xf]
        %v3528 = vld [vmem:[%s9 + $0x14] sm:$0xf]
        %v3529 = vld [vmem:[%s9 + $0x18] sm:$0xf]
        %v3530 = vld [vmem:[%s9 + $0x1c] sm:$0xf]
        %v3531 = vld [vmem:[%s9 + $0x20] sm:$0xf]
        %v3532 = vld [vmem:[%s9 + $0x24] sm:$0xf]
        %v3533 = vld [vmem:[%s9 + $0x28] sm:$0xf]
        %v3534 = vld [vmem:[%s9 + $0x2c] sm:$0xf]
        %v3535 = vld [vmem:[%s9 + $0x30] sm:$0xf]
        %v3536 = vld [vmem:[%s9 + $0x34] sm:$0xf]
        %v3537 = vld [vmem:[%s9 + $0x38] sm:$0xf]
        %v3538 = vld [vmem:[%s9 + $0x3c] sm:$0xf]
        %v3540 = vlaneseq
        %v3541 = vshrl.u32 %v3540, 7
        %v3542 = vsub.s32 0, %v3541
        %v3543 = vrot.slane %v456, %v3542
        %v3561 = vunpack.c.l.b16 %v3523
        %v3562 = vunpack.c.l.b16 %v3524
        %v3563 = vunpack.c.l.b16 %v3525
        %v3564 = vunpack.c.l.b16 %v3526
        %v3565 = vunpack.c.l.b16 %v3527
        %v3566 = vunpack.c.l.b16 %v3528
        %v3567 = vunpack.c.l.b16 %v3529
        %v3568 = vunpack.c.l.b16 %v3530
        %v3569 = vunpack.c.l.b16 %v3531
        %v3570 = vunpack.c.l.b16 %v3532
        %v3571 = vunpack.c.l.b16 %v3533
        %v3572 = vunpack.c.l.b16 %v3534
        %v3573 = vunpack.c.l.b16 %v3535
        %v3574 = vunpack.c.l.b16 %v3536
        %v3575 = vunpack.c.l.b16 %v3537
        %v3576 = vunpack.c.l.b16 %v3538
        %v3577 = vpack.c.b16 %v3562, %v3561
        %v3578 = vpack.c.b16 %v3564, %v3563
        %v3579 = vpack.c.b16 %v3566, %v3565
        %v3580 = vpack.c.b16 %v3568, %v3567
        %v3581 = vpack.c.b16 %v3570, %v3569
        %v3582 = vpack.c.b16 %v3572, %v3571
        %v3583 = vpack.c.b16 %v3574, %v3573
        %v3584 = vpack.c.b16 %v3576, %v3575
        %3593 = vmatprep.subr.bf16.mxu0 0
        %3594 = vmatpush1.bf16.msra.mxu0 %v3577
        %3595 = vmatprep.subr.bf16.mxu0 0
        %3596 = vmatpush1.bf16.msra.mxu0 %v3578
        %3597 = vmatprep.subr.bf16.mxu0 0
        %3598 = vmatpush1.bf16.msra.mxu0 %v3579
        %3599 = vmatprep.subr.bf16.mxu0 0
        %3600 = vmatpush1.bf16.msra.mxu0 %v3580
        %3601 = vmatprep.subr.bf16.mxu0 0
        %3602 = vmatpush1.bf16.msra.mxu0 %v3581
        %3603 = vmatprep.subr.bf16.mxu0 0
        %3604 = vmatpush1.bf16.msra.mxu0 %v3582
        %3605 = vmatprep.subr.bf16.mxu0 0
        %3606 = vmatpush1.bf16.msra.mxu0 %v3583
        %3607 = vmatprep.subr.bf16.mxu0 0
        %3608 = vmatpush1.bf16.msra.mxu0 %v3584
        %3609 = vmatprep.subr.bf16.mxu0 0
        %3610 = vmatpush1.bf16.msra.mxu0 0
        %3611 = vmatprep.subr.bf16.mxu0 0
        %3612 = vmatpush1.bf16.msra.mxu0 0
        %3613 = vmatprep.subr.bf16.mxu0 0
        %3614 = vmatpush1.bf16.msra.mxu0 0
        %3615 = vmatprep.subr.bf16.mxu0 0
        %3616 = vmatpush1.bf16.msra.mxu0 0
        %3617 = vmatprep.subr.bf16.mxu0 0
        %3618 = vmatpush1.bf16.msra.mxu0 0
        %3619 = vmatprep.subr.bf16.mxu0 0
        %3620 = vmatpush1.bf16.msra.mxu0 0
        %3621 = vmatprep.subr.bf16.mxu0 0
        %3622 = vmatpush1.bf16.msra.mxu0 0
        %3623 = vmatprep.subr.bf16.mxu0 0
        %3624 = vmatpush1.bf16.msra.mxu0 0
        %3625 = vmatprep.mubr.bf16.mxu0 0
        %3626 = vmatmul.mubr.bf16.gmra.mrb[0].mxu0 %v3521
        %v3627 = vpop.f32.mrb[0].mxu0
        %v3628 = vadd.f32 %v3543, %v3627
        %v3629 = vpop.f32.mrb[0].mxu0
        %v3630 = vpop.f32.mrb[0].mxu0
        %v3631 = vadd.f32 %v3543, %v3630
        %v3632 = vpop.f32.mrb[0].mxu0
        %3633 = vmatprep.mubr.bf16.mxu0 0
        %3634 = vmatmul.mubr.bf16.gmra.mrb[0].mxu0 %v3522
        %v3635 = vpop.f32.mrb[0].mxu0
        %v3636 = vadd.f32 %v3543, %v3635
        %v3637 = vpop.f32.mrb[0].mxu0
        %v3638 = vpop.f32.mrb[0].mxu0
        %v3639 = vadd.f32 %v3543, %v3638
        %v3640 = vpop.f32.mrb[0].mxu0
        %3641 = vdwg.mxu0
        %v3642 = vadd.f32 %v3402, %v3628
        %v3643 = vadd.f32 %v3403, %v3631
        %v3644 = vadd.f32 %v3404, %v3636
        %v3645 = vadd.f32 %v3405, %v3639
        %v3646 = vsel %vm483, %v3642, 0.0
        %3647 = vadd.xlane.f32.xlu0 %v3646
        %v3648 = vpop.xlane.xlu0 %3647
        %v3649 = vsel %vm483, %v3643, 0.0
        %3650 = vadd.xlane.f32.xlu0 %v3649
        %v3651 = vpop.xlane.xlu0 %3650
        %v3652 = vsel %vm483, %v3644, 0.0
        %3653 = vadd.xlane.f32.xlu0 %v3652
        %v3654 = vpop.xlane.xlu0 %3653
        %v3655 = vsel %vm483, %v3645, 0.0
        %3656 = vadd.xlane.f32.xlu0 %v3655
        %v3657 = vpop.xlane.xlu0 %3656
        %v3658 = vmul.f32 %v3648, %v3333
        %v3659 = vmul.f32 %v3651, %v3333
        %v3660 = vmul.f32 %v3654, %v3333
        %v3661 = vmul.f32 %v3657, %v3333
        %v3662 = vmul.f32 %v3642, %v3642
        %v3663 = vmul.f32 %v3643, %v3643
        %v3664 = vmul.f32 %v3644, %v3644
        %v3665 = vmul.f32 %v3645, %v3645
        %v3666 = vsel %vm483, %v3662, 0.0
        %3667 = vadd.xlane.f32.xlu0 %v3666
        %v3668 = vpop.xlane.xlu0 %3667
        %v3669 = vsel %vm483, %v3663, 0.0
        %3670 = vadd.xlane.f32.xlu0 %v3669
        %v3671 = vpop.xlane.xlu0 %3670
        %v3672 = vsel %vm483, %v3664, 0.0
        %3673 = vadd.xlane.f32.xlu0 %v3672
        %v3674 = vpop.xlane.xlu0 %3673
        %v3675 = vsel %vm483, %v3665, 0.0
        %3676 = vadd.xlane.f32.xlu0 %v3675
        %v3677 = vpop.xlane.xlu0 %3676
        %v3678 = vmul.f32 %v3668, %v3333
        %v3679 = vmul.f32 %v3671, %v3333
        %v3680 = vmul.f32 %v3674, %v3333
        %v3681 = vmul.f32 %v3677, %v3333
        %v3682 = vmul.f32 %v3658, %v3658
        %v3683 = vmul.f32 %v3659, %v3659
        %v3684 = vmul.f32 %v3660, %v3660
        %v3685 = vmul.f32 %v3661, %v3661
        %v3686 = vsub.f32 %v3678, %v3682
        %v3687 = vsub.f32 %v3679, %v3683
        %v3688 = vsub.f32 %v3680, %v3684
        %v3689 = vsub.f32 %v3681, %v3685
        %v3690 = vmax.f32 %v3686, 0.0
        %v3691 = vmax.f32 %v3687, 0.0
        %v3692 = vmax.f32 %v3688, 0.0
        %v3693 = vmax.f32 %v3689, 0.0
        %v3694 = vsub.f32 %v3642, %v3658
        %v3695 = vsub.f32 %v3643, %v3659
        %v3696 = vsub.f32 %v3644, %v3660
        %v3697 = vsub.f32 %v3645, %v3661
        %v3698 = vadd.f32 %v3690, 1e-05
        %v3699 = vadd.f32 %v3691, 1e-05
        %v3700 = vadd.f32 %v3692, 1e-05
        %v3701 = vadd.f32 %v3693, 1e-05
        %v3702 = vrsqrt.pop %v3698
        %v3703 = vrsqrt.pop %v3699
        %v3704 = vrsqrt.pop %v3700
        %v3705 = vrsqrt.pop %v3701
        %v3706 = vmul.f32 %v3694, %v3702
        %v3707 = vmul.f32 %v3695, %v3703
        %v3708 = vmul.f32 %v3696, %v3704
        %v3709 = vmul.f32 %v3697, %v3705
        %v3711 = vlaneseq
        %v3712 = vshrl.u32 %v3711, 7
        %v3713 = vsub.s32 0, %v3712
        %v3714 = vrot.slane %v457, %v3713
        %v3716 = vmul.f32 %v3706, %v3714
        %v3717 = vmul.f32 %v3707, %v3714
        %v3718 = vmul.f32 %v3708, %v3714
        %v3719 = vmul.f32 %v3709, %v3714
        %v3721 = vlaneseq
        %v3722 = vshrl.u32 %v3721, 7
        %v3723 = vsub.s32 0, %v3722
        %v3724 = vrot.slane %v458, %v3723
        %v3726 = vadd.f32 %v3716, %v3724
        %v3727 = vadd.f32 %v3717, %v3724
        %v3728 = vadd.f32 %v3718, %v3724
        %v3729 = vadd.f32 %v3719, %v3724
        %3730 = vst.msk [vmem:[%s434] sm:$0xff] %vm483, %v3726
        %3731 = vst.msk [vmem:[%s434 + $0x8] sm:$0xff] %vm483, %v3727
        %3732 = vst.msk [vmem:[%s434 + $0x10] sm:$0xff] %vm483, %v3728
        %3733 = vst.msk [vmem:[%s434 + $0x18] sm:$0xff] %vm483, %v3729
        %s3734 = sand.u32 %s313, 1
        %s3735 = scalar_lea.sflag [#allocation3], %s3734
        %s3736 = sand.u32 %s313, 1
        %s3737 = smul.addr %s3736, 32
        %s3738 = scalar_lea.vmem [#allocation2], %s3737
        // Predicated region
        $region73: #{tpu_custom_call.1} parent=71 // pred_check
          %p3739 = pneg %p323
        $region74: #{tpu_custom_call.1} parent=71 // pred_check_branch
          %3741 = sbr.rel (%p3739) target = $region76
        $region75: #{tpu_custom_call.1} parent=71 // pred_region
          %s3742 = smul.u32 4, %s27
          %s3744 = ssub.s32 512, 512
          %3745 = vsyncadd %s3735, %s3744
          %s3746 = smul.addr %s3742, 128
          %s3747 = scalar_lea.hbm %s13, %s3746
          %s3748 = sshll.u32 %s3738, 4
          %s3749 = int_to_ptr.vmem [resolvable:$true] %s3748
          %3754 = dma.vmem_to_hbm [thread:$0]  %s3749, 512, %s3747, %s3735, 128, 128, 8
        $region76: #{tpu_custom_call.1} parent=71 // pred_fallthru
          _
      $region72: #{tpu_custom_call.1} parent=5 // pred_fallthru
        _
      %p3755 = scmp.le.s32.totalorder 2, %s22
      // Predicated region
      $region77: #{tpu_custom_call.1} parent=5 // pred_check
        %p3756 = pneg %p3755
      $region78: #{tpu_custom_call.1} parent=5 // pred_check_branch
        %3758 = sbr.rel (%p3756) target = $region80
      $region79: #{tpu_custom_call.1} parent=5 // pred_region
        %s3759 = ssub.s32 %s22, 2
        // Predicated region
        $region81: #{tpu_custom_call.1} parent=79 // pred_check
          %p3760 = pneg %p329
        $region82: #{tpu_custom_call.1} parent=79 // pred_check_branch
          %3762 = sbr.rel (%p3760) target = $region84
        $region83: #{tpu_custom_call.1} parent=79 // pred_region
          %s3763 = sand.u32 %s314, 1
          %s3764 = scalar_lea.sflag [#allocation3], %s3763
          %s3765 = sand.u32 %s314, 1
          %s3766 = smul.addr %s3765, 32
          %s3767 = scalar_lea.vmem [#allocation2], %s3766
          %3768 = dma.done %s3764, 512
        $region84: #{tpu_custom_call.1} parent=79 // pred_fallthru
          _
      $region80: #{tpu_custom_call.1} parent=5 // pred_fallthru
        _
    $region6: #{tpu_custom_call.1} parent=1 // loop_footer
      %s26 = sadd.s32 1, %s22
    $region7: #{tpu_custom_call.1} parent=1 // loop_footer_branch
      %21 = sbr.rel target = $region3
    $region8: #{tpu_custom_call.1} parent=1 // loop_exit
      _
    %3769 = vsyncpa [#allocation3], 1
    %s3770 = scalar_lea.sflag [#allocation3], 1
    %3771 = vsyncpa %s3770, 1

// kernel: tpu_custom_call.1
$region0: #{tpu_custom_call.1}
  #allocation0 [shape = 'u32[]', space=smem, size = 0x4, offset = 0x4, fixed_abs, tag = 'smem constant byte address 0x4 - core index']
  #allocation1 [shape = 'u32[144,128]{1,0:T(1,128)}', space=vmem, size = 0x12000, scoped, tag = 'internal scratch']
  %s0 = inlined_call_operand.vmem [shape: bf16[8,8,32], index: 0, kind: input, shape index: {}]
  %s1 = inlined_call_operand.vmem [shape: bf16[32,96], index: 1, kind: input, shape index: {}]
  %s2 = inlined_call_operand.vmem [shape: f32[1,96], index: 2, kind: input, shape index: {}]
  %s3 = inlined_call_operand.vmem [shape: bf16[32,32], index: 3, kind: input, shape index: {}]
  %s4 = inlined_call_operand.vmem [shape: f32[1,32], index: 4, kind: input, shape index: {}]
  %s5 = inlined_call_operand.vmem [shape: f32[1,32], index: 5, kind: input, shape index: {}]
  %s6 = inlined_call_operand.vmem [shape: f32[1,32], index: 6, kind: input, shape index: {}]
  %s7 = inlined_call_operand.vmem [shape: bf16[32,128], index: 7, kind: input, shape index: {}]
  %s8 = inlined_call_operand.vmem [shape: f32[1,128], index: 8, kind: input, shape index: {}]
  %s9 = inlined_call_operand.vmem [shape: bf16[128,32], index: 9, kind: input, shape index: {}]
  %s10 = inlined_call_operand.vmem [shape: f32[1,32], index: 10, kind: input, shape index: {}]
  %s11 = inlined_call_operand.vmem [shape: f32[1,32], index: 11, kind: input, shape index: {}]
  %s12 = inlined_call_operand.vmem [shape: f32[1,32], index: 12, kind: input, shape index: {}]
  %s13 = inlined_call_operand.hbm [shape: f32[8,8,32], index: 13, kind: output, shape index: {}]
  %s14 = sld [smem:[#allocation0]]
  $region85: #{tpu_custom_call.1} parent=0
    _
  %s16 = ssub.s32 1, %s14
  %s17 = scalar_select 0, %s16, %s14
  $region1: #{tpu_custom_call.1} parent=0
    #allocation2 [shape = 'u8[32768]{0}', space=vmem, size = 0x8000, scoped, tag = 'output window, operand 0']
    #allocation3 [shape = 's32[2]{0}', space=sflag, size = 0x8, scoped, tag = 'scoped memory for tpu_custom_call.1']
    %18 = vsyncpa [#allocation3], 0
    %s19 = scalar_lea.sflag [#allocation3], 1
    %20 = vsyncpa %s19, 0
    loop: start=0, step=1, limit=4
    $region2: #{tpu_custom_call.1} parent=1 // loop_pre_header
      _
    $region3: #{tpu_custom_call.1} parent=1 // loop_header
      %s22 = sphi 0, %s26
      %p23 = scmp.ge.s32.totalorder %s22, 4
      %s32 = sphi 0, %s34
      %s35 = sphi 0, %s32
      %s36 = sphi 0, %s35
      %s52 = sphi 0, %s36
      %s56 = sphi 0, %s56
      %s58 = sphi 0, %s56
      %s59 = sphi 0, %s58
      %s73 = sphi 0, %s59
      %s77 = sphi 0, %s77
      %s79 = sphi 0, %s77
      %s80 = sphi 0, %s79
      %s94 = sphi 0, %s80
      %s98 = sphi 0, %s98
      %s100 = sphi 0, %s98
      %s101 = sphi 0, %s100
      %s115 = sphi 0, %s101
      %s119 = sphi 0, %s119
      %s121 = sphi 0, %s119
      %s122 = sphi 0, %s121
      %s136 = sphi 0, %s122
      %s140 = sphi 0, %s140
      %s142 = sphi 0, %s140
      %s143 = sphi 0, %s142
      %s157 = sphi 0, %s143
      %s161 = sphi 0, %s161
      %s163 = sphi 0, %s161
      %s164 = sphi 0, %s163
      %s178 = sphi 0, %s164
      %s182 = sphi 0, %s182
      %s184 = sphi 0, %s182
      %s185 = sphi 0, %s184
      %s199 = sphi 0, %s185
      %s203 = sphi 0, %s203
      %s205 = sphi 0, %s203
      %s206 = sphi 0, %s205
      %s220 = sphi 0, %s206
      %s224 = sphi 0, %s224
      %s226 = sphi 0, %s224
      %s227 = sphi 0, %s226
      %s241 = sphi 0, %s227
      %s245 = sphi 0, %s245
      %s247 = sphi 0, %s245
      %s248 = sphi 0, %s247
      %s262 = sphi 0, %s248
      %s266 = sphi 0, %s266
      %s268 = sphi 0, %s266
      %s269 = sphi 0, %s268
      %s283 = sphi 0, %s269
      %s287 = sphi 0, %s287
      %s289 = sphi 0, %s287
      %s290 = sphi 0, %s289
      %s304 = sphi 0, %s290
      %s310 = sphi 0, %s312
      %s313 = sphi 0, %s310
      %s314 = sphi 0, %s313
      %s330 = sphi 0, %s314
    $region4: #{tpu_custom_call.1} parent=1 // loop_header_branch
      %25 = sbr.rel (%p23) target = $region8
    $region5: #{tpu_custom_call.1} parent=1 // loop_body
      %s27 = ssub.s32 %s22, 1
      %s28 = ssub.s32 %s22, 2
      %s29 = sadd.s32 %s22, 1
      %s30 = ssub.s32 %s22, %s29
      %p31 = scmp.eq.s32.totalorder %s30, 0
      %s33 = sadd.s32 %s32, 1
      %s34 = scalar_select %p31, %s32, %s33
      %p37 = pneg %p31
      %p38 = scmp.eq.s32.totalorder %s22, 1
      %p39 = por %p37, %p38
      %p40 = scmp.ne.s32.totalorder %s32, %s35
      %p41 = scmp.eq.s32.totalorder %s22, 0
      %p42 = por %p40, %p41
      %p43 = scmp.ne.s32.totalorder %s32, %s35
      %p44 = scmp.eq.s32.totalorder %s27, 1
      %p45 = por %p43, %p44
      %p46 = scmp.ne.s32.totalorder %s35, %s36
      %p47 = scmp.eq.s32.totalorder %s27, 0
      %p48 = por %p46, %p47
      %p49 = scmp.ne.s32.totalorder %s35, %s36
      %p50 = scmp.eq.s32.totalorder %s28, 1
      %p51 = por %p49, %p50
      %p53 = scmp.ne.s32.totalorder %s36, %s52
      %p54 = scmp.eq.s32.totalorder %s28, 0
      %p55 = por %p53, %p54
      %s57 = sadd.s32 %s56, 1
      %p60 = scmp.eq.s32.totalorder %s22, 1
      %p61 = scmp.ne.s32.totalorder %s56, %s58
      %p62 = scmp.eq.s32.totalorder %s22, 0
      %p63 = por %p61, %p62
      %p64 = scmp.ne.s32.totalorder %s56, %s58
      %p65 = scmp.eq.s32.totalorder %s27, 1
      %p66 = por %p64, %p65
      %p67 = scmp.ne.s32.totalorder %s58, %s59
      %p68 = scmp.eq.s32.totalorder %s27, 0
      %p69 = por %p67, %p68
      %p70 = scmp.ne.s32.totalorder %s58, %s59
      %p71 = scmp.eq.s32.totalorder %s28, 1
      %p72 = por %p70, %p71
      %p74 = scmp.ne.s32.totalorder %s59, %s73
      %p75 = scmp.eq.s32.totalorder %s28, 0
      %p76 = por %p74, %p75
      %s78 = sadd.s32 %s77, 1
      %p81 = scmp.eq.s32.totalorder %s22, 1
      %p82 = scmp.ne.s32.totalorder %s77, %s79
      %p83 = scmp.eq.s32.totalorder %s22, 0
      %p84 = por %p82, %p83
      %p85 = scmp.ne.s32.totalorder %s77, %s79
      %p86 = scmp.eq.s32.totalorder %s27, 1
      %p87 = por %p85, %p86
      %p88 = scmp.ne.s32.totalorder %s79, %s80
      %p89 = scmp.eq.s32.totalorder %s27, 0
      %p90 = por %p88, %p89
      %p91 = scmp.ne.s32.totalorder %s79, %s80
      %p92 = scmp.eq.s32.totalorder %s28, 1
      %p93 = por %p91, %p92
      %p95 = scmp.ne.s32.totalorder %s80, %s94
      %p96 = scmp.eq.s32.totalorder %s28, 0
      %p97 = por %p95, %p96
      %s99 = sadd.s32 %s98, 1
      %p102 = scmp.eq.s32.totalorder %s22, 1
      %p103 = scmp.ne.s32.totalorder %s98, %s100
      %p104 = scmp.eq.s32.totalorder %s22, 0
      %p105 = por %p103, %p104
      %p106 = scmp.ne.s32.totalorder %s98, %s100
      %p107 = scmp.eq.s32.totalorder %s27, 1
      %p108 = por %p106, %p107
      %p109 = scmp.ne.s32.totalorder %s100, %s101
      %p110 = scmp.eq.s32.totalorder %s27, 0
      %p111 = por %p109, %p110
      %p112 = scmp.ne.s32.totalorder %s100, %s101
      %p113 = scmp.eq.s32.totalorder %s28, 1
      %p114 = por %p112, %p113
      %p116 = scmp.ne.s32.totalorder %s101, %s115
      %p117 = scmp.eq.s32.totalorder %s28, 0
      %p118 = por %p116, %p117
      %s120 = sadd.s32 %s119, 1
      %p123 = scmp.eq.s32.totalorder %s22, 1
      %p124 = scmp.ne.s32.totalorder %s119, %s121
      %p125 = scmp.eq.s32.totalorder %s22, 0
      %p126 = por %p124, %p125
      %p127 = scmp.ne.s32.totalorder %s119, %s121
      %p128 = scmp.eq.s32.totalorder %s27, 1
      %p129 = por %p127, %p128
      %p130 = scmp.ne.s32.totalorder %s121, %s122
      %p131 = scmp.eq.s32.totalorder %s27, 0
      %p132 = por %p130, %p131
      %p133 = scmp.ne.s32.totalorder %s121, %s122
      %p134 = scmp.eq.s32.totalorder %s28, 1
      %p135 = por %p133, %p134
      %p137 = scmp.ne.s32.totalorder %s122, %s136
      %p138 = scmp.eq.s32.totalorder %s28, 0
      %p139 = por %p137, %p138
      %s141 = sadd.s32 %s140, 1
      %p144 = scmp.eq.s32.totalorder %s22, 1
      %p145 = scmp.ne.s32.totalorder %s140, %s142
      %p146 = scmp.eq.s32.totalorder %s22, 0
      %p147 = por %p145, %p146
      %p148 = scmp.ne.s32.totalorder %s140, %s142
      %p149 = scmp.eq.s32.totalorder %s27, 1
      %p150 = por %p148, %p149
      %p151 = scmp.ne.s32.totalorder %s142, %s143
      %p152 = scmp.eq.s32.totalorder %s27, 0
      %p153 = por %p151, %p152
      %p154 = scmp.ne.s32.totalorder %s142, %s143
      %p155 = scmp.eq.s32.totalorder %s28, 1
      %p156 = por %p154, %p155
      %p158 = scmp.ne.s32.totalorder %s143, %s157
      %p159 = scmp.eq.s32.totalorder %s28, 0
      %p160 = por %p158, %p159
      %s162 = sadd.s32 %s161, 1
      %p165 = scmp.eq.s32.totalorder %s22, 1
      %p166 = scmp.ne.s32.totalorder %s161, %s163
      %p167 = scmp.eq.s32.totalorder %s22, 0
      %p168 = por %p166, %p167
      %p169 = scmp.ne.s32.totalorder %s161, %s163
      %p170 = scmp.eq.s32.totalorder %s27, 1
      %p171 = por %p169, %p170
      %p172 = scmp.ne.s32.totalorder %s163, %s164
      %p173 = scmp.eq.s32.totalorder %s27, 0
      %p174 = por %p172, %p173
      %p175 = scmp.ne.s32.totalorder %s163, %s164
      %p176 = scmp.eq.s32.totalorder %s28, 1
      %p177 = por %p175, %p176
      %p179 = scmp.ne.s32.totalorder %s164, %s178
      %p180 = scmp.eq.s32.totalorder %s28, 0
      %p181 = por %p179, %p180
      %s183 = sadd.s32 %s182, 1
      %p186 = scmp.eq.s32.totalorder %s22, 1
      %p187 = scmp.ne.s32.totalorder %s182, %s184
      %p188 = scmp.eq.s32.totalorder %s22, 0
      %p189 = por %p187, %p188
      %p190 = scmp.ne.s32.totalorder %s182, %s184
      %p191 = scmp.eq.s32.totalorder %s27, 1
      %p192 = por %p190, %p191
      %p193 = scmp.ne.s32.totalorder %s184, %s185
      %p194 = scmp.eq.s32.totalorder %s27, 0
      %p195 = por %p193, %p194
      %p196 = scmp.ne.s32.totalorder %s184, %s185
      %p197 = scmp.eq.s32.totalorder %s28, 1
      %p198 = por %p196, %p197
      %p200 = scmp.ne.s32.totalorder %s185, %s199
      %p201 = scmp.eq.s32.totalorder %s28, 0
      %p202 = por %p200, %p201
      %s204 = sadd.s32 %s203, 1
      %p207 = scmp.eq.s32.totalorder %s22, 1
      %p208 = scmp.ne.s32.totalorder %s203, %s205
      %p209 = scmp.eq.s32.totalorder %s22, 0
      %p210 = por %p208, %p209
      %p211 = scmp.ne.s32.totalorder %s203, %s205
      %p212 = scmp.eq.s32.totalorder %s27, 1
      %p213 = por %p211, %p212
      %p214 = scmp.ne.s32.totalorder %s205, %s206
      %p215 = scmp.eq.s32.totalorder %s27, 0
      %p216 = por %p214, %p215
      %p217 = scmp.ne.s32.totalorder %s205, %s206
      %p218 = scmp.eq.s32.totalorder %s28, 1
      %p219 = por %p217, %p218
      %p221 = scmp.ne.s32.totalorder %s206, %s220
      %p222 = scmp.eq.s32.totalorder %s28, 0
      %p223 = por %p221, %p222
      %s225 = sadd.s32 %s224, 1
      %p228 = scmp.eq.s32.totalorder %s22, 1
      %p229 = scmp.ne.s32.totalorder %s224, %s226
      %p230 = scmp.eq.s32.totalorder %s22, 0
      %p231 = por %p229, %p230
      %p232 = scmp.ne.s32.totalorder %s224, %s226
      %p233 = scmp.eq.s32.totalorder %s27, 1
      %p234 = por %p232, %p233
      %p235 = scmp.ne.s32.totalorder %s226, %s227
      %p236 = scmp.eq.s32.totalorder %s27, 0
      %p237 = por %p235, %p236
      %p238 = scmp.ne.s32.totalorder %s226, %s227
      %p239 = scmp.eq.s32.totalorder %s28, 1
      %p240 = por %p238, %p239
      %p242 = scmp.ne.s32.totalorder %s227, %s241
      %p243 = scmp.eq.s32.totalorder %s28, 0
      %p244 = por %p242, %p243
      %s246 = sadd.s32 %s245, 1
      %p249 = scmp.eq.s32.totalorder %s22, 1
      %p250 = scmp.ne.s32.totalorder %s245, %s247
      %p251 = scmp.eq.s32.totalorder %s22, 0
      %p252 = por %p250, %p251
      %p253 = scmp.ne.s32.totalorder %s245, %s247
      %p254 = scmp.eq.s32.totalorder %s27, 1
      %p255 = por %p253, %p254
      %p256 = scmp.ne.s32.totalorder %s247, %s248
      %p257 = scmp.eq.s32.totalorder %s27, 0
      %p258 = por %p256, %p257
      %p259 = scmp.ne.s32.totalorder %s247, %s248
      %p260 = scmp.eq.s32.totalorder %s28, 1
      %p261 = por %p259, %p260
      %p263 = scmp.ne.s32.totalorder %s248, %s262
      %p264 = scmp.eq.s32.totalorder %s28, 0
      %p265 = por %p263, %p264
      %s267 = sadd.s32 %s266, 1
      %p270 = scmp.eq.s32.totalorder %s22, 1
      %p271 = scmp.ne.s32.totalorder %s266, %s268
      %p272 = scmp.eq.s32.totalorder %s22, 0
      %p273 = por %p271, %p272
      %p274 = scmp.ne.s32.totalorder %s266, %s268
      %p275 = scmp.eq.s32.totalorder %s27, 1
      %p276 = por %p274, %p275
      %p277 = scmp.ne.s32.totalorder %s268, %s269
      %p278 = scmp.eq.s32.totalorder %s27, 0
      %p279 = por %p277, %p278
      %p280 = scmp.ne.s32.totalorder %s268, %s269
      %p281 = scmp.eq.s32.totalorder %s28, 1
      %p282 = por %p280, %p281
      %p284 = scmp.ne.s32.totalorder %s269, %s283
      %p285 = scmp.eq.s32.totalorder %s28, 0
      %p286 = por %p284, %p285
      %s288 = sadd.s32 %s287, 1
      %p291 = scmp.eq.s32.totalorder %s22, 1
      %p292 = scmp.ne.s32.totalorder %s287, %s289
      %p293 = scmp.eq.s32.totalorder %s22, 0
      %p294 = por %p292, %p293
      %p295 = scmp.ne.s32.totalorder %s287, %s289
      %p296 = scmp.eq.s32.totalorder %s27, 1
      %p297 = por %p295, %p296
      %p298 = scmp.ne.s32.totalorder %s289, %s290
      %p299 = scmp.eq.s32.totalorder %s27, 0
      %p300 = por %p298, %p299
      %p301 = scmp.ne.s32.totalorder %s289, %s290
      %p302 = scmp.eq.s32.totalorder %s28, 1
      %p303 = por %p301, %p302
      %p305 = scmp.ne.s32.totalorder %s290, %s304
      %p306 = scmp.eq.s32.totalorder %s28, 0
      %p307 = por %p305, %p306
      %s308 = ssub.s32 %s22, %s29
      %p309 = scmp.eq.s32.totalorder %s308, 0
      %s311 = sadd.s32 %s310, 1
      %s312 = scalar_select %p309, %s310, %s311
      %p315 = pneg %p309
      %p316 = scmp.eq.s32.totalorder %s22, 1
      %p317 = por %p315, %p316
      %p318 = scmp.ne.s32.totalorder %s310, %s313
      %p319 = scmp.eq.s32.totalorder %s22, 0
      %p320 = por %p318, %p319
      %p321 = scmp.ne.s32.totalorder %s310, %s313
      %p322 = scmp.eq.s32.totalorder %s27, 1
      %p323 = por %p321, %p322
      %p324 = scmp.ne.s32.totalorder %s313, %s314
      %p325 = scmp.eq.s32.totalorder %s27, 0
      %p326 = por %p324, %p325
      %p327 = scmp.ne.s32.totalorder %s313, %s314
      %p328 = scmp.eq.s32.totalorder %s28, 1
      %p329 = por %p327, %p328
      %p331 = scmp.ne.s32.totalorder %s314, %s330
      %p332 = scmp.eq.s32.totalorder %s28, 0
      %p333 = por %p331, %p332
      %p334 = scmp.le.s32.totalorder 1, %s22
      %p335 = scmp.lt.s32.totalorder %s22, 3
      %p336 = pnand %p334, %p335
      %p337 = pneg %p336
      // Predicated region
      $region9: #{tpu_custom_call.1} parent=5 // pred_check
        _
      $region10: #{tpu_custom_call.1} parent=5 // pred_check_branch
        %339 = sbr.rel (%p336) target = $region12
      $region11: #{tpu_custom_call.1} parent=5 // pred_region
        %s340 = ssub.s32 %s22, 1
        // Predicated region
        $region13: #{tpu_custom_call.1} parent=11 // pred_check
          %p341 = pneg %p69
        $region14: #{tpu_custom_call.1} parent=11 // pred_check_branch
          %343 = sbr.rel (%p341) target = $region16
        $region15: #{tpu_custom_call.1} parent=11 // pred_region
          _
        $region16: #{tpu_custom_call.1} parent=11 // pred_fallthru
          _
        // Predicated region
        $region17: #{tpu_custom_call.1} parent=11 // pred_check
          %p344 = pneg %p90
        $region18: #{tpu_custom_call.1} parent=11 // pred_check_branch
          %346 = sbr.rel (%p344) target = $region20
        $region19: #{tpu_custom_call.1} parent=11 // pred_region
          _
        $region20: #{tpu_custom_call.1} parent=11 // pred_fallthru
          _
        // Predicated region
        $region21: #{tpu_custom_call.1} parent=11 // pred_check
          %p347 = pneg %p111
        $region22: #{tpu_custom_call.1} parent=11 // pred_check_branch
          %349 = sbr.rel (%p347) target = $region24
        $region23: #{tpu_custom_call.1} parent=11 // pred_region
          _
        $region24: #{tpu_custom_call.1} parent=11 // pred_fallthru
          _
        // Predicated region
        $region25: #{tpu_custom_call.1} parent=11 // pred_check
          %p350 = pneg %p132
        $region26: #{tpu_custom_call.1} parent=11 // pred_check_branch
          %352 = sbr.rel (%p350) target = $region28
        $region27: #{tpu_custom_call.1} parent=11 // pred_region
          _
        $region28: #{tpu_custom_call.1} parent=11 // pred_fallthru
          _
        // Predicated region
        $region29: #{tpu_custom_call.1} parent=11 // pred_check
          %p353 = pneg %p153
        $region30: #{tpu_custom_call.1} parent=11 // pred_check_branch
          %355 = sbr.rel (%p353) target = $region32
        $region31: #{tpu_custom_call.1} parent=11 // pred_region
          _
        $region32: #{tpu_custom_call.1} parent=11 // pred_fallthru
          _
        // Predicated region
        $region33: #{tpu_custom_call.1} parent=11 // pred_check
          %p356 = pneg %p174
        $region34: #{tpu_custom_call.1} parent=11 // pred_check_branch
          %358 = sbr.rel (%p356) target = $region36
        $region35: #{tpu_custom_call.1} parent=11 // pred_region
          _
        $region36: #{tpu_custom_call.1} parent=11 // pred_fallthru
          _
        // Predicated region
        $region37: #{tpu_custom_call.1} parent=11 // pred_check
          %p359 = pneg %p195
        $region38: #{tpu_custom_call.1} parent=11 // pred_check_branch
          %361 = sbr.rel (%p359) target = $region40
        $region39: #{tpu_custom_call.1} parent=11 // pred_region
          _
        $region40: #{tpu_custom_call.1} parent=11 // pred_fallthru
          _
        // Predicated region
        $region41: #{tpu_custom_call.1} parent=11 // pred_check
          %p362 = pneg %p216
        $region42: #{tpu_custom_call.1} parent=11 // pred_check_branch
          %364 = sbr.rel (%p362) target = $region44
        $region43: #{tpu_custom_call.1} parent=11 // pred_region
          _
        $region44: #{tpu_custom_call.1} parent=11 // pred_fallthru
          _
        // Predicated region
        $region45: #{tpu_custom_call.1} parent=11 // pred_check
          %p365 = pneg %p237
        $region46: #{tpu_custom_call.1} parent=11 // pred_check_branch
          %367 = sbr.rel (%p365) target = $region48
        $region47: #{tpu_custom_call.1} parent=11 // pred_region
          _
        $region48: #{tpu_custom_call.1} parent=11 // pred_fallthru
          _
        // Predicated region
        $region49: #{tpu_custom_call.1} parent=11 // pred_check
          %p368 = pneg %p258
        $region50: #{tpu_custom_call.1} parent=11 // pred_check_branch
          %370 = sbr.rel (%p368) target = $region52
        $region51: #{tpu_custom_call.1} parent=11 // pred_region
          _
        $region52: #{tpu_custom_call.1} parent=11 // pred_fallthru
          _
        // Predicated region
        $region53: #{tpu_custom_call.1} parent=11 // pred_check
          %p371 = pneg %p279
        $region54: #{tpu_custom_call.1} parent=11 // pred_check_branch
          %373 = sbr.rel (%p371) target = $region56
        $region55: #{tpu_custom_call.1} parent=11 // pred_region
          _
        $region56: #{tpu_custom_call.1} parent=11 // pred_fallthru
          _
        // Predicated region
        $region57: #{tpu_custom_call.1} parent=11 // pred_check
          %p374 = pneg %p300
        $region58: #{tpu_custom_call.1} parent=11 // pred_check_branch
          %376 = sbr.rel (%p374) target = $region60
        $region59: #{tpu_custom_call.1} parent=11 // pred_region
          _
        $region60: #{tpu_custom_call.1} parent=11 // pred_fallthru
          _
      $region12: #{tpu_custom_call.1} parent=5 // pred_fallthru
        _
      %p377 = scmp.lt.s32.totalorder %s22, 2
      // Predicated region
      $region61: #{tpu_custom_call.1} parent=5 // pred_check
        %p378 = pneg %p377
      $region62: #{tpu_custom_call.1} parent=5 // pred_check_branch
        %380 = sbr.rel (%p378) target = $region64
      $region63: #{tpu_custom_call.1} parent=5 // pred_region
        // Predicated region
        $region65: #{tpu_custom_call.1} parent=63 // pred_check
          %p381 = pneg %p42
        $region66: #{tpu_custom_call.1} parent=63 // pred_check_branch
          %383 = sbr.rel (%p381) target = $region68
        $region67: #{tpu_custom_call.1} parent=63 // pred_region
          %s384 = smul.u32 4, %s22
          %p385 = scmp.lt.s32.totalorder %s384, 7
          %s386 = scalar_select %p385, %s384, 7
          %s387 = smul.addr %s386, 4
          %s388 = scalar_lea.vmem %s0, %s387
          %s389 = smul.u32 4, %s22
        $region68: #{tpu_custom_call.1} parent=63 // pred_fallthru
          _
      $region64: #{tpu_custom_call.1} parent=5 // pred_fallthru
        _
      %p390 = scmp.le.s32.totalorder 1, %s22
      %p391 = scmp.lt.s32.totalorder %s22, 3
      %p392 = pnand %p390, %p391
      %p393 = pneg %p392
      // Predicated region
      $region69: #{tpu_custom_call.1} parent=5 // pred_check
        _
      $region70: #{tpu_custom_call.1} parent=5 // pred_check_branch
        %395 = sbr.rel (%p392) target = $region72
      $region71: #{tpu_custom_call.1} parent=5 // pred_region
        %s396 = ssub.s32 %s22, 1
        %s397 = smul.u32 4, %s27
        %p398 = scmp.lt.s32.totalorder %s397, 7
        %s399 = scalar_select %p398, %s397, 7
        %s400 = smul.addr %s399, 4
        %s401 = scalar_lea.vmem %s0, %s400
        %p402 = pneg %p48
        %p403 = pneg %p45
        %p404 = pneg %p69
        %p405 = pneg %p66
        %p406 = pneg %p90
        %p407 = pneg %p87
        %p408 = pneg %p111
        %p409 = pneg %p108
        %p410 = pneg %p132
        %p411 = pneg %p129
        %p412 = pneg %p153
        %p413 = pneg %p150
        %p414 = pneg %p174
        %p415 = pneg %p171
        %p416 = pneg %p195
        %p417 = pneg %p192
        %p418 = pneg %p216
        %p419 = pneg %p213
        %p420 = pneg %p237
        %p421 = pneg %p234
        %p422 = pneg %p258
        %p423 = pneg %p255
        %p424 = pneg %p279
        %p425 = pneg %p276
        %p426 = pneg %p300
        %p427 = pneg %p297
        %p428 = pneg %p326
        %p429 = pneg %p323
        %s430 = sand.u32 %s313, 1
        %s431 = scalar_lea.sflag [#allocation3], %s430
        %s432 = sand.u32 %s313, 1
        %s433 = smul.addr %s432, 32
        %s434 = scalar_lea.vmem [#allocation2], %s433
        %s435 = smul.u32 4, %s27
        %p436 = scmp.lt.s32.totalorder %s435, 7
        %s437 = scalar_select %p436, %s435, 7
        %s438 = smul.addr %s437, 4
        %s439 = scalar_lea.vmem %s0, %s438
        %s440 = smul.u32 4, %s27
        %s441 = smul.u32 4, %s27
        %v443 = vld [vmem:[%s439] sm:$0xf]
        %v444 = vld [vmem:[%s439 + $0x4] sm:$0xf]
        %v445 = vld [vmem:[%s439 + $0x8] sm:$0xf]
        %v446 = vld [vmem:[%s439 + $0xc] sm:$0xf]
        %v447 = vunpack.c.l.bf16 %v443
        %v448 = vunpack.c.l.bf16 %v444
        %v449 = vunpack.c.l.bf16 %v445
        %v450 = vunpack.c.l.bf16 %v446
        %v451 = vld [vmem:[%s2] sm:$0x1]
        %v452 = vld [vmem:[%s4] sm:$0x1]
        %v453 = vld [vmem:[%s5] sm:$0x1]
        %v454 = vld [vmem:[%s6] sm:$0x1]
        %v455 = vld [vmem:[%s8] sm:$0x1]
        %v456 = vld [vmem:[%s10] sm:$0x1]
        %v457 = vld [vmem:[%s11] sm:$0x1]
        %v458 = vld [vmem:[%s12] sm:$0x1]
        %v459 = vpack.c.bf16 %v448, %v447
        %v460 = vpack.c.bf16 %v450, %v449
        %v461 = vld [vmem:[%s1] sm:$0xf]
        %v462 = vld [vmem:[%s1 + $0x4] sm:$0xf]
        %v463 = vld [vmem:[%s1 + $0x8] sm:$0xf]
        %v464 = vld [vmem:[%s1 + $0xc] sm:$0xf]
        %v466 = vlaneseq
        %v467 = vshrl.u32 %v466, 7
        %v468 = vsub.s32 0, %v467
        %v469 = vrot.slane %v451, %v468
        %v475 = vunpack.c.l.b16 %v461
        %v476 = vunpack.c.l.b16 %v462
        %v477 = vunpack.c.l.b16 %v463
        %v478 = vunpack.c.l.b16 %v464
        %v479 = vpack.c.b16 %v476, %v475
        %v480 = vpack.c.b16 %v478, %v477
        %vm483 = vcmask 261120
        %v485 = vsel %vm483, %v459, 0
        %v488 = vsel %vm483, %v460, 0
        %490 = vmatprep.subr.bf16.mxu0 0
        %491 = vmatpush1.bf16.msra.mxu0 %v479
        %492 = vmatprep.subr.bf16.mxu0 0
        %493 = vmatpush1.bf16.msra.mxu0 %v480
        %494 = vmatprep.subr.bf16.mxu0 0
        %495 = vmatpush1.bf16.msra.mxu0 0
        %496 = vmatprep.subr.bf16.mxu0 0
        %497 = vmatpush1.bf16.msra.mxu0 0
        %498 = vmatprep.subr.bf16.mxu0 0
        %499 = vmatpush1.bf16.msra.mxu0 0
        %500 = vmatprep.subr.bf16.mxu0 0
        %501 = vmatpush1.bf16.msra.mxu0 0
        %502 = vmatprep.subr.bf16.mxu0 0
        %503 = vmatpush1.bf16.msra.mxu0 0
        %504 = vmatprep.subr.bf16.mxu0 0
        %505 = vmatpush1.bf16.msra.mxu0 0
        %506 = vmatprep.subr.bf16.mxu0 0
        %507 = vmatpush1.bf16.msra.mxu0 0
        %508 = vmatprep.subr.bf16.mxu0 0
        %509 = vmatpush1.bf16.msra.mxu0 0
        %510 = vmatprep.subr.bf16.mxu0 0
        %511 = vmatpush1.bf16.msra.mxu0 0
        %512 = vmatprep.subr.bf16.mxu0 0
        %513 = vmatpush1.bf16.msra.mxu0 0
        %514 = vmatprep.subr.bf16.mxu0 0
        %515 = vmatpush1.bf16.msra.mxu0 0
        %516 = vmatprep.subr.bf16.mxu0 0
        %517 = vmatpush1.bf16.msra.mxu0 0
        %518 = vmatprep.subr.bf16.mxu0 0
        %519 = vmatpush1.bf16.msra.mxu0 0
        %520 = vmatprep.subr.bf16.mxu0 0
        %521 = vmatpush1.bf16.msra.mxu0 0
        %522 = vmatprep.mubr.bf16.mxu0 0
        %523 = vmatmul.mubr.bf16.gmra.mrb[0].mxu0 %v485
        %v524 = vpop.f32.mrb[0].mxu0
        %v525 = vadd.f32 %v469, %v524
        %v526 = vpop.f32.mrb[0].mxu0
        %v527 = vpop.f32.mrb[0].mxu0
        %v528 = vadd.f32 %v469, %v527
        %v529 = vpop.f32.mrb[0].mxu0
        %530 = vmatprep.mubr.bf16.mxu0 0
        %531 = vmatmul.mubr.bf16.gmra.mrb[0].mxu0 %v488
        %v532 = vpop.f32.mrb[0].mxu0
        %v533 = vadd.f32 %v469, %v532
        %v534 = vpop.f32.mrb[0].mxu0
        %v535 = vpop.f32.mrb[0].mxu0
        %v536 = vadd.f32 %v469, %v535
        %v537 = vpop.f32.mrb[0].mxu0
        %538 = vdwg.mxu0
        %543 = vrot.lane.b32.xlu0 %v525, 120
        %v544 = vpop.permute.xlu0 %543
        %545 = vrot.lane.b32.xlu0 %v528, 120
        %v546 = vpop.permute.xlu0 %545
        %547 = vrot.lane.b32.xlu0 %v533, 120
        %v548 = vpop.permute.xlu0 %547
        %549 = vrot.lane.b32.xlu0 %v536, 120
        %v550 = vpop.permute.xlu0 %549
        %551 = vrot.lane.b32.xlu0 %v525, 112
        %v552 = vpop.permute.xlu0 %551
        %553 = vrot.lane.b32.xlu0 %v528, 112
        %v554 = vpop.permute.xlu0 %553
        %555 = vrot.lane.b32.xlu0 %v533, 112
        %v556 = vpop.permute.xlu0 %555
        %557 = vrot.lane.b32.xlu0 %v536, 112
        %v558 = vpop.permute.xlu0 %557
        %559 = vrot.lane.b32.xlu0 %v525, 104
        %v560 = vpop.permute.xlu0 %559
        %561 = vrot.lane.b32.xlu0 %v528, 104
        %v562 = vpop.permute.xlu0 %561
        %563 = vrot.lane.b32.xlu0 %v533, 104
        %v564 = vpop.permute.xlu0 %563
        %565 = vrot.lane.b32.xlu0 %v536, 104
        %v566 = vpop.permute.xlu0 %565
        %567 = vrot.lane.b32.xlu0 %v525, 96
        %v568 = vpop.permute.xlu0 %567
        %vm569 = vcmask 64512
        %v570 = vsel %vm569, %v525, 0
        %v572 = vsel %vm569, %v568, 0
        %574 = vmatprep.subr.mxu0 0.0
        %575 = vmatpush1.xpose.msra.mxu0 %v572
        %576 = vmatprep.subr.mxu0 0.0
        %577 = vmatpush1.xpose.msra.mxu0 0.0
        %578 = vmatprep.subr.mxu0 0.0
        %579 = vmatpush1.xpose.msra.mxu0 0.0
        %580 = vmatprep.subr.mxu0 0.0
        %581 = vmatpush1.xpose.msra.mxu0 0.0
        %582 = vmatprep.subr.mxu0 0.0
        %583 = vmatpush1.xpose.msra.mxu0 0.0
        %584 = vmatprep.subr.mxu0 0.0
        %585 = vmatpush1.xpose.msra.mxu0 0.0
        %586 = vmatprep.subr.mxu0 0.0
        %587 = vmatpush1.xpose.msra.mxu0 0.0
        %588 = vmatprep.subr.mxu0 0.0
        %589 = vmatpush1.xpose.msra.mxu0 0.0
        %590 = vmatprep.subr.mxu0 0.0
        %591 = vmatpush1.xpose.msra.mxu0 0.0
        %592 = vmatprep.subr.mxu0 0.0
        %593 = vmatpush1.xpose.msra.mxu0 0.0
        %594 = vmatprep.subr.mxu0 0.0
        %595 = vmatpush1.xpose.msra.mxu0 0.0
        %596 = vmatprep.subr.mxu0 0.0
        %597 = vmatpush1.xpose.msra.mxu0 0.0
        %598 = vmatprep.subr.mxu0 0.0
        %599 = vmatpush1.xpose.msra.mxu0 0.0
        %600 = vmatprep.subr.mxu0 0.0
        %601 = vmatpush1.xpose.msra.mxu0 0.0
        %602 = vmatprep.subr.mxu0 0.0
        %603 = vmatpush1.xpose.msra.mxu0 0.0
        %604 = vmatprep.subr.mxu0 0.0
        %605 = vmatpush1.xpose.msra.mxu0 0.0
        %606 = vmatprep.subr.mxu0 0.0
        %607 = vmatpush1.xpose.msra.mxu0 0.0
        %608 = vmatprep.subr.mxu0 0.0
        %609 = vmatpush1.xpose.msra.mxu0 0.0
        %610 = vmatprep.subr.mxu0 0.0
        %611 = vmatpush1.xpose.msra.mxu0 0.0
        %612 = vmatprep.subr.mxu0 0.0
        %613 = vmatpush1.xpose.msra.mxu0 0.0
        %614 = vmatprep.subr.mxu0 0.0
        %615 = vmatpush1.xpose.msra.mxu0 0.0
        %616 = vmatprep.subr.mxu0 0.0
        %617 = vmatpush1.xpose.msra.mxu0 0.0
        %618 = vmatprep.subr.mxu0 0.0
        %619 = vmatpush1.xpose.msra.mxu0 0.0
        %620 = vmatprep.subr.mxu0 0.0
        %621 = vmatpush1.xpose.msra.mxu0 0.0
        %622 = vmatprep.subr.mxu0 0.0
        %623 = vmatpush1.xpose.msra.mxu0 0.0
        %624 = vmatprep.subr.mxu0 0.0
        %625 = vmatpush1.xpose.msra.mxu0 0.0
        %626 = vmatprep.subr.mxu0 0.0
        %627 = vmatpush1.xpose.msra.mxu0 0.0
        %628 = vmatprep.subr.mxu0 0.0
        %629 = vmatpush1.xpose.msra.mxu0 0.0
        %630 = vmatprep.subr.mxu0 0.0
        %631 = vmatpush1.xpose.msra.mxu0 0.0
        %632 = vmatprep.subr.mxu0 0.0
        %633 = vmatpush1.xpose.msra.mxu0 0.0
        %634 = vmatprep.subr.mxu0 0.0
        %635 = vmatpush1.xpose.msra.mxu0 0.0
        %636 = vmatprep.subr.mxu0 0.0
        %637 = vmatpush1.xpose.msra.mxu0 0.0
        %638 = vmatprep.mubr.f32.mxu0 0.0
        %639 = vmatmul.mubr.f32.gmra.mrb[0].mxu0 %v570
        %v640 = vpop.f32.mrb[0].mxu0
        %v641 = vadd.f32 0.0, %v640
        %v642 = vpop.f32.mrb[0].mxu0
        %643 = vdwg.mxu0
        %644 = vrot.lane.b32.xlu0 %v528, 96
        %v645 = vpop.permute.xlu0 %644
        %v646 = vsel %vm569, %v528, 0
        %v648 = vsel %vm569, %v645, 0
        %650 = vmatprep.subr.mxu0 0.0
        %651 = vmatpush1.xpose.msra.mxu0 %v648
        %652 = vmatprep.subr.mxu0 0.0
        %653 = vmatpush1.xpose.msra.mxu0 0.0
        %654 = vmatprep.subr.mxu0 0.0
        %655 = vmatpush1.xpose.msra.mxu0 0.0
        %656 = vmatprep.subr.mxu0 0.0
        %657 = vmatpush1.xpose.msra.mxu0 0.0
        %658 = vmatprep.subr.mxu0 0.0
        %659 = vmatpush1.xpose.msra.mxu0 0.0
        %660 = vmatprep.subr.mxu0 0.0
        %661 = vmatpush1.xpose.msra.mxu0 0.0
        %662 = vmatprep.subr.mxu0 0.0
        %663 = vmatpush1.xpose.msra.mxu0 0.0
        %664 = vmatprep.subr.mxu0 0.0
        %665 = vmatpush1.xpose.msra.mxu0 0.0
        %666 = vmatprep.subr.mxu0 0.0
        %667 = vmatpush1.xpose.msra.mxu0 0.0
        %668 = vmatprep.subr.mxu0 0.0
        %669 = vmatpush1.xpose.msra.mxu0 0.0
        %670 = vmatprep.subr.mxu0 0.0
        %671 = vmatpush1.xpose.msra.mxu0 0.0
        %672 = vmatprep.subr.mxu0 0.0
        %673 = vmatpush1.xpose.msra.mxu0 0.0
        %674 = vmatprep.subr.mxu0 0.0
        %675 = vmatpush1.xpose.msra.mxu0 0.0
        %676 = vmatprep.subr.mxu0 0.0
        %677 = vmatpush1.xpose.msra.mxu0 0.0
        %678 = vmatprep.subr.mxu0 0.0
        %679 = vmatpush1.xpose.msra.mxu0 0.0
        %680 = vmatprep.subr.mxu0 0.0
        %681 = vmatpush1.xpose.msra.mxu0 0.0
        %682 = vmatprep.subr.mxu0 0.0
        %683 = vmatpush1.xpose.msra.mxu0 0.0
        %684 = vmatprep.subr.mxu0 0.0
        %685 = vmatpush1.xpose.msra.mxu0 0.0
        %686 = vmatprep.subr.mxu0 0.0
        %687 = vmatpush1.xpose.msra.mxu0 0.0
        %688 = vmatprep.subr.mxu0 0.0
        %689 = vmatpush1.xpose.msra.mxu0 0.0
        %690 = vmatprep.subr.mxu0 0.0
        %691 = vmatpush1.xpose.msra.mxu0 0.0
        %692 = vmatprep.subr.mxu0 0.0
        %693 = vmatpush1.xpose.msra.mxu0 0.0
        %694 = vmatprep.subr.mxu0 0.0
        %695 = vmatpush1.xpose.msra.mxu0 0.0
        %696 = vmatprep.subr.mxu0 0.0
        %697 = vmatpush1.xpose.msra.mxu0 0.0
        %698 = vmatprep.subr.mxu0 0.0
        %699 = vmatpush1.xpose.msra.mxu0 0.0
        %700 = vmatprep.subr.mxu0 0.0
        %701 = vmatpush1.xpose.msra.mxu0 0.0
        %702 = vmatprep.subr.mxu0 0.0
        %703 = vmatpush1.xpose.msra.mxu0 0.0
        %704 = vmatprep.subr.mxu0 0.0
        %705 = vmatpush1.xpose.msra.mxu0 0.0
        %706 = vmatprep.subr.mxu0 0.0
        %707 = vmatpush1.xpose.msra.mxu0 0.0
        %708 = vmatprep.subr.mxu0 0.0
        %709 = vmatpush1.xpose.msra.mxu0 0.0
        %710 = vmatprep.subr.mxu0 0.0
        %711 = vmatpush1.xpose.msra.mxu0 0.0
        %712 = vmatprep.subr.mxu0 0.0
        %713 = vmatpush1.xpose.msra.mxu0 0.0
        %714 = vmatprep.mubr.f32.mxu0 0.0
        %715 = vmatmul.mubr.f32.gmra.mrb[0].mxu0 %v646
        %v716 = vpop.f32.mrb[0].mxu0
        %v717 = vadd.f32 0.0, %v716
        %v718 = vpop.f32.mrb[0].mxu0
        %719 = vdwg.mxu0
        %720 = vrot.lane.b32.xlu0 %v533, 96
        %v721 = vpop.permute.xlu0 %720
        %v722 = vsel %vm569, %v533, 0
        %v724 = vsel %vm569, %v721, 0
        %726 = vmatprep.subr.mxu0 0.0
        %727 = vmatpush1.xpose.msra.mxu0 %v724
        %728 = vmatprep.subr.mxu0 0.0
        %729 = vmatpush1.xpose.msra.mxu0 0.0
        %730 = vmatprep.subr.mxu0 0.0
        %731 = vmatpush1.xpose.msra.mxu0 0.0
        %732 = vmatprep.subr.mxu0 0.0
        %733 = vmatpush1.xpose.msra.mxu0 0.0
        %734 = vmatprep.subr.mxu0 0.0
        %735 = vmatpush1.xpose.msra.mxu0 0.0
        %736 = vmatprep.subr.mxu0 0.0
        %737 = vmatpush1.xpose.msra.mxu0 0.0
        %738 = vmatprep.subr.mxu0 0.0
        %739 = vmatpush1.xpose.msra.mxu0 0.0
        %740 = vmatprep.subr.mxu0 0.0
        %741 = vmatpush1.xpose.msra.mxu0 0.0
        %742 = vmatprep.subr.mxu0 0.0
        %743 = vmatpush1.xpose.msra.mxu0 0.0
        %744 = vmatprep.subr.mxu0 0.0
        %745 = vmatpush1.xpose.msra.mxu0 0.0
        %746 = vmatprep.subr.mxu0 0.0
        %747 = vmatpush1.xpose.msra.mxu0 0.0
        %748 = vmatprep.subr.mxu0 0.0
        %749 = vmatpush1.xpose.msra.mxu0 0.0
        %750 = vmatprep.subr.mxu0 0.0
        %751 = vmatpush1.xpose.msra.mxu0 0.0
        %752 = vmatprep.subr.mxu0 0.0
        %753 = vmatpush1.xpose.msra.mxu0 0.0
        %754 = vmatprep.subr.mxu0 0.0
        %755 = vmatpush1.xpose.msra.mxu0 0.0
        %756 = vmatprep.subr.mxu0 0.0
        %757 = vmatpush1.xpose.msra.mxu0 0.0
        %758 = vmatprep.subr.mxu0 0.0
        %759 = vmatpush1.xpose.msra.mxu0 0.0
        %760 = vmatprep.subr.mxu0 0.0
        %761 = vmatpush1.xpose.msra.mxu0 0.0
        %762 = vmatprep.subr.mxu0 0.0
        %763 = vmatpush1.xpose.msra.mxu0 0.0
        %764 = vmatprep.subr.mxu0 0.0
        %765 = vmatpush1.xpose.msra.mxu0 0.0
        %766 = vmatprep.subr.mxu0 0.0
        %767 = vmatpush1.xpose.msra.mxu0 0.0
        %768 = vmatprep.subr.mxu0 0.0
        %769 = vmatpush1.xpose.msra.mxu0 0.0
        %770 = vmatprep.subr.mxu0 0.0
        %771 = vmatpush1.xpose.msra.mxu0 0.0
        %772 = vmatprep.subr.mxu0 0.0
        %773 = vmatpush1.xpose.msra.mxu0 0.0
        %774 = vmatprep.subr.mxu0 0.0
        %775 = vmatpush1.xpose.msra.mxu0 0.0
        %776 = vmatprep.subr.mxu0 0.0
        %777 = vmatpush1.xpose.msra.mxu0 0.0
        %778 = vmatprep.subr.mxu0 0.0
        %779 = vmatpush1.xpose.msra.mxu0 0.0
        %780 = vmatprep.subr.mxu0 0.0
        %781 = vmatpush1.xpose.msra.mxu0 0.0
        %782 = vmatprep.subr.mxu0 0.0
        %783 = vmatpush1.xpose.msra.mxu0 0.0
        %784 = vmatprep.subr.mxu0 0.0
        %785 = vmatpush1.xpose.msra.mxu0 0.0
        %786 = vmatprep.subr.mxu0 0.0
        %787 = vmatpush1.xpose.msra.mxu0 0.0
        %788 = vmatprep.subr.mxu0 0.0
        %789 = vmatpush1.xpose.msra.mxu0 0.0
        %790 = vmatprep.mubr.f32.mxu0 0.0
        %791 = vmatmul.mubr.f32.gmra.mrb[0].mxu0 %v722
        %v792 = vpop.f32.mrb[0].mxu0
        %v793 = vadd.f32 0.0, %v792
        %v794 = vpop.f32.mrb[0].mxu0
        %795 = vdwg.mxu0
        %796 = vrot.lane.b32.xlu0 %v536, 96
        %v797 = vpop.permute.xlu0 %796
        %v798 = vsel %vm569, %v536, 0
        %v800 = vsel %vm569, %v797, 0
        %802 = vmatprep.subr.mxu0 0.0
        %803 = vmatpush1.xpose.msra.mxu0 %v800
        %804 = vmatprep.subr.mxu0 0.0
        %805 = vmatpush1.xpose.msra.mxu0 0.0
        %806 = vmatprep.subr.mxu0 0.0
        %807 = vmatpush1.xpose.msra.mxu0 0.0
        %808 = vmatprep.subr.mxu0 0.0
        %809 = vmatpush1.xpose.msra.mxu0 0.0
        %810 = vmatprep.subr.mxu0 0.0
        %811 = vmatpush1.xpose.msra.mxu0 0.0
        %812 = vmatprep.subr.mxu0 0.0
        %813 = vmatpush1.xpose.msra.mxu0 0.0
        %814 = vmatprep.subr.mxu0 0.0
        %815 = vmatpush1.xpose.msra.mxu0 0.0
        %816 = vmatprep.subr.mxu0 0.0
        %817 = vmatpush1.xpose.msra.mxu0 0.0
        %818 = vmatprep.subr.mxu0 0.0
        %819 = vmatpush1.xpose.msra.mxu0 0.0
        %820 = vmatprep.subr.mxu0 0.0
        %821 = vmatpush1.xpose.msra.mxu0 0.0
        %822 = vmatprep.subr.mxu0 0.0
        %823 = vmatpush1.xpose.msra.mxu0 0.0
        %824 = vmatprep.subr.mxu0 0.0
        %825 = vmatpush1.xpose.msra.mxu0 0.0
        %826 = vmatprep.subr.mxu0 0.0
        %827 = vmatpush1.xpose.msra.mxu0 0.0
        %828 = vmatprep.subr.mxu0 0.0
        %829 = vmatpush1.xpose.msra.mxu0 0.0
        %830 = vmatprep.subr.mxu0 0.0
        %831 = vmatpush1.xpose.msra.mxu0 0.0
        %832 = vmatprep.subr.mxu0 0.0
        %833 = vmatpush1.xpose.msra.mxu0 0.0
        %834 = vmatprep.subr.mxu0 0.0
        %835 = vmatpush1.xpose.msra.mxu0 0.0
        %836 = vmatprep.subr.mxu0 0.0
        %837 = vmatpush1.xpose.msra.mxu0 0.0
        %838 = vmatprep.subr.mxu0 0.0
        %839 = vmatpush1.xpose.msra.mxu0 0.0
        %840 = vmatprep.subr.mxu0 0.0
        %841 = vmatpush1.xpose.msra.mxu0 0.0
        %842 = vmatprep.subr.mxu0 0.0
        %843 = vmatpush1.xpose.msra.mxu0 0.0
        %844 = vmatprep.subr.mxu0 0.0
        %845 = vmatpush1.xpose.msra.mxu0 0.0
        %846 = vmatprep.subr.mxu0 0.0
        %847 = vmatpush1.xpose.msra.mxu0 0.0
        %848 = vmatprep.subr.mxu0 0.0
        %849 = vmatpush1.xpose.msra.mxu0 0.0
        %850 = vmatprep.subr.mxu0 0.0
        %851 = vmatpush1.xpose.msra.mxu0 0.0
        %852 = vmatprep.subr.mxu0 0.0
        %853 = vmatpush1.xpose.msra.mxu0 0.0
        %854 = vmatprep.subr.mxu0 0.0
        %855 = vmatpush1.xpose.msra.mxu0 0.0
        %856 = vmatprep.subr.mxu0 0.0
        %857 = vmatpush1.xpose.msra.mxu0 0.0
        %858 = vmatprep.subr.mxu0 0.0
        %859 = vmatpush1.xpose.msra.mxu0 0.0
        %860 = vmatprep.subr.mxu0 0.0
        %861 = vmatpush1.xpose.msra.mxu0 0.0
        %862 = vmatprep.subr.mxu0 0.0
        %863 = vmatpush1.xpose.msra.mxu0 0.0
        %864 = vmatprep.subr.mxu0 0.0
        %865 = vmatpush1.xpose.msra.mxu0 0.0
        %866 = vmatprep.mubr.f32.mxu0 0.0
        %867 = vmatmul.mubr.f32.gmra.mrb[0].mxu0 %v798
        %v868 = vpop.f32.mrb[0].mxu0
        %v869 = vadd.f32 0.0, %v868
        %v870 = vpop.f32.mrb[0].mxu0
        %871 = vdwg.mxu0
        %872 = vrot.lane.b32.xlu0 %v544, 96
        %v873 = vpop.permute.xlu0 %872
        %v874 = vsel %vm569, %v544, 0
        %v876 = vsel %vm569, %v873, 0
        %878 = vmatprep.subr.mxu0 0.0
        %879 = vmatpush1.xpose.msra.mxu0 %v876
        %880 = vmatprep.subr.mxu0 0.0
        %881 = vmatpush1.xpose.msra.mxu0 0.0
        %882 = vmatprep.subr.mxu0 0.0
        %883 = vmatpush1.xpose.msra.mxu0 0.0
        %884 = vmatprep.subr.mxu0 0.0
        %885 = vmatpush1.xpose.msra.mxu0 0.0
        %886 = vmatprep.subr.mxu0 0.0
        %887 = vmatpush1.xpose.msra.mxu0 0.0
        %888 = vmatprep.subr.mxu0 0.0
        %889 = vmatpush1.xpose.msra.mxu0 0.0
        %890 = vmatprep.subr.mxu0 0.0
        %891 = vmatpush1.xpose.msra.mxu0 0.0
        %892 = vmatprep.subr.mxu0 0.0
        %893 = vmatpush1.xpose.msra.mxu0 0.0
        %894 = vmatprep.subr.mxu0 0.0
        %895 = vmatpush1.xpose.msra.mxu0 0.0
        %896 = vmatprep.subr.mxu0 0.0
        %897 = vmatpush1.xpose.msra.mxu0 0.0
        %898 = vmatprep.subr.mxu0 0.0
        %899 = vmatpush1.xpose.msra.mxu0 0.0
        %900 = vmatprep.subr.mxu0 0.0
        %901 = vmatpush1.xpose.msra.mxu0 0.0
        %902 = vmatprep.subr.mxu0 0.0
        %903 = vmatpush1.xpose.msra.mxu0 0.0
        %904 = vmatprep.subr.mxu0 0.0
        %905 = vmatpush1.xpose.msra.mxu0 0.0
        %906 = vmatprep.subr.mxu0 0.0
        %907 = vmatpush1.xpose.msra.mxu0 0.0
        %908 = vmatprep.subr.mxu0 0.0
        %909 = vmatpush1.xpose.msra.mxu0 0.0
        %910 = vmatprep.subr.mxu0 0.0
        %911 = vmatpush1.xpose.msra.mxu0 0.0
        %912 = vmatprep.subr.mxu0 0.0
        %913 = vmatpush1.xpose.msra.mxu0 0.0
        %914 = vmatprep.subr.mxu0 0.0
        %915 = vmatpush1.xpose.msra.mxu0 0.0
        %916 = vmatprep.subr.mxu0 0.0
        %917 = vmatpush1.xpose.msra.mxu0 0.0
        %918 = vmatprep.subr.mxu0 0.0
        %919 = vmatpush1.xpose.msra.mxu0 0.0
        %920 = vmatprep.subr.mxu0 0.0
        %921 = vmatpush1.xpose.msra.mxu0 0.0
        %922 = vmatprep.subr.mxu0 0.0
        %923 = vmatpush1.xpose.msra.mxu0 0.0
        %924 = vmatprep.subr.mxu0 0.0
        %925 = vmatpush1.xpose.msra.mxu0 0.0
        %926 = vmatprep.subr.mxu0 0.0
        %927 = vmatpush1.xpose.msra.mxu0 0.0
        %928 = vmatprep.subr.mxu0 0.0
        %929 = vmatpush1.xpose.msra.mxu0 0.0
        %930 = vmatprep.subr.mxu0 0.0
        %931 = vmatpush1.xpose.msra.mxu0 0.0
        %932 = vmatprep.subr.mxu0 0.0
        %933 = vmatpush1.xpose.msra.mxu0 0.0
        %934 = vmatprep.subr.mxu0 0.0
        %935 = vmatpush1.xpose.msra.mxu0 0.0
        %936 = vmatprep.subr.mxu0 0.0
        %937 = vmatpush1.xpose.msra.mxu0 0.0
        %938 = vmatprep.subr.mxu0 0.0
        %939 = vmatpush1.xpose.msra.mxu0 0.0
        %940 = vmatprep.subr.mxu0 0.0
        %941 = vmatpush1.xpose.msra.mxu0 0.0
        %942 = vmatprep.mubr.f32.mxu0 0.0
        %943 = vmatmul.mubr.f32.gmra.mrb[0].mxu0 %v874
        %v944 = vpop.f32.mrb[0].mxu0
        %v945 = vadd.f32 0.0, %v944
        %v946 = vpop.f32.mrb[0].mxu0
        %947 = vdwg.mxu0
        %948 = vrot.lane.b32.xlu0 %v546, 96
        %v949 = vpop.permute.xlu0 %948
        %v950 = vsel %vm569, %v546, 0
        %v952 = vsel %vm569, %v949, 0
        %954 = vmatprep.subr.mxu0 0.0
        %955 = vmatpush1.xpose.msra.mxu0 %v952
        %956 = vmatprep.subr.mxu0 0.0
        %957 = vmatpush1.xpose.msra.mxu0 0.0
        %958 = vmatprep.subr.mxu0 0.0
        %959 = vmatpush1.xpose.msra.mxu0 0.0
        %960 = vmatprep.subr.mxu0 0.0
        %961 = vmatpush1.xpose.msra.mxu0 0.0
        %962 = vmatprep.subr.mxu0 0.0
        %963 = vmatpush1.xpose.msra.mxu0 0.0
        %964 = vmatprep.subr.mxu0 0.0
        %965 = vmatpush1.xpose.msra.mxu0 0.0
        %966 = vmatprep.subr.mxu0 0.0
        %967 = vmatpush1.xpose.msra.mxu0 0.0
        %968 = vmatprep.subr.mxu0 0.0
        %969 = vmatpush1.xpose.msra.mxu0 0.0
        %970 = vmatprep.subr.mxu0 0.0
        %971 = vmatpush1.xpose.msra.mxu0 0.0
        %972 = vmatprep.subr.mxu0 0.0
        %973 = vmatpush1.xpose.msra.mxu0 0.0
        %974 = vmatprep.subr.mxu0 0.0
        %975 = vmatpush1.xpose.msra.mxu0 0.0
        %976 = vmatprep.subr.mxu0 0.0
        %977 = vmatpush1.xpose.msra.mxu0 0.0
        %978 = vmatprep.subr.mxu0 0.0
        %979 = vmatpush1.xpose.msra.mxu0 0.0
        %980 = vmatprep.subr.mxu0 0.0
        %981 = vmatpush1.xpose.msra.mxu0 0.0
        %982 = vmatprep.subr.mxu0 0.0
        %983 = vmatpush1.xpose.msra.mxu0 0.0
        %984 = vmatprep.subr.mxu0 0.0
        %985 = vmatpush1.xpose.msra.mxu0 0.0
        %986 = vmatprep.subr.mxu0 0.0
        %987 = vmatpush1.xpose.msra.mxu0 0.0
        %988 = vmatprep.subr.mxu0 0.0
        %989 = vmatpush1.xpose.msra.mxu0 0.0
        %990 = vmatprep.subr.mxu0 0.0
        %991 = vmatpush1.xpose.msra.mxu0 0.0
        %992 = vmatprep.subr.mxu0 0.0
        %993 = vmatpush1.xpose.msra.mxu0 0.0
        %994 = vmatprep.subr.mxu0 0.0
        %995 = vmatpush1.xpose.msra.mxu0 0.0
        %996 = vmatprep.subr.mxu0 0.0
        %997 = vmatpush1.xpose.msra.mxu0 0.0
        %998 = vmatprep.subr.mxu0 0.0
        %999 = vmatpush1.xpose.msra.mxu0 0.0
        %1000 = vmatprep.subr.mxu0 0.0
        %1001 = vmatpush1.xpose.msra.mxu0 0.0
        %1002 = vmatprep.subr.mxu0 0.0
        %1003 = vmatpush1.xpose.msra.mxu0 0.0
        %1004 = vmatprep.subr.mxu0 0.0
        %1005 = vmatpush1.xpose.msra.mxu0 0.0
        %1006 = vmatprep.subr.mxu0 0.0
        %1007 = vmatpush1.xpose.msra.mxu0 0.0
        %1008 = vmatprep.subr.mxu0 0.0
        %1009 = vmatpush1.xpose.msra.mxu0 0.0
        %1010 = vmatprep.subr.mxu0 0.0
        %1011 = vmatpush1.xpose.msra.mxu0 0.0
        %1012 = vmatprep.subr.mxu0 0.0
        %1013 = vmatpush1.xpose.msra.mxu0 0.0
        %1014 = vmatprep.subr.mxu0 0.0
        %1015 = vmatpush1.xpose.msra.mxu0 0.0
        %1016 = vmatprep.subr.mxu0 0.0
        %1017 = vmatpush1.xpose.msra.mxu0 0.0
        %1018 = vmatprep.mubr.f32.mxu0 0.0
        %1019 = vmatmul.mubr.f32.gmra.mrb[0].mxu0 %v950
        %v1020 = vpop.f32.mrb[0].mxu0
        %v1021 = vadd.f32 0.0, %v1020
        %v1022 = vpop.f32.mrb[0].mxu0
        %1023 = vdwg.mxu0
        %1024 = vrot.lane.b32.xlu0 %v548, 96
        %v1025 = vpop.permute.xlu0 %1024
        %v1026 = vsel %vm569, %v548, 0
        %v1028 = vsel %vm569, %v1025, 0
        %1030 = vmatprep.subr.mxu0 0.0
        %1031 = vmatpush1.xpose.msra.mxu0 %v1028
        %1032 = vmatprep.subr.mxu0 0.0
        %1033 = vmatpush1.xpose.msra.mxu0 0.0
        %1034 = vmatprep.subr.mxu0 0.0
        %1035 = vmatpush1.xpose.msra.mxu0 0.0
        %1036 = vmatprep.subr.mxu0 0.0
        %1037 = vmatpush1.xpose.msra.mxu0 0.0
        %1038 = vmatprep.subr.mxu0 0.0
        %1039 = vmatpush1.xpose.msra.mxu0 0.0
        %1040 = vmatprep.subr.mxu0 0.0
        %1041 = vmatpush1.xpose.msra.mxu0 0.0
        %1042 = vmatprep.subr.mxu0 0.0
        %1043 = vmatpush1.xpose.msra.mxu0 0.0
        %1044 = vmatprep.subr.mxu0 0.0
        %1045 = vmatpush1.xpose.msra.mxu0 0.0
        %1046 = vmatprep.subr.mxu0 0.0
        %1047 = vmatpush1.xpose.msra.mxu0 0.0
        %1048 = vmatprep.subr.mxu0 0.0
        %1049 = vmatpush1.xpose.msra.mxu0 0.0
        %1050 = vmatprep.subr.mxu0 0.0
        %1051 = vmatpush1.xpose.msra.mxu0 0.0
        %1052 = vmatprep.subr.mxu0 0.0
        %1053 = vmatpush1.xpose.msra.mxu0 0.0
        %1054 = vmatprep.subr.mxu0 0.0
        %1055 = vmatpush1.xpose.msra.mxu0 0.0
        %1056 = vmatprep.subr.mxu0 0.0
        %1057 = vmatpush1.xpose.msra.mxu0 0.0
        %1058 = vmatprep.subr.mxu0 0.0
        %1059 = vmatpush1.xpose.msra.mxu0 0.0
        %1060 = vmatprep.subr.mxu0 0.0
        %1061 = vmatpush1.xpose.msra.mxu0 0.0
        %1062 = vmatprep.subr.mxu0 0.0
        %1063 = vmatpush1.xpose.msra.mxu0 0.0
        %1064 = vmatprep.subr.mxu0 0.0
        %1065 = vmatpush1.xpose.msra.mxu0 0.0
        %1066 = vmatprep.subr.mxu0 0.0
        %1067 = vmatpush1.xpose.msra.mxu0 0.0
        %1068 = vmatprep.subr.mxu0 0.0
        %1069 = vmatpush1.xpose.msra.mxu0 0.0
        %1070 = vmatprep.subr.mxu0 0.0
        %1071 = vmatpush1.xpose.msra.mxu0 0.0
        %1072 = vmatprep.subr.mxu0 0.0
        %1073 = vmatpush1.xpose.msra.mxu0 0.0
        %1074 = vmatprep.subr.mxu0 0.0
        %1075 = vmatpush1.xpose.msra.mxu0 0.0
        %1076 = vmatprep.subr.mxu0 0.0
        %1077 = vmatpush1.xpose.msra.mxu0 0.0
        %1078 = vmatprep.subr.mxu0 0.0
        %1079 = vmatpush1.xpose.msra.mxu0 0.0
        %1080 = vmatprep.subr.mxu0 0.0
        %1081 = vmatpush1.xpose.msra.mxu0 0.0
        %1082 = vmatprep.subr.mxu0 0.0
        %1083 = vmatpush1.xpose.msra.mxu0 0.0
        %1084 = vmatprep.subr.mxu0 0.0
        %1085 = vmatpush1.xpose.msra.mxu0 0.0
        %1086 = vmatprep.subr.mxu0 0.0
        %1087 = vmatpush1.xpose.msra.mxu0 0.0
        %1088 = vmatprep.subr.mxu0 0.0
        %1089 = vmatpush1.xpose.msra.mxu0 0.0
        %1090 = vmatprep.subr.mxu0 0.0
        %1091 = vmatpush1.xpose.msra.mxu0 0.0
        %1092 = vmatprep.subr.mxu0 0.0
        %1093 = vmatpush1.xpose.msra.mxu0 0.0
        %1094 = vmatprep.mubr.f32.mxu0 0.0
        %1095 = vmatmul.mubr.f32.gmra.mrb[0].mxu0 %v1026
        %v1096 = vpop.f32.mrb[0].mxu0
        %v1097 = vadd.f32 0.0, %v1096
        %v1098 = vpop.f32.mrb[0].mxu0
        %1099 = vdwg.mxu0
        %1100 = vrot.lane.b32.xlu0 %v550, 96
        %v1101 = vpop.permute.xlu0 %1100
        %v1102 = vsel %vm569, %v550, 0
        %v1104 = vsel %vm569, %v1101, 0
        %1106 = vmatprep.subr.mxu0 0.0
        %1107 = vmatpush1.xpose.msra.mxu0 %v1104
        %1108 = vmatprep.subr.mxu0 0.0
        %1109 = vmatpush1.xpose.msra.mxu0 0.0
        %1110 = vmatprep.subr.mxu0 0.0
        %1111 = vmatpush1.xpose.msra.mxu0 0.0
        %1112 = vmatprep.subr.mxu0 0.0
        %1113 = vmatpush1.xpose.msra.mxu0 0.0
        %1114 = vmatprep.subr.mxu0 0.0
        %1115 = vmatpush1.xpose.msra.mxu0 0.0
        %1116 = vmatprep.subr.mxu0 0.0
        %1117 = vmatpush1.xpose.msra.mxu0 0.0
        %1118 = vmatprep.subr.mxu0 0.0
        %1119 = vmatpush1.xpose.msra.mxu0 0.0
        %1120 = vmatprep.subr.mxu0 0.0
        %1121 = vmatpush1.xpose.msra.mxu0 0.0
        %1122 = vmatprep.subr.mxu0 0.0
        %1123 = vmatpush1.xpose.msra.mxu0 0.0
        %1124 = vmatprep.subr.mxu0 0.0
        %1125 = vmatpush1.xpose.msra.mxu0 0.0
        %1126 = vmatprep.subr.mxu0 0.0
        %1127 = vmatpush1.xpose.msra.mxu0 0.0
        %1128 = vmatprep.subr.mxu0 0.0
        %1129 = vmatpush1.xpose.msra.mxu0 0.0
        %1130 = vmatprep.subr.mxu0 0.0
        %1131 = vmatpush1.xpose.msra.mxu0 0.0
        %1132 = vmatprep.subr.mxu0 0.0
        %1133 = vmatpush1.xpose.msra.mxu0 0.0
        %1134 = vmatprep.subr.mxu0 0.0
        %1135 = vmatpush1.xpose.msra.mxu0 0.0
        %1136 = vmatprep.subr.mxu0 0.0
        %1137 = vmatpush1.xpose.msra.mxu0 0.0
        %1138 = vmatprep.subr.mxu0 0.0
        %1139 = vmatpush1.xpose.msra.mxu0 0.0
        %1140 = vmatprep.subr.mxu0 0.0
        %1141 = vmatpush1.xpose.msra.mxu0 0.0
        %1142 = vmatprep.subr.mxu0 0.0
        %1143 = vmatpush1.xpose.msra.mxu0 0.0
        %1144 = vmatprep.subr.mxu0 0.0
        %1145 = vmatpush1.xpose.msra.mxu0 0.0
        %1146 = vmatprep.subr.mxu0 0.0
        %1147 = vmatpush1.xpose.msra.mxu0 0.0
        %1148 = vmatprep.subr.mxu0 0.0
        %1149 = vmatpush1.xpose.msra.mxu0 0.0
        %1150 = vmatprep.subr.mxu0 0.0
        %1151 = vmatpush1.xpose.msra.mxu0 0.0
        %1152 = vmatprep.subr.mxu0 0.0
        %1153 = vmatpush1.xpose.msra.mxu0 0.0
        %1154 = vmatprep.subr.mxu0 0.0
        %1155 = vmatpush1.xpose.msra.mxu0 0.0
        %1156 = vmatprep.subr.mxu0 0.0
        %1157 = vmatpush1.xpose.msra.mxu0 0.0
        %1158 = vmatprep.subr.mxu0 0.0
        %1159 = vmatpush1.xpose.msra.mxu0 0.0
        %1160 = vmatprep.subr.mxu0 0.0
        %1161 = vmatpush1.xpose.msra.mxu0 0.0
        %1162 = vmatprep.subr.mxu0 0.0
        %1163 = vmatpush1.xpose.msra.mxu0 0.0
        %1164 = vmatprep.subr.mxu0 0.0
        %1165 = vmatpush1.xpose.msra.mxu0 0.0
        %1166 = vmatprep.subr.mxu0 0.0
        %1167 = vmatpush1.xpose.msra.mxu0 0.0
        %1168 = vmatprep.subr.mxu0 0.0
        %1169 = vmatpush1.xpose.msra.mxu0 0.0
        %1170 = vmatprep.mubr.f32.mxu0 0.0
        %1171 = vmatmul.mubr.f32.gmra.mrb[0].mxu0 %v1102
        %v1172 = vpop.f32.mrb[0].mxu0
        %v1173 = vadd.f32 0.0, %v1172
        %v1174 = vpop.f32.mrb[0].mxu0
        %1175 = vdwg.mxu0
        %1176 = vrot.lane.b32.xlu0 %v552, 96
        %v1177 = vpop.permute.xlu0 %1176
        %v1178 = vsel %vm569, %v552, 0
        %v1180 = vsel %vm569, %v1177, 0
        %1182 = vmatprep.subr.mxu0 0.0
        %1183 = vmatpush1.xpose.msra.mxu0 %v1180
        %1184 = vmatprep.subr.mxu0 0.0
        %1185 = vmatpush1.xpose.msra.mxu0 0.0
        %1186 = vmatprep.subr.mxu0 0.0
        %1187 = vmatpush1.xpose.msra.mxu0 0.0
        %1188 = vmatprep.subr.mxu0 0.0
        %1189 = vmatpush1.xpose.msra.mxu0 0.0
        %1190 = vmatprep.subr.mxu0 0.0
        %1191 = vmatpush1.xpose.msra.mxu0 0.0
        %1192 = vmatprep.subr.mxu0 0.0
        %1193 = vmatpush1.xpose.msra.mxu0 0.0
        %1194 = vmatprep.subr.mxu0 0.0
        %1195 = vmatpush1.xpose.msra.mxu0 0.0
        %1196 = vmatprep.subr.mxu0 0.0
        %1197 = vmatpush1.xpose.msra.mxu0 0.0
        %1198 = vmatprep.subr.mxu0 0.0
        %1199 = vmatpush1.xpose.msra.mxu0 0.0
        %1200 = vmatprep.subr.mxu0 0.0
        %1201 = vmatpush1.xpose.msra.mxu0 0.0
        %1202 = vmatprep.subr.mxu0 0.0
        %1203 = vmatpush1.xpose.msra.mxu0 0.0
        %1204 = vmatprep.subr.mxu0 0.0
        %1205 = vmatpush1.xpose.msra.mxu0 0.0
        %1206 = vmatprep.subr.mxu0 0.0
        %1207 = vmatpush1.xpose.msra.mxu0 0.0
        %1208 = vmatprep.subr.mxu0 0.0
        %1209 = vmatpush1.xpose.msra.mxu0 0.0
        %1210 = vmatprep.subr.mxu0 0.0
        %1211 = vmatpush1.xpose.msra.mxu0 0.0
        %1212 = vmatprep.subr.mxu0 0.0
        %1213 = vmatpush1.xpose.msra.mxu0 0.0
        %1214 = vmatprep.subr.mxu0 0.0
        %1215 = vmatpush1.xpose.msra.mxu0 0.0
        %1216 = vmatprep.subr.mxu0 0.0
        %1217 = vmatpush1.xpose.msra.mxu0 0.0
        %1218 = vmatprep.subr.mxu0 0.0
        %1219 = vmatpush1.xpose.msra.mxu0 0.0
        %1220 = vmatprep.subr.mxu0 0.0
        %1221 = vmatpush1.xpose.msra.mxu0 0.0
        %1222 = vmatprep.subr.mxu0 0.0
        %1223 = vmatpush1.xpose.msra.mxu0 0.0
        %1224 = vmatprep.subr.mxu0 0.0
        %1225 = vmatpush1.xpose.msra.mxu0 0.0
        %1226 = vmatprep.subr.mxu0 0.0
        %1227 = vmatpush1.xpose.msra.mxu0 0.0
        %1228 = vmatprep.subr.mxu0 0.0
        %1229 = vmatpush1.xpose.msra.mxu0 0.0
        %1230 = vmatprep.subr.mxu0 0.0
        %1231 = vmatpush1.xpose.msra.mxu0 0.0
        %1232 = vmatprep.subr.mxu0 0.0
        %1233 = vmatpush1.xpose.msra.mxu0 0.0
        %1234 = vmatprep.subr.mxu0 0.0
        %1235 = vmatpush1.xpose.msra.mxu0 0.0
        %1236 = vmatprep.subr.mxu0 0.0
        %1237 = vmatpush1.xpose.msra.mxu0 0.0
        %1238 = vmatprep.subr.mxu0 0.0
        %1239 = vmatpush1.xpose.msra.mxu0 0.0
        %1240 = vmatprep.subr.mxu0 0.0
        %1241 = vmatpush1.xpose.msra.mxu0 0.0
        %1242 = vmatprep.subr.mxu0 0.0
        %1243 = vmatpush1.xpose.msra.mxu0 0.0
        %1244 = vmatprep.subr.mxu0 0.0
        %1245 = vmatpush1.xpose.msra.mxu0 0.0
        %1246 = vmatprep.mubr.f32.mxu0 0.0
        %1247 = vmatmul.mubr.f32.gmra.mrb[0].mxu0 %v1178
        %v1248 = vpop.f32.mrb[0].mxu0
        %v1249 = vadd.f32 0.0, %v1248
        %v1250 = vpop.f32.mrb[0].mxu0
        %1251 = vdwg.mxu0
        %1252 = vrot.lane.b32.xlu0 %v554, 96
        %v1253 = vpop.permute.xlu0 %1252
        %v1254 = vsel %vm569, %v554, 0
        %v1256 = vsel %vm569, %v1253, 0
        %1258 = vmatprep.subr.mxu0 0.0
        %1259 = vmatpush1.xpose.msra.mxu0 %v1256
        %1260 = vmatprep.subr.mxu0 0.0
        %1261 = vmatpush1.xpose.msra.mxu0 0.0
        %1262 = vmatprep.subr.mxu0 0.0
        %1263 = vmatpush1.xpose.msra.mxu0 0.0
        %1264 = vmatprep.subr.mxu0 0.0
        %1265 = vmatpush1.xpose.msra.mxu0 0.0
        %1266 = vmatprep.subr.mxu0 0.0
        %1267 = vmatpush1.xpose.msra.mxu0 0.0
        %1268 = vmatprep.subr.mxu0 0.0
        %1269 = vmatpush1.xpose.msra.mxu0 0.0
        %1270 = vmatprep.subr.mxu0 0.0
        %1271 = vmatpush1.xpose.msra.mxu0 0.0
        %1272 = vmatprep.subr.mxu0 0.0
        %1273 = vmatpush1.xpose.msra.mxu0 0.0
        %1274 = vmatprep.subr.mxu0 0.0
        %1275 = vmatpush1.xpose.msra.mxu0 0.0
        %1276 = vmatprep.subr.mxu0 0.0
        %1277 = vmatpush1.xpose.msra.mxu0 0.0
        %1278 = vmatprep.subr.mxu0 0.0
        %1279 = vmatpush1.xpose.msra.mxu0 0.0
        %1280 = vmatprep.subr.mxu0 0.0
        %1281 = vmatpush1.xpose.msra.mxu0 0.0
        %1282 = vmatprep.subr.mxu0 0.0
        %1283 = vmatpush1.xpose.msra.mxu0 0.0
        %1284 = vmatprep.subr.mxu0 0.0
        %1285 = vmatpush1.xpose.msra.mxu0 0.0
        %1286 = vmatprep.subr.mxu0 0.0
        %1287 = vmatpush1.xpose.msra.mxu0 0.0
        %1288 = vmatprep.subr.mxu0 0.0
        %1289 = vmatpush1.xpose.msra.mxu0 0.0
        %1290 = vmatprep.subr.mxu0 0.0
        %1291 = vmatpush1.xpose.msra.mxu0 0.0
        %1292 = vmatprep.subr.mxu0 0.0
        %1293 = vmatpush1.xpose.msra.mxu0 0.0
        %1294 = vmatprep.subr.mxu0 0.0
        %1295 = vmatpush1.xpose.msra.mxu0 0.0
        %1296 = vmatprep.subr.mxu0 0.0
        %1297 = vmatpush1.xpose.msra.mxu0 0.0
        %1298 = vmatprep.subr.mxu0 0.0
        %1299 = vmatpush1.xpose.msra.mxu0 0.0
        %1300 = vmatprep.subr.mxu0 0.0
        %1301 = vmatpush1.xpose.msra.mxu0 0.0
        %1302 = vmatprep.subr.mxu0 0.0
        %1303 = vmatpush1.xpose.msra.mxu0 0.0
        %1304 = vmatprep.subr.mxu0 0.0
        %1305 = vmatpush1.xpose.msra.mxu0 0.0
        %1306 = vmatprep.subr.mxu0 0.0
        %1307 = vmatpush1.xpose.msra.mxu0 0.0
        %1308 = vmatprep.subr.mxu0 0.0
        %1309 = vmatpush1.xpose.msra.mxu0 0.0
        %1310 = vmatprep.subr.mxu0 0.0
        %1311 = vmatpush1.xpose.msra.mxu0 0.0
        %1312 = vmatprep.subr.mxu0 0.0
        %1313 = vmatpush1.xpose.msra.mxu0 0.0
        %1314 = vmatprep.subr.mxu0 0.0
        %1315 = vmatpush1.xpose.msra.mxu0 0.0
        %1316 = vmatprep.subr.mxu0 0.0
        %1317 = vmatpush1.xpose.msra.mxu0 0.0
        %1318 = vmatprep.subr.mxu0 0.0
        %1319 = vmatpush1.xpose.msra.mxu0 0.0
        %1320 = vmatprep.subr.mxu0 0.0
        %1321 = vmatpush1.xpose.msra.mxu0 0.0
        %1322 = vmatprep.mubr.f32.mxu0 0.0
        %1323 = vmatmul.mubr.f32.gmra.mrb[0].mxu0 %v1254
        %v1324 = vpop.f32.mrb[0].mxu0
        %v1325 = vadd.f32 0.0, %v1324
        %v1326 = vpop.f32.mrb[0].mxu0
        %1327 = vdwg.mxu0
        %1328 = vrot.lane.b32.xlu0 %v556, 96
        %v1329 = vpop.permute.xlu0 %1328
        %v1330 = vsel %vm569, %v556, 0
        %v1332 = vsel %vm569, %v1329, 0
        %1334 = vmatprep.subr.mxu0 0.0
        %1335 = vmatpush1.xpose.msra.mxu0 %v1332
        %1336 = vmatprep.subr.mxu0 0.0
        %1337 = vmatpush1.xpose.msra.mxu0 0.0
        %1338 = vmatprep.subr.mxu0 0.0
        %1339 = vmatpush1.xpose.msra.mxu0 0.0
        %1340 = vmatprep.subr.mxu0 0.0
        %1341 = vmatpush1.xpose.msra.mxu0 0.0
        %1342 = vmatprep.subr.mxu0 0.0
        %1343 = vmatpush1.xpose.msra.mxu0 0.0
        %1344 = vmatprep.subr.mxu0 0.0
        %1345 = vmatpush1.xpose.msra.mxu0 0.0
        %1346 = vmatprep.subr.mxu0 0.0
        %1347 = vmatpush1.xpose.msra.mxu0 0.0
        %1348 = vmatprep.subr.mxu0 0.0
        %1349 = vmatpush1.xpose.msra.mxu0 0.0
        %1350 = vmatprep.subr.mxu0 0.0
        %1351 = vmatpush1.xpose.msra.mxu0 0.0
        %1352 = vmatprep.subr.mxu0 0.0
        %1353 = vmatpush1.xpose.msra.mxu0 0.0
        %1354 = vmatprep.subr.mxu0 0.0
        %1355 = vmatpush1.xpose.msra.mxu0 0.0
        %1356 = vmatprep.subr.mxu0 0.0
        %1357 = vmatpush1.xpose.msra.mxu0 0.0
        %1358 = vmatprep.subr.mxu0 0.0
        %1359 = vmatpush1.xpose.msra.mxu0 0.0
        %1360 = vmatprep.subr.mxu0 0.0
        %1361 = vmatpush1.xpose.msra.mxu0 0.0
        %1362 = vmatprep.subr.mxu0 0.0
        %1363 = vmatpush1.xpose.msra.mxu0 0.0
        %1364 = vmatprep.subr.mxu0 0.0
        %1365 = vmatpush1.xpose.msra.mxu0 0.0
        %1366 = vmatprep.subr.mxu0 0.0
        %1367 = vmatpush1.xpose.msra.mxu0 0.0
        %1368 = vmatprep.subr.mxu0 0.0
        %1369 = vmatpush1.xpose.msra.mxu0 0.0
        %1370 = vmatprep.subr.mxu0 0.0
        %1371 = vmatpush1.xpose.msra.mxu0 0.0
        %1372 = vmatprep.subr.mxu0 0.0
        %1373 = vmatpush1.xpose.msra.mxu0 0.0
        %1374 = vmatprep.subr.mxu0 0.0
        %1375 = vmatpush1.xpose.msra.mxu0 0.0
        %1376 = vmatprep.subr.mxu0 0.0
        %1377 = vmatpush1.xpose.msra.mxu0 0.0
        %1378 = vmatprep.subr.mxu0 0.0
        %1379 = vmatpush1.xpose.msra.mxu0 0.0
        %1380 = vmatprep.subr.mxu0 0.0
        %1381 = vmatpush1.xpose.msra.mxu0 0.0
        %1382 = vmatprep.subr.mxu0 0.0
        %1383 = vmatpush1.xpose.msra.mxu0 0.0
        %1384 = vmatprep.subr.mxu0 0.0
        %1385 = vmatpush1.xpose.msra.mxu0 0.0
        %1386 = vmatprep.subr.mxu0 0.0
        %1387 = vmatpush1.xpose.msra.mxu0 0.0
        %1388 = vmatprep.subr.mxu0 0.0
        %1389 = vmatpush1.xpose.msra.mxu0 0.0
        %1390 = vmatprep.subr.mxu0 0.0
        %1391 = vmatpush1.xpose.msra.mxu0 0.0
        %1392 = vmatprep.subr.mxu0 0.0
        %1393 = vmatpush1.xpose.msra.mxu0 0.0
        %1394 = vmatprep.subr.mxu0 0.0
        %1395 = vmatpush1.xpose.msra.mxu0 0.0
        %1396 = vmatprep.subr.mxu0 0.0
        %1397 = vmatpush1.xpose.msra.mxu0 0.0
        %1398 = vmatprep.mubr.f32.mxu0 0.0
        %1399 = vmatmul.mubr.f32.gmra.mrb[0].mxu0 %v1330
        %v1400 = vpop.f32.mrb[0].mxu0
        %v1401 = vadd.f32 0.0, %v1400
        %v1402 = vpop.f32.mrb[0].mxu0
        %1403 = vdwg.mxu0
        %1404 = vrot.lane.b32.xlu0 %v558, 96
        %v1405 = vpop.permute.xlu0 %1404
        %v1406 = vsel %vm569, %v558, 0
        %v1408 = vsel %vm569, %v1405, 0
        %1410 = vmatprep.subr.mxu0 0.0
        %1411 = vmatpush1.xpose.msra.mxu0 %v1408
        %1412 = vmatprep.subr.mxu0 0.0
        %1413 = vmatpush1.xpose.msra.mxu0 0.0
        %1414 = vmatprep.subr.mxu0 0.0
        %1415 = vmatpush1.xpose.msra.mxu0 0.0
        %1416 = vmatprep.subr.mxu0 0.0
        %1417 = vmatpush1.xpose.msra.mxu0 0.0
        %1418 = vmatprep.subr.mxu0 0.0
        %1419 = vmatpush1.xpose.msra.mxu0 0.0
        %1420 = vmatprep.subr.mxu0 0.0
        %1421 = vmatpush1.xpose.msra.mxu0 0.0
        %1422 = vmatprep.subr.mxu0 0.0
        %1423 = vmatpush1.xpose.msra.mxu0 0.0
        %1424 = vmatprep.subr.mxu0 0.0
        %1425 = vmatpush1.xpose.msra.mxu0 0.0
        %1426 = vmatprep.subr.mxu0 0.0
        %1427 = vmatpush1.xpose.msra.mxu0 0.0
        %1428 = vmatprep.subr.mxu0 0.0
        %1429 = vmatpush1.xpose.msra.mxu0 0.0
        %1430 = vmatprep.subr.mxu0 0.0
        %1431 = vmatpush1.xpose.msra.mxu0 0.0
        %1432 = vmatprep.subr.mxu0 0.0
        %1433 = vmatpush1.xpose.msra.mxu0 0.0
        %1434 = vmatprep.subr.mxu0 0.0
        %1435 = vmatpush1.xpose.msra.mxu0 0.0
        %1436 = vmatprep.subr.mxu0 0.0
        %1437 = vmatpush1.xpose.msra.mxu0 0.0
        %1438 = vmatprep.subr.mxu0 0.0
        %1439 = vmatpush1.xpose.msra.mxu0 0.0
        %1440 = vmatprep.subr.mxu0 0.0
        %1441 = vmatpush1.xpose.msra.mxu0 0.0
        %1442 = vmatprep.subr.mxu0 0.0
        %1443 = vmatpush1.xpose.msra.mxu0 0.0
        %1444 = vmatprep.subr.mxu0 0.0
        %1445 = vmatpush1.xpose.msra.mxu0 0.0
        %1446 = vmatprep.subr.mxu0 0.0
        %1447 = vmatpush1.xpose.msra.mxu0 0.0
        %1448 = vmatprep.subr.mxu0 0.0
        %1449 = vmatpush1.xpose.msra.mxu0 0.0
        %1450 = vmatprep.subr.mxu0 0.0
        %1451 = vmatpush1.xpose.msra.mxu0 0.0
        %1452 = vmatprep.subr.mxu0 0.0
        %1453 = vmatpush1.xpose.msra.mxu0 0.0
        %1454 = vmatprep.subr.mxu0 0.0
        %1455 = vmatpush1.xpose.msra.mxu0 0.0
        %1456 = vmatprep.subr.mxu0 0.0
        %1457 = vmatpush1.xpose.msra.mxu0 0.0
        %1458 = vmatprep.subr.mxu0 0.0
        %1459 = vmatpush1.xpose.msra.mxu0 0.0
        %1460 = vmatprep.subr.mxu0 0.0
        %1461 = vmatpush1.xpose.msra.mxu0 0.0
        %1462 = vmatprep.subr.mxu0 0.0
        %1463 = vmatpush1.xpose.msra.mxu0 0.0
        %1464 = vmatprep.subr.mxu0 0.0
        %1465 = vmatpush1.xpose.msra.mxu0 0.0
        %1466 = vmatprep.subr.mxu0 0.0
        %1467 = vmatpush1.xpose.msra.mxu0 0.0
        %1468 = vmatprep.subr.mxu0 0.0
        %1469 = vmatpush1.xpose.msra.mxu0 0.0
        %1470 = vmatprep.subr.mxu0 0.0
        %1471 = vmatpush1.xpose.msra.mxu0 0.0
        %1472 = vmatprep.subr.mxu0 0.0
        %1473 = vmatpush1.xpose.msra.mxu0 0.0
        %1474 = vmatprep.mubr.f32.mxu0 0.0
        %1475 = vmatmul.mubr.f32.gmra.mrb[0].mxu0 %v1406
        %v1476 = vpop.f32.mrb[0].mxu0
        %v1477 = vadd.f32 0.0, %v1476
        %v1478 = vpop.f32.mrb[0].mxu0
        %1479 = vdwg.mxu0
        %1480 = vrot.lane.b32.xlu0 %v560, 96
        %v1481 = vpop.permute.xlu0 %1480
        %v1482 = vsel %vm569, %v560, 0
        %v1484 = vsel %vm569, %v1481, 0
        %1486 = vmatprep.subr.mxu0 0.0
        %1487 = vmatpush1.xpose.msra.mxu0 %v1484
        %1488 = vmatprep.subr.mxu0 0.0
        %1489 = vmatpush1.xpose.msra.mxu0 0.0
        %1490 = vmatprep.subr.mxu0 0.0
        %1491 = vmatpush1.xpose.msra.mxu0 0.0
        %1492 = vmatprep.subr.mxu0 0.0
        %1493 = vmatpush1.xpose.msra.mxu0 0.0
        %1494 = vmatprep.subr.mxu0 0.0
        %1495 = vmatpush1.xpose.msra.mxu0 0.0
        %1496 = vmatprep.subr.mxu0 0.0
        %1497 = vmatpush1.xpose.msra.mxu0 0.0
        %1498 = vmatprep.subr.mxu0 0.0
        %1499 = vmatpush1.xpose.msra.mxu0 0.0
        %1500 = vmatprep.subr.mxu0 0.0
        %1501 = vmatpush1.xpose.msra.mxu0 0.0
        %1502 = vmatprep.subr.mxu0 0.0
        %1503 = vmatpush1.xpose.msra.mxu0 0.0
        %1504 = vmatprep.subr.mxu0 0.0
        %1505 = vmatpush1.xpose.msra.mxu0 0.0
        %1506 = vmatprep.subr.mxu0 0.0
        %1507 = vmatpush1.xpose.msra.mxu0 0.0
        %1508 = vmatprep.subr.mxu0 0.0
        %1509 = vmatpush1.xpose.msra.mxu0 0.0
        %1510 = vmatprep.subr.mxu0 0.0
        %1511 = vmatpush1.xpose.msra.mxu0 0.0
        %1512 = vmatprep.subr.mxu0 0.0
        %1513 = vmatpush1.xpose.msra.mxu0 0.0
        %1514 = vmatprep.subr.mxu0 0.0
        %1515 = vmatpush1.xpose.msra.mxu0 0.0
        %1516 = vmatprep.subr.mxu0 0.0
        %1517 = vmatpush1.xpose.msra.mxu0 0.0
        %1518 = vmatprep.subr.mxu0 0.0
        %1519 = vmatpush1.xpose.msra.mxu0 0.0
        %1520 = vmatprep.subr.mxu0 0.0
        %1521 = vmatpush1.xpose.msra.mxu0 0.0
        %1522 = vmatprep.subr.mxu0 0.0
        %1523 = vmatpush1.xpose.msra.mxu0 0.0
        %1524 = vmatprep.subr.mxu0 0.0
        %1525 = vmatpush1.xpose.msra.mxu0 0.0
        %1526 = vmatprep.subr.mxu0 0.0
        %1527 = vmatpush1.xpose.msra.mxu0 0.0
        %1528 = vmatprep.subr.mxu0 0.0
        %1529 = vmatpush1.xpose.msra.mxu0 0.0
        %1530 = vmatprep.subr.mxu0 0.0
        %1531 = vmatpush1.xpose.msra.mxu0 0.0
        %1532 = vmatprep.subr.mxu0 0.0
        %1533 = vmatpush1.xpose.msra.mxu0 0.0
        %1534 = vmatprep.subr.mxu0 0.0
        %1535 = vmatpush1.xpose.msra.mxu0 0.0
        %1536 = vmatprep.subr.mxu0 0.0
        %1537 = vmatpush1.xpose.msra.mxu0 0.0
        %1538 = vmatprep.subr.mxu0 0.0
        %1539 = vmatpush1.xpose.msra.mxu0 0.0
        %1540 = vmatprep.subr.mxu0 0.0
        %1541 = vmatpush1.xpose.msra.mxu0 0.0
        %1542 = vmatprep.subr.mxu0 0.0
        %1543 = vmatpush1.xpose.msra.mxu0 0.0
        %1544 = vmatprep.subr.mxu0 0.0
        %1545 = vmatpush1.xpose.msra.mxu0 0.0
        %1546 = vmatprep.subr.mxu0 0.0
        %1547 = vmatpush1.xpose.msra.mxu0 0.0
        %1548 = vmatprep.subr.mxu0 0.0
        %1549 = vmatpush1.xpose.msra.mxu0 0.0
        %1550 = vmatprep.mubr.f32.mxu0 0.0
        %1551 = vmatmul.mubr.f32.gmra.mrb[0].mxu0 %v1482
        %v1552 = vpop.f32.mrb[0].mxu0
        %v1553 = vadd.f32 0.0, %v1552
        %v1554 = vpop.f32.mrb[0].mxu0
        %1555 = vdwg.mxu0
        %1556 = vrot.lane.b32.xlu0 %v562, 96
        %v1557 = vpop.permute.xlu0 %1556
        %v1558 = vsel %vm569, %v562, 0
        %v1560 = vsel %vm569, %v1557, 0
        %1562 = vmatprep.subr.mxu0 0.0
        %1563 = vmatpush1.xpose.msra.mxu0 %v1560
        %1564 = vmatprep.subr.mxu0 0.0
        %1565 = vmatpush1.xpose.msra.mxu0 0.0
        %1566 = vmatprep.subr.mxu0 0.0
        %1567 = vmatpush1.xpose.msra.mxu0 0.0
        %1568 = vmatprep.subr.mxu0 0.0
        %1569 = vmatpush1.xpose.msra.mxu0 0.0
        %1570 = vmatprep.subr.mxu0 0.0
        %1571 = vmatpush1.xpose.msra.mxu0 0.0
        %1572 = vmatprep.subr.mxu0 0.0
        %1573 = vmatpush1.xpose.msra.mxu0 0.0
        %1574 = vmatprep.subr.mxu0 0.0
        %1575 = vmatpush1.xpose.msra.mxu0 0.0
        %1576 = vmatprep.subr.mxu0 0.0
        %1577 = vmatpush1.xpose.msra.mxu0 0.0
        %1578 = vmatprep.subr.mxu0 0.0
        %1579 = vmatpush1.xpose.msra.mxu0 0.0
        %1580 = vmatprep.subr.mxu0 0.0
        %1581 = vmatpush1.xpose.msra.mxu0 0.0
        %1582 = vmatprep.subr.mxu0 0.0
        %1583 = vmatpush1.xpose.msra.mxu0 0.0
        %1584 = vmatprep.subr.mxu0 0.0
        %1585 = vmatpush1.xpose.msra.mxu0 0.0
        %1586 = vmatprep.subr.mxu0 0.0
        %1587 = vmatpush1.xpose.msra.mxu0 0.0
        %1588 = vmatprep.subr.mxu0 0.0
        %1589 = vmatpush1.xpose.msra.mxu0 0.0
        %1590 = vmatprep.subr.mxu0 0.0
        %1591 = vmatpush1.xpose.msra.mxu0 0.0
        %1592 = vmatprep.subr.mxu0 0.0
        %1593 = vmatpush1.xpose.msra.mxu0 0.0
        %1594 = vmatprep.subr.mxu0 0.0
        %1595 = vmatpush1.xpose.msra.mxu0 0.0
        %1596 = vmatprep.subr.mxu0 0.0
        %1597 = vmatpush1.xpose.msra.mxu0 0.0
        %1598 = vmatprep.subr.mxu0 0.0
        %1599 = vmatpush1.xpose.msra.mxu0 0.0
        %1600 = vmatprep.subr.mxu0 0.0
        %1601 = vmatpush1.xpose.msra.mxu0 0.0
        %1602 = vmatprep.subr.mxu0 0.0
        %1603 = vmatpush1.xpose.msra.mxu0 0.0
        %1604 = vmatprep.subr.mxu0 0.0
        %1605 = vmatpush1.xpose.msra.mxu0 0.0
        %1606 = vmatprep.subr.mxu0 0.0
        %1607 = vmatpush1.xpose.msra.mxu0 0.0
        %1608 = vmatprep.subr.mxu0 0.0
        %1609 = vmatpush1.xpose.msra.mxu0 0.0
        %1610 = vmatprep.subr.mxu0 0.0
        %1611 = vmatpush1.xpose.msra.mxu0 0.0
        %1612 = vmatprep.subr.mxu0 0.0
        %1613 = vmatpush1.xpose.msra.mxu0 0.0
        %1614 = vmatprep.subr.mxu0 0.0
        %1615 = vmatpush1.xpose.msra.mxu0 0.0
        %1616 = vmatprep.subr.mxu0 0.0
        %1617 = vmatpush1.xpose.msra.mxu0 0.0
        %1618 = vmatprep.subr.mxu0 0.0
        %1619 = vmatpush1.xpose.msra.mxu0 0.0
        %1620 = vmatprep.subr.mxu0 0.0
        %1621 = vmatpush1.xpose.msra.mxu0 0.0
        %1622 = vmatprep.subr.mxu0 0.0
        %1623 = vmatpush1.xpose.msra.mxu0 0.0
        %1624 = vmatprep.subr.mxu0 0.0
        %1625 = vmatpush1.xpose.msra.mxu0 0.0
        %1626 = vmatprep.mubr.f32.mxu0 0.0
        %1627 = vmatmul.mubr.f32.gmra.mrb[0].mxu0 %v1558
        %v1628 = vpop.f32.mrb[0].mxu0
        %v1629 = vadd.f32 0.0, %v1628
        %v1630 = vpop.f32.mrb[0].mxu0
        %1631 = vdwg.mxu0
        %1632 = vrot.lane.b32.xlu0 %v564, 96
        %v1633 = vpop.permute.xlu0 %1632
        %v1634 = vsel %vm569, %v564, 0
        %v1636 = vsel %vm569, %v1633, 0
        %1638 = vmatprep.subr.mxu0 0.0
        %1639 = vmatpush1.xpose.msra.mxu0 %v1636
        %1640 = vmatprep.subr.mxu0 0.0
        %1641 = vmatpush1.xpose.msra.mxu0 0.0
        %1642 = vmatprep.subr.mxu0 0.0
        %1643 = vmatpush1.xpose.msra.mxu0 0.0
        %1644 = vmatprep.subr.mxu0 0.0
        %1645 = vmatpush1.xpose.msra.mxu0 0.0
        %1646 = vmatprep.subr.mxu0 0.0
        %1647 = vmatpush1.xpose.msra.mxu0 0.0
        %1648 = vmatprep.subr.mxu0 0.0
        %1649 = vmatpush1.xpose.msra.mxu0 0.0
        %1650 = vmatprep.subr.mxu0 0.0
        %1651 = vmatpush1.xpose.msra.mxu0 0.0
        %1652 = vmatprep.subr.mxu0 0.0
        %1653 = vmatpush1.xpose.msra.mxu0 0.0
        %1654 = vmatprep.subr.mxu0 0.0
        %1655 = vmatpush1.xpose.msra.mxu0 0.0
        %1656 = vmatprep.subr.mxu0 0.0
        %1657 = vmatpush1.xpose.msra.mxu0 0.0
        %1658 = vmatprep.subr.mxu0 0.0
        %1659 = vmatpush1.xpose.msra.mxu0 0.0
        %1660 = vmatprep.subr.mxu0 0.0
        %1661 = vmatpush1.xpose.msra.mxu0 0.0
        %1662 = vmatprep.subr.mxu0 0.0
        %1663 = vmatpush1.xpose.msra.mxu0 0.0
        %1664 = vmatprep.subr.mxu0 0.0
        %1665 = vmatpush1.xpose.msra.mxu0 0.0
        %1666 = vmatprep.subr.mxu0 0.0
        %1667 = vmatpush1.xpose.msra.mxu0 0.0
        %1668 = vmatprep.subr.mxu0 0.0
        %1669 = vmatpush1.xpose.msra.mxu0 0.0
        %1670 = vmatprep.subr.mxu0 0.0
        %1671 = vmatpush1.xpose.msra.mxu0 0.0
        %1672 = vmatprep.subr.mxu0 0.0
        %1673 = vmatpush1.xpose.msra.mxu0 0.0
        %1674 = vmatprep.subr.mxu0 0.0
        %1675 = vmatpush1.xpose.msra.mxu0 0.0
        %1676 = vmatprep.subr.mxu0 0.0
        %1677 = vmatpush1.xpose.msra.mxu0 0.0
        %1678 = vmatprep.subr.mxu0 0.0
        %1679 = vmatpush1.xpose.msra.mxu0 0.0
        %1680 = vmatprep.subr.mxu0 0.0
        %1681 = vmatpush1.xpose.msra.mxu0 0.0
        %1682 = vmatprep.subr.mxu0 0.0
        %1683 = vmatpush1.xpose.msra.mxu0 0.0
        %1684 = vmatprep.subr.mxu0 0.0
        %1685 = vmatpush1.xpose.msra.mxu0 0.0
        %1686 = vmatprep.subr.mxu0 0.0
        %1687 = vmatpush1.xpose.msra.mxu0 0.0
        %1688 = vmatprep.subr.mxu0 0.0
        %1689 = vmatpush1.xpose.msra.mxu0 0.0
        %1690 = vmatprep.subr.mxu0 0.0
        %1691 = vmatpush1.xpose.msra.mxu0 0.0
        %1692 = vmatprep.subr.mxu0 0.0
        %1693 = vmatpush1.xpose.msra.mxu0 0.0
        %1694 = vmatprep.subr.mxu0 0.0
        %1695 = vmatpush1.xpose.msra.mxu0 0.0
        %1696 = vmatprep.subr.mxu0 0.0
        %1697 = vmatpush1.xpose.msra.mxu0 0.0
        %1698 = vmatprep.subr.mxu0 0.0
        %1699 = vmatpush1.xpose.msra.mxu0 0.0
        %1700 = vmatprep.subr.mxu0 0.0
        %1701 = vmatpush1.xpose.msra.mxu0 0.0
        %1702 = vmatprep.mubr.f32.mxu0 0.0
        %1703 = vmatmul.mubr.f32.gmra.mrb[0].mxu0 %v1634
        %v1704 = vpop.f32.mrb[0].mxu0
        %v1705 = vadd.f32 0.0, %v1704
        %v1706 = vpop.f32.mrb[0].mxu0
        %1707 = vdwg.mxu0
        %1708 = vrot.lane.b32.xlu0 %v566, 96
        %v1709 = vpop.permute.xlu0 %1708
        %v1710 = vsel %vm569, %v566, 0
        %v1712 = vsel %vm569, %v1709, 0
        %1714 = vmatprep.subr.mxu0 0.0
        %1715 = vmatpush1.xpose.msra.mxu0 %v1712
        %1716 = vmatprep.subr.mxu0 0.0
        %1717 = vmatpush1.xpose.msra.mxu0 0.0
        %1718 = vmatprep.subr.mxu0 0.0
        %1719 = vmatpush1.xpose.msra.mxu0 0.0
        %1720 = vmatprep.subr.mxu0 0.0
        %1721 = vmatpush1.xpose.msra.mxu0 0.0
        %1722 = vmatprep.subr.mxu0 0.0
        %1723 = vmatpush1.xpose.msra.mxu0 0.0
        %1724 = vmatprep.subr.mxu0 0.0
        %1725 = vmatpush1.xpose.msra.mxu0 0.0
        %1726 = vmatprep.subr.mxu0 0.0
        %1727 = vmatpush1.xpose.msra.mxu0 0.0
        %1728 = vmatprep.subr.mxu0 0.0
        %1729 = vmatpush1.xpose.msra.mxu0 0.0
        %1730 = vmatprep.subr.mxu0 0.0
        %1731 = vmatpush1.xpose.msra.mxu0 0.0
        %1732 = vmatprep.subr.mxu0 0.0
        %1733 = vmatpush1.xpose.msra.mxu0 0.0
        %1734 = vmatprep.subr.mxu0 0.0
        %1735 = vmatpush1.xpose.msra.mxu0 0.0
        %1736 = vmatprep.subr.mxu0 0.0
        %1737 = vmatpush1.xpose.msra.mxu0 0.0
        %1738 = vmatprep.subr.mxu0 0.0
        %1739 = vmatpush1.xpose.msra.mxu0 0.0
        %1740 = vmatprep.subr.mxu0 0.0
        %1741 = vmatpush1.xpose.msra.mxu0 0.0
        %1742 = vmatprep.subr.mxu0 0.0
        %1743 = vmatpush1.xpose.msra.mxu0 0.0
        %1744 = vmatprep.subr.mxu0 0.0
        %1745 = vmatpush1.xpose.msra.mxu0 0.0
        %1746 = vmatprep.subr.mxu0 0.0
        %1747 = vmatpush1.xpose.msra.mxu0 0.0
        %1748 = vmatprep.subr.mxu0 0.0
        %1749 = vmatpush1.xpose.msra.mxu0 0.0
        %1750 = vmatprep.subr.mxu0 0.0
        %1751 = vmatpush1.xpose.msra.mxu0 0.0
        %1752 = vmatprep.subr.mxu0 0.0
        %1753 = vmatpush1.xpose.msra.mxu0 0.0
        %1754 = vmatprep.subr.mxu0 0.0
        %1755 = vmatpush1.xpose.msra.mxu0 0.0
        %1756 = vmatprep.subr.mxu0 0.0
        %1757 = vmatpush1.xpose.msra.mxu0 0.0
        %1758 = vmatprep.subr.mxu0 0.0
        %1759 = vmatpush1.xpose.msra.mxu0 0.0
        %1760 = vmatprep.subr.mxu0 0.0
        %1761 = vmatpush1.xpose.msra.mxu0 0.0
        %1762 = vmatprep.subr.mxu0 0.0
        %1763 = vmatpush1.xpose.msra.mxu0 0.0
        %1764 = vmatprep.subr.mxu0 0.0
        %1765 = vmatpush1.xpose.msra.mxu0 0.0
        %1766 = vmatprep.subr.mxu0 0.0
        %1767 = vmatpush1.xpose.msra.mxu0 0.0
        %1768 = vmatprep.subr.mxu0 0.0
        %1769 = vmatpush1.xpose.msra.mxu0 0.0
        %1770 = vmatprep.subr.mxu0 0.0
        %1771 = vmatpush1.xpose.msra.mxu0 0.0
        %1772 = vmatprep.subr.mxu0 0.0
        %1773 = vmatpush1.xpose.msra.mxu0 0.0
        %1774 = vmatprep.subr.mxu0 0.0
        %1775 = vmatpush1.xpose.msra.mxu0 0.0
        %1776 = vmatprep.subr.mxu0 0.0
        %1777 = vmatpush1.xpose.msra.mxu0 0.0
        %1778 = vmatprep.mubr.f32.mxu0 0.0
        %1779 = vmatmul.mubr.f32.gmra.mrb[0].mxu0 %v1710
        %v1780 = vpop.f32.mrb[0].mxu0
        %v1781 = vadd.f32 0.0, %v1780
        %v1782 = vpop.f32.mrb[0].mxu0
        %1783 = vdwg.mxu0
        %v1784 = vsel %vm569, %v641, -inf
        %1785 = vmax.xlane.f32.xlu0 %v1784
        %v1786 = vpop.xlane.xlu0 %1785
        %v1787 = vsel %vm569, %v717, -inf
        %1788 = vmax.xlane.f32.xlu0 %v1787
        %v1789 = vpop.xlane.xlu0 %1788
        %v1790 = vsel %vm569, %v793, -inf
        %1791 = vmax.xlane.f32.xlu0 %v1790
        %v1792 = vpop.xlane.xlu0 %1791
        %v1793 = vsel %vm569, %v869, -inf
        %1794 = vmax.xlane.f32.xlu0 %v1793
        %v1795 = vpop.xlane.xlu0 %1794
        %v1796 = vsel %vm569, %v945, -inf
        %1797 = vmax.xlane.f32.xlu0 %v1796
        %v1798 = vpop.xlane.xlu0 %1797
        %v1799 = vsel %vm569, %v1021, -inf
        %1800 = vmax.xlane.f32.xlu0 %v1799
        %v1801 = vpop.xlane.xlu0 %1800
        %v1802 = vsel %vm569, %v1097, -inf
        %1803 = vmax.xlane.f32.xlu0 %v1802
        %v1804 = vpop.xlane.xlu0 %1803
        %v1805 = vsel %vm569, %v1173, -inf
        %1806 = vmax.xlane.f32.xlu0 %v1805
        %v1807 = vpop.xlane.xlu0 %1806
        %v1808 = vsel %vm569, %v1249, -inf
        %1809 = vmax.xlane.f32.xlu0 %v1808
        %v1810 = vpop.xlane.xlu0 %1809
        %v1811 = vsel %vm569, %v1325, -inf
        %1812 = vmax.xlane.f32.xlu0 %v1811
        %v1813 = vpop.xlane.xlu0 %1812
        %v1814 = vsel %vm569, %v1401, -inf
        %1815 = vmax.xlane.f32.xlu0 %v1814
        %v1816 = vpop.xlane.xlu0 %1815
        %v1817 = vsel %vm569, %v1477, -inf
        %1818 = vmax.xlane.f32.xlu0 %v1817
        %v1819 = vpop.xlane.xlu0 %1818
        %v1820 = vsel %vm569, %v1553, -inf
        %1821 = vmax.xlane.f32.xlu0 %v1820
        %v1822 = vpop.xlane.xlu0 %1821
        %v1823 = vsel %vm569, %v1629, -inf
        %1824 = vmax.xlane.f32.xlu0 %v1823
        %v1825 = vpop.xlane.xlu0 %1824
        %v1826 = vsel %vm569, %v1705, -inf
        %1827 = vmax.xlane.f32.xlu0 %v1826
        %v1828 = vpop.xlane.xlu0 %1827
        %v1829 = vsel %vm569, %v1781, -inf
        %1830 = vmax.xlane.f32.xlu0 %v1829
        %v1831 = vpop.xlane.xlu0 %1830
        %v1832 = vsub.f32 %v641, %v1786
        %v1833 = vsub.f32 %v717, %v1789
        %v1834 = vsub.f32 %v793, %v1792
        %v1835 = vsub.f32 %v869, %v1795
        %v1836 = vsub.f32 %v945, %v1798
        %v1837 = vsub.f32 %v1021, %v1801
        %v1838 = vsub.f32 %v1097, %v1804
        %v1839 = vsub.f32 %v1173, %v1807
        %v1840 = vsub.f32 %v1249, %v1810
        %v1841 = vsub.f32 %v1325, %v1813
        %v1842 = vsub.f32 %v1401, %v1816
        %v1843 = vsub.f32 %v1477, %v1819
        %v1844 = vsub.f32 %v1553, %v1822
        %v1845 = vsub.f32 %v1629, %v1825
        %v1846 = vsub.f32 %v1705, %v1828
        %v1847 = vsub.f32 %v1781, %v1831
        %v1848 = vmul.f32 %v1832, 1.442695
        %v1849 = vpow.pop %v1848
        %v1850 = vmul.f32 %v1833, 1.442695
        %v1851 = vpow.pop %v1850
        %v1852 = vmul.f32 %v1834, 1.442695
        %v1853 = vpow.pop %v1852
        %v1854 = vmul.f32 %v1835, 1.442695
        %v1855 = vpow.pop %v1854
        %v1856 = vmul.f32 %v1836, 1.442695
        %v1857 = vpow.pop %v1856
        %v1858 = vmul.f32 %v1837, 1.442695
        %v1859 = vpow.pop %v1858
        %v1860 = vmul.f32 %v1838, 1.442695
        %v1861 = vpow.pop %v1860
        %v1862 = vmul.f32 %v1839, 1.442695
        %v1863 = vpow.pop %v1862
        %v1864 = vmul.f32 %v1840, 1.442695
        %v1865 = vpow.pop %v1864
        %v1866 = vmul.f32 %v1841, 1.442695
        %v1867 = vpow.pop %v1866
        %v1868 = vmul.f32 %v1842, 1.442695
        %v1869 = vpow.pop %v1868
        %v1870 = vmul.f32 %v1843, 1.442695
        %v1871 = vpow.pop %v1870
        %v1872 = vmul.f32 %v1844, 1.442695
        %v1873 = vpow.pop %v1872
        %v1874 = vmul.f32 %v1845, 1.442695
        %v1875 = vpow.pop %v1874
        %v1876 = vmul.f32 %v1846, 1.442695
        %v1877 = vpow.pop %v1876
        %v1878 = vmul.f32 %v1847, 1.442695
        %v1879 = vpow.pop %v1878
        %v1880 = vsel %vm569, %v1849, 0.0
        %1881 = vadd.xlane.f32.xlu0 %v1880
        %v1882 = vpop.xlane.xlu0 %1881
        %v1883 = vsel %vm569, %v1851, 0.0
        %1884 = vadd.xlane.f32.xlu0 %v1883
        %v1885 = vpop.xlane.xlu0 %1884
        %v1886 = vsel %vm569, %v1853, 0.0
        %1887 = vadd.xlane.f32.xlu0 %v1886
        %v1888 = vpop.xlane.xlu0 %1887
        %v1889 = vsel %vm569, %v1855, 0.0
        %1890 = vadd.xlane.f32.xlu0 %v1889
        %v1891 = vpop.xlane.xlu0 %1890
        %v1892 = vsel %vm569, %v1857, 0.0
        %1893 = vadd.xlane.f32.xlu0 %v1892
        %v1894 = vpop.xlane.xlu0 %1893
        %v1895 = vsel %vm569, %v1859, 0.0
        %1896 = vadd.xlane.f32.xlu0 %v1895
        %v1897 = vpop.xlane.xlu0 %1896
        %v1898 = vsel %vm569, %v1861, 0.0
        %1899 = vadd.xlane.f32.xlu0 %v1898
        %v1900 = vpop.xlane.xlu0 %1899
        %v1901 = vsel %vm569, %v1863, 0.0
        %1902 = vadd.xlane.f32.xlu0 %v1901
        %v1903 = vpop.xlane.xlu0 %1902
        %v1904 = vsel %vm569, %v1865, 0.0
        %1905 = vadd.xlane.f32.xlu0 %v1904
        %v1906 = vpop.xlane.xlu0 %1905
        %v1907 = vsel %vm569, %v1867, 0.0
        %1908 = vadd.xlane.f32.xlu0 %v1907
        %v1909 = vpop.xlane.xlu0 %1908
        %v1910 = vsel %vm569, %v1869, 0.0
        %1911 = vadd.xlane.f32.xlu0 %v1910
        %v1912 = vpop.xlane.xlu0 %1911
        %v1913 = vsel %vm569, %v1871, 0.0
        %1914 = vadd.xlane.f32.xlu0 %v1913
        %v1915 = vpop.xlane.xlu0 %1914
        %v1916 = vsel %vm569, %v1873, 0.0
        %1917 = vadd.xlane.f32.xlu0 %v1916
        %v1918 = vpop.xlane.xlu0 %1917
        %v1919 = vsel %vm569, %v1875, 0.0
        %1920 = vadd.xlane.f32.xlu0 %v1919
        %v1921 = vpop.xlane.xlu0 %1920
        %v1922 = vsel %vm569, %v1877, 0.0
        %1923 = vadd.xlane.f32.xlu0 %v1922
        %v1924 = vpop.xlane.xlu0 %1923
        %v1925 = vsel %vm569, %v1879, 0.0
        %1926 = vadd.xlane.f32.xlu0 %v1925
        %v1927 = vpop.xlane.xlu0 %1926
        %1928 = vrot.lane.b32.xlu0 %v525, 64
        %v1929 = vpop.permute.xlu0 %1928
        %v1932 = vsel %vm569, %v1849, 0
        %1934 = vmatprep.subr.mxu0 0.0
        %1935 = vmatpush1.msra.mxu0 %v1929
        %1936 = vmatprep.subr.mxu0 0.0
        %1937 = vmatpush1.msra.mxu0 0.0
        %1938 = vmatprep.subr.mxu0 0.0
        %1939 = vmatpush1.msra.mxu0 0.0
        %1940 = vmatprep.subr.mxu0 0.0
        %1941 = vmatpush1.msra.mxu0 0.0
        %1942 = vmatprep.subr.mxu0 0.0
        %1943 = vmatpush1.msra.mxu0 0.0
        %1944 = vmatprep.subr.mxu0 0.0
        %1945 = vmatpush1.msra.mxu0 0.0
        %1946 = vmatprep.subr.mxu0 0.0
        %1947 = vmatpush1.msra.mxu0 0.0
        %1948 = vmatprep.subr.mxu0 0.0
        %1949 = vmatpush1.msra.mxu0 0.0
        %1950 = vmatprep.subr.mxu0 0.0
        %1951 = vmatpush1.msra.mxu0 0.0
        %1952 = vmatprep.subr.mxu0 0.0
        %1953 = vmatpush1.msra.mxu0 0.0
        %1954 = vmatprep.subr.mxu0 0.0
        %1955 = vmatpush1.msra.mxu0 0.0
        %1956 = vmatprep.subr.mxu0 0.0
        %1957 = vmatpush1.msra.mxu0 0.0
        %1958 = vmatprep.subr.mxu0 0.0
        %1959 = vmatpush1.msra.mxu0 0.0
        %1960 = vmatprep.subr.mxu0 0.0
        %1961 = vmatpush1.msra.mxu0 0.0
        %1962 = vmatprep.subr.mxu0 0.0
        %1963 = vmatpush1.msra.mxu0 0.0
        %1964 = vmatprep.subr.mxu0 0.0
        %1965 = vmatpush1.msra.mxu0 0.0
        %1966 = vmatprep.subr.mxu0 0.0
        %1967 = vmatpush1.msra.mxu0 0.0
        %1968 = vmatprep.subr.mxu0 0.0
        %1969 = vmatpush1.msra.mxu0 0.0
        %1970 = vmatprep.subr.mxu0 0.0
        %1971 = vmatpush1.msra.mxu0 0.0
        %1972 = vmatprep.subr.mxu0 0.0
        %1973 = vmatpush1.msra.mxu0 0.0
        %1974 = vmatprep.subr.mxu0 0.0
        %1975 = vmatpush1.msra.mxu0 0.0
        %1976 = vmatprep.subr.mxu0 0.0
        %1977 = vmatpush1.msra.mxu0 0.0
        %1978 = vmatprep.subr.mxu0 0.0
        %1979 = vmatpush1.msra.mxu0 0.0
        %1980 = vmatprep.subr.mxu0 0.0
        %1981 = vmatpush1.msra.mxu0 0.0
        %1982 = vmatprep.subr.mxu0 0.0
        %1983 = vmatpush1.msra.mxu0 0.0
        %1984 = vmatprep.subr.mxu0 0.0
        %1985 = vmatpush1.msra.mxu0 0.0
        %1986 = vmatprep.subr.mxu0 0.0
        %1987 = vmatpush1.msra.mxu0 0.0
        %1988 = vmatprep.subr.mxu0 0.0
        %1989 = vmatpush1.msra.mxu0 0.0
        %1990 = vmatprep.subr.mxu0 0.0
        %1991 = vmatpush1.msra.mxu0 0.0
        %1992 = vmatprep.subr.mxu0 0.0
        %1993 = vmatpush1.msra.mxu0 0.0
        %1994 = vmatprep.subr.mxu0 0.0
        %1995 = vmatpush1.msra.mxu0 0.0
        %1996 = vmatprep.subr.mxu0 0.0
        %1997 = vmatpush1.msra.mxu0 0.0
        %1998 = vmatprep.mubr.f32.mxu0 0.0
        %1999 = vmatmul.mubr.f32.gmra.mrb[0].mxu0 %v1932
        %v2000 = vpop.f32.mrb[0].mxu0
        %v2001 = vadd.f32 0.0, %v2000
        %v2002 = vpop.f32.mrb[0].mxu0
        %2003 = vdwg.mxu0
        %2004 = vrot.lane.b32.xlu0 %v528, 64
        %v2005 = vpop.permute.xlu0 %2004
        %v2008 = vsel %vm569, %v1851, 0
        %2010 = vmatprep.subr.mxu0 0.0
        %2011 = vmatpush1.msra.mxu0 %v2005
        %2012 = vmatprep.subr.mxu0 0.0
        %2013 = vmatpush1.msra.mxu0 0.0
        %2014 = vmatprep.subr.mxu0 0.0
        %2015 = vmatpush1.msra.mxu0 0.0
        %2016 = vmatprep.subr.mxu0 0.0
        %2017 = vmatpush1.msra.mxu0 0.0
        %2018 = vmatprep.subr.mxu0 0.0
        %2019 = vmatpush1.msra.mxu0 0.0
        %2020 = vmatprep.subr.mxu0 0.0
        %2021 = vmatpush1.msra.mxu0 0.0
        %2022 = vmatprep.subr.mxu0 0.0
        %2023 = vmatpush1.msra.mxu0 0.0
        %2024 = vmatprep.subr.mxu0 0.0
        %2025 = vmatpush1.msra.mxu0 0.0
        %2026 = vmatprep.subr.mxu0 0.0
        %2027 = vmatpush1.msra.mxu0 0.0
        %2028 = vmatprep.subr.mxu0 0.0
        %2029 = vmatpush1.msra.mxu0 0.0
        %2030 = vmatprep.subr.mxu0 0.0
        %2031 = vmatpush1.msra.mxu0 0.0
        %2032 = vmatprep.subr.mxu0 0.0
        %2033 = vmatpush1.msra.mxu0 0.0
        %2034 = vmatprep.subr.mxu0 0.0
        %2035 = vmatpush1.msra.mxu0 0.0
        %2036 = vmatprep.subr.mxu0 0.0
        %2037 = vmatpush1.msra.mxu0 0.0
        %2038 = vmatprep.subr.mxu0 0.0
        %2039 = vmatpush1.msra.mxu0 0.0
        %2040 = vmatprep.subr.mxu0 0.0
        %2041 = vmatpush1.msra.mxu0 0.0
        %2042 = vmatprep.subr.mxu0 0.0
        %2043 = vmatpush1.msra.mxu0 0.0
        %2044 = vmatprep.subr.mxu0 0.0
        %2045 = vmatpush1.msra.mxu0 0.0
        %2046 = vmatprep.subr.mxu0 0.0
        %2047 = vmatpush1.msra.mxu0 0.0
        %2048 = vmatprep.subr.mxu0 0.0
        %2049 = vmatpush1.msra.mxu0 0.0
        %2050 = vmatprep.subr.mxu0 0.0
        %2051 = vmatpush1.msra.mxu0 0.0
        %2052 = vmatprep.subr.mxu0 0.0
        %2053 = vmatpush1.msra.mxu0 0.0
        %2054 = vmatprep.subr.mxu0 0.0
        %2055 = vmatpush1.msra.mxu0 0.0
        %2056 = vmatprep.subr.mxu0 0.0
        %2057 = vmatpush1.msra.mxu0 0.0
        %2058 = vmatprep.subr.mxu0 0.0
        %2059 = vmatpush1.msra.mxu0 0.0
        %2060 = vmatprep.subr.mxu0 0.0
        %2061 = vmatpush1.msra.mxu0 0.0
        %2062 = vmatprep.subr.mxu0 0.0
        %2063 = vmatpush1.msra.mxu0 0.0
        %2064 = vmatprep.subr.mxu0 0.0
        %2065 = vmatpush1.msra.mxu0 0.0
        %2066 = vmatprep.subr.mxu0 0.0
        %2067 = vmatpush1.msra.mxu0 0.0
        %2068 = vmatprep.subr.mxu0 0.0
        %2069 = vmatpush1.msra.mxu0 0.0
        %2070 = vmatprep.subr.mxu0 0.0
        %2071 = vmatpush1.msra.mxu0 0.0
        %2072 = vmatprep.subr.mxu0 0.0
        %2073 = vmatpush1.msra.mxu0 0.0
        %2074 = vmatprep.mubr.f32.mxu0 0.0
        %2075 = vmatmul.mubr.f32.gmra.mrb[0].mxu0 %v2008
        %v2076 = vpop.f32.mrb[0].mxu0
        %v2077 = vadd.f32 0.0, %v2076
        %v2078 = vpop.f32.mrb[0].mxu0
        %2079 = vdwg.mxu0
        %2080 = vrot.lane.b32.xlu0 %v533, 64
        %v2081 = vpop.permute.xlu0 %2080
        %v2084 = vsel %vm569, %v1853, 0
        %2086 = vmatprep.subr.mxu0 0.0
        %2087 = vmatpush1.msra.mxu0 %v2081
        %2088 = vmatprep.subr.mxu0 0.0
        %2089 = vmatpush1.msra.mxu0 0.0
        %2090 = vmatprep.subr.mxu0 0.0
        %2091 = vmatpush1.msra.mxu0 0.0
        %2092 = vmatprep.subr.mxu0 0.0
        %2093 = vmatpush1.msra.mxu0 0.0
        %2094 = vmatprep.subr.mxu0 0.0
        %2095 = vmatpush1.msra.mxu0 0.0
        %2096 = vmatprep.subr.mxu0 0.0
        %2097 = vmatpush1.msra.mxu0 0.0
        %2098 = vmatprep.subr.mxu0 0.0
        %2099 = vmatpush1.msra.mxu0 0.0
        %2100 = vmatprep.subr.mxu0 0.0
        %2101 = vmatpush1.msra.mxu0 0.0
        %2102 = vmatprep.subr.mxu0 0.0
        %2103 = vmatpush1.msra.mxu0 0.0
        %2104 = vmatprep.subr.mxu0 0.0
        %2105 = vmatpush1.msra.mxu0 0.0
        %2106 = vmatprep.subr.mxu0 0.0
        %2107 = vmatpush1.msra.mxu0 0.0
        %2108 = vmatprep.subr.mxu0 0.0
        %2109 = vmatpush1.msra.mxu0 0.0
        %2110 = vmatprep.subr.mxu0 0.0
        %2111 = vmatpush1.msra.mxu0 0.0
        %2112 = vmatprep.subr.mxu0 0.0
        %2113 = vmatpush1.msra.mxu0 0.0
        %2114 = vmatprep.subr.mxu0 0.0
        %2115 = vmatpush1.msra.mxu0 0.0
        %2116 = vmatprep.subr.mxu0 0.0
        %2117 = vmatpush1.msra.mxu0 0.0
        %2118 = vmatprep.subr.mxu0 0.0
        %2119 = vmatpush1.msra.mxu0 0.0
        %2120 = vmatprep.subr.mxu0 0.0
        %2121 = vmatpush1.msra.mxu0 0.0
        %2122 = vmatprep.subr.mxu0 0.0
        %2123 = vmatpush1.msra.mxu0 0.0
        %2124 = vmatprep.subr.mxu0 0.0
        %2125 = vmatpush1.msra.mxu0 0.0
        %2126 = vmatprep.subr.mxu0 0.0
        %2127 = vmatpush1.msra.mxu0 0.0
        %2128 = vmatprep.subr.mxu0 0.0
        %2129 = vmatpush1.msra.mxu0 0.0
        %2130 = vmatprep.subr.mxu0 0.0
        %2131 = vmatpush1.msra.mxu0 0.0
        %2132 = vmatprep.subr.mxu0 0.0
        %2133 = vmatpush1.msra.mxu0 0.0
        %2134 = vmatprep.subr.mxu0 0.0
        %2135 = vmatpush1.msra.mxu0 0.0
        %2136 = vmatprep.subr.mxu0 0.0
        %2137 = vmatpush1.msra.mxu0 0.0
        %2138 = vmatprep.subr.mxu0 0.0
        %2139 = vmatpush1.msra.mxu0 0.0
        %2140 = vmatprep.subr.mxu0 0.0
        %2141 = vmatpush1.msra.mxu0 0.0
        %2142 = vmatprep.subr.mxu0 0.0
        %2143 = vmatpush1.msra.mxu0 0.0
        %2144 = vmatprep.subr.mxu0 0.0
        %2145 = vmatpush1.msra.mxu0 0.0
        %2146 = vmatprep.subr.mxu0 0.0
        %2147 = vmatpush1.msra.mxu0 0.0
        %2148 = vmatprep.subr.mxu0 0.0
        %2149 = vmatpush1.msra.mxu0 0.0
        %2150 = vmatprep.mubr.f32.mxu0 0.0
        %2151 = vmatmul.mubr.f32.gmra.mrb[0].mxu0 %v2084
        %v2152 = vpop.f32.mrb[0].mxu0
        %v2153 = vadd.f32 0.0, %v2152
        %v2154 = vpop.f32.mrb[0].mxu0
        %2155 = vdwg.mxu0
        %2156 = vrot.lane.b32.xlu0 %v536, 64
        %v2157 = vpop.permute.xlu0 %2156
        %v2160 = vsel %vm569, %v1855, 0
        %2162 = vmatprep.subr.mxu0 0.0
        %2163 = vmatpush1.msra.mxu0 %v2157
        %2164 = vmatprep.subr.mxu0 0.0
        %2165 = vmatpush1.msra.mxu0 0.0
        %2166 = vmatprep.subr.mxu0 0.0
        %2167 = vmatpush1.msra.mxu0 0.0
        %2168 = vmatprep.subr.mxu0 0.0
        %2169 = vmatpush1.msra.mxu0 0.0
        %2170 = vmatprep.subr.mxu0 0.0
        %2171 = vmatpush1.msra.mxu0 0.0
        %2172 = vmatprep.subr.mxu0 0.0
        %2173 = vmatpush1.msra.mxu0 0.0
        %2174 = vmatprep.subr.mxu0 0.0
        %2175 = vmatpush1.msra.mxu0 0.0
        %2176 = vmatprep.subr.mxu0 0.0
        %2177 = vmatpush1.msra.mxu0 0.0
        %2178 = vmatprep.subr.mxu0 0.0
        %2179 = vmatpush1.msra.mxu0 0.0
        %2180 = vmatprep.subr.mxu0 0.0
        %2181 = vmatpush1.msra.mxu0 0.0
        %2182 = vmatprep.subr.mxu0 0.0
        %2183 = vmatpush1.msra.mxu0 0.0
        %2184 = vmatprep.subr.mxu0 0.0
        %2185 = vmatpush1.msra.mxu0 0.0
        %2186 = vmatprep.subr.mxu0 0.0
        %2187 = vmatpush1.msra.mxu0 0.0
        %2188 = vmatprep.subr.mxu0 0.0
        %2189 = vmatpush1.msra.mxu0 0.0
        %2190 = vmatprep.subr.mxu0 0.0
        %2191 = vmatpush1.msra.mxu0 0.0
        %2192 = vmatprep.subr.mxu0 0.0
        %2193 = vmatpush1.msra.mxu0 0.0
        %2194 = vmatprep.subr.mxu0 0.0
        %2195 = vmatpush1.msra.mxu0 0.0
        %2196 = vmatprep.subr.mxu0 0.0
        %2197 = vmatpush1.msra.mxu0 0.0
        %2198 = vmatprep.subr.mxu0 0.0
        %2199 = vmatpush1.msra.mxu0 0.0
        %2200 = vmatprep.subr.mxu0 0.0
        %2201 = vmatpush1.msra.mxu0 0.0
        %2202 = vmatprep.subr.mxu0 0.0
        %2203 = vmatpush1.msra.mxu0 0.0
        %2204 = vmatprep.subr.mxu0 0.0
        %2205 = vmatpush1.msra.mxu0 0.0
        %2206 = vmatprep.subr.mxu0 0.0
        %2207 = vmatpush1.msra.mxu0 0.0
        %2208 = vmatprep.subr.mxu0 0.0
        %2209 = vmatpush1.msra.mxu0 0.0
        %2210 = vmatprep.subr.mxu0 0.0
        %2211 = vmatpush1.msra.mxu0 0.0
        %2212 = vmatprep.subr.mxu0 0.0
        %2213 = vmatpush1.msra.mxu0 0.0
        %2214 = vmatprep.subr.mxu0 0.0
        %2215 = vmatpush1.msra.mxu0 0.0
        %2216 = vmatprep.subr.mxu0 0.0
        %2217 = vmatpush1.msra.mxu0 0.0
        %2218 = vmatprep.subr.mxu0 0.0
        %2219 = vmatpush1.msra.mxu0 0.0
        %2220 = vmatprep.subr.mxu0 0.0
        %2221 = vmatpush1.msra.mxu0 0.0
        %2222 = vmatprep.subr.mxu0 0.0
        %2223 = vmatpush1.msra.mxu0 0.0
        %2224 = vmatprep.subr.mxu0 0.0
        %2225 = vmatpush1.msra.mxu0 0.0
        %2226 = vmatprep.mubr.f32.mxu0 0.0
        %2227 = vmatmul.mubr.f32.gmra.mrb[0].mxu0 %v2160
        %v2228 = vpop.f32.mrb[0].mxu0
        %v2229 = vadd.f32 0.0, %v2228
        %v2230 = vpop.f32.mrb[0].mxu0
        %2231 = vdwg.mxu0
        %2232 = vrot.lane.b32.xlu0 %v544, 64
        %v2233 = vpop.permute.xlu0 %2232
        %v2236 = vsel %vm569, %v1857, 0
        %2238 = vmatprep.subr.mxu0 0.0
        %2239 = vmatpush1.msra.mxu0 %v2233
        %2240 = vmatprep.subr.mxu0 0.0
        %2241 = vmatpush1.msra.mxu0 0.0
        %2242 = vmatprep.subr.mxu0 0.0
        %2243 = vmatpush1.msra.mxu0 0.0
        %2244 = vmatprep.subr.mxu0 0.0
        %2245 = vmatpush1.msra.mxu0 0.0
        %2246 = vmatprep.subr.mxu0 0.0
        %2247 = vmatpush1.msra.mxu0 0.0
        %2248 = vmatprep.subr.mxu0 0.0
        %2249 = vmatpush1.msra.mxu0 0.0
        %2250 = vmatprep.subr.mxu0 0.0
        %2251 = vmatpush1.msra.mxu0 0.0
        %2252 = vmatprep.subr.mxu0 0.0
        %2253 = vmatpush1.msra.mxu0 0.0
        %2254 = vmatprep.subr.mxu0 0.0
        %2255 = vmatpush1.msra.mxu0 0.0
        %2256 = vmatprep.subr.mxu0 0.0
        %2257 = vmatpush1.msra.mxu0 0.0
        %2258 = vmatprep.subr.mxu0 0.0
        %2259 = vmatpush1.msra.mxu0 0.0
        %2260 = vmatprep.subr.mxu0 0.0
        %2261 = vmatpush1.msra.mxu0 0.0
        %2262 = vmatprep.subr.mxu0 0.0
        %2263 = vmatpush1.msra.mxu0 0.0
        %2264 = vmatprep.subr.mxu0 0.0
        %2265 = vmatpush1.msra.mxu0 0.0
        %2266 = vmatprep.subr.mxu0 0.0
        %2267 = vmatpush1.msra.mxu0 0.0
        %2268 = vmatprep.subr.mxu0 0.0
        %2269 = vmatpush1.msra.mxu0 0.0
        %2270 = vmatprep.subr.mxu0 0.0
        %2271 = vmatpush1.msra.mxu0 0.0
        %2272 = vmatprep.subr.mxu0 0.0
        %2273 = vmatpush1.msra.mxu0 0.0
        %2274 = vmatprep.subr.mxu0 0.0
        %2275 = vmatpush1.msra.mxu0 0.0
        %2276 = vmatprep.subr.mxu0 0.0
        %2277 = vmatpush1.msra.mxu0 0.0
        %2278 = vmatprep.subr.mxu0 0.0
        %2279 = vmatpush1.msra.mxu0 0.0
        %2280 = vmatprep.subr.mxu0 0.0
        %2281 = vmatpush1.msra.mxu0 0.0
        %2282 = vmatprep.subr.mxu0 0.0
        %2283 = vmatpush1.msra.mxu0 0.0
        %2284 = vmatprep.subr.mxu0 0.0
        %2285 = vmatpush1.msra.mxu0 0.0
        %2286 = vmatprep.subr.mxu0 0.0
        %2287 = vmatpush1.msra.mxu0 0.0
        %2288 = vmatprep.subr.mxu0 0.0
        %2289 = vmatpush1.msra.mxu0 0.0
        %2290 = vmatprep.subr.mxu0 0.0
        %2291 = vmatpush1.msra.mxu0 0.0
        %2292 = vmatprep.subr.mxu0 0.0
        %2293 = vmatpush1.msra.mxu0 0.0
        %2294 = vmatprep.subr.mxu0 0.0
        %2295 = vmatpush1.msra.mxu0 0.0
        %2296 = vmatprep.subr.mxu0 0.0
        %2297 = vmatpush1.msra.mxu0 0.0
        %2298 = vmatprep.subr.mxu0 0.0
        %2299 = vmatpush1.msra.mxu0 0.0
        %2300 = vmatprep.subr.mxu0 0.0
        %2301 = vmatpush1.msra.mxu0 0.0
        %2302 = vmatprep.mubr.f32.mxu0 0.0
        %2303 = vmatmul.mubr.f32.gmra.mrb[0].mxu0 %v2236
        %v2304 = vpop.f32.mrb[0].mxu0
        %v2305 = vadd.f32 0.0, %v2304
        %v2306 = vpop.f32.mrb[0].mxu0
        %2307 = vdwg.mxu0
        %2308 = vrot.lane.b32.xlu0 %v546, 64
        %v2309 = vpop.permute.xlu0 %2308
        %v2312 = vsel %vm569, %v1859, 0
        %2314 = vmatprep.subr.mxu0 0.0
        %2315 = vmatpush1.msra.mxu0 %v2309
        %2316 = vmatprep.subr.mxu0 0.0
        %2317 = vmatpush1.msra.mxu0 0.0
        %2318 = vmatprep.subr.mxu0 0.0
        %2319 = vmatpush1.msra.mxu0 0.0
        %2320 = vmatprep.subr.mxu0 0.0
        %2321 = vmatpush1.msra.mxu0 0.0
        %2322 = vmatprep.subr.mxu0 0.0
        %2323 = vmatpush1.msra.mxu0 0.0
        %2324 = vmatprep.subr.mxu0 0.0
        %2325 = vmatpush1.msra.mxu0 0.0
        %2326 = vmatprep.subr.mxu0 0.0
        %2327 = vmatpush1.msra.mxu0 0.0
        %2328 = vmatprep.subr.mxu0 0.0
        %2329 = vmatpush1.msra.mxu0 0.0
        %2330 = vmatprep.subr.mxu0 0.0
        %2331 = vmatpush1.msra.mxu0 0.0
        %2332 = vmatprep.subr.mxu0 0.0
        %2333 = vmatpush1.msra.mxu0 0.0
        %2334 = vmatprep.subr.mxu0 0.0
        %2335 = vmatpush1.msra.mxu0 0.0
        %2336 = vmatprep.subr.mxu0 0.0
        %2337 = vmatpush1.msra.mxu0 0.0
        %2338 = vmatprep.subr.mxu0 0.0
        %2339 = vmatpush1.msra.mxu0 0.0
        %2340 = vmatprep.subr.mxu0 0.0
        %2341 = vmatpush1.msra.mxu0 0.0
        %2342 = vmatprep.subr.mxu0 0.0
        %2343 = vmatpush1.msra.mxu0 0.0
        %2344 = vmatprep.subr.mxu0 0.0
        %2345 = vmatpush1.msra.mxu0 0.0
        %2346 = vmatprep.subr.mxu0 0.0
        %2347 = vmatpush1.msra.mxu0 0.0
        %2348 = vmatprep.subr.mxu0 0.0
        %2349 = vmatpush1.msra.mxu0 0.0
        %2350 = vmatprep.subr.mxu0 0.0
        %2351 = vmatpush1.msra.mxu0 0.0
        %2352 = vmatprep.subr.mxu0 0.0
        %2353 = vmatpush1.msra.mxu0 0.0
        %2354 = vmatprep.subr.mxu0 0.0
        %2355 = vmatpush1.msra.mxu0 0.0
        %2356 = vmatprep.subr.mxu0 0.0
        %2357 = vmatpush1.msra.mxu0 0.0
        %2358 = vmatprep.subr.mxu0 0.0
        %2359 = vmatpush1.msra.mxu0 0.0
        %2360 = vmatprep.subr.mxu0 0.0
        %2361 = vmatpush1.msra.mxu0 0.0
        %2362 = vmatprep.subr.mxu0 0.0
        %2363 = vmatpush1.msra.mxu0 0.0
        %2364 = vmatprep.subr.mxu0 0.0
        %2365 = vmatpush1.msra.mxu0 0.0
        %2366 = vmatprep.subr.mxu0 0.0
        %2367 = vmatpush1.msra.mxu0 0.0
        %2368 = vmatprep.subr.mxu0 0.0
        %2369 = vmatpush1.msra.mxu0 0.0
        %2370 = vmatprep.subr.mxu0 0.0
        %2371 = vmatpush1.msra.mxu0 0.0
        %2372 = vmatprep.subr.mxu0 0.0
        %2373 = vmatpush1.msra.mxu0 0.0
        %2374 = vmatprep.subr.mxu0 0.0
        %2375 = vmatpush1.msra.mxu0 0.0
        %2376 = vmatprep.subr.mxu0 0.0
        %2377 = vmatpush1.msra.mxu0 0.0
        %2378 = vmatprep.mubr.f32.mxu0 0.0
        %2379 = vmatmul.mubr.f32.gmra.mrb[0].mxu0 %v2312
        %v2380 = vpop.f32.mrb[0].mxu0
        %v2381 = vadd.f32 0.0, %v2380
        %v2382 = vpop.f32.mrb[0].mxu0
        %2383 = vdwg.mxu0
        %2384 = vrot.lane.b32.xlu0 %v548, 64
        %v2385 = vpop.permute.xlu0 %2384
        %v2388 = vsel %vm569, %v1861, 0
        %2390 = vmatprep.subr.mxu0 0.0
        %2391 = vmatpush1.msra.mxu0 %v2385
        %2392 = vmatprep.subr.mxu0 0.0
        %2393 = vmatpush1.msra.mxu0 0.0
        %2394 = vmatprep.subr.mxu0 0.0
        %2395 = vmatpush1.msra.mxu0 0.0
        %2396 = vmatprep.subr.mxu0 0.0
        %2397 = vmatpush1.msra.mxu0 0.0
        %2398 = vmatprep.subr.mxu0 0.0
        %2399 = vmatpush1.msra.mxu0 0.0
        %2400 = vmatprep.subr.mxu0 0.0
        %2401 = vmatpush1.msra.mxu0 0.0
        %2402 = vmatprep.subr.mxu0 0.0
        %2403 = vmatpush1.msra.mxu0 0.0
        %2404 = vmatprep.subr.mxu0 0.0
        %2405 = vmatpush1.msra.mxu0 0.0
        %2406 = vmatprep.subr.mxu0 0.0
        %2407 = vmatpush1.msra.mxu0 0.0
        %2408 = vmatprep.subr.mxu0 0.0
        %2409 = vmatpush1.msra.mxu0 0.0
        %2410 = vmatprep.subr.mxu0 0.0
        %2411 = vmatpush1.msra.mxu0 0.0
        %2412 = vmatprep.subr.mxu0 0.0
        %2413 = vmatpush1.msra.mxu0 0.0
        %2414 = vmatprep.subr.mxu0 0.0
        %2415 = vmatpush1.msra.mxu0 0.0
        %2416 = vmatprep.subr.mxu0 0.0
        %2417 = vmatpush1.msra.mxu0 0.0
        %2418 = vmatprep.subr.mxu0 0.0
        %2419 = vmatpush1.msra.mxu0 0.0
        %2420 = vmatprep.subr.mxu0 0.0
        %2421 = vmatpush1.msra.mxu0 0.0
        %2422 = vmatprep.subr.mxu0 0.0
        %2423 = vmatpush1.msra.mxu0 0.0
        %2424 = vmatprep.subr.mxu0 0.0
        %2425 = vmatpush1.msra.mxu0 0.0
        %2426 = vmatprep.subr.mxu0 0.0
        %2427 = vmatpush1.msra.mxu0 0.0
        %2428 = vmatprep.subr.mxu0 0.0
        %2429 = vmatpush1.msra.mxu0 0.0
        %2430 = vmatprep.subr.mxu0 0.0
        %2431 = vmatpush1.msra.mxu0 0.0
        %2432 = vmatprep.subr.mxu0 0.0
        %2433 = vmatpush1.msra.mxu0 0.0
        %2434 = vmatprep.subr.mxu0 0.0
        %2435 = vmatpush1.msra.mxu0 0.0
        %2436 = vmatprep.subr.mxu0 0.0
        %2437 = vmatpush1.msra.mxu0 0.0
        %2438 = vmatprep.subr.mxu0 0.0
        %2439 = vmatpush1.msra.mxu0 0.0
        %2440 = vmatprep.subr.mxu0 0.0
        %2441 = vmatpush1.msra.mxu0 0.0
        %2442 = vmatprep.subr.mxu0 0.0
        %2443 = vmatpush1.msra.mxu0 0.0
        %2444 = vmatprep.subr.mxu0 0.0
        %2445 = vmatpush1.msra.mxu0 0.0
        %2446 = vmatprep.subr.mxu0 0.0
        %2447 = vmatpush1.msra.mxu0 0.0
        %2448 = vmatprep.subr.mxu0 0.0
        %2449 = vmatpush1.msra.mxu0 0.0
        %2450 = vmatprep.subr.mxu0 0.0
        %2451 = vmatpush1.msra.mxu0 0.0
        %2452 = vmatprep.subr.mxu0 0.0
        %2453 = vmatpush1.msra.mxu0 0.0
        %2454 = vmatprep.mubr.f32.mxu0 0.0
        %2455 = vmatmul.mubr.f32.gmra.mrb[0].mxu0 %v2388
        %v2456 = vpop.f32.mrb[0].mxu0
        %v2457 = vadd.f32 0.0, %v2456
        %v2458 = vpop.f32.mrb[0].mxu0
        %2459 = vdwg.mxu0
        %2460 = vrot.lane.b32.xlu0 %v550, 64
        %v2461 = vpop.permute.xlu0 %2460
        %v2464 = vsel %vm569, %v1863, 0
        %2466 = vmatprep.subr.mxu0 0.0
        %2467 = vmatpush1.msra.mxu0 %v2461
        %2468 = vmatprep.subr.mxu0 0.0
        %2469 = vmatpush1.msra.mxu0 0.0
        %2470 = vmatprep.subr.mxu0 0.0
        %2471 = vmatpush1.msra.mxu0 0.0
        %2472 = vmatprep.subr.mxu0 0.0
        %2473 = vmatpush1.msra.mxu0 0.0
        %2474 = vmatprep.subr.mxu0 0.0
        %2475 = vmatpush1.msra.mxu0 0.0
        %2476 = vmatprep.subr.mxu0 0.0
        %2477 = vmatpush1.msra.mxu0 0.0
        %2478 = vmatprep.subr.mxu0 0.0
        %2479 = vmatpush1.msra.mxu0 0.0
        %2480 = vmatprep.subr.mxu0 0.0
        %2481 = vmatpush1.msra.mxu0 0.0
        %2482 = vmatprep.subr.mxu0 0.0
        %2483 = vmatpush1.msra.mxu0 0.0
        %2484 = vmatprep.subr.mxu0 0.0
        %2485 = vmatpush1.msra.mxu0 0.0
        %2486 = vmatprep.subr.mxu0 0.0
        %2487 = vmatpush1.msra.mxu0 0.0
        %2488 = vmatprep.subr.mxu0 0.0
        %2489 = vmatpush1.msra.mxu0 0.0
        %2490 = vmatprep.subr.mxu0 0.0
        %2491 = vmatpush1.msra.mxu0 0.0
        %2492 = vmatprep.subr.mxu0 0.0
        %2493 = vmatpush1.msra.mxu0 0.0
        %2494 = vmatprep.subr.mxu0 0.0
        %2495 = vmatpush1.msra.mxu0 0.0
        %2496 = vmatprep.subr.mxu0 0.0
        %2497 = vmatpush1.msra.mxu0 0.0
        %2498 = vmatprep.subr.mxu0 0.0
        %2499 = vmatpush1.msra.mxu0 0.0
        %2500 = vmatprep.subr.mxu0 0.0
        %2501 = vmatpush1.msra.mxu0 0.0
        %2502 = vmatprep.subr.mxu0 0.0
        %2503 = vmatpush1.msra.mxu0 0.0
        %2504 = vmatprep.subr.mxu0 0.0
        %2505 = vmatpush1.msra.mxu0 0.0
        %2506 = vmatprep.subr.mxu0 0.0
        %2507 = vmatpush1.msra.mxu0 0.0
        %2508 = vmatprep.subr.mxu0 0.0
        %2509 = vmatpush1.msra.mxu0 0.0
        %2510 = vmatprep.subr.mxu0 0.0
        %2511 = vmatpush1.msra.mxu0 0.0
        %2512 = vmatprep.subr.mxu0 0.0
        %2513 = vmatpush1.msra.mxu0 0.0
        %2514 = vmatprep.subr.mxu0 0.0
        %2515 = vmatpush1.msra.mxu0 0.0
        %2516 = vmatprep.subr.mxu0 0.0
        %2517 = vmatpush1.msra.mxu0 0.0
        %2518 = vmatprep.subr.mxu0 0.0
        %2519 = vmatpush1.msra.mxu0 0.0
        %2520 = vmatprep.subr.mxu0 0.0
        %2521 = vmatpush1.msra.mxu0 0.0
        %2522 = vmatprep.subr.mxu0 0.0
        %2523 = vmatpush1.msra.mxu0 0.0
        %2524 = vmatprep.subr.mxu0 0.0
        %2525 = vmatpush1.msra.mxu0 0.0
        %2526 = vmatprep.subr.mxu0 0.0
        %2527 = vmatpush1.msra.mxu0 0.0
        %2528 = vmatprep.subr.mxu0 0.0
        %2529 = vmatpush1.msra.mxu0 0.0
        %2530 = vmatprep.mubr.f32.mxu0 0.0
        %2531 = vmatmul.mubr.f32.gmra.mrb[0].mxu0 %v2464
        %v2532 = vpop.f32.mrb[0].mxu0
        %v2533 = vadd.f32 0.0, %v2532
        %v2534 = vpop.f32.mrb[0].mxu0
        %2535 = vdwg.mxu0
        %2536 = vrot.lane.b32.xlu0 %v552, 64
        %v2537 = vpop.permute.xlu0 %2536
        %v2540 = vsel %vm569, %v1865, 0
        %2542 = vmatprep.subr.mxu0 0.0
        %2543 = vmatpush1.msra.mxu0 %v2537
        %2544 = vmatprep.subr.mxu0 0.0
        %2545 = vmatpush1.msra.mxu0 0.0
        %2546 = vmatprep.subr.mxu0 0.0
        %2547 = vmatpush1.msra.mxu0 0.0
        %2548 = vmatprep.subr.mxu0 0.0
        %2549 = vmatpush1.msra.mxu0 0.0
        %2550 = vmatprep.subr.mxu0 0.0
        %2551 = vmatpush1.msra.mxu0 0.0
        %2552 = vmatprep.subr.mxu0 0.0
        %2553 = vmatpush1.msra.mxu0 0.0
        %2554 = vmatprep.subr.mxu0 0.0
        %2555 = vmatpush1.msra.mxu0 0.0
        %2556 = vmatprep.subr.mxu0 0.0
        %2557 = vmatpush1.msra.mxu0 0.0
        %2558 = vmatprep.subr.mxu0 0.0
        %2559 = vmatpush1.msra.mxu0 0.0
        %2560 = vmatprep.subr.mxu0 0.0
        %2561 = vmatpush1.msra.mxu0 0.0
        %2562 = vmatprep.subr.mxu0 0.0
        %2563 = vmatpush1.msra.mxu0 0.0
        %2564 = vmatprep.subr.mxu0 0.0
        %2565 = vmatpush1.msra.mxu0 0.0
        %2566 = vmatprep.subr.mxu0 0.0
        %2567 = vmatpush1.msra.mxu0 0.0
        %2568 = vmatprep.subr.mxu0 0.0
        %2569 = vmatpush1.msra.mxu0 0.0
        %2570 = vmatprep.subr.mxu0 0.0
        %2571 = vmatpush1.msra.mxu0 0.0
        %2572 = vmatprep.subr.mxu0 0.0
        %2573 = vmatpush1.msra.mxu0 0.0
        %2574 = vmatprep.subr.mxu0 0.0
        %2575 = vmatpush1.msra.mxu0 0.0
        %2576 = vmatprep.subr.mxu0 0.0
        %2577 = vmatpush1.msra.mxu0 0.0
        %2578 = vmatprep.subr.mxu0 0.0
        %2579 = vmatpush1.msra.mxu0 0.0
        %2580 = vmatprep.subr.mxu0 0.0
        %2581 = vmatpush1.msra.mxu0 0.0
        %2582 = vmatprep.subr.mxu0 0.0
        %2583 = vmatpush1.msra.mxu0 0.0
        %2584 = vmatprep.subr.mxu0 0.0
        %2585 = vmatpush1.msra.mxu0 0.0
        %2586 = vmatprep.subr.mxu0 0.0
        %2587 = vmatpush1.msra.mxu0 0.0
        %2588 = vmatprep.subr.mxu0 0.0
        %2589 = vmatpush1.msra.mxu0 0.0
        %2590 = vmatprep.subr.mxu0 0.0
        %2591 = vmatpush1.msra.mxu0 0.0
        %2592 = vmatprep.subr.mxu0 0.0
        %2593 = vmatpush1.msra.mxu0 0.0
        %2594 = vmatprep.subr.mxu0 0.0
        %2595 = vmatpush1.msra.mxu0 0.0
        %2596 = vmatprep.subr.mxu0 0.0
        %2597 = vmatpush1.msra.mxu0 0.0
        %2598 = vmatprep.subr.mxu0 0.0
        %2599 = vmatpush1.msra.mxu0 0.0
        %2600 = vmatprep.subr.mxu0 0.0
        %2601 = vmatpush1.msra.mxu0 0.0
        %2602 = vmatprep.subr.mxu0 0.0
        %2603 = vmatpush1.msra.mxu0 0.0
        %2604 = vmatprep.subr.mxu0 0.0
        %2605 = vmatpush1.msra.mxu0 0.0
        %2606 = vmatprep.mubr.f32.mxu0 0.0
        %2607 = vmatmul.mubr.f32.gmra.mrb[0].mxu0 %v2540
        %v2608 = vpop.f32.mrb[0].mxu0
        %v2609 = vadd.f32 0.0, %v2608
        %v2610 = vpop.f32.mrb[0].mxu0
        %2611 = vdwg.mxu0
        %2612 = vrot.lane.b32.xlu0 %v554, 64
        %v2613 = vpop.permute.xlu0 %2612
        %v2616 = vsel %vm569, %v1867, 0
        %2618 = vmatprep.subr.mxu0 0.0
        %2619 = vmatpush1.msra.mxu0 %v2613
        %2620 = vmatprep.subr.mxu0 0.0
        %2621 = vmatpush1.msra.mxu0 0.0
        %2622 = vmatprep.subr.mxu0 0.0
        %2623 = vmatpush1.msra.mxu0 0.0
        %2624 = vmatprep.subr.mxu0 0.0
        %2625 = vmatpush1.msra.mxu0 0.0
        %2626 = vmatprep.subr.mxu0 0.0
        %2627 = vmatpush1.msra.mxu0 0.0
        %2628 = vmatprep.subr.mxu0 0.0
        %2629 = vmatpush1.msra.mxu0 0.0
        %2630 = vmatprep.subr.mxu0 0.0
        %2631 = vmatpush1.msra.mxu0 0.0
        %2632 = vmatprep.subr.mxu0 0.0
        %2633 = vmatpush1.msra.mxu0 0.0
        %2634 = vmatprep.subr.mxu0 0.0
        %2635 = vmatpush1.msra.mxu0 0.0
        %2636 = vmatprep.subr.mxu0 0.0
        %2637 = vmatpush1.msra.mxu0 0.0
        %2638 = vmatprep.subr.mxu0 0.0
        %2639 = vmatpush1.msra.mxu0 0.0
        %2640 = vmatprep.subr.mxu0 0.0
        %2641 = vmatpush1.msra.mxu0 0.0
        %2642 = vmatprep.subr.mxu0 0.0
        %2643 = vmatpush1.msra.mxu0 0.0
        %2644 = vmatprep.subr.mxu0 0.0
        %2645 = vmatpush1.msra.mxu0 0.0
        %2646 = vmatprep.subr.mxu0 0.0
        %2647 = vmatpush1.msra.mxu0 0.0
        %2648 = vmatprep.subr.mxu0 0.0
        %2649 = vmatpush1.msra.mxu0 0.0
        %2650 = vmatprep.subr.mxu0 0.0
        %2651 = vmatpush1.msra.mxu0 0.0
        %2652 = vmatprep.subr.mxu0 0.0
        %2653 = vmatpush1.msra.mxu0 0.0
        %2654 = vmatprep.subr.mxu0 0.0
        %2655 = vmatpush1.msra.mxu0 0.0
        %2656 = vmatprep.subr.mxu0 0.0
        %2657 = vmatpush1.msra.mxu0 0.0
        %2658 = vmatprep.subr.mxu0 0.0
        %2659 = vmatpush1.msra.mxu0 0.0
        %2660 = vmatprep.subr.mxu0 0.0
        %2661 = vmatpush1.msra.mxu0 0.0
        %2662 = vmatprep.subr.mxu0 0.0
        %2663 = vmatpush1.msra.mxu0 0.0
        %2664 = vmatprep.subr.mxu0 0.0
        %2665 = vmatpush1.msra.mxu0 0.0
        %2666 = vmatprep.subr.mxu0 0.0
        %2667 = vmatpush1.msra.mxu0 0.0
        %2668 = vmatprep.subr.mxu0 0.0
        %2669 = vmatpush1.msra.mxu0 0.0
        %2670 = vmatprep.subr.mxu0 0.0
        %2671 = vmatpush1.msra.mxu0 0.0
        %2672 = vmatprep.subr.mxu0 0.0
        %2673 = vmatpush1.msra.mxu0 0.0
        %2674 = vmatprep.subr.mxu0 0.0
        %2675 = vmatpush1.msra.mxu0 0.0
        %2676 = vmatprep.subr.mxu0 0.0
        %2677 = vmatpush1.msra.mxu0 0.0
        %2678 = vmatprep.subr.mxu0 0.0
        %2679 = vmatpush1.msra.mxu0 0.0
        %2680 = vmatprep.subr.mxu0 0.0
        %2681 = vmatpush1.msra.mxu0 0.0
        %2682 = vmatprep.mubr.f32.mxu0 0.0
        %2683 = vmatmul.mubr.f32.gmra.mrb[0].mxu0 %v2616
        %v2684 = vpop.f32.mrb[0].mxu0
        %v2685 = vadd.f32 0.0, %v2684
        %v2686 = vpop.f32.mrb[0].mxu0
        %2687 = vdwg.mxu0
        %2688 = vrot.lane.b32.xlu0 %v556, 64
        %v2689 = vpop.permute.xlu0 %2688
        %v2692 = vsel %vm569, %v1869, 0
        %2694 = vmatprep.subr.mxu0 0.0
        %2695 = vmatpush1.msra.mxu0 %v2689
        %2696 = vmatprep.subr.mxu0 0.0
        %2697 = vmatpush1.msra.mxu0 0.0
        %2698 = vmatprep.subr.mxu0 0.0
        %2699 = vmatpush1.msra.mxu0 0.0
        %2700 = vmatprep.subr.mxu0 0.0
        %2701 = vmatpush1.msra.mxu0 0.0
        %2702 = vmatprep.subr.mxu0 0.0
        %2703 = vmatpush1.msra.mxu0 0.0
        %2704 = vmatprep.subr.mxu0 0.0
        %2705 = vmatpush1.msra.mxu0 0.0
        %2706 = vmatprep.subr.mxu0 0.0
        %2707 = vmatpush1.msra.mxu0 0.0
        %2708 = vmatprep.subr.mxu0 0.0
        %2709 = vmatpush1.msra.mxu0 0.0
        %2710 = vmatprep.subr.mxu0 0.0
        %2711 = vmatpush1.msra.mxu0 0.0
        %2712 = vmatprep.subr.mxu0 0.0
        %2713 = vmatpush1.msra.mxu0 0.0
        %2714 = vmatprep.subr.mxu0 0.0
        %2715 = vmatpush1.msra.mxu0 0.0
        %2716 = vmatprep.subr.mxu0 0.0
        %2717 = vmatpush1.msra.mxu0 0.0
        %2718 = vmatprep.subr.mxu0 0.0
        %2719 = vmatpush1.msra.mxu0 0.0
        %2720 = vmatprep.subr.mxu0 0.0
        %2721 = vmatpush1.msra.mxu0 0.0
        %2722 = vmatprep.subr.mxu0 0.0
        %2723 = vmatpush1.msra.mxu0 0.0
        %2724 = vmatprep.subr.mxu0 0.0
        %2725 = vmatpush1.msra.mxu0 0.0
        %2726 = vmatprep.subr.mxu0 0.0
        %2727 = vmatpush1.msra.mxu0 0.0
        %2728 = vmatprep.subr.mxu0 0.0
        %2729 = vmatpush1.msra.mxu0 0.0
        %2730 = vmatprep.subr.mxu0 0.0
        %2731 = vmatpush1.msra.mxu0 0.0
        %2732 = vmatprep.subr.mxu0 0.0
        %2733 = vmatpush1.msra.mxu0 0.0
        %2734 = vmatprep.subr.mxu0 0.0
        %2735 = vmatpush1.msra.mxu0 0.0
        %2736 = vmatprep.subr.mxu0 0.0
        %2737 = vmatpush1.msra.mxu0 0.0
        %2738 = vmatprep.subr.mxu0 0.0
        %2739 = vmatpush1.msra.mxu0 0.0
        %2740 = vmatprep.subr.mxu0 0.0
        %2741 = vmatpush1.msra.mxu0 0.0
        %2742 = vmatprep.subr.mxu0 0.0
        %2743 = vmatpush1.msra.mxu0 0.0
        %2744 = vmatprep.subr.mxu0 0.0
        %2745 = vmatpush1.msra.mxu0 0.0
        %2746 = vmatprep.subr.mxu0 0.0
        %2747 = vmatpush1.msra.mxu0 0.0
        %2748 = vmatprep.subr.mxu0 0.0
        %2749 = vmatpush1.msra.mxu0 0.0
        %2750 = vmatprep.subr.mxu0 0.0
        %2751 = vmatpush1.msra.mxu0 0.0
        %2752 = vmatprep.subr.mxu0 0.0
        %2753 = vmatpush1.msra.mxu0 0.0
        %2754 = vmatprep.subr.mxu0 0.0
        %2755 = vmatpush1.msra.mxu0 0.0
        %2756 = vmatprep.subr.mxu0 0.0
        %2757 = vmatpush1.msra.mxu0 0.0
        %2758 = vmatprep.mubr.f32.mxu0 0.0
        %2759 = vmatmul.mubr.f32.gmra.mrb[0].mxu0 %v2692
        %v2760 = vpop.f32.mrb[0].mxu0
        %v2761 = vadd.f32 0.0, %v2760
        %v2762 = vpop.f32.mrb[0].mxu0
        %2763 = vdwg.mxu0
        %2764 = vrot.lane.b32.xlu0 %v558, 64
        %v2765 = vpop.permute.xlu0 %2764
        %v2768 = vsel %vm569, %v1871, 0
        %2770 = vmatprep.subr.mxu0 0.0
        %2771 = vmatpush1.msra.mxu0 %v2765
        %2772 = vmatprep.subr.mxu0 0.0
        %2773 = vmatpush1.msra.mxu0 0.0
        %2774 = vmatprep.subr.mxu0 0.0
        %2775 = vmatpush1.msra.mxu0 0.0
        %2776 = vmatprep.subr.mxu0 0.0
        %2777 = vmatpush1.msra.mxu0 0.0
        %2778 = vmatprep.subr.mxu0 0.0
        %2779 = vmatpush1.msra.mxu0 0.0
        %2780 = vmatprep.subr.mxu0 0.0
        %2781 = vmatpush1.msra.mxu0 0.0
        %2782 = vmatprep.subr.mxu0 0.0
        %2783 = vmatpush1.msra.mxu0 0.0
        %2784 = vmatprep.subr.mxu0 0.0
        %2785 = vmatpush1.msra.mxu0 0.0
        %2786 = vmatprep.subr.mxu0 0.0
        %2787 = vmatpush1.msra.mxu0 0.0
        %2788 = vmatprep.subr.mxu0 0.0
        %2789 = vmatpush1.msra.mxu0 0.0
        %2790 = vmatprep.subr.mxu0 0.0
        %2791 = vmatpush1.msra.mxu0 0.0
        %2792 = vmatprep.subr.mxu0 0.0
        %2793 = vmatpush1.msra.mxu0 0.0
        %2794 = vmatprep.subr.mxu0 0.0
        %2795 = vmatpush1.msra.mxu0 0.0
        %2796 = vmatprep.subr.mxu0 0.0
        %2797 = vmatpush1.msra.mxu0 0.0
        %2798 = vmatprep.subr.mxu0 0.0
        %2799 = vmatpush1.msra.mxu0 0.0
        %2800 = vmatprep.subr.mxu0 0.0
        %2801 = vmatpush1.msra.mxu0 0.0
        %2802 = vmatprep.subr.mxu0 0.0
        %2803 = vmatpush1.msra.mxu0 0.0
        %2804 = vmatprep.subr.mxu0 0.0
        %2805 = vmatpush1.msra.mxu0 0.0
        %2806 = vmatprep.subr.mxu0 0.0
        %2807 = vmatpush1.msra.mxu0 0.0
        %2808 = vmatprep.subr.mxu0 0.0
        %2809 = vmatpush1.msra.mxu0 0.0
        %2810 = vmatprep.subr.mxu0 0.0
        %2811 = vmatpush1.msra.mxu0 0.0
        %2812 = vmatprep.subr.mxu0 0.0
        %2813 = vmatpush1.msra.mxu0 0.0
        %2814 = vmatprep.subr.mxu0 0.0
        %2815 = vmatpush1.msra.mxu0 0.0
        %2816 = vmatprep.subr.mxu0 0.0
        %2817 = vmatpush1.msra.mxu0 0.0
        %2818 = vmatprep.subr.mxu0 0.0
        %2819 = vmatpush1.msra.mxu0 0.0
        %2820 = vmatprep.subr.mxu0 0.0
        %2821 = vmatpush1.msra.mxu0 0.0
        %2822 = vmatprep.subr.mxu0 0.0
        %2823 = vmatpush1.msra.mxu0 0.0
        %2824 = vmatprep.subr.mxu0 0.0
        %2825 = vmatpush1.msra.mxu0 0.0
        %2826 = vmatprep.subr.mxu0 0.0
        %2827 = vmatpush1.msra.mxu0 0.0
        %2828 = vmatprep.subr.mxu0 0.0
        %2829 = vmatpush1.msra.mxu0 0.0
        %2830 = vmatprep.subr.mxu0 0.0
        %2831 = vmatpush1.msra.mxu0 0.0
        %2832 = vmatprep.subr.mxu0 0.0
        %2833 = vmatpush1.msra.mxu0 0.0
        %2834 = vmatprep.mubr.f32.mxu0 0.0
        %2835 = vmatmul.mubr.f32.gmra.mrb[0].mxu0 %v2768
        %v2836 = vpop.f32.mrb[0].mxu0
        %v2837 = vadd.f32 0.0, %v2836
        %v2838 = vpop.f32.mrb[0].mxu0
        %2839 = vdwg.mxu0
        %2840 = vrot.lane.b32.xlu0 %v560, 64
        %v2841 = vpop.permute.xlu0 %2840
        %v2844 = vsel %vm569, %v1873, 0
        %2846 = vmatprep.subr.mxu0 0.0
        %2847 = vmatpush1.msra.mxu0 %v2841
        %2848 = vmatprep.subr.mxu0 0.0
        %2849 = vmatpush1.msra.mxu0 0.0
        %2850 = vmatprep.subr.mxu0 0.0
        %2851 = vmatpush1.msra.mxu0 0.0
        %2852 = vmatprep.subr.mxu0 0.0
        %2853 = vmatpush1.msra.mxu0 0.0
        %2854 = vmatprep.subr.mxu0 0.0
        %2855 = vmatpush1.msra.mxu0 0.0
        %2856 = vmatprep.subr.mxu0 0.0
        %2857 = vmatpush1.msra.mxu0 0.0
        %2858 = vmatprep.subr.mxu0 0.0
        %2859 = vmatpush1.msra.mxu0 0.0
        %2860 = vmatprep.subr.mxu0 0.0
        %2861 = vmatpush1.msra.mxu0 0.0
        %2862 = vmatprep.subr.mxu0 0.0
        %2863 = vmatpush1.msra.mxu0 0.0
        %2864 = vmatprep.subr.mxu0 0.0
        %2865 = vmatpush1.msra.mxu0 0.0
        %2866 = vmatprep.subr.mxu0 0.0
        %2867 = vmatpush1.msra.mxu0 0.0
        %2868 = vmatprep.subr.mxu0 0.0
        %2869 = vmatpush1.msra.mxu0 0.0
        %2870 = vmatprep.subr.mxu0 0.0
        %2871 = vmatpush1.msra.mxu0 0.0
        %2872 = vmatprep.subr.mxu0 0.0
        %2873 = vmatpush1.msra.mxu0 0.0
        %2874 = vmatprep.subr.mxu0 0.0
        %2875 = vmatpush1.msra.mxu0 0.0
        %2876 = vmatprep.subr.mxu0 0.0
        %2877 = vmatpush1.msra.mxu0 0.0
        %2878 = vmatprep.subr.mxu0 0.0
        %2879 = vmatpush1.msra.mxu0 0.0
        %2880 = vmatprep.subr.mxu0 0.0
        %2881 = vmatpush1.msra.mxu0 0.0
        %2882 = vmatprep.subr.mxu0 0.0
        %2883 = vmatpush1.msra.mxu0 0.0
        %2884 = vmatprep.subr.mxu0 0.0
        %2885 = vmatpush1.msra.mxu0 0.0
        %2886 = vmatprep.subr.mxu0 0.0
        %2887 = vmatpush1.msra.mxu0 0.0
        %2888 = vmatprep.subr.mxu0 0.0
        %2889 = vmatpush1.msra.mxu0 0.0
        %2890 = vmatprep.subr.mxu0 0.0
        %2891 = vmatpush1.msra.mxu0 0.0
        %2892 = vmatprep.subr.mxu0 0.0
        %2893 = vmatpush1.msra.mxu0 0.0
        %2894 = vmatprep.subr.mxu0 0.0
        %2895 = vmatpush1.msra.mxu0 0.0
        %2896 = vmatprep.subr.mxu0 0.0
        %2897 = vmatpush1.msra.mxu0 0.0
        %2898 = vmatprep.subr.mxu0 0.0
        %2899 = vmatpush1.msra.mxu0 0.0
        %2900 = vmatprep.subr.mxu0 0.0
        %2901 = vmatpush1.msra.mxu0 0.0
        %2902 = vmatprep.subr.mxu0 0.0
        %2903 = vmatpush1.msra.mxu0 0.0
        %2904 = vmatprep.subr.mxu0 0.0
        %2905 = vmatpush1.msra.mxu0 0.0
        %2906 = vmatprep.subr.mxu0 0.0
        %2907 = vmatpush1.msra.mxu0 0.0
        %2908 = vmatprep.subr.mxu0 0.0
        %2909 = vmatpush1.msra.mxu0 0.0
        %2910 = vmatprep.mubr.f32.mxu0 0.0
        %2911 = vmatmul.mubr.f32.gmra.mrb[0].mxu0 %v2844
        %v2912 = vpop.f32.mrb[0].mxu0
        %v2913 = vadd.f32 0.0, %v2912
        %v2914 = vpop.f32.mrb[0].mxu0
        %2915 = vdwg.mxu0
        %2916 = vrot.lane.b32.xlu0 %v562, 64
        %v2917 = vpop.permute.xlu0 %2916
        %v2920 = vsel %vm569, %v1875, 0
        %2922 = vmatprep.subr.mxu0 0.0
        %2923 = vmatpush1.msra.mxu0 %v2917
        %2924 = vmatprep.subr.mxu0 0.0
        %2925 = vmatpush1.msra.mxu0 0.0
        %2926 = vmatprep.subr.mxu0 0.0
        %2927 = vmatpush1.msra.mxu0 0.0
        %2928 = vmatprep.subr.mxu0 0.0
        %2929 = vmatpush1.msra.mxu0 0.0
        %2930 = vmatprep.subr.mxu0 0.0
        %2931 = vmatpush1.msra.mxu0 0.0
        %2932 = vmatprep.subr.mxu0 0.0
        %2933 = vmatpush1.msra.mxu0 0.0
        %2934 = vmatprep.subr.mxu0 0.0
        %2935 = vmatpush1.msra.mxu0 0.0
        %2936 = vmatprep.subr.mxu0 0.0
        %2937 = vmatpush1.msra.mxu0 0.0
        %2938 = vmatprep.subr.mxu0 0.0
        %2939 = vmatpush1.msra.mxu0 0.0
        %2940 = vmatprep.subr.mxu0 0.0
        %2941 = vmatpush1.msra.mxu0 0.0
        %2942 = vmatprep.subr.mxu0 0.0
        %2943 = vmatpush1.msra.mxu0 0.0
        %2944 = vmatprep.subr.mxu0 0.0
        %2945 = vmatpush1.msra.mxu0 0.0
        %2946 = vmatprep.subr.mxu0 0.0
        %2947 = vmatpush1.msra.mxu0 0.0
        %2948 = vmatprep.subr.mxu0 0.0
        %2949 = vmatpush1.msra.mxu0 0.0
        %2950 = vmatprep.subr.mxu0 0.0
        %2951 = vmatpush1.msra.mxu0 0.0
        %2952 = vmatprep.subr.mxu0 0.0
        %2953 = vmatpush1.msra.mxu0 0.0
        %2954 = vmatprep.subr.mxu0 0.0
        %2955 = vmatpush1.msra.mxu0 0.0
        %2956 = vmatprep.subr.mxu0 0.0
        %2957 = vmatpush1.msra.mxu0 0.0
        %2958 = vmatprep.subr.mxu0 0.0
        %2959 = vmatpush1.msra.mxu0 0.0
        %2960 = vmatprep.subr.mxu0 0.0
        %2961 = vmatpush1.msra.mxu0 0.0
        %2962 = vmatprep.subr.mxu0 0.0
        %2963 = vmatpush1.msra.mxu0 0.0
        %2964 = vmatprep.subr.mxu0 0.0
        %2965 = vmatpush1.msra.mxu0 0.0
        %2966 = vmatprep.subr.mxu0 0.0
        %2967 = vmatpush1.msra.mxu0 0.0
        %2968 = vmatprep.subr.mxu0 0.0
        %2969 = vmatpush1.msra.mxu0 0.0
        %2970 = vmatprep.subr.mxu0 0.0
        %2971 = vmatpush1.msra.mxu0 0.0
        %2972 = vmatprep.subr.mxu0 0.0
        %2973 = vmatpush1.msra.mxu0 0.0
        %2974 = vmatprep.subr.mxu0 0.0
        %2975 = vmatpush1.msra.mxu0 0.0
        %2976 = vmatprep.subr.mxu0 0.0
        %2977 = vmatpush1.msra.mxu0 0.0
        %2978 = vmatprep.subr.mxu0 0.0
        %2979 = vmatpush1.msra.mxu0 0.0
        %2980 = vmatprep.subr.mxu0 0.0
        %2981 = vmatpush1.msra.mxu0 0.0
        %2982 = vmatprep.subr.mxu0 0.0
        %2983 = vmatpush1.msra.mxu0 0.0
        %2984 = vmatprep.subr.mxu0 0.0
        %2985 = vmatpush1.msra.mxu0 0.0
        %2986 = vmatprep.mubr.f32.mxu0 0.0
        %2987 = vmatmul.mubr.f32.gmra.mrb[0].mxu0 %v2920
        %v2988 = vpop.f32.mrb[0].mxu0
        %v2989 = vadd.f32 0.0, %v2988
        %v2990 = vpop.f32.mrb[0].mxu0
        %2991 = vdwg.mxu0
        %2992 = vrot.lane.b32.xlu0 %v564, 64
        %v2993 = vpop.permute.xlu0 %2992
        %v2996 = vsel %vm569, %v1877, 0
        %2998 = vmatprep.subr.mxu0 0.0
        %2999 = vmatpush1.msra.mxu0 %v2993
        %3000 = vmatprep.subr.mxu0 0.0
        %3001 = vmatpush1.msra.mxu0 0.0
        %3002 = vmatprep.subr.mxu0 0.0
        %3003 = vmatpush1.msra.mxu0 0.0
        %3004 = vmatprep.subr.mxu0 0.0
        %3005 = vmatpush1.msra.mxu0 0.0
        %3006 = vmatprep.subr.mxu0 0.0
        %3007 = vmatpush1.msra.mxu0 0.0
        %3008 = vmatprep.subr.mxu0 0.0
        %3009 = vmatpush1.msra.mxu0 0.0
        %3010 = vmatprep.subr.mxu0 0.0
        %3011 = vmatpush1.msra.mxu0 0.0
        %3012 = vmatprep.subr.mxu0 0.0
        %3013 = vmatpush1.msra.mxu0 0.0
        %3014 = vmatprep.subr.mxu0 0.0
        %3015 = vmatpush1.msra.mxu0 0.0
        %3016 = vmatprep.subr.mxu0 0.0
        %3017 = vmatpush1.msra.mxu0 0.0
        %3018 = vmatprep.subr.mxu0 0.0
        %3019 = vmatpush1.msra.mxu0 0.0
        %3020 = vmatprep.subr.mxu0 0.0
        %3021 = vmatpush1.msra.mxu0 0.0
        %3022 = vmatprep.subr.mxu0 0.0
        %3023 = vmatpush1.msra.mxu0 0.0
        %3024 = vmatprep.subr.mxu0 0.0
        %3025 = vmatpush1.msra.mxu0 0.0
        %3026 = vmatprep.subr.mxu0 0.0
        %3027 = vmatpush1.msra.mxu0 0.0
        %3028 = vmatprep.subr.mxu0 0.0
        %3029 = vmatpush1.msra.mxu0 0.0
        %3030 = vmatprep.subr.mxu0 0.0
        %3031 = vmatpush1.msra.mxu0 0.0
        %3032 = vmatprep.subr.mxu0 0.0
        %3033 = vmatpush1.msra.mxu0 0.0
        %3034 = vmatprep.subr.mxu0 0.0
        %3035 = vmatpush1.msra.mxu0 0.0
        %3036 = vmatprep.subr.mxu0 0.0
        %3037 = vmatpush1.msra.mxu0 0.0
        %3038 = vmatprep.subr.mxu0 0.0
        %3039 = vmatpush1.msra.mxu0 0.0
        %3040 = vmatprep.subr.mxu0 0.0
        %3041 = vmatpush1.msra.mxu0 0.0
        %3042 = vmatprep.subr.mxu0 0.0
        %3043 = vmatpush1.msra.mxu0 0.0
        %3044 = vmatprep.subr.mxu0 0.0
        %3045 = vmatpush1.msra.mxu0 0.0
        %3046 = vmatprep.subr.mxu0 0.0
        %3047 = vmatpush1.msra.mxu0 0.0
        %3048 = vmatprep.subr.mxu0 0.0
        %3049 = vmatpush1.msra.mxu0 0.0
        %3050 = vmatprep.subr.mxu0 0.0
        %3051 = vmatpush1.msra.mxu0 0.0
        %3052 = vmatprep.subr.mxu0 0.0
        %3053 = vmatpush1.msra.mxu0 0.0
        %3054 = vmatprep.subr.mxu0 0.0
        %3055 = vmatpush1.msra.mxu0 0.0
        %3056 = vmatprep.subr.mxu0 0.0
        %3057 = vmatpush1.msra.mxu0 0.0
        %3058 = vmatprep.subr.mxu0 0.0
        %3059 = vmatpush1.msra.mxu0 0.0
        %3060 = vmatprep.subr.mxu0 0.0
        %3061 = vmatpush1.msra.mxu0 0.0
        %3062 = vmatprep.mubr.f32.mxu0 0.0
        %3063 = vmatmul.mubr.f32.gmra.mrb[0].mxu0 %v2996
        %v3064 = vpop.f32.mrb[0].mxu0
        %v3065 = vadd.f32 0.0, %v3064
        %v3066 = vpop.f32.mrb[0].mxu0
        %3067 = vdwg.mxu0
        %3068 = vrot.lane.b32.xlu0 %v566, 64
        %v3069 = vpop.permute.xlu0 %3068
        %v3072 = vsel %vm569, %v1879, 0
        %3074 = vmatprep.subr.mxu0 0.0
        %3075 = vmatpush1.msra.mxu0 %v3069
        %3076 = vmatprep.subr.mxu0 0.0
        %3077 = vmatpush1.msra.mxu0 0.0
        %3078 = vmatprep.subr.mxu0 0.0
        %3079 = vmatpush1.msra.mxu0 0.0
        %3080 = vmatprep.subr.mxu0 0.0
        %3081 = vmatpush1.msra.mxu0 0.0
        %3082 = vmatprep.subr.mxu0 0.0
        %3083 = vmatpush1.msra.mxu0 0.0
        %3084 = vmatprep.subr.mxu0 0.0
        %3085 = vmatpush1.msra.mxu0 0.0
        %3086 = vmatprep.subr.mxu0 0.0
        %3087 = vmatpush1.msra.mxu0 0.0
        %3088 = vmatprep.subr.mxu0 0.0
        %3089 = vmatpush1.msra.mxu0 0.0
        %3090 = vmatprep.subr.mxu0 0.0
        %3091 = vmatpush1.msra.mxu0 0.0
        %3092 = vmatprep.subr.mxu0 0.0
        %3093 = vmatpush1.msra.mxu0 0.0
        %3094 = vmatprep.subr.mxu0 0.0
        %3095 = vmatpush1.msra.mxu0 0.0
        %3096 = vmatprep.subr.mxu0 0.0
        %3097 = vmatpush1.msra.mxu0 0.0
        %3098 = vmatprep.subr.mxu0 0.0
        %3099 = vmatpush1.msra.mxu0 0.0
        %3100 = vmatprep.subr.mxu0 0.0
        %3101 = vmatpush1.msra.mxu0 0.0
        %3102 = vmatprep.subr.mxu0 0.0
        %3103 = vmatpush1.msra.mxu0 0.0
        %3104 = vmatprep.subr.mxu0 0.0
        %3105 = vmatpush1.msra.mxu0 0.0
        %3106 = vmatprep.subr.mxu0 0.0
        %3107 = vmatpush1.msra.mxu0 0.0
        %3108 = vmatprep.subr.mxu0 0.0
        %3109 = vmatpush1.msra.mxu0 0.0
        %3110 = vmatprep.subr.mxu0 0.0
        %3111 = vmatpush1.msra.mxu0 0.0
        %3112 = vmatprep.subr.mxu0 0.0
        %3113 = vmatpush1.msra.mxu0 0.0
        %3114 = vmatprep.subr.mxu0 0.0
        %3115 = vmatpush1.msra.mxu0 0.0
        %3116 = vmatprep.subr.mxu0 0.0
        %3117 = vmatpush1.msra.mxu0 0.0
        %3118 = vmatprep.subr.mxu0 0.0
        %3119 = vmatpush1.msra.mxu0 0.0
        %3120 = vmatprep.subr.mxu0 0.0
        %3121 = vmatpush1.msra.mxu0 0.0
        %3122 = vmatprep.subr.mxu0 0.0
        %3123 = vmatpush1.msra.mxu0 0.0
        %3124 = vmatprep.subr.mxu0 0.0
        %3125 = vmatpush1.msra.mxu0 0.0
        %3126 = vmatprep.subr.mxu0 0.0
        %3127 = vmatpush1.msra.mxu0 0.0
        %3128 = vmatprep.subr.mxu0 0.0
        %3129 = vmatpush1.msra.mxu0 0.0
        %3130 = vmatprep.subr.mxu0 0.0
        %3131 = vmatpush1.msra.mxu0 0.0
        %3132 = vmatprep.subr.mxu0 0.0
        %3133 = vmatpush1.msra.mxu0 0.0
        %3134 = vmatprep.subr.mxu0 0.0
        %3135 = vmatpush1.msra.mxu0 0.0
        %3136 = vmatprep.subr.mxu0 0.0
        %3137 = vmatpush1.msra.mxu0 0.0
        %3138 = vmatprep.mubr.f32.mxu0 0.0
        %3139 = vmatmul.mubr.f32.gmra.mrb[0].mxu0 %v3072
        %v3140 = vpop.f32.mrb[0].mxu0
        %v3141 = vadd.f32 0.0, %v3140
        %v3142 = vpop.f32.mrb[0].mxu0
        %3143 = vdwg.mxu0
        %v3144 = vrcp.pop %v1882
        %v3145 = vrcp.pop %v1885
        %v3146 = vrcp.pop %v1888
        %v3147 = vrcp.pop %v1891
        %v3148 = vrcp.pop %v1894
        %v3149 = vrcp.pop %v1897
        %v3150 = vrcp.pop %v1900
        %v3151 = vrcp.pop %v1903
        %v3152 = vrcp.pop %v1906
        %v3153 = vrcp.pop %v1909
        %v3154 = vrcp.pop %v1912
        %v3155 = vrcp.pop %v1915
        %v3156 = vrcp.pop %v1918
        %v3157 = vrcp.pop %v1921
        %v3158 = vrcp.pop %v1924
        %v3159 = vrcp.pop %v1927
        %v3160 = vmul.f32 %v2001, %v3144
        %v3161 = vmul.f32 %v2077, %v3145
        %v3162 = vmul.f32 %v2153, %v3146
        %v3163 = vmul.f32 %v2229, %v3147
        %v3164 = vmul.f32 %v2305, %v3148
        %v3165 = vmul.f32 %v2381, %v3149
        %v3166 = vmul.f32 %v2457, %v3150
        %v3167 = vmul.f32 %v2533, %v3151
        %v3168 = vmul.f32 %v2609, %v3152
        %v3169 = vmul.f32 %v2685, %v3153
        %v3170 = vmul.f32 %v2761, %v3154
        %v3171 = vmul.f32 %v2837, %v3155
        %v3172 = vmul.f32 %v2913, %v3156
        %v3173 = vmul.f32 %v2989, %v3157
        %v3174 = vmul.f32 %v3065, %v3158
        %v3175 = vmul.f32 %v3141, %v3159
        %3180 = vrot.lane.b32.xlu0 %v3164, 8
        %v3181 = vpop.permute.xlu0 %3180
        %3182 = vrot.lane.b32.xlu0 %v3165, 8
        %v3183 = vpop.permute.xlu0 %3182
        %3184 = vrot.lane.b32.xlu0 %v3166, 8
        %v3185 = vpop.permute.xlu0 %3184
        %3186 = vrot.lane.b32.xlu0 %v3167, 8
        %v3187 = vpop.permute.xlu0 %3186
        %3196 = vrot.lane.b32.xlu0 %v3168, 16
        %v3197 = vpop.permute.xlu0 %3196
        %3198 = vrot.lane.b32.xlu0 %v3169, 16
        %v3199 = vpop.permute.xlu0 %3198
        %3200 = vrot.lane.b32.xlu0 %v3170, 16
        %v3201 = vpop.permute.xlu0 %3200
        %3202 = vrot.lane.b32.xlu0 %v3171, 16
        %v3203 = vpop.permute.xlu0 %3202
        %3212 = vrot.lane.b32.xlu0 %v3172, 24
        %v3213 = vpop.permute.xlu0 %3212
        %3214 = vrot.lane.b32.xlu0 %v3173, 24
        %v3215 = vpop.permute.xlu0 %3214
        %3216 = vrot.lane.b32.xlu0 %v3174, 24
        %v3217 = vpop.permute.xlu0 %3216
        %3218 = vrot.lane.b32.xlu0 %v3175, 24
        %v3219 = vpop.permute.xlu0 %3218
        %v3224 = vsel %vm569, %v3160, %v3181
        %v3225 = vsel %vm569, %v3161, %v3183
        %v3226 = vsel %vm569, %v3162, %v3185
        %v3227 = vsel %vm569, %v3163, %v3187
        %vm3228 = vcmask 130048
        %v3229 = vsel %vm3228, %v3224, %v3197
        %v3230 = vsel %vm3228, %v3225, %v3199
        %v3231 = vsel %vm3228, %v3226, %v3201
        %v3232 = vsel %vm3228, %v3227, %v3203
        %vm3233 = vcmask 195584
        %v3234 = vsel %vm3233, %v3229, %v3213
        %v3235 = vsel %vm3233, %v3230, %v3215
        %v3236 = vsel %vm3233, %v3231, %v3217
        %v3237 = vsel %vm3233, %v3232, %v3219
        %v3238 = vpack.c.bf16 %v3235, %v3234
        %v3239 = vpack.c.bf16 %v3237, %v3236
        %v3240 = vld [vmem:[%s3] sm:$0xf]
        %v3241 = vld [vmem:[%s3 + $0x4] sm:$0xf]
        %v3242 = vld [vmem:[%s3 + $0x8] sm:$0xf]
        %v3243 = vld [vmem:[%s3 + $0xc] sm:$0xf]
        %v3245 = vlaneseq
        %v3246 = vshrl.u32 %v3245, 7
        %v3247 = vsub.s32 0, %v3246
        %v3248 = vrot.slane %v452, %v3247
        %v3254 = vunpack.c.l.b16 %v3240
        %v3255 = vunpack.c.l.b16 %v3241
        %v3256 = vunpack.c.l.b16 %v3242
        %v3257 = vunpack.c.l.b16 %v3243
        %v3258 = vpack.c.b16 %v3255, %v3254
        %v3259 = vpack.c.b16 %v3257, %v3256
        %v3263 = vsel %vm483, %v3238, 0
        %v3266 = vsel %vm483, %v3239, 0
        %3268 = vmatprep.subr.bf16.mxu0 0
        %3269 = vmatpush1.bf16.msra.mxu0 %v3258
        %3270 = vmatprep.subr.bf16.mxu0 0
        %3271 = vmatpush1.bf16.msra.mxu0 %v3259
        %3272 = vmatprep.subr.bf16.mxu0 0
        %3273 = vmatpush1.bf16.msra.mxu0 0
        %3274 = vmatprep.subr.bf16.mxu0 0
        %3275 = vmatpush1.bf16.msra.mxu0 0
        %3276 = vmatprep.subr.bf16.mxu0 0
        %3277 = vmatpush1.bf16.msra.mxu0 0
        %3278 = vmatprep.subr.bf16.mxu0 0
        %3279 = vmatpush1.bf16.msra.mxu0 0
        %3280 = vmatprep.subr.bf16.mxu0 0
        %3281 = vmatpush1.bf16.msra.mxu0 0
        %3282 = vmatprep.subr.bf16.mxu0 0
        %3283 = vmatpush1.bf16.msra.mxu0 0
        %3284 = vmatprep.subr.bf16.mxu0 0
        %3285 = vmatpush1.bf16.msra.mxu0 0
        %3286 = vmatprep.subr.bf16.mxu0 0
        %3287 = vmatpush1.bf16.msra.mxu0 0
        %3288 = vmatprep.subr.bf16.mxu0 0
        %3289 = vmatpush1.bf16.msra.mxu0 0
        %3290 = vmatprep.subr.bf16.mxu0 0
        %3291 = vmatpush1.bf16.msra.mxu0 0
        %3292 = vmatprep.subr.bf16.mxu0 0
        %3293 = vmatpush1.bf16.msra.mxu0 0
        %3294 = vmatprep.subr.bf16.mxu0 0
        %3295 = vmatpush1.bf16.msra.mxu0 0
        %3296 = vmatprep.subr.bf16.mxu0 0
        %3297 = vmatpush1.bf16.msra.mxu0 0
        %3298 = vmatprep.subr.bf16.mxu0 0
        %3299 = vmatpush1.bf16.msra.mxu0 0
        %3300 = vmatprep.mubr.bf16.mxu0 0
        %3301 = vmatmul.mubr.bf16.gmra.mrb[0].mxu0 %v3263
        %v3302 = vpop.f32.mrb[0].mxu0
        %v3303 = vadd.f32 %v3248, %v3302
        %v3304 = vpop.f32.mrb[0].mxu0
        %v3305 = vpop.f32.mrb[0].mxu0
        %v3306 = vadd.f32 %v3248, %v3305
        %v3307 = vpop.f32.mrb[0].mxu0
        %3308 = vmatprep.mubr.bf16.mxu0 0
        %3309 = vmatmul.mubr.bf16.gmra.mrb[0].mxu0 %v3266
        %v3310 = vpop.f32.mrb[0].mxu0
        %v3311 = vadd.f32 %v3248, %v3310
        %v3312 = vpop.f32.mrb[0].mxu0
        %v3313 = vpop.f32.mrb[0].mxu0
        %v3314 = vadd.f32 %v3248, %v3313
        %v3315 = vpop.f32.mrb[0].mxu0
        %3316 = vdwg.mxu0
        %v3317 = vadd.f32 %v447, %v3303
        %v3318 = vadd.f32 %v448, %v3306
        %v3319 = vadd.f32 %v449, %v3311
        %v3320 = vadd.f32 %v450, %v3314
        %v3321 = vsel %vm483, %v3317, 0.0
        %3322 = vadd.xlane.f32.xlu0 %v3321
        %v3323 = vpop.xlane.xlu0 %3322
        %v3324 = vsel %vm483, %v3318, 0.0
        %3325 = vadd.xlane.f32.xlu0 %v3324
        %v3326 = vpop.xlane.xlu0 %3325
        %v3327 = vsel %vm483, %v3319, 0.0
        %3328 = vadd.xlane.f32.xlu0 %v3327
        %v3329 = vpop.xlane.xlu0 %3328
        %v3330 = vsel %vm483, %v3320, 0.0
        %3331 = vadd.xlane.f32.xlu0 %v3330
        %v3332 = vpop.xlane.xlu0 %3331
        %v3333 = vrcp.pop 32.0
        %v3334 = vmul.f32 %v3323, %v3333
        %v3335 = vmul.f32 %v3326, %v3333
        %v3336 = vmul.f32 %v3329, %v3333
        %v3337 = vmul.f32 %v3332, %v3333
        %v3338 = vmul.f32 %v3317, %v3317
        %v3339 = vmul.f32 %v3318, %v3318
        %v3340 = vmul.f32 %v3319, %v3319
        %v3341 = vmul.f32 %v3320, %v3320
        %v3342 = vsel %vm483, %v3338, 0.0
        %3343 = vadd.xlane.f32.xlu0 %v3342
        %v3344 = vpop.xlane.xlu0 %3343
        %v3345 = vsel %vm483, %v3339, 0.0
        %3346 = vadd.xlane.f32.xlu0 %v3345
        %v3347 = vpop.xlane.xlu0 %3346
        %v3348 = vsel %vm483, %v3340, 0.0
        %3349 = vadd.xlane.f32.xlu0 %v3348
        %v3350 = vpop.xlane.xlu0 %3349
        %v3351 = vsel %vm483, %v3341, 0.0
        %3352 = vadd.xlane.f32.xlu0 %v3351
        %v3353 = vpop.xlane.xlu0 %3352
        %v3354 = vmul.f32 %v3344, %v3333
        %v3355 = vmul.f32 %v3347, %v3333
        %v3356 = vmul.f32 %v3350, %v3333
        %v3357 = vmul.f32 %v3353, %v3333
        %v3358 = vmul.f32 %v3334, %v3334
        %v3359 = vmul.f32 %v3335, %v3335
        %v3360 = vmul.f32 %v3336, %v3336
        %v3361 = vmul.f32 %v3337, %v3337
        %v3362 = vsub.f32 %v3354, %v3358
        %v3363 = vsub.f32 %v3355, %v3359
        %v3364 = vsub.f32 %v3356, %v3360
        %v3365 = vsub.f32 %v3357, %v3361
        %v3366 = vmax.f32 %v3362, 0.0
        %v3367 = vmax.f32 %v3363, 0.0
        %v3368 = vmax.f32 %v3364, 0.0
        %v3369 = vmax.f32 %v3365, 0.0
        %v3370 = vsub.f32 %v3317, %v3334
        %v3371 = vsub.f32 %v3318, %v3335
        %v3372 = vsub.f32 %v3319, %v3336
        %v3373 = vsub.f32 %v3320, %v3337
        %v3374 = vadd.f32 %v3366, 1e-05
        %v3375 = vadd.f32 %v3367, 1e-05
        %v3376 = vadd.f32 %v3368, 1e-05
        %v3377 = vadd.f32 %v3369, 1e-05
        %v3378 = vrsqrt.pop %v3374
        %v3379 = vrsqrt.pop %v3375
        %v3380 = vrsqrt.pop %v3376
        %v3381 = vrsqrt.pop %v3377
        %v3382 = vmul.f32 %v3370, %v3378
        %v3383 = vmul.f32 %v3371, %v3379
        %v3384 = vmul.f32 %v3372, %v3380
        %v3385 = vmul.f32 %v3373, %v3381
        %v3387 = vlaneseq
        %v3388 = vshrl.u32 %v3387, 7
        %v3389 = vsub.s32 0, %v3388
        %v3390 = vrot.slane %v453, %v3389
        %v3392 = vmul.f32 %v3382, %v3390
        %v3393 = vmul.f32 %v3383, %v3390
        %v3394 = vmul.f32 %v3384, %v3390
        %v3395 = vmul.f32 %v3385, %v3390
        %v3397 = vlaneseq
        %v3398 = vshrl.u32 %v3397, 7
        %v3399 = vsub.s32 0, %v3398
        %v3400 = vrot.slane %v454, %v3399
        %v3402 = vadd.f32 %v3392, %v3400
        %v3403 = vadd.f32 %v3393, %v3400
        %v3404 = vadd.f32 %v3394, %v3400
        %v3405 = vadd.f32 %v3395, %v3400
        %v3406 = vpack.c.bf16 %v3403, %v3402
        %v3407 = vpack.c.bf16 %v3405, %v3404
        %v3408 = vld [vmem:[%s7] sm:$0xf]
        %v3409 = vld [vmem:[%s7 + $0x4] sm:$0xf]
        %v3410 = vld [vmem:[%s7 + $0x8] sm:$0xf]
        %v3411 = vld [vmem:[%s7 + $0xc] sm:$0xf]
        %v3413 = vlaneseq
        %v3414 = vshrl.u32 %v3413, 7
        %v3415 = vsub.s32 0, %v3414
        %v3416 = vrot.slane %v455, %v3415
        %v3422 = vunpack.c.l.b16 %v3408
        %v3423 = vunpack.c.l.b16 %v3409
        %v3424 = vunpack.c.l.b16 %v3410
        %v3425 = vunpack.c.l.b16 %v3411
        %v3426 = vpack.c.b16 %v3423, %v3422
        %v3427 = vpack.c.b16 %v3425, %v3424
        %v3431 = vsel %vm483, %v3406, 0
        %v3434 = vsel %vm483, %v3407, 0
        %3436 = vmatprep.subr.bf16.mxu0 0
        %3437 = vmatpush1.bf16.msra.mxu0 %v3426
        %3438 = vmatprep.subr.bf16.mxu0 0
        %3439 = vmatpush1.bf16.msra.mxu0 %v3427
        %3440 = vmatprep.subr.bf16.mxu0 0
        %3441 = vmatpush1.bf16.msra.mxu0 0
        %3442 = vmatprep.subr.bf16.mxu0 0
        %3443 = vmatpush1.bf16.msra.mxu0 0
        %3444 = vmatprep.subr.bf16.mxu0 0
        %3445 = vmatpush1.bf16.msra.mxu0 0
        %3446 = vmatprep.subr.bf16.mxu0 0
        %3447 = vmatpush1.bf16.msra.mxu0 0
        %3448 = vmatprep.subr.bf16.mxu0 0
        %3449 = vmatpush1.bf16.msra.mxu0 0
        %3450 = vmatprep.subr.bf16.mxu0 0
        %3451 = vmatpush1.bf16.msra.mxu0 0
        %3452 = vmatprep.subr.bf16.mxu0 0
        %3453 = vmatpush1.bf16.msra.mxu0 0
        %3454 = vmatprep.subr.bf16.mxu0 0
        %3455 = vmatpush1.bf16.msra.mxu0 0
        %3456 = vmatprep.subr.bf16.mxu0 0
        %3457 = vmatpush1.bf16.msra.mxu0 0
        %3458 = vmatprep.subr.bf16.mxu0 0
        %3459 = vmatpush1.bf16.msra.mxu0 0
        %3460 = vmatprep.subr.bf16.mxu0 0
        %3461 = vmatpush1.bf16.msra.mxu0 0
        %3462 = vmatprep.subr.bf16.mxu0 0
        %3463 = vmatpush1.bf16.msra.mxu0 0
        %3464 = vmatprep.subr.bf16.mxu0 0
        %3465 = vmatpush1.bf16.msra.mxu0 0
        %3466 = vmatprep.subr.bf16.mxu0 0
        %3467 = vmatpush1.bf16.msra.mxu0 0
        %3468 = vmatprep.mubr.bf16.mxu0 0
        %3469 = vmatmul.mubr.bf16.gmra.mrb[0].mxu0 %v3431
        %v3470 = vpop.f32.mrb[0].mxu0
        %v3471 = vadd.f32 %v3416, %v3470
        %v3472 = vpop.f32.mrb[0].mxu0
        %v3473 = vpop.f32.mrb[0].mxu0
        %v3474 = vadd.f32 %v3416, %v3473
        %v3475 = vpop.f32.mrb[0].mxu0
        %3476 = vmatprep.mubr.bf16.mxu0 0
        %3477 = vmatmul.mubr.bf16.gmra.mrb[0].mxu0 %v3434
        %v3478 = vpop.f32.mrb[0].mxu0
        %v3479 = vadd.f32 %v3416, %v3478
        %v3480 = vpop.f32.mrb[0].mxu0
        %v3481 = vpop.f32.mrb[0].mxu0
        %v3482 = vadd.f32 %v3416, %v3481
        %v3483 = vpop.f32.mrb[0].mxu0
        %3484 = vdwg.mxu0
        %v3485 = vmul.f32 %v3471, %v3471
        %v3486 = vmul.f32 %v3474, %v3474
        %v3487 = vmul.f32 %v3479, %v3479
        %v3488 = vmul.f32 %v3482, %v3482
        %v3489 = vmul.f32 %v3471, %v3485
        %v3490 = vmul.f32 %v3474, %v3486
        %v3491 = vmul.f32 %v3479, %v3487
        %v3492 = vmul.f32 %v3482, %v3488
        %v3493 = vmul.f32 %v3489, 0.044715
        %v3494 = vmul.f32 %v3490, 0.044715
        %v3495 = vmul.f32 %v3491, 0.044715
        %v3496 = vmul.f32 %v3492, 0.044715
        %v3497 = vadd.f32 %v3471, %v3493
        %v3498 = vadd.f32 %v3474, %v3494
        %v3499 = vadd.f32 %v3479, %v3495
        %v3500 = vadd.f32 %v3482, %v3496
        %v3501 = vmul.f32 %v3497, 0.7978846
        %v3502 = vmul.f32 %v3498, 0.7978846
        %v3503 = vmul.f32 %v3499, 0.7978846
        %v3504 = vmul.f32 %v3500, 0.7978846
        %v3505 = vtanh.pop %v3501
        %v3506 = vtanh.pop %v3502
        %v3507 = vtanh.pop %v3503
        %v3508 = vtanh.pop %v3504
        %v3509 = vadd.f32 %v3505, 1.0
        %v3510 = vadd.f32 %v3506, 1.0
        %v3511 = vadd.f32 %v3507, 1.0
        %v3512 = vadd.f32 %v3508, 1.0
        %v3513 = vmul.f32 %v3509, 0.5
        %v3514 = vmul.f32 %v3510, 0.5
        %v3515 = vmul.f32 %v3511, 0.5
        %v3516 = vmul.f32 %v3512, 0.5
        %v3517 = vmul.f32 %v3471, %v3513
        %v3518 = vmul.f32 %v3474, %v3514
        %v3519 = vmul.f32 %v3479, %v3515
        %v3520 = vmul.f32 %v3482, %v3516
        %v3521 = vpack.c.bf16 %v3518, %v3517
        %v3522 = vpack.c.bf16 %v3520, %v3519
        %v3523 = vld [vmem:[%s9] sm:$0xf]
        %v3524 = vld [vmem:[%s9 + $0x4] sm:$0xf]
        %v3525 = vld [vmem:[%s9 + $0x8] sm:$0xf]
        %v3526 = vld [vmem:[%s9 + $0xc] sm:$0xf]
        %v3527 = vld [vmem:[%s9 + $0x10] sm:$0xf]
        %v3528 = vld [vmem:[%s9 + $0x14] sm:$0xf]
        %v3529 = vld [vmem:[%s9 + $0x18] sm:$0xf]
        %v3530 = vld [vmem:[%s9 + $0x1c] sm:$0xf]
        %v3531 = vld [vmem:[%s9 + $0x20] sm:$0xf]
        %v3532 = vld [vmem:[%s9 + $0x24] sm:$0xf]
        %v3533 = vld [vmem:[%s9 + $0x28] sm:$0xf]
        %v3534 = vld [vmem:[%s9 + $0x2c] sm:$0xf]
        %v3535 = vld [vmem:[%s9 + $0x30] sm:$0xf]
        %v3536 = vld [vmem:[%s9 + $0x34] sm:$0xf]
        %v3537 = vld [vmem:[%s9 + $0x38] sm:$0xf]
        %v3538 = vld [vmem:[%s9 + $0x3c] sm:$0xf]
        %v3540 = vlaneseq
        %v3541 = vshrl.u32 %v3540, 7
        %v3542 = vsub.s32 0, %v3541
        %v3543 = vrot.slane %v456, %v3542
        %v3561 = vunpack.c.l.b16 %v3523
        %v3562 = vunpack.c.l.b16 %v3524
        %v3563 = vunpack.c.l.b16 %v3525
        %v3564 = vunpack.c.l.b16 %v3526
        %v3565 = vunpack.c.l.b16 %v3527
        %v3566 = vunpack.c.l.b16 %v3528
        %v3567 = vunpack.c.l.b16 %v3529
        %v3568 = vunpack.c.l.b16 %v3530
        %v3569 = vunpack.c.l.b16 %v3531
        %v3570 = vunpack.c.l.b16 %v3532
        %v3571 = vunpack.c.l.b16 %v3533
        %v3572 = vunpack.c.l.b16 %v3534
        %v3573 = vunpack.c.l.b16 %v3535
        %v3574 = vunpack.c.l.b16 %v3536
        %v3575 = vunpack.c.l.b16 %v3537
        %v3576 = vunpack.c.l.b16 %v3538
        %v3577 = vpack.c.b16 %v3562, %v3561
        %v3578 = vpack.c.b16 %v3564, %v3563
        %v3579 = vpack.c.b16 %v3566, %v3565
        %v3580 = vpack.c.b16 %v3568, %v3567
        %v3581 = vpack.c.b16 %v3570, %v3569
        %v3582 = vpack.c.b16 %v3572, %v3571
        %v3583 = vpack.c.b16 %v3574, %v3573
        %v3584 = vpack.c.b16 %v3576, %v3575
        %3593 = vmatprep.subr.bf16.mxu0 0
        %3594 = vmatpush1.bf16.msra.mxu0 %v3577
        %3595 = vmatprep.subr.bf16.mxu0 0
        %3596 = vmatpush1.bf16.msra.mxu0 %v3578
        %3597 = vmatprep.subr.bf16.mxu0 0
        %3598 = vmatpush1.bf16.msra.mxu0 %v3579
        %3599 = vmatprep.subr.bf16.mxu0 0
        %3600 = vmatpush1.bf16.msra.mxu0 %v3580
        %3601 = vmatprep.subr.bf16.mxu0 0
        %3602 = vmatpush1.bf16.msra.mxu0 %v3581
        %3603 = vmatprep.subr.bf16.mxu0 0
        %3604 = vmatpush1.bf16.msra.mxu0 %v3582
        %3605 = vmatprep.subr.bf16.mxu0 0
        %3606 = vmatpush1.bf16.msra.mxu0 %v3583
        %3607 = vmatprep.subr.bf16.mxu0 0
        %3608 = vmatpush1.bf16.msra.mxu0 %v3584
        %3609 = vmatprep.subr.bf16.mxu0 0
        %3610 = vmatpush1.bf16.msra.mxu0 0
        %3611 = vmatprep.subr.bf16.mxu0 0
        %3612 = vmatpush1.bf16.msra.mxu0 0
        %3613 = vmatprep.subr.bf16.mxu0 0
        %3614 = vmatpush1.bf16.msra.mxu0 0
        %3615 = vmatprep.subr.bf16.mxu0 0
        %3616 = vmatpush1.bf16.msra.mxu0 0
        %3617 = vmatprep.subr.bf16.mxu0 0
        %3618 = vmatpush1.bf16.msra.mxu0 0
        %3619 = vmatprep.subr.bf16.mxu0 0
        %3620 = vmatpush1.bf16.msra.mxu0 0
        %3621 = vmatprep.subr.bf16.mxu0 0
        %3622 = vmatpush1.bf16.msra.mxu0 0
        %3623 = vmatprep.subr.bf16.mxu0 0
        %3624 = vmatpush1.bf16.msra.mxu0 0
        %3625 = vmatprep.mubr.bf16.mxu0 0
        %3626 = vmatmul.mubr.bf16.gmra.mrb[0].mxu0 %v3521
        %v3627 = vpop.f32.mrb[0].mxu0
        %v3628 = vadd.f32 %v3543, %v3627
        %v3629 = vpop.f32.mrb[0].mxu0
        %v3630 = vpop.f32.mrb[0].mxu0
        %v3631 = vadd.f32 %v3543, %v3630
        %v3632 = vpop.f32.mrb[0].mxu0
        %3633 = vmatprep.mubr.bf16.mxu0 0
        %3634 = vmatmul.mubr.bf16.gmra.mrb[0].mxu0 %v3522
        %v3635 = vpop.f32.mrb[0].mxu0
        %v3636 = vadd.f32 %v3543, %v3635
        %v3637 = vpop.f32.mrb[0].mxu0
        %v3638 = vpop.f32.mrb[0].mxu0
        %v3639 = vadd.f32 %v3543, %v3638
        %v3640 = vpop.f32.mrb[0].mxu0
        %3641 = vdwg.mxu0
        %v3642 = vadd.f32 %v3402, %v3628
        %v3643 = vadd.f32 %v3403, %v3631
        %v3644 = vadd.f32 %v3404, %v3636
        %v3645 = vadd.f32 %v3405, %v3639
        %v3646 = vsel %vm483, %v3642, 0.0
        %3647 = vadd.xlane.f32.xlu0 %v3646
        %v3648 = vpop.xlane.xlu0 %3647
        %v3649 = vsel %vm483, %v3643, 0.0
        %3650 = vadd.xlane.f32.xlu0 %v3649
        %v3651 = vpop.xlane.xlu0 %3650
        %v3652 = vsel %vm483, %v3644, 0.0
        %3653 = vadd.xlane.f32.xlu0 %v3652
        %v3654 = vpop.xlane.xlu0 %3653
        %v3655 = vsel %vm483, %v3645, 0.0
        %3656 = vadd.xlane.f32.xlu0 %v3655
        %v3657 = vpop.xlane.xlu0 %3656
        %v3658 = vmul.f32 %v3648, %v3333
        %v3659 = vmul.f32 %v3651, %v3333
        %v3660 = vmul.f32 %v3654, %v3333
        %v3661 = vmul.f32 %v3657, %v3333
        %v3662 = vmul.f32 %v3642, %v3642
        %v3663 = vmul.f32 %v3643, %v3643
        %v3664 = vmul.f32 %v3644, %v3644
        %v3665 = vmul.f32 %v3645, %v3645
        %v3666 = vsel %vm483, %v3662, 0.0
        %3667 = vadd.xlane.f32.xlu0 %v3666
        %v3668 = vpop.xlane.xlu0 %3667
        %v3669 = vsel %vm483, %v3663, 0.0
        %3670 = vadd.xlane.f32.xlu0 %v3669
        %v3671 = vpop.xlane.xlu0 %3670
        %v3672 = vsel %vm483, %v3664, 0.0
        %3673 = vadd.xlane.f32.xlu0 %v3672
        %v3674 = vpop.xlane.xlu0 %3673
        %v3675 = vsel %vm483, %v3665, 0.0
        %3676 = vadd.xlane.f32.xlu0 %v3675
        %v3677 = vpop.xlane.xlu0 %3676
        %v3678 = vmul.f32 %v3668, %v3333
        %v3679 = vmul.f32 %v3671, %v3333
        %v3680 = vmul.f32 %v3674, %v3333
        %v3681 = vmul.f32 %v3677, %v3333
        %v3682 = vmul.f32 %v3658, %v3658
        %v3683 = vmul.f32 %v3659, %v3659
        %v3684 = vmul.f32 %v3660, %v3660
        %v3685 = vmul.f32 %v3661, %v3661
        %v3686 = vsub.f32 %v3678, %v3682
        %v3687 = vsub.f32 %v3679, %v3683
        %v3688 = vsub.f32 %v3680, %v3684
        %v3689 = vsub.f32 %v3681, %v3685
        %v3690 = vmax.f32 %v3686, 0.0
        %v3691 = vmax.f32 %v3687, 0.0
        %v3692 = vmax.f32 %v3688, 0.0
        %v3693 = vmax.f32 %v3689, 0.0
        %v3694 = vsub.f32 %v3642, %v3658
        %v3695 = vsub.f32 %v3643, %v3659
        %v3696 = vsub.f32 %v3644, %v3660
        %v3697 = vsub.f32 %v3645, %v3661
        %v3698 = vadd.f32 %v3690, 1e-05
        %v3699 = vadd.f32 %v3691, 1e-05
        %v3700 = vadd.f32 %v3692, 1e-05
        %v3701 = vadd.f32 %v3693, 1e-05
        %v3702 = vrsqrt.pop %v3698
        %v3703 = vrsqrt.pop %v3699
        %v3704 = vrsqrt.pop %v3700
        %v3705 = vrsqrt.pop %v3701
        %v3706 = vmul.f32 %v3694, %v3702
        %v3707 = vmul.f32 %v3695, %v3703
        %v3708 = vmul.f32 %v3696, %v3704
        %v3709 = vmul.f32 %v3697, %v3705
        %v3711 = vlaneseq
        %v3712 = vshrl.u32 %v3711, 7
        %v3713 = vsub.s32 0, %v3712
        %v3714 = vrot.slane %v457, %v3713
        %v3716 = vmul.f32 %v3706, %v3714
        %v3717 = vmul.f32 %v3707, %v3714
        %v3718 = vmul.f32 %v3708, %v3714
        %v3719 = vmul.f32 %v3709, %v3714
        %v3721 = vlaneseq
        %v3722 = vshrl.u32 %v3721, 7
        %v3723 = vsub.s32 0, %v3722
        %v3724 = vrot.slane %v458, %v3723
        %v3726 = vadd.f32 %v3716, %v3724
        %v3727 = vadd.f32 %v3717, %v3724
        %v3728 = vadd.f32 %v3718, %v3724
        %v3729 = vadd.f32 %v3719, %v3724
        %3730 = vst.msk [vmem:[%s434] sm:$0xff] %vm483, %v3726
        %3731 = vst.msk [vmem:[%s434 + $0x8] sm:$0xff] %vm483, %v3727
        %3732 = vst.msk [vmem:[%s434 + $0x10] sm:$0xff] %vm483, %v3728
        %3733 = vst.msk [vmem:[%s434 + $0x18] sm:$0xff] %vm483, %v3729
        %s3734 = sand.u32 %s313, 1
        %s3735 = scalar_lea.sflag [#allocation3], %s3734
        %s3736 = sand.u32 %s313, 1
        %s3737 = smul.addr %s3736, 32
        %s3738 = scalar_lea.vmem [#allocation2], %s3737
        // Predicated region
        $region73: #{tpu_custom_call.1} parent=71 // pred_check
          %p3739 = pneg %p323
        $region74: #{tpu_custom_call.1} parent=71 // pred_check_branch
          %3741 = sbr.rel (%p3739) target = $region76
        $region75: #{tpu_custom_call.1} parent=71 // pred_region
          %s3742 = smul.u32 4, %s27
          %s3744 = ssub.s32 512, 512
          %3745 = vsyncadd %s3735, %s3744
          %s3746 = smul.addr %s3742, 128
          %s3747 = scalar_lea.hbm %s13, %s3746
          %s3748 = sshll.u32 %s3738, 4
          %s3749 = int_to_ptr.vmem [resolvable:$true] %s3748
          %3754 = dma.vmem_to_hbm [thread:$0]  %s3749, 512, %s3747, %s3735, 128, 128, 8
        $region76: #{tpu_custom_call.1} parent=71 // pred_fallthru
          _
      $region72: #{tpu_custom_call.1} parent=5 // pred_fallthru
        _
      %p3755 = scmp.le.s32.totalorder 2, %s22
      // Predicated region
      $region77: #{tpu_custom_call.1} parent=5 // pred_check
        %p3756 = pneg %p3755
      $region78: #{tpu_custom_call.1} parent=5 // pred_check_branch
        %3758 = sbr.rel (%p3756) target = $region80
      $region79: #{tpu_custom_call.1} parent=5 // pred_region
        %s3759 = ssub.s32 %s22, 2
        // Predicated region
        $region81: #{tpu_custom_call.1} parent=79 // pred_check
          %p3760 = pneg %p329
        $region82: #{tpu_custom_call.1} parent=79 // pred_check_branch
          %3762 = sbr.rel (%p3760) target = $region84
        $region83: #{tpu_custom_call.1} parent=79 // pred_region
          %s3763 = sand.u32 %s314, 1
          %s3764 = scalar_lea.sflag [#allocation3], %s3763
          %s3765 = sand.u32 %s314, 1
          %s3766 = smul.addr %s3765, 32
          %s3767 = scalar_lea.vmem [#allocation2], %s3766
          %3768 = dma.done %s3764, 512
        $region84: #{tpu_custom_call.1} parent=79 // pred_fallthru
          _
      $region80: #{tpu_custom_call.1} parent=5 // pred_fallthru
        _
    $region6: #{tpu_custom_call.1} parent=1 // loop_footer
      %s26 = sadd.s32 1, %s22
    $region7: #{tpu_custom_call.1} parent=1 // loop_footer_branch
      %21 = sbr.rel target = $region3
    $region8: #{tpu_custom_call.1} parent=1 // loop_exit
      _
    %3769 = vsyncpa [#allocation3], 1
    %s3770 = scalar_lea.sflag [#allocation3], 1
    %3771 = vsyncpa %s3770, 1

</llo_original>
